<compile_context>
chip_gen: v7x
topology: tpu7x:2x2x1
jax: 0.10.0
libtpu: 0.0.40
codegen_flags: <defaults>
</compile_context>

<pallas_src>
import functools

import jax
import jax.numpy as jnp
from jax.experimental import pallas as pl
from jax.experimental.pallas import tpu as pltpu


_VMEM_LIMIT = 32 * 1024 * 1024  # bytes; safe on v5e/v6e/v7x


def _pick_tile(m, want):
    """Largest multiple of 8 that divides m and is <= want; else m (grid of 1)."""
    best = None
    for t in range(8, min(m, want) + 1, 8):
        if m % t == 0:
            best = t
    return best if best is not None else m


# ----------------------------------------------------------------------------
# Pallas kernel: fused GEMM + bias + optional ReLU (used for all conv layers)
# ----------------------------------------------------------------------------
def _gemm_bias_act_kernel(x_ref, w_ref, b_ref, o_ref, *, relu):
    y = jnp.dot(x_ref[...], w_ref[...], preferred_element_type=jnp.float32)
    y = y + b_ref[...]
    if relu:
        y = jnp.maximum(y, 0.0)
    o_ref[...] = y.astype(o_ref.dtype)


def pallas_linear(x, w, b, *, relu=False, tile_m=256):
    """y = relu?(x @ w + b).  x:(M,K) w:(K,N) b:(1,N) -> (M,N).

    M is tiled (parallel grid axis) so DMA is double-buffered and the batch
    dimension scales / shards across v7x's two TensorCores.  tile_m is
    sweepable (256 matches the v6e/v7x MXU; use 128 on v5e).
    """
    M, K = x.shape
    N = w.shape[1]
    tm = _pick_tile(M, tile_m)
    grid = (M // tm,)
    return pl.pallas_call(
        functools.partial(_gemm_bias_act_kernel, relu=relu),
        out_shape=jax.ShapeDtypeStruct((M, N), jnp.float32),
        grid=grid,
        in_specs=[
            pl.BlockSpec((tm, K), lambda i: (i, 0)),
            pl.BlockSpec((K, N), lambda i: (0, 0)),
            pl.BlockSpec((1, N), lambda i: (0, 0)),
        ],
        out_specs=pl.BlockSpec((tm, N), lambda i: (i, 0)),
        compiler_params=pltpu.CompilerParams(
            dimension_semantics=("parallel",),
            vmem_limit_bytes=_VMEM_LIMIT,
        ),
    )(x, w, b)


# ----------------------------------------------------------------------------
# Pallas kernel: fused fc1 + fc2 + actor + extra_layer + merged critics
# ----------------------------------------------------------------------------
def _mlp_heads_kernel(x_ref,
                      w1_ref, b1_ref, w2_ref, b2_ref,
                      wa1_ref, ba1_ref, wa2_ref, ba2_ref,
                      we_ref, be_ref, wc_ref, bc_ref,
                      pol_ref, vext_ref, vint_ref):
    """feature-MLP + heads, all activations kept in vregs/VMEM.

    f      = relu(relu(x @ W1 + b1) @ W2 + b2)           # fc1, fc2
    policy = relu(f @ Wa1 + ba1) @ Wa2 + ba2              # actor
    e      = relu(f @ We + be)                            # extra_layer
    v      = (e + f) @ [Wce|Wci] + [bce|bci]              # merged critics
    """
    x = x_ref[...]
    f = jnp.maximum(
        jnp.dot(x, w1_ref[...], preferred_element_type=jnp.float32) + b1_ref[...], 0.0)
    f = jnp.maximum(
        jnp.dot(f, w2_ref[...], preferred_element_type=jnp.float32) + b2_ref[...], 0.0)
    h = jnp.maximum(
        jnp.dot(f, wa1_ref[...], preferred_element_type=jnp.float32) + ba1_ref[...], 0.0)
    pol_ref[...] = (
        jnp.dot(h, wa2_ref[...], preferred_element_type=jnp.float32) + ba2_ref[...])
    e = jnp.maximum(
        jnp.dot(f, we_ref[...], preferred_element_type=jnp.float32) + be_ref[...], 0.0)
    s = e + f
    v = jnp.dot(s, wc_ref[...], preferred_element_type=jnp.float32) + bc_ref[...]
    vext_ref[...] = v[:, 0:1]
    vint_ref[...] = v[:, 1:2]


def pallas_mlp_heads(x, p, output_size, *, tile_b=128):
    B, K = x.shape
    tb = _pick_tile(B, tile_b)
    grid = (B // tb,)

    ws = [
        p["fc1_w"], p["fc1_b"], p["fc2_w"], p["fc2_b"],
        p["a1_w"], p["a1_b"], p["a2_w"], p["a2_b"],
        p["ex_w"], p["ex_b"], p["c_w"], p["c_b"],
    ]

    def const_spec(a):
        shape = a.shape
        return pl.BlockSpec(shape, lambda i: (0,) * len(shape))

    in_specs = [pl.BlockSpec((tb, K), lambda i: (i, 0))] + [const_spec(a) for a in ws]
    out_specs = (
        pl.BlockSpec((tb, output_size), lambda i: (i, 0)),
        pl.BlockSpec((tb, 1), lambda i: (i, 0)),
        pl.BlockSpec((tb, 1), lambda i: (i, 0)),
    )
    out_shapes = (
        jax.ShapeDtypeStruct((B, output_size), jnp.float32),  # policy
        jax.ShapeDtypeStruct((B, 1), jnp.float32),            # value_ext
        jax.ShapeDtypeStruct((B, 1), jnp.float32),            # value_int
    )
    return pl.pallas_call(
        _mlp_heads_kernel,
        out_shape=out_shapes,
        grid=grid,
        in_specs=in_specs,
        out_specs=out_specs,
        compiler_params=pltpu.CompilerParams(
            dimension_semantics=("parallel",),
            vmem_limit_bytes=_VMEM_LIMIT,
        ),
    )(x, *ws)


# ----------------------------------------------------------------------------
# Conv layer = XLA patches op + fused Pallas GEMM (NHWC throughout)
# ----------------------------------------------------------------------------
def conv2d_relu(x, w_gemm, b, kh, kw, stride, dim_numbers):
    """x: NCHW or NHWC (per dim_numbers), w_gemm: (C*kh*kw, O), b: (1, O).
    Returns NHWC activation with ReLU applied."""
    patches = jax.lax.conv_general_dilated_patches(
        x, (kh, kw), (stride, stride), "VALID",
        dimension_numbers=dim_numbers,
        precision=jax.lax.Precision.HIGHEST,  # identity kernel: keep f32 exact
    )  # -> (B, OH, OW, C*kh*kw), feature order (C, kh, kw) == PyTorch flatten
    B, OH, OW, K = patches.shape
    y = pallas_linear(patches.reshape(B * OH * OW, K), w_gemm, b, relu=True)
    return y.reshape(B, OH, OW, -1)  # NHWC, no transpose needed


# ----------------------------------------------------------------------------
# Parameter construction (deterministic synthetic init, GEMM-ready layouts)
# ----------------------------------------------------------------------------
def init_params(key, output_size):
    # TODO(synk): PyTorch uses orthogonal init; we keep shapes/gains but use a
    # deterministic scaled-normal init (synthetic weights, not a checkpoint).
    keys = jax.random.split(key, 12)
    ki = iter(keys)
    g = 2.0 ** 0.5

    def conv_w(k, o, c, kh, kw, gain):
        # PyTorch layout (O, C, KH, KW) -> GEMM layout (C*KH*KW, O); row order
        # (C major, then kh, kw) matches conv_general_dilated_patches output.
        fan_in = c * kh * kw
        w = gain * jax.random.normal(k, (o, c, kh, kw), jnp.float32) / jnp.sqrt(fan_in)
        return w.reshape(o, fan_in).T

    def lin_w(k, fin, fout, gain):
        # Stored as (in, out): kernels compute x @ W  (== PyTorch x @ W.T).
        return gain * jax.random.normal(k, (fin, fout), jnp.float32) / jnp.sqrt(fin)

    def bias(n):
        return jnp.zeros((1, n), jnp.float32)

    # fc1: PyTorch flattens NCHW (channel-major).  Our conv stack keeps NHWC,
    # so permute fc1's input rows once at init from (C,H,W) order to (H,W,C).
    fc1_chw = lin_w(next(ki), 7 * 7 * 64, 256, g)
    perm = jnp.arange(64 * 7 * 7).reshape(64, 7, 7).transpose(1, 2, 0).reshape(-1)
    fc1_w = fc1_chw[perm]

    # critic_ext / critic_int merged into a single (448, 2) matmul.
    ce = lin_w(next(ki), 448, 1, 0.01)
    ci = lin_w(next(ki), 448, 1, 0.01)

    return {
        # feature extractor
        "c1_w": conv_w(next(ki), 32, 4, 8, 8, g),   "c1_b": bias(32),
        "c2_w": conv_w(next(ki), 64, 32, 4, 4, g),  "c2_b": bias(64),
        "c3_w": conv_w(next(ki), 64, 64, 3, 3, g),  "c3_b": bias(64),
        "fc1_w": fc1_w,                              "fc1_b": bias(256),
        "fc2_w": lin_w(next(ki), 256, 448, g),       "fc2_b": bias(448),
        # actor
        "a1_w": lin_w(next(ki), 448, 448, 0.01),     "a1_b": bias(448),
        "a2_w": lin_w(next(ki), 448, output_size, 0.01), "a2_b": bias(output_size),
        # extra layer
        "ex_w": lin_w(next(ki), 448, 448, 0.1),      "ex_b": bias(448),
        # merged critics: [critic_ext | critic_int]
        "c_w": jnp.concatenate([ce, ci], axis=1),    "c_b": bias(2),
    }


# ----------------------------------------------------------------------------
# Full forward pass (mirrors CnnActorCriticNetwork.forward)
# ----------------------------------------------------------------------------
@functools.partial(jax.jit, static_argnums=(2,))
def cnn_actor_critic_forward(params, state, output_size):
    # feature (convs stay in NHWC; first patches op reads NCHW input directly)
    x = conv2d_relu(state, params["c1_w"], params["c1_b"], 8, 8, 4,
                    ("NCHW", "OIHW", "NHWC"))                    # (B,20,20,32)
    x = conv2d_relu(x, params["c2_w"], params["c2_b"], 4, 4, 2,
                    ("NHWC", "OIHW", "NHWC"))                    # (B,9,9,64)
    x = conv2d_relu(x, params["c3_w"], params["c3_b"], 3, 3, 1,
                    ("NHWC", "OIHW", "NHWC"))                    # (B,7,7,64)
    B = x.shape[0]
    feat = x.reshape(B, -1)  # HWC flatten; fc1_w rows were permuted to match
    # fc1 + fc2 + actor + extra_layer + critics: one fused Pallas kernel
    policy, value_ext, value_int = pallas_mlp_heads(feat, params, output_size)
    return policy, value_ext, value_int


if __name__ == "__main__":
    key = jax.random.PRNGKey(0)
    k_param, k_input = jax.random.split(key)

    output_size = 6
    params = init_params(k_param, output_size)

    # Architecture hard-codes 84x84 spatial input (Linear(7*7*64, 256)).
    state = jax.random.uniform(k_input, (2, 4, 84, 84), jnp.float32)

    policy, value_ext, value_int = cnn_actor_critic_forward(params, state, output_size)
    jax.block_until_ready((policy, value_ext, value_int))

    assert policy.shape == (2, output_size)
    assert value_ext.shape == (2, 1)
    assert value_int.shape == (2, 1)
    assert bool(jnp.all(jnp.isfinite(policy)))
    assert bool(jnp.all(jnp.isfinite(value_ext)))
    assert bool(jnp.all(jnp.isfinite(value_int)))
    print("KERNEL_OK")
</pallas_src>

<mosaic_0001>
module attributes {stable_mosaic.version = 11 : i64} {
  func.func @_gemm_bias_act_kernel(%arg0: i32, %arg1: memref<200x256xf32, #tpu.memory_space<vmem>>, %arg2: memref<256x32xf32, #tpu.memory_space<vmem>>, %arg3: memref<1x32xf32, #tpu.memory_space<vmem>>, %arg4: memref<200x32xf32, #tpu.memory_space<vmem>>) attributes {dimension_semantics = [#tpu.dimension_semantics<parallel>], iteration_bounds = array<i64: 4>, scalar_prefetch = 0 : i64, scratch_operands = 0 : i64, tpu.core_type = #tpu.core_type<tc>, window_params = [{transform_indices = @transform_0, window_bounds = array<i64: 200, 256>}, {pipeline_mode = #tpu.pipeline_mode<synchronous>, transform_indices = @transform_1, window_bounds = array<i64: 256, 32>}, {pipeline_mode = #tpu.pipeline_mode<synchronous>, transform_indices = @transform_2, window_bounds = array<i64: 1, 32>}, {transform_indices = @transform_3, window_bounds = array<i64: 200, 32>}]} {
    %c0 = arith.constant 0 : index
    %c0_0 = arith.constant 0 : index
    %0 = vector.load %arg1[%c0, %c0_0] : memref<200x256xf32, #tpu.memory_space<vmem>>, vector<200x256xf32>
    %c0_1 = arith.constant 0 : index
    %c0_2 = arith.constant 0 : index
    %1 = vector.load %arg2[%c0_1, %c0_2] : memref<256x32xf32, #tpu.memory_space<vmem>>, vector<256x32xf32>
    %cst = arith.constant dense<0.000000e+00> : vector<200x32xf32>
    %2 = tpu.matmul %0, %1, %cst {dimension_numbers = #tpu.dot_dimension_numbers<[1], [0], [0], [1], [0, 0, 1, 1], [], []>} : vector<200x256xf32>, vector<256x32xf32>, vector<200x32xf32> -> vector<200x32xf32>
    %c0_3 = arith.constant 0 : index
    %c0_4 = arith.constant 0 : index
    %3 = vector.load %arg3[%c0_3, %c0_4] : memref<1x32xf32, #tpu.memory_space<vmem>>, vector<1x32xf32>
    %4 = vector.broadcast %3 : vector<1x32xf32> to vector<200x32xf32>
    %5 = arith.addf %2, %4 : vector<200x32xf32>
    %cst_5 = arith.constant 0.000000e+00 : f32
    %6 = vector.broadcast %cst_5 : f32 to vector<200x32xf32>
    %7 = arith.maximumf %5, %6 : vector<200x32xf32>
    %c0_6 = arith.constant 0 : index
    %c0_7 = arith.constant 0 : index
    %8 = vector.load %arg4[%c0_6, %c0_7] : memref<200x32xf32, #tpu.memory_space<vmem>>, vector<200x32xf32>
    tpu.vector_store %arg4[%c0_6, %c0_7], %7 {strides = array<i32>} : memref<200x32xf32, #tpu.memory_space<vmem>>, vector<200x32xf32>,
    return
  }
  func.func @transform_0(%arg0: i32) -> (i32, i32) {
    %c0_i32 = arith.constant 0 : i32
    %c0_i32_0 = arith.constant 0 : i32
    return %arg0, %c0_i32 : i32, i32
  }
  func.func @transform_1(%arg0: i32) -> (i32, i32) {
    %c0_i32 = arith.constant 0 : i32
    %c0_i32_0 = arith.constant 0 : i32
    %c0_i32_1 = arith.constant 0 : i32
    return %c0_i32, %c0_i32_0 : i32, i32
  }
  func.func @transform_2(%arg0: i32) -> (i32, i32) {
    %c0_i32 = arith.constant 0 : i32
    %c0_i32_0 = arith.constant 0 : i32
    %c0_i32_1 = arith.constant 0 : i32
    return %c0_i32, %c0_i32_0 : i32, i32
  }
  func.func @transform_3(%arg0: i32) -> (i32, i32) {
    %c0_i32 = arith.constant 0 : i32
    %c0_i32_0 = arith.constant 0 : i32
    return %arg0, %c0_i32 : i32, i32
  }
}

module attributes {stable_mosaic.version = 11 : i64} {
  func.func @_gemm_bias_act_kernel(%arg0: i32, %arg1: memref<162x512xf32, #tpu.memory_space<vmem>>, %arg2: memref<512x64xf32, #tpu.memory_space<vmem>>, %arg3: memref<1x64xf32, #tpu.memory_space<vmem>>, %arg4: memref<162x64xf32, #tpu.memory_space<vmem>>) attributes {dimension_semantics = [#tpu.dimension_semantics<parallel>], iteration_bounds = array<i64: 1>, scalar_prefetch = 0 : i64, scratch_operands = 0 : i64, tpu.core_type = #tpu.core_type<tc>, window_params = [{transform_indices = @transform_0, window_bounds = array<i64: 162, 512>}, {pipeline_mode = #tpu.pipeline_mode<synchronous>, transform_indices = @transform_1, window_bounds = array<i64: 512, 64>}, {pipeline_mode = #tpu.pipeline_mode<synchronous>, transform_indices = @transform_2, window_bounds = array<i64: 1, 64>}, {transform_indices = @transform_3, window_bounds = array<i64: 162, 64>}]} {
    %c0 = arith.constant 0 : index
    %c0_0 = arith.constant 0 : index
    %0 = vector.load %arg1[%c0, %c0_0] : memref<162x512xf32, #tpu.memory_space<vmem>>, vector<162x512xf32>
    %c0_1 = arith.constant 0 : index
    %c0_2 = arith.constant 0 : index
    %1 = vector.load %arg2[%c0_1, %c0_2] : memref<512x64xf32, #tpu.memory_space<vmem>>, vector<512x64xf32>
    %cst = arith.constant dense<0.000000e+00> : vector<162x64xf32>
    %2 = tpu.matmul %0, %1, %cst {dimension_numbers = #tpu.dot_dimension_numbers<[1], [0], [0], [1], [0, 0, 1, 1], [], []>} : vector<162x512xf32>, vector<512x64xf32>, vector<162x64xf32> -> vector<162x64xf32>
    %c0_3 = arith.constant 0 : index
    %c0_4 = arith.constant 0 : index
    %3 = vector.load %arg3[%c0_3, %c0_4] : memref<1x64xf32, #tpu.memory_space<vmem>>, vector<1x64xf32>
    %4 = vector.broadcast %3 : vector<1x64xf32> to vector<162x64xf32>
    %5 = arith.addf %2, %4 : vector<162x64xf32>
    %cst_5 = arith.constant 0.000000e+00 : f32
    %6 = vector.broadcast %cst_5 : f32 to vector<162x64xf32>
    %7 = arith.maximumf %5, %6 : vector<162x64xf32>
    %c0_6 = arith.constant 0 : index
    %c0_7 = arith.constant 0 : index
    %8 = vector.load %arg4[%c0_6, %c0_7] : memref<162x64xf32, #tpu.memory_space<vmem>>, vector<162x64xf32>
    tpu.vector_store %arg4[%c0_6, %c0_7], %7 {strides = array<i32>} : memref<162x64xf32, #tpu.memory_space<vmem>>, vector<162x64xf32>,
    return
  }
  func.func @transform_0(%arg0: i32) -> (i32, i32) {
    %c0_i32 = arith.constant 0 : i32
    %c0_i32_0 = arith.constant 0 : i32
    return %arg0, %c0_i32 : i32, i32
  }
  func.func @transform_1(%arg0: i32) -> (i32, i32) {
    %c0_i32 = arith.constant 0 : i32
    %c0_i32_0 = arith.constant 0 : i32
    %c0_i32_1 = arith.constant 0 : i32
    return %c0_i32, %c0_i32_0 : i32, i32
  }
  func.func @transform_2(%arg0: i32) -> (i32, i32) {
    %c0_i32 = arith.constant 0 : i32
    %c0_i32_0 = arith.constant 0 : i32
    %c0_i32_1 = arith.constant 0 : i32
    return %c0_i32, %c0_i32_0 : i32, i32
  }
  func.func @transform_3(%arg0: i32) -> (i32, i32) {
    %c0_i32 = arith.constant 0 : i32
    %c0_i32_0 = arith.constant 0 : i32
    return %arg0, %c0_i32 : i32, i32
  }
}

module attributes {stable_mosaic.version = 11 : i64} {
  func.func @_gemm_bias_act_kernel(%arg0: i32, %arg1: memref<98x576xf32, #tpu.memory_space<vmem>>, %arg2: memref<576x64xf32, #tpu.memory_space<vmem>>, %arg3: memref<1x64xf32, #tpu.memory_space<vmem>>, %arg4: memref<98x64xf32, #tpu.memory_space<vmem>>) attributes {dimension_semantics = [#tpu.dimension_semantics<parallel>], iteration_bounds = array<i64: 1>, scalar_prefetch = 0 : i64, scratch_operands = 0 : i64, tpu.core_type = #tpu.core_type<tc>, window_params = [{transform_indices = @transform_0, window_bounds = array<i64: 98, 576>}, {pipeline_mode = #tpu.pipeline_mode<synchronous>, transform_indices = @transform_1, window_bounds = array<i64: 576, 64>}, {pipeline_mode = #tpu.pipeline_mode<synchronous>, transform_indices = @transform_2, window_bounds = array<i64: 1, 64>}, {transform_indices = @transform_3, window_bounds = array<i64: 98, 64>}]} {
    %c0 = arith.constant 0 : index
    %c0_0 = arith.constant 0 : index
    %0 = vector.load %arg1[%c0, %c0_0] : memref<98x576xf32, #tpu.memory_space<vmem>>, vector<98x576xf32>
    %c0_1 = arith.constant 0 : index
    %c0_2 = arith.constant 0 : index
    %1 = vector.load %arg2[%c0_1, %c0_2] : memref<576x64xf32, #tpu.memory_space<vmem>>, vector<576x64xf32>
    %cst = arith.constant dense<0.000000e+00> : vector<98x64xf32>
    %2 = tpu.matmul %0, %1, %cst {dimension_numbers = #tpu.dot_dimension_numbers<[1], [0], [0], [1], [0, 0, 1, 1], [], []>} : vector<98x576xf32>, vector<576x64xf32>, vector<98x64xf32> -> vector<98x64xf32>
    %c0_3 = arith.constant 0 : index
    %c0_4 = arith.constant 0 : index
    %3 = vector.load %arg3[%c0_3, %c0_4] : memref<1x64xf32, #tpu.memory_space<vmem>>, vector<1x64xf32>
    %4 = vector.broadcast %3 : vector<1x64xf32> to vector<98x64xf32>
    %5 = arith.addf %2, %4 : vector<98x64xf32>
    %cst_5 = arith.constant 0.000000e+00 : f32
    %6 = vector.broadcast %cst_5 : f32 to vector<98x64xf32>
    %7 = arith.maximumf %5, %6 : vector<98x64xf32>
    %c0_6 = arith.constant 0 : index
    %c0_7 = arith.constant 0 : index
    %8 = vector.load %arg4[%c0_6, %c0_7] : memref<98x64xf32, #tpu.memory_space<vmem>>, vector<98x64xf32>
    tpu.vector_store %arg4[%c0_6, %c0_7], %7 {strides = array<i32>} : memref<98x64xf32, #tpu.memory_space<vmem>>, vector<98x64xf32>,
    return
  }
  func.func @transform_0(%arg0: i32) -> (i32, i32) {
    %c0_i32 = arith.constant 0 : i32
    %c0_i32_0 = arith.constant 0 : i32
    return %arg0, %c0_i32 : i32, i32
  }
  func.func @transform_1(%arg0: i32) -> (i32, i32) {
    %c0_i32 = arith.constant 0 : i32
    %c0_i32_0 = arith.constant 0 : i32
    %c0_i32_1 = arith.constant 0 : i32
    return %c0_i32, %c0_i32_0 : i32, i32
  }
  func.func @transform_2(%arg0: i32) -> (i32, i32) {
    %c0_i32 = arith.constant 0 : i32
    %c0_i32_0 = arith.constant 0 : i32
    %c0_i32_1 = arith.constant 0 : i32
    return %c0_i32, %c0_i32_0 : i32, i32
  }
  func.func @transform_3(%arg0: i32) -> (i32, i32) {
    %c0_i32 = arith.constant 0 : i32
    %c0_i32_0 = arith.constant 0 : i32
    return %arg0, %c0_i32 : i32, i32
  }
}

module attributes {stable_mosaic.version = 11 : i64} {
  func.func @_mlp_heads_kernel(%arg0: i32, %arg1: memref<2x3136xf32, #tpu.memory_space<vmem>>, %arg2: memref<3136x256xf32, #tpu.memory_space<vmem>>, %arg3: memref<1x256xf32, #tpu.memory_space<vmem>>, %arg4: memref<256x448xf32, #tpu.memory_space<vmem>>, %arg5: memref<1x448xf32, #tpu.memory_space<vmem>>, %arg6: memref<448x448xf32, #tpu.memory_space<vmem>>, %arg7: memref<1x448xf32, #tpu.memory_space<vmem>>, %arg8: memref<448x6xf32, #tpu.memory_space<vmem>>, %arg9: memref<1x6xf32, #tpu.memory_space<vmem>>, %arg10: memref<448x448xf32, #tpu.memory_space<vmem>>, %arg11: memref<1x448xf32, #tpu.memory_space<vmem>>, %arg12: memref<448x2xf32, #tpu.memory_space<vmem>>, %arg13: memref<1x2xf32, #tpu.memory_space<vmem>>, %arg14: memref<2x6xf32, #tpu.memory_space<vmem>>, %arg15: memref<2x1xf32, #tpu.memory_space<vmem>>, %arg16: memref<2x1xf32, #tpu.memory_space<vmem>>) attributes {dimension_semantics = [#tpu.dimension_semantics<parallel>], iteration_bounds = array<i64: 1>, scalar_prefetch = 0 : i64, scratch_operands = 0 : i64, tpu.core_type = #tpu.core_type<tc>, window_params = [{transform_indices = @transform_0, window_bounds = array<i64: 2, 3136>}, {pipeline_mode = #tpu.pipeline_mode<synchronous>, transform_indices = @transform_1, window_bounds = array<i64: 3136, 256>}, {pipeline_mode = #tpu.pipeline_mode<synchronous>, transform_indices = @transform_2, window_bounds = array<i64: 1, 256>}, {pipeline_mode = #tpu.pipeline_mode<synchronous>, transform_indices = @transform_3, window_bounds = array<i64: 256, 448>}, {pipeline_mode = #tpu.pipeline_mode<synchronous>, transform_indices = @transform_4, window_bounds = array<i64: 1, 448>}, {pipeline_mode = #tpu.pipeline_mode<synchronous>, transform_indices = @transform_5, window_bounds = array<i64: 448, 448>}, {pipeline_mode = #tpu.pipeline_mode<synchronous>, transform_indices = @transform_6, window_bounds = array<i64: 1, 448>}, {pipeline_mode = #tpu.pipeline_mode<synchronous>, transform_indices = @transform_7, window_bounds = array<i64: 448, 6>}, {pipeline_mode = #tpu.pipeline_mode<synchronous>, transform_indices = @transform_8, window_bounds = array<i64: 1, 6>}, {pipeline_mode = #tpu.pipeline_mode<synchronous>, transform_indices = @transform_9, window_bounds = array<i64: 448, 448>}, {pipeline_mode = #tpu.pipeline_mode<synchronous>, transform_indices = @transform_10, window_bounds = array<i64: 1, 448>}, {pipeline_mode = #tpu.pipeline_mode<synchronous>, transform_indices = @transform_11, window_bounds = array<i64: 448, 2>}, {pipeline_mode = #tpu.pipeline_mode<synchronous>, transform_indices = @transform_12, window_bounds = array<i64: 1, 2>}, {transform_indices = @transform_13, window_bounds = array<i64: 2, 6>}, {transform_indices = @transform_14, window_bounds = array<i64: 2, 1>}, {transform_indices = @transform_15, window_bounds = array<i64: 2, 1>}]} {
    %c0 = arith.constant 0 : index
    %c0_0 = arith.constant 0 : index
    %0 = vector.load %arg1[%c0, %c0_0] : memref<2x3136xf32, #tpu.memory_space<vmem>>, vector<2x3136xf32>
    %c0_1 = arith.constant 0 : index
    %c0_2 = arith.constant 0 : index
    %1 = vector.load %arg2[%c0_1, %c0_2] : memref<3136x256xf32, #tpu.memory_space<vmem>>, vector<3136x256xf32>
    %cst = arith.constant dense<0.000000e+00> : vector<2x256xf32>
    %2 = tpu.matmul %0, %1, %cst {dimension_numbers = #tpu.dot_dimension_numbers<[1], [0], [0], [1], [0, 0, 1, 1], [], []>} : vector<2x3136xf32>, vector<3136x256xf32>, vector<2x256xf32> -> vector<2x256xf32>
    %c0_3 = arith.constant 0 : index
    %c0_4 = arith.constant 0 : index
    %3 = vector.load %arg3[%c0_3, %c0_4] : memref<1x256xf32, #tpu.memory_space<vmem>>, vector<1x256xf32>
    %4 = vector.broadcast %3 : vector<1x256xf32> to vector<2x256xf32>
    %5 = arith.addf %2, %4 : vector<2x256xf32>
    %cst_5 = arith.constant 0.000000e+00 : f32
    %6 = vector.broadcast %cst_5 : f32 to vector<2x256xf32>
    %7 = arith.maximumf %5, %6 : vector<2x256xf32>
    %c0_6 = arith.constant 0 : index
    %c0_7 = arith.constant 0 : index
    %8 = vector.load %arg4[%c0_6, %c0_7] : memref<256x448xf32, #tpu.memory_space<vmem>>, vector<256x448xf32>
    %cst_8 = arith.constant dense<0.000000e+00> : vector<2x448xf32>
    %9 = tpu.matmul %7, %8, %cst_8 {dimension_numbers = #tpu.dot_dimension_numbers<[1], [0], [0], [1], [0, 0, 1, 1], [], []>} : vector<2x256xf32>, vector<256x448xf32>, vector<2x448xf32> -> vector<2x448xf32>
    %c0_9 = arith.constant 0 : index
    %c0_10 = arith.constant 0 : index
    %10 = vector.load %arg5[%c0_9, %c0_10] : memref<1x448xf32, #tpu.memory_space<vmem>>, vector<1x448xf32>
    %11 = vector.broadcast %10 : vector<1x448xf32> to vector<2x448xf32>
    %12 = arith.addf %9, %11 : vector<2x448xf32>
    %cst_11 = arith.constant 0.000000e+00 : f32
    %13 = vector.broadcast %cst_11 : f32 to vector<2x448xf32>
    %14 = arith.maximumf %12, %13 : vector<2x448xf32>
    %c0_12 = arith.constant 0 : index
    %c0_13 = arith.constant 0 : index
    %15 = vector.load %arg6[%c0_12, %c0_13] : memref<448x448xf32, #tpu.memory_space<vmem>>, vector<448x448xf32>
    %cst_14 = arith.constant dense<0.000000e+00> : vector<2x448xf32>
    %16 = tpu.matmul %14, %15, %cst_14 {dimension_numbers = #tpu.dot_dimension_numbers<[1], [0], [0], [1], [0, 0, 1, 1], [], []>} : vector<2x448xf32>, vector<448x448xf32>, vector<2x448xf32> -> vector<2x448xf32>
    %c0_15 = arith.constant 0 : index
    %c0_16 = arith.constant 0 : index
    %17 = vector.load %arg7[%c0_15, %c0_16] : memref<1x448xf32, #tpu.memory_space<vmem>>, vector<1x448xf32>
    %18 = vector.broadcast %17 : vector<1x448xf32> to vector<2x448xf32>
    %19 = arith.addf %16, %18 : vector<2x448xf32>
    %cst_17 = arith.constant 0.000000e+00 : f32
    %20 = vector.broadcast %cst_17 : f32 to vector<2x448xf32>
    %21 = arith.maximumf %19, %20 : vector<2x448xf32>
    %c0_18 = arith.constant 0 : index
    %c0_19 = arith.constant 0 : index
    %22 = vector.load %arg8[%c0_18, %c0_19] : memref<448x6xf32, #tpu.memory_space<vmem>>, vector<448x6xf32>
    %cst_20 = arith.constant dense<0.000000e+00> : vector<2x6xf32>
    %23 = tpu.matmul %21, %22, %cst_20 {dimension_numbers = #tpu.dot_dimension_numbers<[1], [0], [0], [1], [0, 0, 1, 1], [], []>} : vector<2x448xf32>, vector<448x6xf32>, vector<2x6xf32> -> vector<2x6xf32>
    %c0_21 = arith.constant 0 : index
    %c0_22 = arith.constant 0 : index
    %24 = vector.load %arg9[%c0_21, %c0_22] : memref<1x6xf32, #tpu.memory_space<vmem>>, vector<1x6xf32>
    %25 = vector.broadcast %24 : vector<1x6xf32> to vector<2x6xf32>
    %26 = arith.addf %23, %25 : vector<2x6xf32>
    %c0_23 = arith.constant 0 : index
    %c0_24 = arith.constant 0 : index
    %27 = vector.load %arg14[%c0_23, %c0_24] : memref<2x6xf32, #tpu.memory_space<vmem>>, vector<2x6xf32>
    tpu.vector_store %arg14[%c0_23, %c0_24], %26 {strides = array<i32>} : memref<2x6xf32, #tpu.memory_space<vmem>>, vector<2x6xf32>,
    %c0_25 = arith.constant 0 : index
    %c0_26 = arith.constant 0 : index
    %28 = vector.load %arg10[%c0_25, %c0_26] : memref<448x448xf32, #tpu.memory_space<vmem>>, vector<448x448xf32>
    %cst_27 = arith.constant dense<0.000000e+00> : vector<2x448xf32>
    %29 = tpu.matmul %14, %28, %cst_27 {dimension_numbers = #tpu.dot_dimension_numbers<[1], [0], [0], [1], [0, 0, 1, 1], [], []>} : vector<2x448xf32>, vector<448x448xf32>, vector<2x448xf32> -> vector<2x448xf32>
    %c0_28 = arith.constant 0 : index
    %c0_29 = arith.constant 0 : index
    %30 = vector.load %arg11[%c0_28, %c0_29] : memref<1x448xf32, #tpu.memory_space<vmem>>, vector<1x448xf32>
    %31 = vector.broadcast %30 : vector<1x448xf32> to vector<2x448xf32>
    %32 = arith.addf %29, %31 : vector<2x448xf32>
    %cst_30 = arith.constant 0.000000e+00 : f32
    %33 = vector.broadcast %cst_30 : f32 to vector<2x448xf32>
    %34 = arith.maximumf %32, %33 : vector<2x448xf32>
    %35 = arith.addf %34, %14 : vector<2x448xf32>
    %c0_31 = arith.constant 0 : index
    %c0_32 = arith.constant 0 : index
    %36 = vector.load %arg12[%c0_31, %c0_32] : memref<448x2xf32, #tpu.memory_space<vmem>>, vector<448x2xf32>
    %cst_33 = arith.constant dense<0.000000e+00> : vector<2x2xf32>
    %37 = tpu.matmul %35, %36, %cst_33 {dimension_numbers = #tpu.dot_dimension_numbers<[1], [0], [0], [1], [0, 0, 1, 1], [], []>} : vector<2x448xf32>, vector<448x2xf32>, vector<2x2xf32> -> vector<2x2xf32>
    %c0_34 = arith.constant 0 : index
    %c0_35 = arith.constant 0 : index
    %38 = vector.load %arg13[%c0_34, %c0_35] : memref<1x2xf32, #tpu.memory_space<vmem>>, vector<1x2xf32>
    %39 = vector.broadcast %38 : vector<1x2xf32> to vector<2x2xf32>
    %40 = arith.addf %37, %39 : vector<2x2xf32>
    %41 = vector.extract_strided_slice %40 {offsets = [0, 0], sizes = [2, 1], strides = [1, 1]} : vector<2x2xf32> to vector<2x1xf32>
    %c0_36 = arith.constant 0 : index
    %c0_37 = arith.constant 0 : index
    %42 = vector.load %arg15[%c0_36, %c0_37] : memref<2x1xf32, #tpu.memory_space<vmem>>, vector<2x1xf32>
    tpu.vector_store %arg15[%c0_36, %c0_37], %41 {strides = array<i32>} : memref<2x1xf32, #tpu.memory_space<vmem>>, vector<2x1xf32>,
    %43 = vector.extract_strided_slice %40 {offsets = [0, 1], sizes = [2, 1], strides = [1, 1]} : vector<2x2xf32> to vector<2x1xf32>
    %c0_38 = arith.constant 0 : index
    %c0_39 = arith.constant 0 : index
    %44 = vector.load %arg16[%c0_38, %c0_39] : memref<2x1xf32, #tpu.memory_space<vmem>>, vector<2x1xf32>
    tpu.vector_store %arg16[%c0_38, %c0_39], %43 {strides = array<i32>} : memref<2x1xf32, #tpu.memory_space<vmem>>, vector<2x1xf32>,
    return
  }
  func.func @transform_0(%arg0: i32) -> (i32, i32) {
    %c0_i32 = arith.constant 0 : i32
    %c0_i32_0 = arith.constant 0 : i32
    return %arg0, %c0_i32 : i32, i32
  }
  func.func @transform_1(%arg0: i32) -> (i32, i32) {
    %c0_i32 = arith.constant 0 : i32
    %c0_i32_0 = arith.constant 0 : i32
    %c0_i32_1 = arith.constant 0 : i32
    return %c0_i32, %c0_i32_0 : i32, i32
  }
  func.func @transform_2(%arg0: i32) -> (i32, i32) {
    %c0_i32 = arith.constant 0 : i32
    %c0_i32_0 = arith.constant 0 : i32
    %c0_i32_1 = arith.constant 0 : i32
    return %c0_i32, %c0_i32_0 : i32, i32
  }
  func.func @transform_3(%arg0: i32) -> (i32, i32) {
    %c0_i32 = arith.constant 0 : i32
    %c0_i32_0 = arith.constant 0 : i32
    %c0_i32_1 = arith.constant 0 : i32
    return %c0_i32, %c0_i32_0 : i32, i32
  }
  func.func @transform_4(%arg0: i32) -> (i32, i32) {
    %c0_i32 = arith.constant 0 : i32
    %c0_i32_0 = arith.constant 0 : i32
    %c0_i32_1 = arith.constant 0 : i32
    return %c0_i32, %c0_i32_0 : i32, i32
  }
  func.func @transform_5(%arg0: i32) -> (i32, i32) {
    %c0_i32 = arith.constant 0 : i32
    %c0_i32_0 = arith.constant 0 : i32
    %c0_i32_1 = arith.constant 0 : i32
    return %c0_i32, %c0_i32_0 : i32, i32
  }
  func.func @transform_6(%arg0: i32) -> (i32, i32) {
    %c0_i32 = arith.constant 0 : i32
    %c0_i32_0 = arith.constant 0 : i32
    %c0_i32_1 = arith.constant 0 : i32
    return %c0_i32, %c0_i32_0 : i32, i32
  }
  func.func @transform_7(%arg0: i32) -> (i32, i32) {
    %c0_i32 = arith.constant 0 : i32
    %c0_i32_0 = arith.constant 0 : i32
    %c0_i32_1 = arith.constant 0 : i32
    return %c0_i32, %c0_i32_0 : i32, i32
  }
  func.func @transform_8(%arg0: i32) -> (i32, i32) {
    %c0_i32 = arith.constant 0 : i32
    %c0_i32_0 = arith.constant 0 : i32
    %c0_i32_1 = arith.constant 0 : i32
    return %c0_i32, %c0_i32_0 : i32, i32
  }
  func.func @transform_9(%arg0: i32) -> (i32, i32) {
    %c0_i32 = arith.constant 0 : i32
    %c0_i32_0 = arith.constant 0 : i32
    %c0_i32_1 = arith.constant 0 : i32
    return %c0_i32, %c0_i32_0 : i32, i32
  }
  func.func @transform_10(%arg0: i32) -> (i32, i32) {
    %c0_i32 = arith.constant 0 : i32
    %c0_i32_0 = arith.constant 0 : i32
    %c0_i32_1 = arith.constant 0 : i32
    return %c0_i32, %c0_i32_0 : i32, i32
  }
  func.func @transform_11(%arg0: i32) -> (i32, i32) {
    %c0_i32 = arith.constant 0 : i32
    %c0_i32_0 = arith.constant 0 : i32
    %c0_i32_1 = arith.constant 0 : i32
    return %c0_i32, %c0_i32_0 : i32, i32
  }
  func.func @transform_12(%arg0: i32) -> (i32, i32) {
    %c0_i32 = arith.constant 0 : i32
    %c0_i32_0 = arith.constant 0 : i32
    %c0_i32_1 = arith.constant 0 : i32
    return %c0_i32, %c0_i32_0 : i32, i32
  }
  func.func @transform_13(%arg0: i32) -> (i32, i32) {
    %c0_i32 = arith.constant 0 : i32
    %c0_i32_0 = arith.constant 0 : i32
    return %arg0, %c0_i32 : i32, i32
  }
  func.func @transform_14(%arg0: i32) -> (i32, i32) {
    %c0_i32 = arith.constant 0 : i32
    %c0_i32_0 = arith.constant 0 : i32
    return %arg0, %c0_i32 : i32, i32
  }
  func.func @transform_15(%arg0: i32) -> (i32, i32) {
    %c0_i32 = arith.constant 0 : i32
    %c0_i32_0 = arith.constant 0 : i32
    return %arg0, %c0_i32 : i32, i32
  }
}

</mosaic_0001>

<llo_original>
// kernel: cnn_actor_critic_forward.4
$region0: #{cnn_actor_critic_forward.4}
  #allocation0 [shape = 'u32[]', space=smem, size = 0x4, offset = 0x4, fixed_abs, tag = 'smem constant byte address 0x4 - core index']
  #allocation1 [shape = 'u32[144,128]{1,0:T(1,128)}', space=vmem, size = 0x12000, scoped, tag = 'internal scratch']
  %s0 = inlined_call_operand.vmem [shape: f32[800,256], index: 0, kind: input, shape index: {}]
  %s1 = inlined_call_operand.vmem [shape: f32[256,32], index: 1, kind: input, shape index: {}]
  %s2 = inlined_call_operand.vmem [shape: f32[1,32], index: 2, kind: input, shape index: {}]
  %s3 = inlined_call_operand.vmem [shape: f32[800,32], index: 3, kind: output, shape index: {}]
  %s4 = sld [smem:[#allocation0]]
  $region45: #{cnn_actor_critic_forward.4} parent=0
    _
  %s6 = ssub.s32 1, %s4
  %s7 = scalar_select 0, %s6, %s4
  loop: start=0, step=1, limit=6
  $region2: #{cnn_actor_critic_forward.4} parent=0 // loop_pre_header
    _
  $region3: #{cnn_actor_critic_forward.4} parent=0 // loop_header
    %s9 = sphi 0, %s13
    %p10 = scmp.ge.s32.totalorder %s9, 6
    %s19 = sphi 0, %s21
    %s22 = sphi 0, %s19
    %s23 = sphi 0, %s22
    %s39 = sphi 0, %s23
    %s43 = sphi 0, %s43
    %s45 = sphi 0, %s43
    %s46 = sphi 0, %s45
    %s60 = sphi 0, %s46
    %s64 = sphi 0, %s64
    %s66 = sphi 0, %s64
    %s67 = sphi 0, %s66
    %s81 = sphi 0, %s67
    %s87 = sphi 0, %s89
    %s90 = sphi 0, %s87
    %s91 = sphi 0, %s90
    %s107 = sphi 0, %s91
  $region4: #{cnn_actor_critic_forward.4} parent=0 // loop_header_branch
    %12 = sbr.rel (%p10) target = $region8
  $region5: #{cnn_actor_critic_forward.4} parent=0 // loop_body
    %s14 = ssub.s32 %s9, 1
    %s15 = ssub.s32 %s9, 2
    %s16 = sadd.s32 %s9, 1
    %s17 = ssub.s32 %s9, %s16
    %p18 = scmp.eq.s32.totalorder %s17, 0
    %s20 = sadd.s32 %s19, 1
    %s21 = scalar_select %p18, %s19, %s20
    %p24 = pneg %p18
    %p25 = scmp.eq.s32.totalorder %s9, 3
    %p26 = por %p24, %p25
    %p27 = scmp.ne.s32.totalorder %s19, %s22
    %p28 = scmp.eq.s32.totalorder %s9, 0
    %p29 = por %p27, %p28
    %p30 = scmp.ne.s32.totalorder %s19, %s22
    %p31 = scmp.eq.s32.totalorder %s14, 3
    %p32 = por %p30, %p31
    %p33 = scmp.ne.s32.totalorder %s22, %s23
    %p34 = scmp.eq.s32.totalorder %s14, 0
    %p35 = por %p33, %p34
    %p36 = scmp.ne.s32.totalorder %s22, %s23
    %p37 = scmp.eq.s32.totalorder %s15, 3
    %p38 = por %p36, %p37
    %p40 = scmp.ne.s32.totalorder %s23, %s39
    %p41 = scmp.eq.s32.totalorder %s15, 0
    %p42 = por %p40, %p41
    %s44 = sadd.s32 %s43, 1
    %p47 = scmp.eq.s32.totalorder %s9, 3
    %p48 = scmp.ne.s32.totalorder %s43, %s45
    %p49 = scmp.eq.s32.totalorder %s9, 0
    %p50 = por %p48, %p49
    %p51 = scmp.ne.s32.totalorder %s43, %s45
    %p52 = scmp.eq.s32.totalorder %s14, 3
    %p53 = por %p51, %p52
    %p54 = scmp.ne.s32.totalorder %s45, %s46
    %p55 = scmp.eq.s32.totalorder %s14, 0
    %p56 = por %p54, %p55
    %p57 = scmp.ne.s32.totalorder %s45, %s46
    %p58 = scmp.eq.s32.totalorder %s15, 3
    %p59 = por %p57, %p58
    %p61 = scmp.ne.s32.totalorder %s46, %s60
    %p62 = scmp.eq.s32.totalorder %s15, 0
    %p63 = por %p61, %p62
    %s65 = sadd.s32 %s64, 1
    %p68 = scmp.eq.s32.totalorder %s9, 3
    %p69 = scmp.ne.s32.totalorder %s64, %s66
    %p70 = scmp.eq.s32.totalorder %s9, 0
    %p71 = por %p69, %p70
    %p72 = scmp.ne.s32.totalorder %s64, %s66
    %p73 = scmp.eq.s32.totalorder %s14, 3
    %p74 = por %p72, %p73
    %p75 = scmp.ne.s32.totalorder %s66, %s67
    %p76 = scmp.eq.s32.totalorder %s14, 0
    %p77 = por %p75, %p76
    %p78 = scmp.ne.s32.totalorder %s66, %s67
    %p79 = scmp.eq.s32.totalorder %s15, 3
    %p80 = por %p78, %p79
    %p82 = scmp.ne.s32.totalorder %s67, %s81
    %p83 = scmp.eq.s32.totalorder %s15, 0
    %p84 = por %p82, %p83
    %s85 = ssub.s32 %s9, %s16
    %p86 = scmp.eq.s32.totalorder %s85, 0
    %s88 = sadd.s32 %s87, 1
    %s89 = scalar_select %p86, %s87, %s88
    %p92 = pneg %p86
    %p93 = scmp.eq.s32.totalorder %s9, 3
    %p94 = por %p92, %p93
    %p95 = scmp.ne.s32.totalorder %s87, %s90
    %p96 = scmp.eq.s32.totalorder %s9, 0
    %p97 = por %p95, %p96
    %p98 = scmp.ne.s32.totalorder %s87, %s90
    %p99 = scmp.eq.s32.totalorder %s14, 3
    %p100 = por %p98, %p99
    %p101 = scmp.ne.s32.totalorder %s90, %s91
    %p102 = scmp.eq.s32.totalorder %s14, 0
    %p103 = por %p101, %p102
    %p104 = scmp.ne.s32.totalorder %s90, %s91
    %p105 = scmp.eq.s32.totalorder %s15, 3
    %p106 = por %p104, %p105
    %p108 = scmp.ne.s32.totalorder %s91, %s107
    %p109 = scmp.eq.s32.totalorder %s15, 0
    %p110 = por %p108, %p109
    %p111 = scmp.le.s32.totalorder 1, %s9
    %p112 = scmp.lt.s32.totalorder %s9, 5
    %p113 = pnand %p111, %p112
    %p114 = pneg %p113
    // Predicated region
    $region9: #{cnn_actor_critic_forward.4} parent=5 // pred_check
      _
    $region10: #{cnn_actor_critic_forward.4} parent=5 // pred_check_branch
      %116 = sbr.rel (%p113) target = $region12
    $region11: #{cnn_actor_critic_forward.4} parent=5 // pred_region
      %s117 = ssub.s32 %s9, 1
      // Predicated region
      $region13: #{cnn_actor_critic_forward.4} parent=11 // pred_check
        %p118 = pneg %p56
      $region14: #{cnn_actor_critic_forward.4} parent=11 // pred_check_branch
        %120 = sbr.rel (%p118) target = $region16
      $region15: #{cnn_actor_critic_forward.4} parent=11 // pred_region
        _
      $region16: #{cnn_actor_critic_forward.4} parent=11 // pred_fallthru
        _
      // Predicated region
      $region17: #{cnn_actor_critic_forward.4} parent=11 // pred_check
        %p121 = pneg %p77
      $region18: #{cnn_actor_critic_forward.4} parent=11 // pred_check_branch
        %123 = sbr.rel (%p121) target = $region20
      $region19: #{cnn_actor_critic_forward.4} parent=11 // pred_region
        _
      $region20: #{cnn_actor_critic_forward.4} parent=11 // pred_fallthru
        _
    $region12: #{cnn_actor_critic_forward.4} parent=5 // pred_fallthru
      _
    %p124 = scmp.lt.s32.totalorder %s9, 4
    // Predicated region
    $region21: #{cnn_actor_critic_forward.4} parent=5 // pred_check
      %p125 = pneg %p124
    $region22: #{cnn_actor_critic_forward.4} parent=5 // pred_check_branch
      %127 = sbr.rel (%p125) target = $region24
    $region23: #{cnn_actor_critic_forward.4} parent=5 // pred_region
      // Predicated region
      $region25: #{cnn_actor_critic_forward.4} parent=23 // pred_check
        %p128 = pneg %p29
      $region26: #{cnn_actor_critic_forward.4} parent=23 // pred_check_branch
        %130 = sbr.rel (%p128) target = $region28
      $region27: #{cnn_actor_critic_forward.4} parent=23 // pred_region
        %s131 = smul.u32 25, %s9
        %p132 = scmp.lt.s32.totalorder %s131, 99
        %s133 = scalar_select %p132, %s131, 99
        %s134 = smul.addr %s133, 2
        %s135 = smul.addr %s134, 8
        %s136 = scalar_lea.vmem %s0, %s135
        %s137 = smul.u32 25, %s9
      $region28: #{cnn_actor_critic_forward.4} parent=23 // pred_fallthru
        _
    $region24: #{cnn_actor_critic_forward.4} parent=5 // pred_fallthru
      _
    %p138 = scmp.le.s32.totalorder 1, %s9
    %p139 = scmp.lt.s32.totalorder %s9, 5
    %p140 = pnand %p138, %p139
    %p141 = pneg %p140
    // Predicated region
    $region29: #{cnn_actor_critic_forward.4} parent=5 // pred_check
      _
    $region30: #{cnn_actor_critic_forward.4} parent=5 // pred_check_branch
      %143 = sbr.rel (%p140) target = $region32
    $region31: #{cnn_actor_critic_forward.4} parent=5 // pred_region
      %s144 = ssub.s32 %s9, 1
      %s145 = smul.u32 25, %s14
      %p146 = scmp.lt.s32.totalorder %s145, 99
      %s147 = scalar_select %p146, %s145, 99
      %s148 = smul.addr %s147, 2
      %s149 = smul.addr %s148, 8
      %s150 = scalar_lea.vmem %s0, %s149
      %p151 = pneg %p35
      %p152 = pneg %p32
      %p153 = pneg %p56
      %p154 = pneg %p53
      %p155 = pneg %p77
      %p156 = pneg %p74
      %p157 = pneg %p103
      %p158 = pneg %p100
      %s159 = smul.u32 25, %s14
      %p160 = scmp.lt.s32.totalorder %s159, 99
      %s161 = scalar_select %p160, %s159, 99
      %s162 = smul.addr %s161, 8
      %s163 = scalar_lea.vmem %s3, %s162
      %s164 = smul.u32 25, %s14
      %p165 = scmp.lt.s32.totalorder %s164, 99
      %s166 = scalar_select %p165, %s164, 99
      %s167 = smul.addr %s166, 2
      %s168 = smul.addr %s167, 8
      %s169 = scalar_lea.vmem %s0, %s168
      %s170 = smul.u32 25, %s14
      %s171 = smul.u32 25, %s14
      %p172 = scmp.lt.s32.totalorder %s171, 99
      %s173 = scalar_select %p172, %s171, 99
      %s174 = smul.addr %s173, 8
      %s175 = scalar_lea.vmem %s3, %s174
      %s176 = smul.u32 25, %s14
      %v177 = vld [vmem:[%s169] sm:$0xff]
      %v178 = vld [vmem:[%s169 + $0x8] sm:$0xff]
      %v179 = vld [vmem:[%s169 + $0x10] sm:$0xff]
      %v180 = vld [vmem:[%s169 + $0x18] sm:$0xff]
      %v181 = vld [vmem:[%s169 + $0x20] sm:$0xff]
      %v182 = vld [vmem:[%s169 + $0x28] sm:$0xff]
      %v183 = vld [vmem:[%s169 + $0x30] sm:$0xff]
      %v184 = vld [vmem:[%s169 + $0x38] sm:$0xff]
      %v185 = vld [vmem:[%s169 + $0x40] sm:$0xff]
      %v186 = vld [vmem:[%s169 + $0x48] sm:$0xff]
      %v187 = vld [vmem:[%s169 + $0x50] sm:$0xff]
      %v188 = vld [vmem:[%s169 + $0x58] sm:$0xff]
      %v189 = vld [vmem:[%s169 + $0x60] sm:$0xff]
      %v190 = vld [vmem:[%s169 + $0x68] sm:$0xff]
      %v191 = vld [vmem:[%s169 + $0x70] sm:$0xff]
      %v192 = vld [vmem:[%s169 + $0x78] sm:$0xff]
      %v193 = vld [vmem:[%s169 + $0x80] sm:$0xff]
      %v194 = vld [vmem:[%s169 + $0x88] sm:$0xff]
      %v195 = vld [vmem:[%s169 + $0x90] sm:$0xff]
      %v196 = vld [vmem:[%s169 + $0x98] sm:$0xff]
      %v197 = vld [vmem:[%s169 + $0xa0] sm:$0xff]
      %v198 = vld [vmem:[%s169 + $0xa8] sm:$0xff]
      %v199 = vld [vmem:[%s169 + $0xb0] sm:$0xff]
      %v200 = vld [vmem:[%s169 + $0xb8] sm:$0xff]
      %v201 = vld [vmem:[%s169 + $0xc0] sm:$0xff]
      %v202 = vld [vmem:[%s169 + $0xc8] sm:$0xff]
      %v203 = vld [vmem:[%s169 + $0xd0] sm:$0xff]
      %v204 = vld [vmem:[%s169 + $0xd8] sm:$0xff]
      %v205 = vld [vmem:[%s169 + $0xe0] sm:$0xff]
      %v206 = vld [vmem:[%s169 + $0xe8] sm:$0xff]
      %v207 = vld [vmem:[%s169 + $0xf0] sm:$0xff]
      %v208 = vld [vmem:[%s169 + $0xf8] sm:$0xff]
      %v209 = vld [vmem:[%s169 + $0x100] sm:$0xff]
      %v210 = vld [vmem:[%s169 + $0x108] sm:$0xff]
      %v211 = vld [vmem:[%s169 + $0x110] sm:$0xff]
      %v212 = vld [vmem:[%s169 + $0x118] sm:$0xff]
      %v213 = vld [vmem:[%s169 + $0x120] sm:$0xff]
      %v214 = vld [vmem:[%s169 + $0x128] sm:$0xff]
      %v215 = vld [vmem:[%s169 + $0x130] sm:$0xff]
      %v216 = vld [vmem:[%s169 + $0x138] sm:$0xff]
      %v217 = vld [vmem:[%s169 + $0x140] sm:$0xff]
      %v218 = vld [vmem:[%s169 + $0x148] sm:$0xff]
      %v219 = vld [vmem:[%s169 + $0x150] sm:$0xff]
      %v220 = vld [vmem:[%s169 + $0x158] sm:$0xff]
      %v221 = vld [vmem:[%s169 + $0x160] sm:$0xff]
      %v222 = vld [vmem:[%s169 + $0x168] sm:$0xff]
      %v223 = vld [vmem:[%s169 + $0x170] sm:$0xff]
      %v224 = vld [vmem:[%s169 + $0x178] sm:$0xff]
      %v225 = vld [vmem:[%s169 + $0x180] sm:$0xff]
      %v226 = vld [vmem:[%s169 + $0x188] sm:$0xff]
      %v227 = vld [vmem:[%s1] sm:$0xff]
      %v228 = vld [vmem:[%s1 + $0x8] sm:$0xff]
      %v229 = vld [vmem:[%s1 + $0x10] sm:$0xff]
      %v230 = vld [vmem:[%s1 + $0x18] sm:$0xff]
      %v231 = vld [vmem:[%s1 + $0x20] sm:$0xff]
      %v232 = vld [vmem:[%s1 + $0x28] sm:$0xff]
      %v233 = vld [vmem:[%s1 + $0x30] sm:$0xff]
      %v234 = vld [vmem:[%s1 + $0x38] sm:$0xff]
      %v235 = vld [vmem:[%s1 + $0x40] sm:$0xff]
      %v236 = vld [vmem:[%s1 + $0x48] sm:$0xff]
      %v237 = vld [vmem:[%s1 + $0x50] sm:$0xff]
      %v238 = vld [vmem:[%s1 + $0x58] sm:$0xff]
      %v239 = vld [vmem:[%s1 + $0x60] sm:$0xff]
      %v240 = vld [vmem:[%s1 + $0x68] sm:$0xff]
      %v241 = vld [vmem:[%s1 + $0x70] sm:$0xff]
      %v242 = vld [vmem:[%s1 + $0x78] sm:$0xff]
      %v243 = vld [vmem:[%s1 + $0x80] sm:$0xff]
      %v244 = vld [vmem:[%s1 + $0x88] sm:$0xff]
      %v245 = vld [vmem:[%s1 + $0x90] sm:$0xff]
      %v246 = vld [vmem:[%s1 + $0x98] sm:$0xff]
      %v247 = vld [vmem:[%s1 + $0xa0] sm:$0xff]
      %v248 = vld [vmem:[%s1 + $0xa8] sm:$0xff]
      %v249 = vld [vmem:[%s1 + $0xb0] sm:$0xff]
      %v250 = vld [vmem:[%s1 + $0xb8] sm:$0xff]
      %v251 = vld [vmem:[%s1 + $0xc0] sm:$0xff]
      %v252 = vld [vmem:[%s1 + $0xc8] sm:$0xff]
      %v253 = vld [vmem:[%s1 + $0xd0] sm:$0xff]
      %v254 = vld [vmem:[%s1 + $0xd8] sm:$0xff]
      %v255 = vld [vmem:[%s1 + $0xe0] sm:$0xff]
      %v256 = vld [vmem:[%s1 + $0xe8] sm:$0xff]
      %v257 = vld [vmem:[%s1 + $0xf0] sm:$0xff]
      %v258 = vld [vmem:[%s1 + $0xf8] sm:$0xff]
      %v259 = vld [vmem:[%s2] sm:$0x1]
      %v261 = vlaneseq
      %v262 = vshrl.u32 %v261, 7
      %v263 = vsub.s32 0, %v262
      %v264 = vrot.slane %v259, %v263
      %266 = vmatprep.subr.mxu0 0.0
      %267 = vmatpush1.msra.mxu0 %v227
      %268 = vmatprep.subr.mxu0 0.0
      %269 = vmatpush1.msra.mxu0 %v228
      %270 = vmatprep.subr.mxu0 0.0
      %271 = vmatpush1.msra.mxu0 %v229
      %272 = vmatprep.subr.mxu0 0.0
      %273 = vmatpush1.msra.mxu0 %v230
      %274 = vmatprep.subr.mxu0 0.0
      %275 = vmatpush1.msra.mxu0 %v231
      %276 = vmatprep.subr.mxu0 0.0
      %277 = vmatpush1.msra.mxu0 %v232
      %278 = vmatprep.subr.mxu0 0.0
      %279 = vmatpush1.msra.mxu0 %v233
      %280 = vmatprep.subr.mxu0 0.0
      %281 = vmatpush1.msra.mxu0 %v234
      %282 = vmatprep.subr.mxu0 0.0
      %283 = vmatpush1.msra.mxu0 %v235
      %284 = vmatprep.subr.mxu0 0.0
      %285 = vmatpush1.msra.mxu0 %v236
      %286 = vmatprep.subr.mxu0 0.0
      %287 = vmatpush1.msra.mxu0 %v237
      %288 = vmatprep.subr.mxu0 0.0
      %289 = vmatpush1.msra.mxu0 %v238
      %290 = vmatprep.subr.mxu0 0.0
      %291 = vmatpush1.msra.mxu0 %v239
      %292 = vmatprep.subr.mxu0 0.0
      %293 = vmatpush1.msra.mxu0 %v240
      %294 = vmatprep.subr.mxu0 0.0
      %295 = vmatpush1.msra.mxu0 %v241
      %296 = vmatprep.subr.mxu0 0.0
      %297 = vmatpush1.msra.mxu0 %v242
      %298 = vmatprep.subr.mxu0 0.0
      %299 = vmatpush1.msra.mxu0 %v243
      %300 = vmatprep.subr.mxu0 0.0
      %301 = vmatpush1.msra.mxu0 %v244
      %302 = vmatprep.subr.mxu0 0.0
      %303 = vmatpush1.msra.mxu0 %v245
      %304 = vmatprep.subr.mxu0 0.0
      %305 = vmatpush1.msra.mxu0 %v246
      %306 = vmatprep.subr.mxu0 0.0
      %307 = vmatpush1.msra.mxu0 %v247
      %308 = vmatprep.subr.mxu0 0.0
      %309 = vmatpush1.msra.mxu0 %v248
      %310 = vmatprep.subr.mxu0 0.0
      %311 = vmatpush1.msra.mxu0 %v249
      %312 = vmatprep.subr.mxu0 0.0
      %313 = vmatpush1.msra.mxu0 %v250
      %314 = vmatprep.subr.mxu0 0.0
      %315 = vmatpush1.msra.mxu0 %v251
      %316 = vmatprep.subr.mxu0 0.0
      %317 = vmatpush1.msra.mxu0 %v252
      %318 = vmatprep.subr.mxu0 0.0
      %319 = vmatpush1.msra.mxu0 %v253
      %320 = vmatprep.subr.mxu0 0.0
      %321 = vmatpush1.msra.mxu0 %v254
      %322 = vmatprep.subr.mxu0 0.0
      %323 = vmatpush1.msra.mxu0 %v255
      %324 = vmatprep.subr.mxu0 0.0
      %325 = vmatpush1.msra.mxu0 %v256
      %326 = vmatprep.subr.mxu0 0.0
      %327 = vmatpush1.msra.mxu0 %v257
      %328 = vmatprep.subr.mxu0 0.0
      %329 = vmatpush1.msra.mxu0 %v258
      %330 = vmatprep.mubr.f32.mxu0 %v178
      %331 = vmatmul.mubr.f32.gmra.mrb[0].mxu0 %v177
      %v332 = vpop.f32.mrb[0].mxu0
      %v333 = vadd.f32 %v264, %v332
      %v334 = vpop.f32.mrb[0].mxu0
      %335 = vmatprep.mubr.f32.mxu0 %v180
      %336 = vmatmul.mubr.f32.gmra.mrb[0].mxu0 %v179
      %v337 = vpop.f32.mrb[0].mxu0
      %v338 = vadd.f32 %v264, %v337
      %v339 = vpop.f32.mrb[0].mxu0
      %340 = vmatprep.mubr.f32.mxu0 %v182
      %341 = vmatmul.mubr.f32.gmra.mrb[0].mxu0 %v181
      %v342 = vpop.f32.mrb[0].mxu0
      %v343 = vadd.f32 %v264, %v342
      %v344 = vpop.f32.mrb[0].mxu0
      %345 = vmatprep.mubr.f32.mxu0 %v184
      %346 = vmatmul.mubr.f32.gmra.mrb[0].mxu0 %v183
      %v347 = vpop.f32.mrb[0].mxu0
      %v348 = vadd.f32 %v264, %v347
      %v349 = vpop.f32.mrb[0].mxu0
      %350 = vmatprep.mubr.f32.mxu0 %v186
      %351 = vmatmul.mubr.f32.gmra.mrb[0].mxu0 %v185
      %v352 = vpop.f32.mrb[0].mxu0
      %v353 = vadd.f32 %v264, %v352
      %v354 = vpop.f32.mrb[0].mxu0
      %355 = vmatprep.mubr.f32.mxu0 %v188
      %356 = vmatmul.mubr.f32.gmra.mrb[0].mxu0 %v187
      %v357 = vpop.f32.mrb[0].mxu0
      %v358 = vadd.f32 %v264, %v357
      %v359 = vpop.f32.mrb[0].mxu0
      %360 = vmatprep.mubr.f32.mxu0 %v190
      %361 = vmatmul.mubr.f32.gmra.mrb[0].mxu0 %v189
      %v362 = vpop.f32.mrb[0].mxu0
      %v363 = vadd.f32 %v264, %v362
      %v364 = vpop.f32.mrb[0].mxu0
      %365 = vmatprep.mubr.f32.mxu0 %v192
      %366 = vmatmul.mubr.f32.gmra.mrb[0].mxu0 %v191
      %v367 = vpop.f32.mrb[0].mxu0
      %v368 = vadd.f32 %v264, %v367
      %v369 = vpop.f32.mrb[0].mxu0
      %370 = vmatprep.mubr.f32.mxu0 %v194
      %371 = vmatmul.mubr.f32.gmra.mrb[0].mxu0 %v193
      %v372 = vpop.f32.mrb[0].mxu0
      %v373 = vadd.f32 %v264, %v372
      %v374 = vpop.f32.mrb[0].mxu0
      %375 = vmatprep.mubr.f32.mxu0 %v196
      %376 = vmatmul.mubr.f32.gmra.mrb[0].mxu0 %v195
      %v377 = vpop.f32.mrb[0].mxu0
      %v378 = vadd.f32 %v264, %v377
      %v379 = vpop.f32.mrb[0].mxu0
      %380 = vmatprep.mubr.f32.mxu0 %v198
      %381 = vmatmul.mubr.f32.gmra.mrb[0].mxu0 %v197
      %v382 = vpop.f32.mrb[0].mxu0
      %v383 = vadd.f32 %v264, %v382
      %v384 = vpop.f32.mrb[0].mxu0
      %385 = vmatprep.mubr.f32.mxu0 %v200
      %386 = vmatmul.mubr.f32.gmra.mrb[0].mxu0 %v199
      %v387 = vpop.f32.mrb[0].mxu0
      %v388 = vadd.f32 %v264, %v387
      %v389 = vpop.f32.mrb[0].mxu0
      %390 = vmatprep.mubr.f32.mxu0 %v202
      %391 = vmatmul.mubr.f32.gmra.mrb[0].mxu0 %v201
      %v392 = vpop.f32.mrb[0].mxu0
      %v393 = vadd.f32 %v264, %v392
      %v394 = vpop.f32.mrb[0].mxu0
      %395 = vmatprep.mubr.f32.mxu0 %v204
      %396 = vmatmul.mubr.f32.gmra.mrb[0].mxu0 %v203
      %v397 = vpop.f32.mrb[0].mxu0
      %v398 = vadd.f32 %v264, %v397
      %v399 = vpop.f32.mrb[0].mxu0
      %400 = vmatprep.mubr.f32.mxu0 %v206
      %401 = vmatmul.mubr.f32.gmra.mrb[0].mxu0 %v205
      %v402 = vpop.f32.mrb[0].mxu0
      %v403 = vadd.f32 %v264, %v402
      %v404 = vpop.f32.mrb[0].mxu0
      %405 = vmatprep.mubr.f32.mxu0 %v208
      %406 = vmatmul.mubr.f32.gmra.mrb[0].mxu0 %v207
      %v407 = vpop.f32.mrb[0].mxu0
      %v408 = vadd.f32 %v264, %v407
      %v409 = vpop.f32.mrb[0].mxu0
      %410 = vmatprep.mubr.f32.mxu0 %v210
      %411 = vmatmul.mubr.f32.gmra.mrb[0].mxu0 %v209
      %v412 = vpop.f32.mrb[0].mxu0
      %v413 = vadd.f32 %v264, %v412
      %v414 = vpop.f32.mrb[0].mxu0
      %415 = vmatprep.mubr.f32.mxu0 %v212
      %416 = vmatmul.mubr.f32.gmra.mrb[0].mxu0 %v211
      %v417 = vpop.f32.mrb[0].mxu0
      %v418 = vadd.f32 %v264, %v417
      %v419 = vpop.f32.mrb[0].mxu0
      %420 = vmatprep.mubr.f32.mxu0 %v214
      %421 = vmatmul.mubr.f32.gmra.mrb[0].mxu0 %v213
      %v422 = vpop.f32.mrb[0].mxu0
      %v423 = vadd.f32 %v264, %v422
      %v424 = vpop.f32.mrb[0].mxu0
      %425 = vmatprep.mubr.f32.mxu0 %v216
      %426 = vmatmul.mubr.f32.gmra.mrb[0].mxu0 %v215
      %v427 = vpop.f32.mrb[0].mxu0
      %v428 = vadd.f32 %v264, %v427
      %v429 = vpop.f32.mrb[0].mxu0
      %430 = vmatprep.mubr.f32.mxu0 %v218
      %431 = vmatmul.mubr.f32.gmra.mrb[0].mxu0 %v217
      %v432 = vpop.f32.mrb[0].mxu0
      %v433 = vadd.f32 %v264, %v432
      %v434 = vpop.f32.mrb[0].mxu0
      %435 = vmatprep.mubr.f32.mxu0 %v220
      %436 = vmatmul.mubr.f32.gmra.mrb[0].mxu0 %v219
      %v437 = vpop.f32.mrb[0].mxu0
      %v438 = vadd.f32 %v264, %v437
      %v439 = vpop.f32.mrb[0].mxu0
      %440 = vmatprep.mubr.f32.mxu0 %v222
      %441 = vmatmul.mubr.f32.gmra.mrb[0].mxu0 %v221
      %v442 = vpop.f32.mrb[0].mxu0
      %v443 = vadd.f32 %v264, %v442
      %v444 = vpop.f32.mrb[0].mxu0
      %445 = vmatprep.mubr.f32.mxu0 %v224
      %446 = vmatmul.mubr.f32.gmra.mrb[0].mxu0 %v223
      %v447 = vpop.f32.mrb[0].mxu0
      %v448 = vadd.f32 %v264, %v447
      %v449 = vpop.f32.mrb[0].mxu0
      %450 = vmatprep.mubr.f32.mxu0 %v226
      %451 = vmatmul.mubr.f32.gmra.mrb[0].mxu0 %v225
      %v452 = vpop.f32.mrb[0].mxu0
      %v453 = vadd.f32 %v264, %v452
      %v454 = vpop.f32.mrb[0].mxu0
      %455 = vdwg.mxu0
      %v456 = vmax.f32 %v333, 0.0
      %v457 = vmax.f32 %v338, 0.0
      %v458 = vmax.f32 %v343, 0.0
      %v459 = vmax.f32 %v348, 0.0
      %v460 = vmax.f32 %v353, 0.0
      %v461 = vmax.f32 %v358, 0.0
      %v462 = vmax.f32 %v363, 0.0
      %v463 = vmax.f32 %v368, 0.0
      %v464 = vmax.f32 %v373, 0.0
      %v465 = vmax.f32 %v378, 0.0
      %v466 = vmax.f32 %v383, 0.0
      %v467 = vmax.f32 %v388, 0.0
      %v468 = vmax.f32 %v393, 0.0
      %v469 = vmax.f32 %v398, 0.0
      %v470 = vmax.f32 %v403, 0.0
      %v471 = vmax.f32 %v408, 0.0
      %v472 = vmax.f32 %v413, 0.0
      %v473 = vmax.f32 %v418, 0.0
      %v474 = vmax.f32 %v423, 0.0
      %v475 = vmax.f32 %v428, 0.0
      %v476 = vmax.f32 %v433, 0.0
      %v477 = vmax.f32 %v438, 0.0
      %v478 = vmax.f32 %v443, 0.0
      %v479 = vmax.f32 %v448, 0.0
      %v480 = vmax.f32 %v453, 0.0
      %vm481 = vcmask 261120
      %482 = vst.msk [vmem:[%s175] sm:$0xff] %vm481, %v456
      %483 = vst.msk [vmem:[%s175 + $0x8] sm:$0xff] %vm481, %v457
      %484 = vst.msk [vmem:[%s175 + $0x10] sm:$0xff] %vm481, %v458
      %485 = vst.msk [vmem:[%s175 + $0x18] sm:$0xff] %vm481, %v459
      %486 = vst.msk [vmem:[%s175 + $0x20] sm:$0xff] %vm481, %v460
      %487 = vst.msk [vmem:[%s175 + $0x28] sm:$0xff] %vm481, %v461
      %488 = vst.msk [vmem:[%s175 + $0x30] sm:$0xff] %vm481, %v462
      %489 = vst.msk [vmem:[%s175 + $0x38] sm:$0xff] %vm481, %v463
      %490 = vst.msk [vmem:[%s175 + $0x40] sm:$0xff] %vm481, %v464
      %491 = vst.msk [vmem:[%s175 + $0x48] sm:$0xff] %vm481, %v465
      %492 = vst.msk [vmem:[%s175 + $0x50] sm:$0xff] %vm481, %v466
      %493 = vst.msk [vmem:[%s175 + $0x58] sm:$0xff] %vm481, %v467
      %494 = vst.msk [vmem:[%s175 + $0x60] sm:$0xff] %vm481, %v468
      %495 = vst.msk [vmem:[%s175 + $0x68] sm:$0xff] %vm481, %v469
      %496 = vst.msk [vmem:[%s175 + $0x70] sm:$0xff] %vm481, %v470
      %497 = vst.msk [vmem:[%s175 + $0x78] sm:$0xff] %vm481, %v471
      %498 = vst.msk [vmem:[%s175 + $0x80] sm:$0xff] %vm481, %v472
      %499 = vst.msk [vmem:[%s175 + $0x88] sm:$0xff] %vm481, %v473
      %500 = vst.msk [vmem:[%s175 + $0x90] sm:$0xff] %vm481, %v474
      %501 = vst.msk [vmem:[%s175 + $0x98] sm:$0xff] %vm481, %v475
      %502 = vst.msk [vmem:[%s175 + $0xa0] sm:$0xff] %vm481, %v476
      %503 = vst.msk [vmem:[%s175 + $0xa8] sm:$0xff] %vm481, %v477
      %504 = vst.msk [vmem:[%s175 + $0xb0] sm:$0xff] %vm481, %v478
      %505 = vst.msk [vmem:[%s175 + $0xb8] sm:$0xff] %vm481, %v479
      %506 = vst.msk [vmem:[%s175 + $0xc0] sm:$0xff] %vm481, %v480
      %s507 = smul.u32 25, %s14
      %p508 = scmp.lt.s32.totalorder %s507, 99
      %s509 = scalar_select %p508, %s507, 99
      %s510 = smul.addr %s509, 8
      %s511 = scalar_lea.vmem %s3, %s510
      // Predicated region
      $region33: #{cnn_actor_critic_forward.4} parent=31 // pred_check
        %p512 = pneg %p100
      $region34: #{cnn_actor_critic_forward.4} parent=31 // pred_check_branch
        %514 = sbr.rel (%p512) target = $region36
      $region35: #{cnn_actor_critic_forward.4} parent=31 // pred_region
        %s515 = smul.u32 25, %s14
      $region36: #{cnn_actor_critic_forward.4} parent=31 // pred_fallthru
        _
    $region32: #{cnn_actor_critic_forward.4} parent=5 // pred_fallthru
      _
    %p516 = scmp.le.s32.totalorder 2, %s9
    // Predicated region
    $region37: #{cnn_actor_critic_forward.4} parent=5 // pred_check
      %p517 = pneg %p516
    $region38: #{cnn_actor_critic_forward.4} parent=5 // pred_check_branch
      %519 = sbr.rel (%p517) target = $region40
    $region39: #{cnn_actor_critic_forward.4} parent=5 // pred_region
      %s520 = ssub.s32 %s9, 2
      // Predicated region
      $region41: #{cnn_actor_critic_forward.4} parent=39 // pred_check
        %p521 = pneg %p106
      $region42: #{cnn_actor_critic_forward.4} parent=39 // pred_check_branch
        %523 = sbr.rel (%p521) target = $region44
      $region43: #{cnn_actor_critic_forward.4} parent=39 // pred_region
        %s524 = smul.u32 25, %s15
        %p525 = scmp.lt.s32.totalorder %s524, 99
        %s526 = scalar_select %p525, %s524, 99
        %s527 = smul.addr %s526, 8
        %s528 = scalar_lea.vmem %s3, %s527
      $region44: #{cnn_actor_critic_forward.4} parent=39 // pred_fallthru
        _
    $region40: #{cnn_actor_critic_forward.4} parent=5 // pred_fallthru
      _
  $region6: #{cnn_actor_critic_forward.4} parent=0 // loop_footer
    %s13 = sadd.s32 1, %s9
  $region7: #{cnn_actor_critic_forward.4} parent=0 // loop_footer_branch
    %8 = sbr.rel target = $region3
  $region8: #{cnn_actor_critic_forward.4} parent=0 // loop_exit
    _

// kernel: cnn_actor_critic_forward.5
$region0: #{cnn_actor_critic_forward.5}
  #allocation0 [shape = 'u32[]', space=smem, size = 0x4, offset = 0x4, fixed_abs, tag = 'smem constant byte address 0x4 - core index']
  #allocation1 [shape = 'u32[144,128]{1,0:T(1,128)}', space=vmem, size = 0x12000, scoped, tag = 'internal scratch']
  %s0 = inlined_call_operand.vmem [shape: f32[162,512], index: 0, kind: input, shape index: {}]
  %s1 = inlined_call_operand.vmem [shape: f32[512,64], index: 1, kind: input, shape index: {}]
  %s2 = inlined_call_operand.vmem [shape: f32[1,64], index: 2, kind: input, shape index: {}]
  %s3 = inlined_call_operand.vmem [shape: f32[162,64], index: 3, kind: output, shape index: {}]
  %s4 = sld [smem:[#allocation0]]
  $region22: #{cnn_actor_critic_forward.5} parent=0
    _
  %s6 = ssub.s32 1, %s4
  %s7 = scalar_select 0, %s6, %s4
  // Predicated region
  $region2: #{cnn_actor_critic_forward.5} parent=0 // pred_check
    _
  $region3: #{cnn_actor_critic_forward.5} parent=0 // pred_check_branch
    %9 = sbr.rel (0) target = $region5
  $region4: #{cnn_actor_critic_forward.5} parent=0 // pred_region
    _
  $region5: #{cnn_actor_critic_forward.5} parent=0 // pred_fallthru
    _
  // Predicated region
  $region6: #{cnn_actor_critic_forward.5} parent=0 // pred_check
    _
  $region7: #{cnn_actor_critic_forward.5} parent=0 // pred_check_branch
    %11 = sbr.rel (0) target = $region9
  $region8: #{cnn_actor_critic_forward.5} parent=0 // pred_region
    _
  $region9: #{cnn_actor_critic_forward.5} parent=0 // pred_fallthru
    _
  // Predicated region
  $region10: #{cnn_actor_critic_forward.5} parent=0 // pred_check
    _
  $region11: #{cnn_actor_critic_forward.5} parent=0 // pred_check_branch
    %13 = sbr.rel (0) target = $region13
  $region12: #{cnn_actor_critic_forward.5} parent=0 // pred_region
    _
  $region13: #{cnn_actor_critic_forward.5} parent=0 // pred_fallthru
    _
  %v14 = vld [vmem:[%s0] sm:$0xff]
  %v15 = vld [vmem:[%s0 + $0x8] sm:$0xff]
  %v16 = vld [vmem:[%s0 + $0x10] sm:$0xff]
  %v17 = vld [vmem:[%s0 + $0x18] sm:$0xff]
  %v18 = vld [vmem:[%s0 + $0x20] sm:$0xff]
  %v19 = vld [vmem:[%s0 + $0x28] sm:$0xff]
  %v20 = vld [vmem:[%s0 + $0x30] sm:$0xff]
  %v21 = vld [vmem:[%s0 + $0x38] sm:$0xff]
  %v22 = vld [vmem:[%s0 + $0x40] sm:$0xff]
  %v23 = vld [vmem:[%s0 + $0x48] sm:$0xff]
  %v24 = vld [vmem:[%s0 + $0x50] sm:$0xff]
  %v25 = vld [vmem:[%s0 + $0x58] sm:$0xff]
  %v26 = vld [vmem:[%s0 + $0x60] sm:$0xff]
  %v27 = vld [vmem:[%s0 + $0x68] sm:$0xff]
  %v28 = vld [vmem:[%s0 + $0x70] sm:$0xff]
  %v29 = vld [vmem:[%s0 + $0x78] sm:$0xff]
  %v30 = vld [vmem:[%s0 + $0x80] sm:$0xff]
  %v31 = vld [vmem:[%s0 + $0x88] sm:$0xff]
  %v32 = vld [vmem:[%s0 + $0x90] sm:$0xff]
  %v33 = vld [vmem:[%s0 + $0x98] sm:$0xff]
  %v34 = vld [vmem:[%s0 + $0xa0] sm:$0xff]
  %v35 = vld [vmem:[%s0 + $0xa8] sm:$0xff]
  %v36 = vld [vmem:[%s0 + $0xb0] sm:$0xff]
  %v37 = vld [vmem:[%s0 + $0xb8] sm:$0xff]
  %v38 = vld [vmem:[%s0 + $0xc0] sm:$0xff]
  %v39 = vld [vmem:[%s0 + $0xc8] sm:$0xff]
  %v40 = vld [vmem:[%s0 + $0xd0] sm:$0xff]
  %v41 = vld [vmem:[%s0 + $0xd8] sm:$0xff]
  %v42 = vld [vmem:[%s0 + $0xe0] sm:$0xff]
  %v43 = vld [vmem:[%s0 + $0xe8] sm:$0xff]
  %v44 = vld [vmem:[%s0 + $0xf0] sm:$0xff]
  %v45 = vld [vmem:[%s0 + $0xf8] sm:$0xff]
  %v46 = vld [vmem:[%s0 + $0x100] sm:$0xff]
  %v47 = vld [vmem:[%s0 + $0x108] sm:$0xff]
  %v48 = vld [vmem:[%s0 + $0x110] sm:$0xff]
  %v49 = vld [vmem:[%s0 + $0x118] sm:$0xff]
  %v50 = vld [vmem:[%s0 + $0x120] sm:$0xff]
  %v51 = vld [vmem:[%s0 + $0x128] sm:$0xff]
  %v52 = vld [vmem:[%s0 + $0x130] sm:$0xff]
  %v53 = vld [vmem:[%s0 + $0x138] sm:$0xff]
  %v54 = vld [vmem:[%s0 + $0x140] sm:$0xff]
  %v55 = vld [vmem:[%s0 + $0x148] sm:$0xff]
  %v56 = vld [vmem:[%s0 + $0x150] sm:$0xff]
  %v57 = vld [vmem:[%s0 + $0x158] sm:$0xff]
  %v58 = vld [vmem:[%s0 + $0x160] sm:$0xff]
  %v59 = vld [vmem:[%s0 + $0x168] sm:$0xff]
  %v60 = vld [vmem:[%s0 + $0x170] sm:$0xff]
  %v61 = vld [vmem:[%s0 + $0x178] sm:$0xff]
  %v62 = vld [vmem:[%s0 + $0x180] sm:$0xff]
  %v63 = vld [vmem:[%s0 + $0x188] sm:$0xff]
  %v64 = vld [vmem:[%s0 + $0x190] sm:$0xff]
  %v65 = vld [vmem:[%s0 + $0x198] sm:$0xff]
  %v66 = vld [vmem:[%s0 + $0x1a0] sm:$0xff]
  %v67 = vld [vmem:[%s0 + $0x1a8] sm:$0xff]
  %v68 = vld [vmem:[%s0 + $0x1b0] sm:$0xff]
  %v69 = vld [vmem:[%s0 + $0x1b8] sm:$0xff]
  %v70 = vld [vmem:[%s0 + $0x1c0] sm:$0xff]
  %v71 = vld [vmem:[%s0 + $0x1c8] sm:$0xff]
  %v72 = vld [vmem:[%s0 + $0x1d0] sm:$0xff]
  %v73 = vld [vmem:[%s0 + $0x1d8] sm:$0xff]
  %v74 = vld [vmem:[%s0 + $0x1e0] sm:$0xff]
  %v75 = vld [vmem:[%s0 + $0x1e8] sm:$0xff]
  %v76 = vld [vmem:[%s0 + $0x1f0] sm:$0xff]
  %v77 = vld [vmem:[%s0 + $0x1f8] sm:$0xff]
  %v78 = vld [vmem:[%s0 + $0x200] sm:$0xff]
  %v79 = vld [vmem:[%s0 + $0x208] sm:$0xff]
  %v80 = vld [vmem:[%s0 + $0x210] sm:$0xff]
  %v81 = vld [vmem:[%s0 + $0x218] sm:$0xff]
  %v82 = vld [vmem:[%s0 + $0x220] sm:$0xff]
  %v83 = vld [vmem:[%s0 + $0x228] sm:$0xff]
  %v84 = vld [vmem:[%s0 + $0x230] sm:$0xff]
  %v85 = vld [vmem:[%s0 + $0x238] sm:$0xff]
  %v86 = vld [vmem:[%s0 + $0x240] sm:$0xff]
  %v87 = vld [vmem:[%s0 + $0x248] sm:$0xff]
  %v88 = vld [vmem:[%s0 + $0x250] sm:$0xff]
  %v89 = vld [vmem:[%s0 + $0x258] sm:$0xff]
  %v90 = vld [vmem:[%s0 + $0x260] sm:$0xff]
  %v91 = vld [vmem:[%s0 + $0x268] sm:$0xff]
  %v92 = vld [vmem:[%s0 + $0x270] sm:$0xff]
  %v93 = vld [vmem:[%s0 + $0x278] sm:$0xff]
  %v94 = vld [vmem:[%s0 + $0x280] sm:$0x3]
  %v95 = vld [vmem:[%s0 + $0x288] sm:$0x3]
  %v96 = vld [vmem:[%s0 + $0x290] sm:$0x3]
  %v97 = vld [vmem:[%s0 + $0x298] sm:$0x3]
  %v98 = vld [vmem:[%s1] sm:$0xff]
  %v99 = vld [vmem:[%s1 + $0x8] sm:$0xff]
  %v100 = vld [vmem:[%s1 + $0x10] sm:$0xff]
  %v101 = vld [vmem:[%s1 + $0x18] sm:$0xff]
  %v102 = vld [vmem:[%s1 + $0x20] sm:$0xff]
  %v103 = vld [vmem:[%s1 + $0x28] sm:$0xff]
  %v104 = vld [vmem:[%s1 + $0x30] sm:$0xff]
  %v105 = vld [vmem:[%s1 + $0x38] sm:$0xff]
  %v106 = vld [vmem:[%s1 + $0x40] sm:$0xff]
  %v107 = vld [vmem:[%s1 + $0x48] sm:$0xff]
  %v108 = vld [vmem:[%s1 + $0x50] sm:$0xff]
  %v109 = vld [vmem:[%s1 + $0x58] sm:$0xff]
  %v110 = vld [vmem:[%s1 + $0x60] sm:$0xff]
  %v111 = vld [vmem:[%s1 + $0x68] sm:$0xff]
  %v112 = vld [vmem:[%s1 + $0x70] sm:$0xff]
  %v113 = vld [vmem:[%s1 + $0x78] sm:$0xff]
  %v114 = vld [vmem:[%s1 + $0x80] sm:$0xff]
  %v115 = vld [vmem:[%s1 + $0x88] sm:$0xff]
  %v116 = vld [vmem:[%s1 + $0x90] sm:$0xff]
  %v117 = vld [vmem:[%s1 + $0x98] sm:$0xff]
  %v118 = vld [vmem:[%s1 + $0xa0] sm:$0xff]
  %v119 = vld [vmem:[%s1 + $0xa8] sm:$0xff]
  %v120 = vld [vmem:[%s1 + $0xb0] sm:$0xff]
  %v121 = vld [vmem:[%s1 + $0xb8] sm:$0xff]
  %v122 = vld [vmem:[%s1 + $0xc0] sm:$0xff]
  %v123 = vld [vmem:[%s1 + $0xc8] sm:$0xff]
  %v124 = vld [vmem:[%s1 + $0xd0] sm:$0xff]
  %v125 = vld [vmem:[%s1 + $0xd8] sm:$0xff]
  %v126 = vld [vmem:[%s1 + $0xe0] sm:$0xff]
  %v127 = vld [vmem:[%s1 + $0xe8] sm:$0xff]
  %v128 = vld [vmem:[%s1 + $0xf0] sm:$0xff]
  %v129 = vld [vmem:[%s1 + $0xf8] sm:$0xff]
  %v130 = vld [vmem:[%s1 + $0x100] sm:$0xff]
  %v131 = vld [vmem:[%s1 + $0x108] sm:$0xff]
  %v132 = vld [vmem:[%s1 + $0x110] sm:$0xff]
  %v133 = vld [vmem:[%s1 + $0x118] sm:$0xff]
  %v134 = vld [vmem:[%s1 + $0x120] sm:$0xff]
  %v135 = vld [vmem:[%s1 + $0x128] sm:$0xff]
  %v136 = vld [vmem:[%s1 + $0x130] sm:$0xff]
  %v137 = vld [vmem:[%s1 + $0x138] sm:$0xff]
  %v138 = vld [vmem:[%s1 + $0x140] sm:$0xff]
  %v139 = vld [vmem:[%s1 + $0x148] sm:$0xff]
  %v140 = vld [vmem:[%s1 + $0x150] sm:$0xff]
  %v141 = vld [vmem:[%s1 + $0x158] sm:$0xff]
  %v142 = vld [vmem:[%s1 + $0x160] sm:$0xff]
  %v143 = vld [vmem:[%s1 + $0x168] sm:$0xff]
  %v144 = vld [vmem:[%s1 + $0x170] sm:$0xff]
  %v145 = vld [vmem:[%s1 + $0x178] sm:$0xff]
  %v146 = vld [vmem:[%s1 + $0x180] sm:$0xff]
  %v147 = vld [vmem:[%s1 + $0x188] sm:$0xff]
  %v148 = vld [vmem:[%s1 + $0x190] sm:$0xff]
  %v149 = vld [vmem:[%s1 + $0x198] sm:$0xff]
  %v150 = vld [vmem:[%s1 + $0x1a0] sm:$0xff]
  %v151 = vld [vmem:[%s1 + $0x1a8] sm:$0xff]
  %v152 = vld [vmem:[%s1 + $0x1b0] sm:$0xff]
  %v153 = vld [vmem:[%s1 + $0x1b8] sm:$0xff]
  %v154 = vld [vmem:[%s1 + $0x1c0] sm:$0xff]
  %v155 = vld [vmem:[%s1 + $0x1c8] sm:$0xff]
  %v156 = vld [vmem:[%s1 + $0x1d0] sm:$0xff]
  %v157 = vld [vmem:[%s1 + $0x1d8] sm:$0xff]
  %v158 = vld [vmem:[%s1 + $0x1e0] sm:$0xff]
  %v159 = vld [vmem:[%s1 + $0x1e8] sm:$0xff]
  %v160 = vld [vmem:[%s1 + $0x1f0] sm:$0xff]
  %v161 = vld [vmem:[%s1 + $0x1f8] sm:$0xff]
  %v162 = vld [vmem:[%s2] sm:$0x1]
  %v164 = vlaneseq
  %v165 = vshrl.u32 %v164, 7
  %v166 = vsub.s32 0, %v165
  %v167 = vrot.slane %v162, %v166
  %169 = vmatprep.subr.mxu0 0.0
  %170 = vmatpush1.msra.mxu0 %v98
  %171 = vmatprep.subr.mxu0 0.0
  %172 = vmatpush1.msra.mxu0 %v99
  %173 = vmatprep.subr.mxu0 0.0
  %174 = vmatpush1.msra.mxu0 %v100
  %175 = vmatprep.subr.mxu0 0.0
  %176 = vmatpush1.msra.mxu0 %v101
  %177 = vmatprep.subr.mxu0 0.0
  %178 = vmatpush1.msra.mxu0 %v102
  %179 = vmatprep.subr.mxu0 0.0
  %180 = vmatpush1.msra.mxu0 %v103
  %181 = vmatprep.subr.mxu0 0.0
  %182 = vmatpush1.msra.mxu0 %v104
  %183 = vmatprep.subr.mxu0 0.0
  %184 = vmatpush1.msra.mxu0 %v105
  %185 = vmatprep.subr.mxu0 0.0
  %186 = vmatpush1.msra.mxu0 %v106
  %187 = vmatprep.subr.mxu0 0.0
  %188 = vmatpush1.msra.mxu0 %v107
  %189 = vmatprep.subr.mxu0 0.0
  %190 = vmatpush1.msra.mxu0 %v108
  %191 = vmatprep.subr.mxu0 0.0
  %192 = vmatpush1.msra.mxu0 %v109
  %193 = vmatprep.subr.mxu0 0.0
  %194 = vmatpush1.msra.mxu0 %v110
  %195 = vmatprep.subr.mxu0 0.0
  %196 = vmatpush1.msra.mxu0 %v111
  %197 = vmatprep.subr.mxu0 0.0
  %198 = vmatpush1.msra.mxu0 %v112
  %199 = vmatprep.subr.mxu0 0.0
  %200 = vmatpush1.msra.mxu0 %v113
  %201 = vmatprep.subr.mxu0 0.0
  %202 = vmatpush1.msra.mxu0 %v114
  %203 = vmatprep.subr.mxu0 0.0
  %204 = vmatpush1.msra.mxu0 %v115
  %205 = vmatprep.subr.mxu0 0.0
  %206 = vmatpush1.msra.mxu0 %v116
  %207 = vmatprep.subr.mxu0 0.0
  %208 = vmatpush1.msra.mxu0 %v117
  %209 = vmatprep.subr.mxu0 0.0
  %210 = vmatpush1.msra.mxu0 %v118
  %211 = vmatprep.subr.mxu0 0.0
  %212 = vmatpush1.msra.mxu0 %v119
  %213 = vmatprep.subr.mxu0 0.0
  %214 = vmatpush1.msra.mxu0 %v120
  %215 = vmatprep.subr.mxu0 0.0
  %216 = vmatpush1.msra.mxu0 %v121
  %217 = vmatprep.subr.mxu0 0.0
  %218 = vmatpush1.msra.mxu0 %v122
  %219 = vmatprep.subr.mxu0 0.0
  %220 = vmatpush1.msra.mxu0 %v123
  %221 = vmatprep.subr.mxu0 0.0
  %222 = vmatpush1.msra.mxu0 %v124
  %223 = vmatprep.subr.mxu0 0.0
  %224 = vmatpush1.msra.mxu0 %v125
  %225 = vmatprep.subr.mxu0 0.0
  %226 = vmatpush1.msra.mxu0 %v126
  %227 = vmatprep.subr.mxu0 0.0
  %228 = vmatpush1.msra.mxu0 %v127
  %229 = vmatprep.subr.mxu0 0.0
  %230 = vmatpush1.msra.mxu0 %v128
  %231 = vmatprep.subr.mxu0 0.0
  %232 = vmatpush1.msra.mxu0 %v129
  %233 = vmatprep.mubr.f32.mxu0 %v15
  %234 = vmatmul.mubr.f32.gmra.mrb[0].mxu0 %v14
  %v235 = vpop.f32.mrb[0].mxu0
  %v236 = vadd.f32 %v167, %v235
  %v237 = vpop.f32.mrb[0].mxu0
  %238 = vmatprep.mubr.f32.mxu0 %v19
  %239 = vmatmul.mubr.f32.gmra.mrb[0].mxu0 %v18
  %v240 = vpop.f32.mrb[0].mxu0
  %v241 = vadd.f32 %v167, %v240
  %v242 = vpop.f32.mrb[0].mxu0
  %243 = vmatprep.mubr.f32.mxu0 %v23
  %244 = vmatmul.mubr.f32.gmra.mrb[0].mxu0 %v22
  %v245 = vpop.f32.mrb[0].mxu0
  %v246 = vadd.f32 %v167, %v245
  %v247 = vpop.f32.mrb[0].mxu0
  %248 = vmatprep.mubr.f32.mxu0 %v27
  %249 = vmatmul.mubr.f32.gmra.mrb[0].mxu0 %v26
  %v250 = vpop.f32.mrb[0].mxu0
  %v251 = vadd.f32 %v167, %v250
  %v252 = vpop.f32.mrb[0].mxu0
  %253 = vmatprep.mubr.f32.mxu0 %v31
  %254 = vmatmul.mubr.f32.gmra.mrb[0].mxu0 %v30
  %v255 = vpop.f32.mrb[0].mxu0
  %v256 = vadd.f32 %v167, %v255
  %v257 = vpop.f32.mrb[0].mxu0
  %258 = vmatprep.mubr.f32.mxu0 %v35
  %259 = vmatmul.mubr.f32.gmra.mrb[0].mxu0 %v34
  %v260 = vpop.f32.mrb[0].mxu0
  %v261 = vadd.f32 %v167, %v260
  %v262 = vpop.f32.mrb[0].mxu0
  %263 = vmatprep.mubr.f32.mxu0 %v39
  %264 = vmatmul.mubr.f32.gmra.mrb[0].mxu0 %v38
  %v265 = vpop.f32.mrb[0].mxu0
  %v266 = vadd.f32 %v167, %v265
  %v267 = vpop.f32.mrb[0].mxu0
  %268 = vmatprep.mubr.f32.mxu0 %v43
  %269 = vmatmul.mubr.f32.gmra.mrb[0].mxu0 %v42
  %v270 = vpop.f32.mrb[0].mxu0
  %v271 = vadd.f32 %v167, %v270
  %v272 = vpop.f32.mrb[0].mxu0
  %273 = vmatprep.mubr.f32.mxu0 %v47
  %274 = vmatmul.mubr.f32.gmra.mrb[0].mxu0 %v46
  %v275 = vpop.f32.mrb[0].mxu0
  %v276 = vadd.f32 %v167, %v275
  %v277 = vpop.f32.mrb[0].mxu0
  %278 = vmatprep.mubr.f32.mxu0 %v51
  %279 = vmatmul.mubr.f32.gmra.mrb[0].mxu0 %v50
  %v280 = vpop.f32.mrb[0].mxu0
  %v281 = vadd.f32 %v167, %v280
  %v282 = vpop.f32.mrb[0].mxu0
  %283 = vmatprep.mubr.f32.mxu0 %v55
  %284 = vmatmul.mubr.f32.gmra.mrb[0].mxu0 %v54
  %v285 = vpop.f32.mrb[0].mxu0
  %v286 = vadd.f32 %v167, %v285
  %v287 = vpop.f32.mrb[0].mxu0
  %288 = vmatprep.mubr.f32.mxu0 %v59
  %289 = vmatmul.mubr.f32.gmra.mrb[0].mxu0 %v58
  %v290 = vpop.f32.mrb[0].mxu0
  %v291 = vadd.f32 %v167, %v290
  %v292 = vpop.f32.mrb[0].mxu0
  %293 = vmatprep.mubr.f32.mxu0 %v63
  %294 = vmatmul.mubr.f32.gmra.mrb[0].mxu0 %v62
  %v295 = vpop.f32.mrb[0].mxu0
  %v296 = vadd.f32 %v167, %v295
  %v297 = vpop.f32.mrb[0].mxu0
  %298 = vmatprep.mubr.f32.mxu0 %v67
  %299 = vmatmul.mubr.f32.gmra.mrb[0].mxu0 %v66
  %v300 = vpop.f32.mrb[0].mxu0
  %v301 = vadd.f32 %v167, %v300
  %v302 = vpop.f32.mrb[0].mxu0
  %303 = vmatprep.mubr.f32.mxu0 %v71
  %304 = vmatmul.mubr.f32.gmra.mrb[0].mxu0 %v70
  %v305 = vpop.f32.mrb[0].mxu0
  %v306 = vadd.f32 %v167, %v305
  %v307 = vpop.f32.mrb[0].mxu0
  %308 = vmatprep.mubr.f32.mxu0 %v75
  %309 = vmatmul.mubr.f32.gmra.mrb[0].mxu0 %v74
  %v310 = vpop.f32.mrb[0].mxu0
  %v311 = vadd.f32 %v167, %v310
  %v312 = vpop.f32.mrb[0].mxu0
  %313 = vmatprep.mubr.f32.mxu0 %v79
  %314 = vmatmul.mubr.f32.gmra.mrb[0].mxu0 %v78
  %v315 = vpop.f32.mrb[0].mxu0
  %v316 = vadd.f32 %v167, %v315
  %v317 = vpop.f32.mrb[0].mxu0
  %318 = vmatprep.mubr.f32.mxu0 %v83
  %319 = vmatmul.mubr.f32.gmra.mrb[0].mxu0 %v82
  %v320 = vpop.f32.mrb[0].mxu0
  %v321 = vadd.f32 %v167, %v320
  %v322 = vpop.f32.mrb[0].mxu0
  %323 = vmatprep.mubr.f32.mxu0 %v87
  %324 = vmatmul.mubr.f32.gmra.mrb[0].mxu0 %v86
  %v325 = vpop.f32.mrb[0].mxu0
  %v326 = vadd.f32 %v167, %v325
  %v327 = vpop.f32.mrb[0].mxu0
  %328 = vmatprep.mubr.f32.mxu0 %v91
  %329 = vmatmul.mubr.f32.gmra.mrb[0].mxu0 %v90
  %v330 = vpop.f32.mrb[0].mxu0
  %v331 = vadd.f32 %v167, %v330
  %v332 = vpop.f32.mrb[0].mxu0
  %333 = vmatprep.mubr.f32.mxu0 %v95
  %334 = vmatmul.mubr.f32.gmra.mrb[0].mxu0 %v94
  %v335 = vpop.f32.mrb[0].mxu0
  %v336 = vadd.f32 %v167, %v335
  %v337 = vpop.f32.mrb[0].mxu0
  %338 = vdwg.mxu0
  %339 = vmatprep.subr.mxu0 0.0
  %340 = vmatpush1.msra.mxu0 %v130
  %341 = vmatprep.subr.mxu0 0.0
  %342 = vmatpush1.msra.mxu0 %v131
  %343 = vmatprep.subr.mxu0 0.0
  %344 = vmatpush1.msra.mxu0 %v132
  %345 = vmatprep.subr.mxu0 0.0
  %346 = vmatpush1.msra.mxu0 %v133
  %347 = vmatprep.subr.mxu0 0.0
  %348 = vmatpush1.msra.mxu0 %v134
  %349 = vmatprep.subr.mxu0 0.0
  %350 = vmatpush1.msra.mxu0 %v135
  %351 = vmatprep.subr.mxu0 0.0
  %352 = vmatpush1.msra.mxu0 %v136
  %353 = vmatprep.subr.mxu0 0.0
  %354 = vmatpush1.msra.mxu0 %v137
  %355 = vmatprep.subr.mxu0 0.0
  %356 = vmatpush1.msra.mxu0 %v138
  %357 = vmatprep.subr.mxu0 0.0
  %358 = vmatpush1.msra.mxu0 %v139
  %359 = vmatprep.subr.mxu0 0.0
  %360 = vmatpush1.msra.mxu0 %v140
  %361 = vmatprep.subr.mxu0 0.0
  %362 = vmatpush1.msra.mxu0 %v141
  %363 = vmatprep.subr.mxu0 0.0
  %364 = vmatpush1.msra.mxu0 %v142
  %365 = vmatprep.subr.mxu0 0.0
  %366 = vmatpush1.msra.mxu0 %v143
  %367 = vmatprep.subr.mxu0 0.0
  %368 = vmatpush1.msra.mxu0 %v144
  %369 = vmatprep.subr.mxu0 0.0
  %370 = vmatpush1.msra.mxu0 %v145
  %371 = vmatprep.subr.mxu0 0.0
  %372 = vmatpush1.msra.mxu0 %v146
  %373 = vmatprep.subr.mxu0 0.0
  %374 = vmatpush1.msra.mxu0 %v147
  %375 = vmatprep.subr.mxu0 0.0
  %376 = vmatpush1.msra.mxu0 %v148
  %377 = vmatprep.subr.mxu0 0.0
  %378 = vmatpush1.msra.mxu0 %v149
  %379 = vmatprep.subr.mxu0 0.0
  %380 = vmatpush1.msra.mxu0 %v150
  %381 = vmatprep.subr.mxu0 0.0
  %382 = vmatpush1.msra.mxu0 %v151
  %383 = vmatprep.subr.mxu0 0.0
  %384 = vmatpush1.msra.mxu0 %v152
  %385 = vmatprep.subr.mxu0 0.0
  %386 = vmatpush1.msra.mxu0 %v153
  %387 = vmatprep.subr.mxu0 0.0
  %388 = vmatpush1.msra.mxu0 %v154
  %389 = vmatprep.subr.mxu0 0.0
  %390 = vmatpush1.msra.mxu0 %v155
  %391 = vmatprep.subr.mxu0 0.0
  %392 = vmatpush1.msra.mxu0 %v156
  %393 = vmatprep.subr.mxu0 0.0
  %394 = vmatpush1.msra.mxu0 %v157
  %395 = vmatprep.subr.mxu0 0.0
  %396 = vmatpush1.msra.mxu0 %v158
  %397 = vmatprep.subr.mxu0 0.0
  %398 = vmatpush1.msra.mxu0 %v159
  %399 = vmatprep.subr.mxu0 0.0
  %400 = vmatpush1.msra.mxu0 %v160
  %401 = vmatprep.subr.mxu0 0.0
  %402 = vmatpush1.msra.mxu0 %v161
  %403 = vmatprep.mubr.f32.mxu0 %v17
  %404 = vmatmul.mubr.f32.gmra.mrb[0].mxu0 %v16
  %v405 = vpop.f32.mrb[0].mxu0
  %v406 = vadd.f32 %v236, %v405
  %v407 = vpop.f32.mrb[0].mxu0
  %408 = vmatprep.mubr.f32.mxu0 %v21
  %409 = vmatmul.mubr.f32.gmra.mrb[0].mxu0 %v20
  %v410 = vpop.f32.mrb[0].mxu0
  %v411 = vadd.f32 %v241, %v410
  %v412 = vpop.f32.mrb[0].mxu0
  %413 = vmatprep.mubr.f32.mxu0 %v25
  %414 = vmatmul.mubr.f32.gmra.mrb[0].mxu0 %v24
  %v415 = vpop.f32.mrb[0].mxu0
  %v416 = vadd.f32 %v246, %v415
  %v417 = vpop.f32.mrb[0].mxu0
  %418 = vmatprep.mubr.f32.mxu0 %v29
  %419 = vmatmul.mubr.f32.gmra.mrb[0].mxu0 %v28
  %v420 = vpop.f32.mrb[0].mxu0
  %v421 = vadd.f32 %v251, %v420
  %v422 = vpop.f32.mrb[0].mxu0
  %423 = vmatprep.mubr.f32.mxu0 %v33
  %424 = vmatmul.mubr.f32.gmra.mrb[0].mxu0 %v32
  %v425 = vpop.f32.mrb[0].mxu0
  %v426 = vadd.f32 %v256, %v425
  %v427 = vpop.f32.mrb[0].mxu0
  %428 = vmatprep.mubr.f32.mxu0 %v37
  %429 = vmatmul.mubr.f32.gmra.mrb[0].mxu0 %v36
  %v430 = vpop.f32.mrb[0].mxu0
  %v431 = vadd.f32 %v261, %v430
  %v432 = vpop.f32.mrb[0].mxu0
  %433 = vmatprep.mubr.f32.mxu0 %v41
  %434 = vmatmul.mubr.f32.gmra.mrb[0].mxu0 %v40
  %v435 = vpop.f32.mrb[0].mxu0
  %v436 = vadd.f32 %v266, %v435
  %v437 = vpop.f32.mrb[0].mxu0
  %438 = vmatprep.mubr.f32.mxu0 %v45
  %439 = vmatmul.mubr.f32.gmra.mrb[0].mxu0 %v44
  %v440 = vpop.f32.mrb[0].mxu0
  %v441 = vadd.f32 %v271, %v440
  %v442 = vpop.f32.mrb[0].mxu0
  %443 = vmatprep.mubr.f32.mxu0 %v49
  %444 = vmatmul.mubr.f32.gmra.mrb[0].mxu0 %v48
  %v445 = vpop.f32.mrb[0].mxu0
  %v446 = vadd.f32 %v276, %v445
  %v447 = vpop.f32.mrb[0].mxu0
  %448 = vmatprep.mubr.f32.mxu0 %v53
  %449 = vmatmul.mubr.f32.gmra.mrb[0].mxu0 %v52
  %v450 = vpop.f32.mrb[0].mxu0
  %v451 = vadd.f32 %v281, %v450
  %v452 = vpop.f32.mrb[0].mxu0
  %453 = vmatprep.mubr.f32.mxu0 %v57
  %454 = vmatmul.mubr.f32.gmra.mrb[0].mxu0 %v56
  %v455 = vpop.f32.mrb[0].mxu0
  %v456 = vadd.f32 %v286, %v455
  %v457 = vpop.f32.mrb[0].mxu0
  %458 = vmatprep.mubr.f32.mxu0 %v61
  %459 = vmatmul.mubr.f32.gmra.mrb[0].mxu0 %v60
  %v460 = vpop.f32.mrb[0].mxu0
  %v461 = vadd.f32 %v291, %v460
  %v462 = vpop.f32.mrb[0].mxu0
  %463 = vmatprep.mubr.f32.mxu0 %v65
  %464 = vmatmul.mubr.f32.gmra.mrb[0].mxu0 %v64
  %v465 = vpop.f32.mrb[0].mxu0
  %v466 = vadd.f32 %v296, %v465
  %v467 = vpop.f32.mrb[0].mxu0
  %468 = vmatprep.mubr.f32.mxu0 %v69
  %469 = vmatmul.mubr.f32.gmra.mrb[0].mxu0 %v68
  %v470 = vpop.f32.mrb[0].mxu0
  %v471 = vadd.f32 %v301, %v470
  %v472 = vpop.f32.mrb[0].mxu0
  %473 = vmatprep.mubr.f32.mxu0 %v73
  %474 = vmatmul.mubr.f32.gmra.mrb[0].mxu0 %v72
  %v475 = vpop.f32.mrb[0].mxu0
  %v476 = vadd.f32 %v306, %v475
  %v477 = vpop.f32.mrb[0].mxu0
  %478 = vmatprep.mubr.f32.mxu0 %v77
  %479 = vmatmul.mubr.f32.gmra.mrb[0].mxu0 %v76
  %v480 = vpop.f32.mrb[0].mxu0
  %v481 = vadd.f32 %v311, %v480
  %v482 = vpop.f32.mrb[0].mxu0
  %483 = vmatprep.mubr.f32.mxu0 %v81
  %484 = vmatmul.mubr.f32.gmra.mrb[0].mxu0 %v80
  %v485 = vpop.f32.mrb[0].mxu0
  %v486 = vadd.f32 %v316, %v485
  %v487 = vpop.f32.mrb[0].mxu0
  %488 = vmatprep.mubr.f32.mxu0 %v85
  %489 = vmatmul.mubr.f32.gmra.mrb[0].mxu0 %v84
  %v490 = vpop.f32.mrb[0].mxu0
  %v491 = vadd.f32 %v321, %v490
  %v492 = vpop.f32.mrb[0].mxu0
  %493 = vmatprep.mubr.f32.mxu0 %v89
  %494 = vmatmul.mubr.f32.gmra.mrb[0].mxu0 %v88
  %v495 = vpop.f32.mrb[0].mxu0
  %v496 = vadd.f32 %v326, %v495
  %v497 = vpop.f32.mrb[0].mxu0
  %498 = vmatprep.mubr.f32.mxu0 %v93
  %499 = vmatmul.mubr.f32.gmra.mrb[0].mxu0 %v92
  %v500 = vpop.f32.mrb[0].mxu0
  %v501 = vadd.f32 %v331, %v500
  %v502 = vpop.f32.mrb[0].mxu0
  %503 = vmatprep.mubr.f32.mxu0 %v97
  %504 = vmatmul.mubr.f32.gmra.mrb[0].mxu0 %v96
  %v505 = vpop.f32.mrb[0].mxu0
  %v506 = vadd.f32 %v336, %v505
  %v507 = vpop.f32.mrb[0].mxu0
  %508 = vdwg.mxu0
  %v509 = vmax.f32 %v406, 0.0
  %v510 = vmax.f32 %v411, 0.0
  %v511 = vmax.f32 %v416, 0.0
  %v512 = vmax.f32 %v421, 0.0
  %v513 = vmax.f32 %v426, 0.0
  %v514 = vmax.f32 %v431, 0.0
  %v515 = vmax.f32 %v436, 0.0
  %v516 = vmax.f32 %v441, 0.0
  %v517 = vmax.f32 %v446, 0.0
  %v518 = vmax.f32 %v451, 0.0
  %v519 = vmax.f32 %v456, 0.0
  %v520 = vmax.f32 %v461, 0.0
  %v521 = vmax.f32 %v466, 0.0
  %v522 = vmax.f32 %v471, 0.0
  %v523 = vmax.f32 %v476, 0.0
  %v524 = vmax.f32 %v481, 0.0
  %v525 = vmax.f32 %v486, 0.0
  %v526 = vmax.f32 %v491, 0.0
  %v527 = vmax.f32 %v496, 0.0
  %v528 = vmax.f32 %v501, 0.0
  %v529 = vmax.f32 %v506, 0.0
  %vm530 = vcmask 523264
  %531 = vst.msk [vmem:[%s3] sm:$0xff] %vm530, %v509
  %532 = vst.msk [vmem:[%s3 + $0x8] sm:$0xff] %vm530, %v510
  %533 = vst.msk [vmem:[%s3 + $0x10] sm:$0xff] %vm530, %v511
  %534 = vst.msk [vmem:[%s3 + $0x18] sm:$0xff] %vm530, %v512
  %535 = vst.msk [vmem:[%s3 + $0x20] sm:$0xff] %vm530, %v513
  %536 = vst.msk [vmem:[%s3 + $0x28] sm:$0xff] %vm530, %v514
  %537 = vst.msk [vmem:[%s3 + $0x30] sm:$0xff] %vm530, %v515
  %538 = vst.msk [vmem:[%s3 + $0x38] sm:$0xff] %vm530, %v516
  %539 = vst.msk [vmem:[%s3 + $0x40] sm:$0xff] %vm530, %v517
  %540 = vst.msk [vmem:[%s3 + $0x48] sm:$0xff] %vm530, %v518
  %541 = vst.msk [vmem:[%s3 + $0x50] sm:$0xff] %vm530, %v519
  %542 = vst.msk [vmem:[%s3 + $0x58] sm:$0xff] %vm530, %v520
  %543 = vst.msk [vmem:[%s3 + $0x60] sm:$0xff] %vm530, %v521
  %544 = vst.msk [vmem:[%s3 + $0x68] sm:$0xff] %vm530, %v522
  %545 = vst.msk [vmem:[%s3 + $0x70] sm:$0xff] %vm530, %v523
  %546 = vst.msk [vmem:[%s3 + $0x78] sm:$0xff] %vm530, %v524
  %547 = vst.msk [vmem:[%s3 + $0x80] sm:$0xff] %vm530, %v525
  %548 = vst.msk [vmem:[%s3 + $0x88] sm:$0xff] %vm530, %v526
  %549 = vst.msk [vmem:[%s3 + $0x90] sm:$0xff] %vm530, %v527
  %550 = vst.msk [vmem:[%s3 + $0x98] sm:$0xff] %vm530, %v528
  %vm551 = vcmask 517120
  %552 = vst.msk [vmem:[%s3 + $0xa0] sm:$0x3] %vm551, %v529
  // Predicated region
  $region14: #{cnn_actor_critic_forward.5} parent=0 // pred_check
    _
  $region15: #{cnn_actor_critic_forward.5} parent=0 // pred_check_branch
    %554 = sbr.rel (0) target = $region17
  $region16: #{cnn_actor_critic_forward.5} parent=0 // pred_region
    _
  $region17: #{cnn_actor_critic_forward.5} parent=0 // pred_fallthru
    _
  // Predicated region
  $region18: #{cnn_actor_critic_forward.5} parent=0 // pred_check
    _
  $region19: #{cnn_actor_critic_forward.5} parent=0 // pred_check_branch
    %556 = sbr.rel (0) target = $region21
  $region20: #{cnn_actor_critic_forward.5} parent=0 // pred_region
    _
  $region21: #{cnn_actor_critic_forward.5} parent=0 // pred_fallthru
    _

// kernel: cnn_actor_critic_forward.6
$region0: #{cnn_actor_critic_forward.6}
  #allocation0 [shape = 'u32[]', space=smem, size = 0x4, offset = 0x4, fixed_abs, tag = 'smem constant byte address 0x4 - core index']
  #allocation1 [shape = 'u32[144,128]{1,0:T(1,128)}', space=vmem, size = 0x12000, scoped, tag = 'internal scratch']
  %s0 = inlined_call_operand.vmem [shape: f32[98,576], index: 0, kind: input, shape index: {}]
  %s1 = inlined_call_operand.vmem [shape: f32[576,64], index: 1, kind: input, shape index: {}]
  %s2 = inlined_call_operand.vmem [shape: f32[1,64], index: 2, kind: input, shape index: {}]
  %s3 = inlined_call_operand.vmem [shape: f32[98,64], index: 3, kind: output, shape index: {}]
  %s4 = sld [smem:[#allocation0]]
  $region22: #{cnn_actor_critic_forward.6} parent=0
    _
  %s6 = ssub.s32 1, %s4
  %s7 = scalar_select 0, %s6, %s4
  // Predicated region
  $region2: #{cnn_actor_critic_forward.6} parent=0 // pred_check
    _
  $region3: #{cnn_actor_critic_forward.6} parent=0 // pred_check_branch
    %9 = sbr.rel (0) target = $region5
  $region4: #{cnn_actor_critic_forward.6} parent=0 // pred_region
    _
  $region5: #{cnn_actor_critic_forward.6} parent=0 // pred_fallthru
    _
  // Predicated region
  $region6: #{cnn_actor_critic_forward.6} parent=0 // pred_check
    _
  $region7: #{cnn_actor_critic_forward.6} parent=0 // pred_check_branch
    %11 = sbr.rel (0) target = $region9
  $region8: #{cnn_actor_critic_forward.6} parent=0 // pred_region
    _
  $region9: #{cnn_actor_critic_forward.6} parent=0 // pred_fallthru
    _
  // Predicated region
  $region10: #{cnn_actor_critic_forward.6} parent=0 // pred_check
    _
  $region11: #{cnn_actor_critic_forward.6} parent=0 // pred_check_branch
    %13 = sbr.rel (0) target = $region13
  $region12: #{cnn_actor_critic_forward.6} parent=0 // pred_region
    _
  $region13: #{cnn_actor_critic_forward.6} parent=0 // pred_fallthru
    _
  %v14 = vld [vmem:[%s0] sm:$0xff]
  %v15 = vld [vmem:[%s0 + $0x8] sm:$0xff]
  %v16 = vld [vmem:[%s0 + $0x10] sm:$0xff]
  %v17 = vld [vmem:[%s0 + $0x18] sm:$0xff]
  %v18 = vld [vmem:[%s0 + $0x20] sm:$0xff]
  %v19 = vld [vmem:[%s0 + $0x28] sm:$0xff]
  %v20 = vld [vmem:[%s0 + $0x30] sm:$0xff]
  %v21 = vld [vmem:[%s0 + $0x38] sm:$0xff]
  %v22 = vld [vmem:[%s0 + $0x40] sm:$0xff]
  %v23 = vld [vmem:[%s0 + $0x48] sm:$0xff]
  %v24 = vld [vmem:[%s0 + $0x50] sm:$0xff]
  %v25 = vld [vmem:[%s0 + $0x58] sm:$0xff]
  %v26 = vld [vmem:[%s0 + $0x60] sm:$0xff]
  %v27 = vld [vmem:[%s0 + $0x68] sm:$0xff]
  %v28 = vld [vmem:[%s0 + $0x70] sm:$0xff]
  %v29 = vld [vmem:[%s0 + $0x78] sm:$0xff]
  %v30 = vld [vmem:[%s0 + $0x80] sm:$0xff]
  %v31 = vld [vmem:[%s0 + $0x88] sm:$0xff]
  %v32 = vld [vmem:[%s0 + $0x90] sm:$0xff]
  %v33 = vld [vmem:[%s0 + $0x98] sm:$0xff]
  %v34 = vld [vmem:[%s0 + $0xa0] sm:$0xff]
  %v35 = vld [vmem:[%s0 + $0xa8] sm:$0xff]
  %v36 = vld [vmem:[%s0 + $0xb0] sm:$0xff]
  %v37 = vld [vmem:[%s0 + $0xb8] sm:$0xff]
  %v38 = vld [vmem:[%s0 + $0xc0] sm:$0xff]
  %v39 = vld [vmem:[%s0 + $0xc8] sm:$0xff]
  %v40 = vld [vmem:[%s0 + $0xd0] sm:$0xff]
  %v41 = vld [vmem:[%s0 + $0xd8] sm:$0xff]
  %v42 = vld [vmem:[%s0 + $0xe0] sm:$0xff]
  %v43 = vld [vmem:[%s0 + $0xe8] sm:$0xff]
  %v44 = vld [vmem:[%s0 + $0xf0] sm:$0xff]
  %v45 = vld [vmem:[%s0 + $0xf8] sm:$0xff]
  %v46 = vld [vmem:[%s0 + $0x100] sm:$0xff]
  %v47 = vld [vmem:[%s0 + $0x108] sm:$0xff]
  %v48 = vld [vmem:[%s0 + $0x110] sm:$0xff]
  %v49 = vld [vmem:[%s0 + $0x118] sm:$0xff]
  %v50 = vld [vmem:[%s0 + $0x120] sm:$0xff]
  %v51 = vld [vmem:[%s0 + $0x128] sm:$0xff]
  %v52 = vld [vmem:[%s0 + $0x130] sm:$0xff]
  %v53 = vld [vmem:[%s0 + $0x138] sm:$0xff]
  %v54 = vld [vmem:[%s0 + $0x140] sm:$0xff]
  %v55 = vld [vmem:[%s0 + $0x148] sm:$0xff]
  %v56 = vld [vmem:[%s0 + $0x150] sm:$0xff]
  %v57 = vld [vmem:[%s0 + $0x158] sm:$0xff]
  %v58 = vld [vmem:[%s0 + $0x160] sm:$0xff]
  %v59 = vld [vmem:[%s0 + $0x168] sm:$0xff]
  %v60 = vld [vmem:[%s0 + $0x170] sm:$0xff]
  %v61 = vld [vmem:[%s0 + $0x178] sm:$0xff]
  %v62 = vld [vmem:[%s0 + $0x180] sm:$0xff]
  %v63 = vld [vmem:[%s0 + $0x188] sm:$0xff]
  %v64 = vld [vmem:[%s0 + $0x190] sm:$0xff]
  %v65 = vld [vmem:[%s0 + $0x198] sm:$0xff]
  %v66 = vld [vmem:[%s0 + $0x1a0] sm:$0xff]
  %v67 = vld [vmem:[%s0 + $0x1a8] sm:$0xff]
  %v68 = vld [vmem:[%s0 + $0x1b0] sm:$0xff]
  %v69 = vld [vmem:[%s0 + $0x1b8] sm:$0xff]
  %v70 = vld [vmem:[%s0 + $0x1c0] sm:$0xff]
  %v71 = vld [vmem:[%s0 + $0x1c8] sm:$0xff]
  %v72 = vld [vmem:[%s0 + $0x1d0] sm:$0xff]
  %v73 = vld [vmem:[%s0 + $0x1d8] sm:$0xff]
  %v74 = vld [vmem:[%s0 + $0x1e0] sm:$0x3]
  %v75 = vld [vmem:[%s0 + $0x1e8] sm:$0x3]
  %v76 = vld [vmem:[%s0 + $0x1f0] sm:$0x3]
  %v77 = vld [vmem:[%s0 + $0x1f8] sm:$0x3]
  %v78 = vld [vmem:[%s0 + $0x200] sm:$0x3]
  %v79 = vld [vmem:[%s1] sm:$0xff]
  %v80 = vld [vmem:[%s1 + $0x8] sm:$0xff]
  %v81 = vld [vmem:[%s1 + $0x10] sm:$0xff]
  %v82 = vld [vmem:[%s1 + $0x18] sm:$0xff]
  %v83 = vld [vmem:[%s1 + $0x20] sm:$0xff]
  %v84 = vld [vmem:[%s1 + $0x28] sm:$0xff]
  %v85 = vld [vmem:[%s1 + $0x30] sm:$0xff]
  %v86 = vld [vmem:[%s1 + $0x38] sm:$0xff]
  %v87 = vld [vmem:[%s1 + $0x40] sm:$0xff]
  %v88 = vld [vmem:[%s1 + $0x48] sm:$0xff]
  %v89 = vld [vmem:[%s1 + $0x50] sm:$0xff]
  %v90 = vld [vmem:[%s1 + $0x58] sm:$0xff]
  %v91 = vld [vmem:[%s1 + $0x60] sm:$0xff]
  %v92 = vld [vmem:[%s1 + $0x68] sm:$0xff]
  %v93 = vld [vmem:[%s1 + $0x70] sm:$0xff]
  %v94 = vld [vmem:[%s1 + $0x78] sm:$0xff]
  %v95 = vld [vmem:[%s1 + $0x80] sm:$0xff]
  %v96 = vld [vmem:[%s1 + $0x88] sm:$0xff]
  %v97 = vld [vmem:[%s1 + $0x90] sm:$0xff]
  %v98 = vld [vmem:[%s1 + $0x98] sm:$0xff]
  %v99 = vld [vmem:[%s1 + $0xa0] sm:$0xff]
  %v100 = vld [vmem:[%s1 + $0xa8] sm:$0xff]
  %v101 = vld [vmem:[%s1 + $0xb0] sm:$0xff]
  %v102 = vld [vmem:[%s1 + $0xb8] sm:$0xff]
  %v103 = vld [vmem:[%s1 + $0xc0] sm:$0xff]
  %v104 = vld [vmem:[%s1 + $0xc8] sm:$0xff]
  %v105 = vld [vmem:[%s1 + $0xd0] sm:$0xff]
  %v106 = vld [vmem:[%s1 + $0xd8] sm:$0xff]
  %v107 = vld [vmem:[%s1 + $0xe0] sm:$0xff]
  %v108 = vld [vmem:[%s1 + $0xe8] sm:$0xff]
  %v109 = vld [vmem:[%s1 + $0xf0] sm:$0xff]
  %v110 = vld [vmem:[%s1 + $0xf8] sm:$0xff]
  %v111 = vld [vmem:[%s1 + $0x100] sm:$0xff]
  %v112 = vld [vmem:[%s1 + $0x108] sm:$0xff]
  %v113 = vld [vmem:[%s1 + $0x110] sm:$0xff]
  %v114 = vld [vmem:[%s1 + $0x118] sm:$0xff]
  %v115 = vld [vmem:[%s1 + $0x120] sm:$0xff]
  %v116 = vld [vmem:[%s1 + $0x128] sm:$0xff]
  %v117 = vld [vmem:[%s1 + $0x130] sm:$0xff]
  %v118 = vld [vmem:[%s1 + $0x138] sm:$0xff]
  %v119 = vld [vmem:[%s1 + $0x140] sm:$0xff]
  %v120 = vld [vmem:[%s1 + $0x148] sm:$0xff]
  %v121 = vld [vmem:[%s1 + $0x150] sm:$0xff]
  %v122 = vld [vmem:[%s1 + $0x158] sm:$0xff]
  %v123 = vld [vmem:[%s1 + $0x160] sm:$0xff]
  %v124 = vld [vmem:[%s1 + $0x168] sm:$0xff]
  %v125 = vld [vmem:[%s1 + $0x170] sm:$0xff]
  %v126 = vld [vmem:[%s1 + $0x178] sm:$0xff]
  %v127 = vld [vmem:[%s1 + $0x180] sm:$0xff]
  %v128 = vld [vmem:[%s1 + $0x188] sm:$0xff]
  %v129 = vld [vmem:[%s1 + $0x190] sm:$0xff]
  %v130 = vld [vmem:[%s1 + $0x198] sm:$0xff]
  %v131 = vld [vmem:[%s1 + $0x1a0] sm:$0xff]
  %v132 = vld [vmem:[%s1 + $0x1a8] sm:$0xff]
  %v133 = vld [vmem:[%s1 + $0x1b0] sm:$0xff]
  %v134 = vld [vmem:[%s1 + $0x1b8] sm:$0xff]
  %v135 = vld [vmem:[%s1 + $0x1c0] sm:$0xff]
  %v136 = vld [vmem:[%s1 + $0x1c8] sm:$0xff]
  %v137 = vld [vmem:[%s1 + $0x1d0] sm:$0xff]
  %v138 = vld [vmem:[%s1 + $0x1d8] sm:$0xff]
  %v139 = vld [vmem:[%s1 + $0x1e0] sm:$0xff]
  %v140 = vld [vmem:[%s1 + $0x1e8] sm:$0xff]
  %v141 = vld [vmem:[%s1 + $0x1f0] sm:$0xff]
  %v142 = vld [vmem:[%s1 + $0x1f8] sm:$0xff]
  %v143 = vld [vmem:[%s1 + $0x200] sm:$0xff]
  %v144 = vld [vmem:[%s1 + $0x208] sm:$0xff]
  %v145 = vld [vmem:[%s1 + $0x210] sm:$0xff]
  %v146 = vld [vmem:[%s1 + $0x218] sm:$0xff]
  %v147 = vld [vmem:[%s1 + $0x220] sm:$0xff]
  %v148 = vld [vmem:[%s1 + $0x228] sm:$0xff]
  %v149 = vld [vmem:[%s1 + $0x230] sm:$0xff]
  %v150 = vld [vmem:[%s1 + $0x238] sm:$0xff]
  %v151 = vld [vmem:[%s2] sm:$0x1]
  %v153 = vlaneseq
  %v154 = vshrl.u32 %v153, 7
  %v155 = vsub.s32 0, %v154
  %v156 = vrot.slane %v151, %v155
  %vm158 = vcmask 523264
  %v160 = vsel %vm158, %v18, 0
  %v163 = vsel %vm158, %v23, 0
  %v166 = vsel %vm158, %v28, 0
  %v169 = vsel %vm158, %v33, 0
  %v172 = vsel %vm158, %v38, 0
  %v175 = vsel %vm158, %v43, 0
  %v178 = vsel %vm158, %v48, 0
  %v181 = vsel %vm158, %v53, 0
  %v184 = vsel %vm158, %v58, 0
  %v187 = vsel %vm158, %v63, 0
  %v190 = vsel %vm158, %v68, 0
  %v193 = vsel %vm158, %v73, 0
  %v196 = vsel %vm158, %v78, 0
  %198 = vmatprep.subr.mxu0 0.0
  %199 = vmatpush1.msra.mxu0 %v79
  %200 = vmatprep.subr.mxu0 0.0
  %201 = vmatpush1.msra.mxu0 %v80
  %202 = vmatprep.subr.mxu0 0.0
  %203 = vmatpush1.msra.mxu0 %v81
  %204 = vmatprep.subr.mxu0 0.0
  %205 = vmatpush1.msra.mxu0 %v82
  %206 = vmatprep.subr.mxu0 0.0
  %207 = vmatpush1.msra.mxu0 %v83
  %208 = vmatprep.subr.mxu0 0.0
  %209 = vmatpush1.msra.mxu0 %v84
  %210 = vmatprep.subr.mxu0 0.0
  %211 = vmatpush1.msra.mxu0 %v85
  %212 = vmatprep.subr.mxu0 0.0
  %213 = vmatpush1.msra.mxu0 %v86
  %214 = vmatprep.subr.mxu0 0.0
  %215 = vmatpush1.msra.mxu0 %v87
  %216 = vmatprep.subr.mxu0 0.0
  %217 = vmatpush1.msra.mxu0 %v88
  %218 = vmatprep.subr.mxu0 0.0
  %219 = vmatpush1.msra.mxu0 %v89
  %220 = vmatprep.subr.mxu0 0.0
  %221 = vmatpush1.msra.mxu0 %v90
  %222 = vmatprep.subr.mxu0 0.0
  %223 = vmatpush1.msra.mxu0 %v91
  %224 = vmatprep.subr.mxu0 0.0
  %225 = vmatpush1.msra.mxu0 %v92
  %226 = vmatprep.subr.mxu0 0.0
  %227 = vmatpush1.msra.mxu0 %v93
  %228 = vmatprep.subr.mxu0 0.0
  %229 = vmatpush1.msra.mxu0 %v94
  %230 = vmatprep.subr.mxu0 0.0
  %231 = vmatpush1.msra.mxu0 %v95
  %232 = vmatprep.subr.mxu0 0.0
  %233 = vmatpush1.msra.mxu0 %v96
  %234 = vmatprep.subr.mxu0 0.0
  %235 = vmatpush1.msra.mxu0 %v97
  %236 = vmatprep.subr.mxu0 0.0
  %237 = vmatpush1.msra.mxu0 %v98
  %238 = vmatprep.subr.mxu0 0.0
  %239 = vmatpush1.msra.mxu0 %v99
  %240 = vmatprep.subr.mxu0 0.0
  %241 = vmatpush1.msra.mxu0 %v100
  %242 = vmatprep.subr.mxu0 0.0
  %243 = vmatpush1.msra.mxu0 %v101
  %244 = vmatprep.subr.mxu0 0.0
  %245 = vmatpush1.msra.mxu0 %v102
  %246 = vmatprep.subr.mxu0 0.0
  %247 = vmatpush1.msra.mxu0 %v103
  %248 = vmatprep.subr.mxu0 0.0
  %249 = vmatpush1.msra.mxu0 %v104
  %250 = vmatprep.subr.mxu0 0.0
  %251 = vmatpush1.msra.mxu0 %v105
  %252 = vmatprep.subr.mxu0 0.0
  %253 = vmatpush1.msra.mxu0 %v106
  %254 = vmatprep.subr.mxu0 0.0
  %255 = vmatpush1.msra.mxu0 %v107
  %256 = vmatprep.subr.mxu0 0.0
  %257 = vmatpush1.msra.mxu0 %v108
  %258 = vmatprep.subr.mxu0 0.0
  %259 = vmatpush1.msra.mxu0 %v109
  %260 = vmatprep.subr.mxu0 0.0
  %261 = vmatpush1.msra.mxu0 %v110
  %262 = vmatprep.mubr.f32.mxu0 %v15
  %263 = vmatmul.mubr.f32.gmra.mrb[0].mxu0 %v14
  %v264 = vpop.f32.mrb[0].mxu0
  %v265 = vadd.f32 %v156, %v264
  %v266 = vpop.f32.mrb[0].mxu0
  %267 = vmatprep.mubr.f32.mxu0 %v20
  %268 = vmatmul.mubr.f32.gmra.mrb[0].mxu0 %v19
  %v269 = vpop.f32.mrb[0].mxu0
  %v270 = vadd.f32 %v156, %v269
  %v271 = vpop.f32.mrb[0].mxu0
  %272 = vmatprep.mubr.f32.mxu0 %v25
  %273 = vmatmul.mubr.f32.gmra.mrb[0].mxu0 %v24
  %v274 = vpop.f32.mrb[0].mxu0
  %v275 = vadd.f32 %v156, %v274
  %v276 = vpop.f32.mrb[0].mxu0
  %277 = vmatprep.mubr.f32.mxu0 %v30
  %278 = vmatmul.mubr.f32.gmra.mrb[0].mxu0 %v29
  %v279 = vpop.f32.mrb[0].mxu0
  %v280 = vadd.f32 %v156, %v279
  %v281 = vpop.f32.mrb[0].mxu0
  %282 = vmatprep.mubr.f32.mxu0 %v35
  %283 = vmatmul.mubr.f32.gmra.mrb[0].mxu0 %v34
  %v284 = vpop.f32.mrb[0].mxu0
  %v285 = vadd.f32 %v156, %v284
  %v286 = vpop.f32.mrb[0].mxu0
  %287 = vmatprep.mubr.f32.mxu0 %v40
  %288 = vmatmul.mubr.f32.gmra.mrb[0].mxu0 %v39
  %v289 = vpop.f32.mrb[0].mxu0
  %v290 = vadd.f32 %v156, %v289
  %v291 = vpop.f32.mrb[0].mxu0
  %292 = vmatprep.mubr.f32.mxu0 %v45
  %293 = vmatmul.mubr.f32.gmra.mrb[0].mxu0 %v44
  %v294 = vpop.f32.mrb[0].mxu0
  %v295 = vadd.f32 %v156, %v294
  %v296 = vpop.f32.mrb[0].mxu0
  %297 = vmatprep.mubr.f32.mxu0 %v50
  %298 = vmatmul.mubr.f32.gmra.mrb[0].mxu0 %v49
  %v299 = vpop.f32.mrb[0].mxu0
  %v300 = vadd.f32 %v156, %v299
  %v301 = vpop.f32.mrb[0].mxu0
  %302 = vmatprep.mubr.f32.mxu0 %v55
  %303 = vmatmul.mubr.f32.gmra.mrb[0].mxu0 %v54
  %v304 = vpop.f32.mrb[0].mxu0
  %v305 = vadd.f32 %v156, %v304
  %v306 = vpop.f32.mrb[0].mxu0
  %307 = vmatprep.mubr.f32.mxu0 %v60
  %308 = vmatmul.mubr.f32.gmra.mrb[0].mxu0 %v59
  %v309 = vpop.f32.mrb[0].mxu0
  %v310 = vadd.f32 %v156, %v309
  %v311 = vpop.f32.mrb[0].mxu0
  %312 = vmatprep.mubr.f32.mxu0 %v65
  %313 = vmatmul.mubr.f32.gmra.mrb[0].mxu0 %v64
  %v314 = vpop.f32.mrb[0].mxu0
  %v315 = vadd.f32 %v156, %v314
  %v316 = vpop.f32.mrb[0].mxu0
  %317 = vmatprep.mubr.f32.mxu0 %v70
  %318 = vmatmul.mubr.f32.gmra.mrb[0].mxu0 %v69
  %v319 = vpop.f32.mrb[0].mxu0
  %v320 = vadd.f32 %v156, %v319
  %v321 = vpop.f32.mrb[0].mxu0
  %322 = vmatprep.mubr.f32.mxu0 %v75
  %323 = vmatmul.mubr.f32.gmra.mrb[0].mxu0 %v74
  %v324 = vpop.f32.mrb[0].mxu0
  %v325 = vadd.f32 %v156, %v324
  %v326 = vpop.f32.mrb[0].mxu0
  %327 = vdwg.mxu0
  %328 = vmatprep.subr.mxu0 0.0
  %329 = vmatpush1.msra.mxu0 %v111
  %330 = vmatprep.subr.mxu0 0.0
  %331 = vmatpush1.msra.mxu0 %v112
  %332 = vmatprep.subr.mxu0 0.0
  %333 = vmatpush1.msra.mxu0 %v113
  %334 = vmatprep.subr.mxu0 0.0
  %335 = vmatpush1.msra.mxu0 %v114
  %336 = vmatprep.subr.mxu0 0.0
  %337 = vmatpush1.msra.mxu0 %v115
  %338 = vmatprep.subr.mxu0 0.0
  %339 = vmatpush1.msra.mxu0 %v116
  %340 = vmatprep.subr.mxu0 0.0
  %341 = vmatpush1.msra.mxu0 %v117
  %342 = vmatprep.subr.mxu0 0.0
  %343 = vmatpush1.msra.mxu0 %v118
  %344 = vmatprep.subr.mxu0 0.0
  %345 = vmatpush1.msra.mxu0 %v119
  %346 = vmatprep.subr.mxu0 0.0
  %347 = vmatpush1.msra.mxu0 %v120
  %348 = vmatprep.subr.mxu0 0.0
  %349 = vmatpush1.msra.mxu0 %v121
  %350 = vmatprep.subr.mxu0 0.0
  %351 = vmatpush1.msra.mxu0 %v122
  %352 = vmatprep.subr.mxu0 0.0
  %353 = vmatpush1.msra.mxu0 %v123
  %354 = vmatprep.subr.mxu0 0.0
  %355 = vmatpush1.msra.mxu0 %v124
  %356 = vmatprep.subr.mxu0 0.0
  %357 = vmatpush1.msra.mxu0 %v125
  %358 = vmatprep.subr.mxu0 0.0
  %359 = vmatpush1.msra.mxu0 %v126
  %360 = vmatprep.subr.mxu0 0.0
  %361 = vmatpush1.msra.mxu0 %v127
  %362 = vmatprep.subr.mxu0 0.0
  %363 = vmatpush1.msra.mxu0 %v128
  %364 = vmatprep.subr.mxu0 0.0
  %365 = vmatpush1.msra.mxu0 %v129
  %366 = vmatprep.subr.mxu0 0.0
  %367 = vmatpush1.msra.mxu0 %v130
  %368 = vmatprep.subr.mxu0 0.0
  %369 = vmatpush1.msra.mxu0 %v131
  %370 = vmatprep.subr.mxu0 0.0
  %371 = vmatpush1.msra.mxu0 %v132
  %372 = vmatprep.subr.mxu0 0.0
  %373 = vmatpush1.msra.mxu0 %v133
  %374 = vmatprep.subr.mxu0 0.0
  %375 = vmatpush1.msra.mxu0 %v134
  %376 = vmatprep.subr.mxu0 0.0
  %377 = vmatpush1.msra.mxu0 %v135
  %378 = vmatprep.subr.mxu0 0.0
  %379 = vmatpush1.msra.mxu0 %v136
  %380 = vmatprep.subr.mxu0 0.0
  %381 = vmatpush1.msra.mxu0 %v137
  %382 = vmatprep.subr.mxu0 0.0
  %383 = vmatpush1.msra.mxu0 %v138
  %384 = vmatprep.subr.mxu0 0.0
  %385 = vmatpush1.msra.mxu0 %v139
  %386 = vmatprep.subr.mxu0 0.0
  %387 = vmatpush1.msra.mxu0 %v140
  %388 = vmatprep.subr.mxu0 0.0
  %389 = vmatpush1.msra.mxu0 %v141
  %390 = vmatprep.subr.mxu0 0.0
  %391 = vmatpush1.msra.mxu0 %v142
  %392 = vmatprep.mubr.f32.mxu0 %v17
  %393 = vmatmul.mubr.f32.gmra.mrb[0].mxu0 %v16
  %v394 = vpop.f32.mrb[0].mxu0
  %v395 = vadd.f32 %v265, %v394
  %v396 = vpop.f32.mrb[0].mxu0
  %397 = vmatprep.mubr.f32.mxu0 %v22
  %398 = vmatmul.mubr.f32.gmra.mrb[0].mxu0 %v21
  %v399 = vpop.f32.mrb[0].mxu0
  %v400 = vadd.f32 %v270, %v399
  %v401 = vpop.f32.mrb[0].mxu0
  %402 = vmatprep.mubr.f32.mxu0 %v27
  %403 = vmatmul.mubr.f32.gmra.mrb[0].mxu0 %v26
  %v404 = vpop.f32.mrb[0].mxu0
  %v405 = vadd.f32 %v275, %v404
  %v406 = vpop.f32.mrb[0].mxu0
  %407 = vmatprep.mubr.f32.mxu0 %v32
  %408 = vmatmul.mubr.f32.gmra.mrb[0].mxu0 %v31
  %v409 = vpop.f32.mrb[0].mxu0
  %v410 = vadd.f32 %v280, %v409
  %v411 = vpop.f32.mrb[0].mxu0
  %412 = vmatprep.mubr.f32.mxu0 %v37
  %413 = vmatmul.mubr.f32.gmra.mrb[0].mxu0 %v36
  %v414 = vpop.f32.mrb[0].mxu0
  %v415 = vadd.f32 %v285, %v414
  %v416 = vpop.f32.mrb[0].mxu0
  %417 = vmatprep.mubr.f32.mxu0 %v42
  %418 = vmatmul.mubr.f32.gmra.mrb[0].mxu0 %v41
  %v419 = vpop.f32.mrb[0].mxu0
  %v420 = vadd.f32 %v290, %v419
  %v421 = vpop.f32.mrb[0].mxu0
  %422 = vmatprep.mubr.f32.mxu0 %v47
  %423 = vmatmul.mubr.f32.gmra.mrb[0].mxu0 %v46
  %v424 = vpop.f32.mrb[0].mxu0
  %v425 = vadd.f32 %v295, %v424
  %v426 = vpop.f32.mrb[0].mxu0
  %427 = vmatprep.mubr.f32.mxu0 %v52
  %428 = vmatmul.mubr.f32.gmra.mrb[0].mxu0 %v51
  %v429 = vpop.f32.mrb[0].mxu0
  %v430 = vadd.f32 %v300, %v429
  %v431 = vpop.f32.mrb[0].mxu0
  %432 = vmatprep.mubr.f32.mxu0 %v57
  %433 = vmatmul.mubr.f32.gmra.mrb[0].mxu0 %v56
  %v434 = vpop.f32.mrb[0].mxu0
  %v435 = vadd.f32 %v305, %v434
  %v436 = vpop.f32.mrb[0].mxu0
  %437 = vmatprep.mubr.f32.mxu0 %v62
  %438 = vmatmul.mubr.f32.gmra.mrb[0].mxu0 %v61
  %v439 = vpop.f32.mrb[0].mxu0
  %v440 = vadd.f32 %v310, %v439
  %v441 = vpop.f32.mrb[0].mxu0
  %442 = vmatprep.mubr.f32.mxu0 %v67
  %443 = vmatmul.mubr.f32.gmra.mrb[0].mxu0 %v66
  %v444 = vpop.f32.mrb[0].mxu0
  %v445 = vadd.f32 %v315, %v444
  %v446 = vpop.f32.mrb[0].mxu0
  %447 = vmatprep.mubr.f32.mxu0 %v72
  %448 = vmatmul.mubr.f32.gmra.mrb[0].mxu0 %v71
  %v449 = vpop.f32.mrb[0].mxu0
  %v450 = vadd.f32 %v320, %v449
  %v451 = vpop.f32.mrb[0].mxu0
  %452 = vmatprep.mubr.f32.mxu0 %v77
  %453 = vmatmul.mubr.f32.gmra.mrb[0].mxu0 %v76
  %v454 = vpop.f32.mrb[0].mxu0
  %v455 = vadd.f32 %v325, %v454
  %v456 = vpop.f32.mrb[0].mxu0
  %457 = vdwg.mxu0
  %458 = vmatprep.subr.mxu0 0.0
  %459 = vmatpush1.msra.mxu0 %v143
  %460 = vmatprep.subr.mxu0 0.0
  %461 = vmatpush1.msra.mxu0 %v144
  %462 = vmatprep.subr.mxu0 0.0
  %463 = vmatpush1.msra.mxu0 %v145
  %464 = vmatprep.subr.mxu0 0.0
  %465 = vmatpush1.msra.mxu0 %v146
  %466 = vmatprep.subr.mxu0 0.0
  %467 = vmatpush1.msra.mxu0 %v147
  %468 = vmatprep.subr.mxu0 0.0
  %469 = vmatpush1.msra.mxu0 %v148
  %470 = vmatprep.subr.mxu0 0.0
  %471 = vmatpush1.msra.mxu0 %v149
  %472 = vmatprep.subr.mxu0 0.0
  %473 = vmatpush1.msra.mxu0 %v150
  %474 = vmatprep.subr.mxu0 0.0
  %475 = vmatpush1.msra.mxu0 0.0
  %476 = vmatprep.subr.mxu0 0.0
  %477 = vmatpush1.msra.mxu0 0.0
  %478 = vmatprep.subr.mxu0 0.0
  %479 = vmatpush1.msra.mxu0 0.0
  %480 = vmatprep.subr.mxu0 0.0
  %481 = vmatpush1.msra.mxu0 0.0
  %482 = vmatprep.subr.mxu0 0.0
  %483 = vmatpush1.msra.mxu0 0.0
  %484 = vmatprep.subr.mxu0 0.0
  %485 = vmatpush1.msra.mxu0 0.0
  %486 = vmatprep.subr.mxu0 0.0
  %487 = vmatpush1.msra.mxu0 0.0
  %488 = vmatprep.subr.mxu0 0.0
  %489 = vmatpush1.msra.mxu0 0.0
  %490 = vmatprep.subr.mxu0 0.0
  %491 = vmatpush1.msra.mxu0 0.0
  %492 = vmatprep.subr.mxu0 0.0
  %493 = vmatpush1.msra.mxu0 0.0
  %494 = vmatprep.subr.mxu0 0.0
  %495 = vmatpush1.msra.mxu0 0.0
  %496 = vmatprep.subr.mxu0 0.0
  %497 = vmatpush1.msra.mxu0 0.0
  %498 = vmatprep.subr.mxu0 0.0
  %499 = vmatpush1.msra.mxu0 0.0
  %500 = vmatprep.subr.mxu0 0.0
  %501 = vmatpush1.msra.mxu0 0.0
  %502 = vmatprep.subr.mxu0 0.0
  %503 = vmatpush1.msra.mxu0 0.0
  %504 = vmatprep.subr.mxu0 0.0
  %505 = vmatpush1.msra.mxu0 0.0
  %506 = vmatprep.subr.mxu0 0.0
  %507 = vmatpush1.msra.mxu0 0.0
  %508 = vmatprep.subr.mxu0 0.0
  %509 = vmatpush1.msra.mxu0 0.0
  %510 = vmatprep.subr.mxu0 0.0
  %511 = vmatpush1.msra.mxu0 0.0
  %512 = vmatprep.subr.mxu0 0.0
  %513 = vmatpush1.msra.mxu0 0.0
  %514 = vmatprep.subr.mxu0 0.0
  %515 = vmatpush1.msra.mxu0 0.0
  %516 = vmatprep.subr.mxu0 0.0
  %517 = vmatpush1.msra.mxu0 0.0
  %518 = vmatprep.subr.mxu0 0.0
  %519 = vmatpush1.msra.mxu0 0.0
  %520 = vmatprep.subr.mxu0 0.0
  %521 = vmatpush1.msra.mxu0 0.0
  %522 = vmatprep.mubr.f32.mxu0 0.0
  %523 = vmatmul.mubr.f32.gmra.mrb[0].mxu0 %v160
  %v524 = vpop.f32.mrb[0].mxu0
  %v525 = vadd.f32 %v395, %v524
  %v526 = vpop.f32.mrb[0].mxu0
  %527 = vmatprep.mubr.f32.mxu0 0.0
  %528 = vmatmul.mubr.f32.gmra.mrb[0].mxu0 %v163
  %v529 = vpop.f32.mrb[0].mxu0
  %v530 = vadd.f32 %v400, %v529
  %v531 = vpop.f32.mrb[0].mxu0
  %532 = vmatprep.mubr.f32.mxu0 0.0
  %533 = vmatmul.mubr.f32.gmra.mrb[0].mxu0 %v166
  %v534 = vpop.f32.mrb[0].mxu0
  %v535 = vadd.f32 %v405, %v534
  %v536 = vpop.f32.mrb[0].mxu0
  %537 = vmatprep.mubr.f32.mxu0 0.0
  %538 = vmatmul.mubr.f32.gmra.mrb[0].mxu0 %v169
  %v539 = vpop.f32.mrb[0].mxu0
  %v540 = vadd.f32 %v410, %v539
  %v541 = vpop.f32.mrb[0].mxu0
  %542 = vmatprep.mubr.f32.mxu0 0.0
  %543 = vmatmul.mubr.f32.gmra.mrb[0].mxu0 %v172
  %v544 = vpop.f32.mrb[0].mxu0
  %v545 = vadd.f32 %v415, %v544
  %v546 = vpop.f32.mrb[0].mxu0
  %547 = vmatprep.mubr.f32.mxu0 0.0
  %548 = vmatmul.mubr.f32.gmra.mrb[0].mxu0 %v175
  %v549 = vpop.f32.mrb[0].mxu0
  %v550 = vadd.f32 %v420, %v549
  %v551 = vpop.f32.mrb[0].mxu0
  %552 = vmatprep.mubr.f32.mxu0 0.0
  %553 = vmatmul.mubr.f32.gmra.mrb[0].mxu0 %v178
  %v554 = vpop.f32.mrb[0].mxu0
  %v555 = vadd.f32 %v425, %v554
  %v556 = vpop.f32.mrb[0].mxu0
  %557 = vmatprep.mubr.f32.mxu0 0.0
  %558 = vmatmul.mubr.f32.gmra.mrb[0].mxu0 %v181
  %v559 = vpop.f32.mrb[0].mxu0
  %v560 = vadd.f32 %v430, %v559
  %v561 = vpop.f32.mrb[0].mxu0
  %562 = vmatprep.mubr.f32.mxu0 0.0
  %563 = vmatmul.mubr.f32.gmra.mrb[0].mxu0 %v184
  %v564 = vpop.f32.mrb[0].mxu0
  %v565 = vadd.f32 %v435, %v564
  %v566 = vpop.f32.mrb[0].mxu0
  %567 = vmatprep.mubr.f32.mxu0 0.0
  %568 = vmatmul.mubr.f32.gmra.mrb[0].mxu0 %v187
  %v569 = vpop.f32.mrb[0].mxu0
  %v570 = vadd.f32 %v440, %v569
  %v571 = vpop.f32.mrb[0].mxu0
  %572 = vmatprep.mubr.f32.mxu0 0.0
  %573 = vmatmul.mubr.f32.gmra.mrb[0].mxu0 %v190
  %v574 = vpop.f32.mrb[0].mxu0
  %v575 = vadd.f32 %v445, %v574
  %v576 = vpop.f32.mrb[0].mxu0
  %577 = vmatprep.mubr.f32.mxu0 0.0
  %578 = vmatmul.mubr.f32.gmra.mrb[0].mxu0 %v193
  %v579 = vpop.f32.mrb[0].mxu0
  %v580 = vadd.f32 %v450, %v579
  %v581 = vpop.f32.mrb[0].mxu0
  %582 = vmatprep.mubr.f32.mxu0 0.0
  %583 = vmatmul.mubr.f32.gmra.mrb[0].mxu0 %v196
  %v584 = vpop.f32.mrb[0].mxu0
  %v585 = vadd.f32 %v455, %v584
  %v586 = vpop.f32.mrb[0].mxu0
  %587 = vdwg.mxu0
  %v588 = vmax.f32 %v525, 0.0
  %v589 = vmax.f32 %v530, 0.0
  %v590 = vmax.f32 %v535, 0.0
  %v591 = vmax.f32 %v540, 0.0
  %v592 = vmax.f32 %v545, 0.0
  %v593 = vmax.f32 %v550, 0.0
  %v594 = vmax.f32 %v555, 0.0
  %v595 = vmax.f32 %v560, 0.0
  %v596 = vmax.f32 %v565, 0.0
  %v597 = vmax.f32 %v570, 0.0
  %v598 = vmax.f32 %v575, 0.0
  %v599 = vmax.f32 %v580, 0.0
  %v600 = vmax.f32 %v585, 0.0
  %601 = vst.msk [vmem:[%s3] sm:$0xff] %vm158, %v588
  %602 = vst.msk [vmem:[%s3 + $0x8] sm:$0xff] %vm158, %v589
  %603 = vst.msk [vmem:[%s3 + $0x10] sm:$0xff] %vm158, %v590
  %604 = vst.msk [vmem:[%s3 + $0x18] sm:$0xff] %vm158, %v591
  %605 = vst.msk [vmem:[%s3 + $0x20] sm:$0xff] %vm158, %v592
  %606 = vst.msk [vmem:[%s3 + $0x28] sm:$0xff] %vm158, %v593
  %607 = vst.msk [vmem:[%s3 + $0x30] sm:$0xff] %vm158, %v594
  %608 = vst.msk [vmem:[%s3 + $0x38] sm:$0xff] %vm158, %v595
  %609 = vst.msk [vmem:[%s3 + $0x40] sm:$0xff] %vm158, %v596
  %610 = vst.msk [vmem:[%s3 + $0x48] sm:$0xff] %vm158, %v597
  %611 = vst.msk [vmem:[%s3 + $0x50] sm:$0xff] %vm158, %v598
  %612 = vst.msk [vmem:[%s3 + $0x58] sm:$0xff] %vm158, %v599
  %vm613 = vcmask 517120
  %614 = vst.msk [vmem:[%s3 + $0x60] sm:$0x3] %vm613, %v600
  // Predicated region
  $region14: #{cnn_actor_critic_forward.6} parent=0 // pred_check
    _
  $region15: #{cnn_actor_critic_forward.6} parent=0 // pred_check_branch
    %616 = sbr.rel (0) target = $region17
  $region16: #{cnn_actor_critic_forward.6} parent=0 // pred_region
    _
  $region17: #{cnn_actor_critic_forward.6} parent=0 // pred_fallthru
    _
  // Predicated region
  $region18: #{cnn_actor_critic_forward.6} parent=0 // pred_check
    _
  $region19: #{cnn_actor_critic_forward.6} parent=0 // pred_check_branch
    %618 = sbr.rel (0) target = $region21
  $region20: #{cnn_actor_critic_forward.6} parent=0 // pred_region
    _
  $region21: #{cnn_actor_critic_forward.6} parent=0 // pred_fallthru
    _

// kernel: cnn_actor_critic_forward.7
$region0: #{cnn_actor_critic_forward.7}
  #allocation0 [shape = 'u32[]', space=smem, size = 0x4, offset = 0x4, fixed_abs, tag = 'smem constant byte address 0x4 - core index']
  #allocation1 [shape = 'u32[144,128]{1,0:T(1,128)}', space=vmem, size = 0x12000, scoped, tag = 'internal scratch']
  %s0 = inlined_call_operand.vmem [shape: f32[2,3136], index: 0, kind: input, shape index: {}]
  %s1 = inlined_call_operand.vmem [shape: f32[3136,256], index: 1, kind: input, shape index: {}]
  %s2 = inlined_call_operand.vmem [shape: f32[1,256], index: 2, kind: input, shape index: {}]
  %s3 = inlined_call_operand.vmem [shape: f32[256,448], index: 3, kind: input, shape index: {}]
  %s4 = inlined_call_operand.vmem [shape: f32[1,448], index: 4, kind: input, shape index: {}]
  %s5 = inlined_call_operand.vmem [shape: f32[448,448], index: 5, kind: input, shape index: {}]
  %s6 = inlined_call_operand.vmem [shape: f32[1,448], index: 6, kind: input, shape index: {}]
  %s7 = inlined_call_operand.vmem [shape: f32[448,6], index: 7, kind: input, shape index: {}]
  %s8 = inlined_call_operand.vmem [shape: f32[1,6], index: 8, kind: input, shape index: {}]
  %s9 = inlined_call_operand.vmem [shape: f32[448,448], index: 9, kind: input, shape index: {}]
  %s10 = inlined_call_operand.vmem [shape: f32[1,448], index: 10, kind: input, shape index: {}]
  %s11 = inlined_call_operand.vmem [shape: f32[448,2], index: 11, kind: input, shape index: {}]
  %s12 = inlined_call_operand.vmem [shape: f32[1,2], index: 12, kind: input, shape index: {}]
  %s13 = inlined_call_operand.hbm [shape: f32[2,6], index: 13, kind: output, shape index: {0}]
  %s14 = inlined_call_operand.vmem [shape: f32[2,1], index: 14, kind: output, shape index: {1}]
  %s15 = inlined_call_operand.vmem [shape: f32[2,1], index: 15, kind: output, shape index: {2}]
  %16 = xla_tuple %s13, %s14, %s15
  %s17 = sld [smem:[#allocation0]]
  $region78: #{cnn_actor_critic_forward.7} parent=0
    _
  %s19 = ssub.s32 1, %s17
  %s20 = scalar_select 0, %s19, %s17
  $region1: #{cnn_actor_critic_forward.7} parent=0
    #allocation2 [shape = 'u8[1024]{0}', space=vmem, size = 0x400, scoped, tag = 'output window, operand 0, single buffered']
    #allocation3 [shape = 's32[1]{0}', space=sflag, size = 0x4, scoped, tag = 'scoped memory for cnn_actor_critic_forward.7']
    %21 = vsyncpa [#allocation3], 0
    // Predicated region
    $region2: #{cnn_actor_critic_forward.7} parent=1 // pred_check
      _
    $region3: #{cnn_actor_critic_forward.7} parent=1 // pred_check_branch
      %23 = sbr.rel (0) target = $region5
    $region4: #{cnn_actor_critic_forward.7} parent=1 // pred_region
      _
    $region5: #{cnn_actor_critic_forward.7} parent=1 // pred_fallthru
      _
    // Predicated region
    $region6: #{cnn_actor_critic_forward.7} parent=1 // pred_check
      _
    $region7: #{cnn_actor_critic_forward.7} parent=1 // pred_check_branch
      %25 = sbr.rel (0) target = $region9
    $region8: #{cnn_actor_critic_forward.7} parent=1 // pred_region
      _
    $region9: #{cnn_actor_critic_forward.7} parent=1 // pred_fallthru
      _
    // Predicated region
    $region10: #{cnn_actor_critic_forward.7} parent=1 // pred_check
      _
    $region11: #{cnn_actor_critic_forward.7} parent=1 // pred_check_branch
      %27 = sbr.rel (0) target = $region13
    $region12: #{cnn_actor_critic_forward.7} parent=1 // pred_region
      _
    $region13: #{cnn_actor_critic_forward.7} parent=1 // pred_fallthru
      _
    // Predicated region
    $region14: #{cnn_actor_critic_forward.7} parent=1 // pred_check
      _
    $region15: #{cnn_actor_critic_forward.7} parent=1 // pred_check_branch
      %29 = sbr.rel (0) target = $region17
    $region16: #{cnn_actor_critic_forward.7} parent=1 // pred_region
      _
    $region17: #{cnn_actor_critic_forward.7} parent=1 // pred_fallthru
      _
    // Predicated region
    $region18: #{cnn_actor_critic_forward.7} parent=1 // pred_check
      _
    $region19: #{cnn_actor_critic_forward.7} parent=1 // pred_check_branch
      %31 = sbr.rel (0) target = $region21
    $region20: #{cnn_actor_critic_forward.7} parent=1 // pred_region
      _
    $region21: #{cnn_actor_critic_forward.7} parent=1 // pred_fallthru
      _
    // Predicated region
    $region22: #{cnn_actor_critic_forward.7} parent=1 // pred_check
      _
    $region23: #{cnn_actor_critic_forward.7} parent=1 // pred_check_branch
      %33 = sbr.rel (0) target = $region25
    $region24: #{cnn_actor_critic_forward.7} parent=1 // pred_region
      _
    $region25: #{cnn_actor_critic_forward.7} parent=1 // pred_fallthru
      _
    // Predicated region
    $region26: #{cnn_actor_critic_forward.7} parent=1 // pred_check
      _
    $region27: #{cnn_actor_critic_forward.7} parent=1 // pred_check_branch
      %35 = sbr.rel (0) target = $region29
    $region28: #{cnn_actor_critic_forward.7} parent=1 // pred_region
      _
    $region29: #{cnn_actor_critic_forward.7} parent=1 // pred_fallthru
      _
    // Predicated region
    $region30: #{cnn_actor_critic_forward.7} parent=1 // pred_check
      _
    $region31: #{cnn_actor_critic_forward.7} parent=1 // pred_check_branch
      %37 = sbr.rel (0) target = $region33
    $region32: #{cnn_actor_critic_forward.7} parent=1 // pred_region
      _
    $region33: #{cnn_actor_critic_forward.7} parent=1 // pred_fallthru
      _
    // Predicated region
    $region34: #{cnn_actor_critic_forward.7} parent=1 // pred_check
      _
    $region35: #{cnn_actor_critic_forward.7} parent=1 // pred_check_branch
      %39 = sbr.rel (0) target = $region37
    $region36: #{cnn_actor_critic_forward.7} parent=1 // pred_region
      _
    $region37: #{cnn_actor_critic_forward.7} parent=1 // pred_fallthru
      _
    // Predicated region
    $region38: #{cnn_actor_critic_forward.7} parent=1 // pred_check
      _
    $region39: #{cnn_actor_critic_forward.7} parent=1 // pred_check_branch
      %41 = sbr.rel (0) target = $region41
    $region40: #{cnn_actor_critic_forward.7} parent=1 // pred_region
      _
    $region41: #{cnn_actor_critic_forward.7} parent=1 // pred_fallthru
      _
    // Predicated region
    $region42: #{cnn_actor_critic_forward.7} parent=1 // pred_check
      _
    $region43: #{cnn_actor_critic_forward.7} parent=1 // pred_check_branch
      %43 = sbr.rel (0) target = $region45
    $region44: #{cnn_actor_critic_forward.7} parent=1 // pred_region
      _
    $region45: #{cnn_actor_critic_forward.7} parent=1 // pred_fallthru
      _
    // Predicated region
    $region46: #{cnn_actor_critic_forward.7} parent=1 // pred_check
      _
    $region47: #{cnn_actor_critic_forward.7} parent=1 // pred_check_branch
      %45 = sbr.rel (0) target = $region49
    $region48: #{cnn_actor_critic_forward.7} parent=1 // pred_region
      _
    $region49: #{cnn_actor_critic_forward.7} parent=1 // pred_fallthru
      _
    // Predicated region
    $region50: #{cnn_actor_critic_forward.7} parent=1 // pred_check
      _
    $region51: #{cnn_actor_critic_forward.7} parent=1 // pred_check_branch
      %47 = sbr.rel (0) target = $region53
    $region52: #{cnn_actor_critic_forward.7} parent=1 // pred_region
      _
    $region53: #{cnn_actor_critic_forward.7} parent=1 // pred_fallthru
      _
    %v48 = vld [vmem:[%s0] sm:$0xff]
    %v49 = vld [vmem:[%s0 + $0x8] sm:$0xff]
    %v50 = vld [vmem:[%s0 + $0x10] sm:$0xff]
    %v51 = vld [vmem:[%s0 + $0x18] sm:$0xff]
    %v52 = vld [vmem:[%s0 + $0x20] sm:$0xff]
    %v53 = vld [vmem:[%s0 + $0x28] sm:$0xff]
    %v54 = vld [vmem:[%s0 + $0x30] sm:$0x3]
    %v55 = vld [vmem:[%s1] sm:$0xff]
    %v56 = vld [vmem:[%s1 + $0x8] sm:$0xff]
    %v57 = vld [vmem:[%s1 + $0x10] sm:$0xff]
    %v58 = vld [vmem:[%s1 + $0x18] sm:$0xff]
    %v59 = vld [vmem:[%s1 + $0x20] sm:$0xff]
    %v60 = vld [vmem:[%s1 + $0x28] sm:$0xff]
    %v61 = vld [vmem:[%s1 + $0x30] sm:$0xff]
    %v62 = vld [vmem:[%s1 + $0x38] sm:$0xff]
    %v63 = vld [vmem:[%s1 + $0x40] sm:$0xff]
    %v64 = vld [vmem:[%s1 + $0x48] sm:$0xff]
    %v65 = vld [vmem:[%s1 + $0x50] sm:$0xff]
    %v66 = vld [vmem:[%s1 + $0x58] sm:$0xff]
    %v67 = vld [vmem:[%s1 + $0x60] sm:$0xff]
    %v68 = vld [vmem:[%s1 + $0x68] sm:$0xff]
    %v69 = vld [vmem:[%s1 + $0x70] sm:$0xff]
    %v70 = vld [vmem:[%s1 + $0x78] sm:$0xff]
    %v71 = vld [vmem:[%s1 + $0x80] sm:$0xff]
    %v72 = vld [vmem:[%s1 + $0x88] sm:$0xff]
    %v73 = vld [vmem:[%s1 + $0x90] sm:$0xff]
    %v74 = vld [vmem:[%s1 + $0x98] sm:$0xff]
    %v75 = vld [vmem:[%s1 + $0xa0] sm:$0xff]
    %v76 = vld [vmem:[%s1 + $0xa8] sm:$0xff]
    %v77 = vld [vmem:[%s1 + $0xb0] sm:$0xff]
    %v78 = vld [vmem:[%s1 + $0xb8] sm:$0xff]
    %v79 = vld [vmem:[%s1 + $0xc0] sm:$0xff]
    %v80 = vld [vmem:[%s1 + $0xc8] sm:$0xff]
    %v81 = vld [vmem:[%s1 + $0xd0] sm:$0xff]
    %v82 = vld [vmem:[%s1 + $0xd8] sm:$0xff]
    %v83 = vld [vmem:[%s1 + $0xe0] sm:$0xff]
    %v84 = vld [vmem:[%s1 + $0xe8] sm:$0xff]
    %v85 = vld [vmem:[%s1 + $0xf0] sm:$0xff]
    %v86 = vld [vmem:[%s1 + $0xf8] sm:$0xff]
    %v87 = vld [vmem:[%s1 + $0x100] sm:$0xff]
    %v88 = vld [vmem:[%s1 + $0x108] sm:$0xff]
    %v89 = vld [vmem:[%s1 + $0x110] sm:$0xff]
    %v90 = vld [vmem:[%s1 + $0x118] sm:$0xff]
    %v91 = vld [vmem:[%s1 + $0x120] sm:$0xff]
    %v92 = vld [vmem:[%s1 + $0x128] sm:$0xff]
    %v93 = vld [vmem:[%s1 + $0x130] sm:$0xff]
    %v94 = vld [vmem:[%s1 + $0x138] sm:$0xff]
    %v95 = vld [vmem:[%s1 + $0x140] sm:$0xff]
    %v96 = vld [vmem:[%s1 + $0x148] sm:$0xff]
    %v97 = vld [vmem:[%s1 + $0x150] sm:$0xff]
    %v98 = vld [vmem:[%s1 + $0x158] sm:$0xff]
    %v99 = vld [vmem:[%s1 + $0x160] sm:$0xff]
    %v100 = vld [vmem:[%s1 + $0x168] sm:$0xff]
    %v101 = vld [vmem:[%s1 + $0x170] sm:$0xff]
    %v102 = vld [vmem:[%s1 + $0x178] sm:$0xff]
    %v103 = vld [vmem:[%s1 + $0x180] sm:$0xff]
    %v104 = vld [vmem:[%s1 + $0x188] sm:$0xff]
    %v105 = vld [vmem:[%s1 + $0x190] sm:$0xff]
    %v106 = vld [vmem:[%s1 + $0x198] sm:$0xff]
    %v107 = vld [vmem:[%s1 + $0x1a0] sm:$0xff]
    %v108 = vld [vmem:[%s1 + $0x1a8] sm:$0xff]
    %v109 = vld [vmem:[%s1 + $0x1b0] sm:$0xff]
    %v110 = vld [vmem:[%s1 + $0x1b8] sm:$0xff]
    %v111 = vld [vmem:[%s1 + $0x1c0] sm:$0xff]
    %v112 = vld [vmem:[%s1 + $0x1c8] sm:$0xff]
    %v113 = vld [vmem:[%s1 + $0x1d0] sm:$0xff]
    %v114 = vld [vmem:[%s1 + $0x1d8] sm:$0xff]
    %v115 = vld [vmem:[%s1 + $0x1e0] sm:$0xff]
    %v116 = vld [vmem:[%s1 + $0x1e8] sm:$0xff]
    %v117 = vld [vmem:[%s1 + $0x1f0] sm:$0xff]
    %v118 = vld [vmem:[%s1 + $0x1f8] sm:$0xff]
    %v119 = vld [vmem:[%s1 + $0x200] sm:$0xff]
    %v120 = vld [vmem:[%s1 + $0x208] sm:$0xff]
    %v121 = vld [vmem:[%s1 + $0x210] sm:$0xff]
    %v122 = vld [vmem:[%s1 + $0x218] sm:$0xff]
    %v123 = vld [vmem:[%s1 + $0x220] sm:$0xff]
    %v124 = vld [vmem:[%s1 + $0x228] sm:$0xff]
    %v125 = vld [vmem:[%s1 + $0x230] sm:$0xff]
    %v126 = vld [vmem:[%s1 + $0x238] sm:$0xff]
    %v127 = vld [vmem:[%s1 + $0x240] sm:$0xff]
    %v128 = vld [vmem:[%s1 + $0x248] sm:$0xff]
    %v129 = vld [vmem:[%s1 + $0x250] sm:$0xff]
    %v130 = vld [vmem:[%s1 + $0x258] sm:$0xff]
    %v131 = vld [vmem:[%s1 + $0x260] sm:$0xff]
    %v132 = vld [vmem:[%s1 + $0x268] sm:$0xff]
    %v133 = vld [vmem:[%s1 + $0x270] sm:$0xff]
    %v134 = vld [vmem:[%s1 + $0x278] sm:$0xff]
    %v135 = vld [vmem:[%s1 + $0x280] sm:$0xff]
    %v136 = vld [vmem:[%s1 + $0x288] sm:$0xff]
    %v137 = vld [vmem:[%s1 + $0x290] sm:$0xff]
    %v138 = vld [vmem:[%s1 + $0x298] sm:$0xff]
    %v139 = vld [vmem:[%s1 + $0x2a0] sm:$0xff]
    %v140 = vld [vmem:[%s1 + $0x2a8] sm:$0xff]
    %v141 = vld [vmem:[%s1 + $0x2b0] sm:$0xff]
    %v142 = vld [vmem:[%s1 + $0x2b8] sm:$0xff]
    %v143 = vld [vmem:[%s1 + $0x2c0] sm:$0xff]
    %v144 = vld [vmem:[%s1 + $0x2c8] sm:$0xff]
    %v145 = vld [vmem:[%s1 + $0x2d0] sm:$0xff]
    %v146 = vld [vmem:[%s1 + $0x2d8] sm:$0xff]
    %v147 = vld [vmem:[%s1 + $0x2e0] sm:$0xff]
    %v148 = vld [vmem:[%s1 + $0x2e8] sm:$0xff]
    %v149 = vld [vmem:[%s1 + $0x2f0] sm:$0xff]
    %v150 = vld [vmem:[%s1 + $0x2f8] sm:$0xff]
    %v151 = vld [vmem:[%s1 + $0x300] sm:$0xff]
    %v152 = vld [vmem:[%s1 + $0x308] sm:$0xff]
    %v153 = vld [vmem:[%s1 + $0x310] sm:$0xff]
    %v154 = vld [vmem:[%s1 + $0x318] sm:$0xff]
    %v155 = vld [vmem:[%s1 + $0x320] sm:$0xff]
    %v156 = vld [vmem:[%s1 + $0x328] sm:$0xff]
    %v157 = vld [vmem:[%s1 + $0x330] sm:$0xff]
    %v158 = vld [vmem:[%s1 + $0x338] sm:$0xff]
    %v159 = vld [vmem:[%s1 + $0x340] sm:$0xff]
    %v160 = vld [vmem:[%s1 + $0x348] sm:$0xff]
    %v161 = vld [vmem:[%s1 + $0x350] sm:$0xff]
    %v162 = vld [vmem:[%s1 + $0x358] sm:$0xff]
    %v163 = vld [vmem:[%s1 + $0x360] sm:$0xff]
    %v164 = vld [vmem:[%s1 + $0x368] sm:$0xff]
    %v165 = vld [vmem:[%s1 + $0x370] sm:$0xff]
    %v166 = vld [vmem:[%s1 + $0x378] sm:$0xff]
    %v167 = vld [vmem:[%s1 + $0x380] sm:$0xff]
    %v168 = vld [vmem:[%s1 + $0x388] sm:$0xff]
    %v169 = vld [vmem:[%s1 + $0x390] sm:$0xff]
    %v170 = vld [vmem:[%s1 + $0x398] sm:$0xff]
    %v171 = vld [vmem:[%s1 + $0x3a0] sm:$0xff]
    %v172 = vld [vmem:[%s1 + $0x3a8] sm:$0xff]
    %v173 = vld [vmem:[%s1 + $0x3b0] sm:$0xff]
    %v174 = vld [vmem:[%s1 + $0x3b8] sm:$0xff]
    %v175 = vld [vmem:[%s1 + $0x3c0] sm:$0xff]
    %v176 = vld [vmem:[%s1 + $0x3c8] sm:$0xff]
    %v177 = vld [vmem:[%s1 + $0x3d0] sm:$0xff]
    %v178 = vld [vmem:[%s1 + $0x3d8] sm:$0xff]
    %v179 = vld [vmem:[%s1 + $0x3e0] sm:$0xff]
    %v180 = vld [vmem:[%s1 + $0x3e8] sm:$0xff]
    %v181 = vld [vmem:[%s1 + $0x3f0] sm:$0xff]
    %v182 = vld [vmem:[%s1 + $0x3f8] sm:$0xff]
    %v183 = vld [vmem:[%s1 + $0x400] sm:$0xff]
    %v184 = vld [vmem:[%s1 + $0x408] sm:$0xff]
    %v185 = vld [vmem:[%s1 + $0x410] sm:$0xff]
    %v186 = vld [vmem:[%s1 + $0x418] sm:$0xff]
    %v187 = vld [vmem:[%s1 + $0x420] sm:$0xff]
    %v188 = vld [vmem:[%s1 + $0x428] sm:$0xff]
    %v189 = vld [vmem:[%s1 + $0x430] sm:$0xff]
    %v190 = vld [vmem:[%s1 + $0x438] sm:$0xff]
    %v191 = vld [vmem:[%s1 + $0x440] sm:$0xff]
    %v192 = vld [vmem:[%s1 + $0x448] sm:$0xff]
    %v193 = vld [vmem:[%s1 + $0x450] sm:$0xff]
    %v194 = vld [vmem:[%s1 + $0x458] sm:$0xff]
    %v195 = vld [vmem:[%s1 + $0x460] sm:$0xff]
    %v196 = vld [vmem:[%s1 + $0x468] sm:$0xff]
    %v197 = vld [vmem:[%s1 + $0x470] sm:$0xff]
    %v198 = vld [vmem:[%s1 + $0x478] sm:$0xff]
    %v199 = vld [vmem:[%s1 + $0x480] sm:$0xff]
    %v200 = vld [vmem:[%s1 + $0x488] sm:$0xff]
    %v201 = vld [vmem:[%s1 + $0x490] sm:$0xff]
    %v202 = vld [vmem:[%s1 + $0x498] sm:$0xff]
    %v203 = vld [vmem:[%s1 + $0x4a0] sm:$0xff]
    %v204 = vld [vmem:[%s1 + $0x4a8] sm:$0xff]
    %v205 = vld [vmem:[%s1 + $0x4b0] sm:$0xff]
    %v206 = vld [vmem:[%s1 + $0x4b8] sm:$0xff]
    %v207 = vld [vmem:[%s1 + $0x4c0] sm:$0xff]
    %v208 = vld [vmem:[%s1 + $0x4c8] sm:$0xff]
    %v209 = vld [vmem:[%s1 + $0x4d0] sm:$0xff]
    %v210 = vld [vmem:[%s1 + $0x4d8] sm:$0xff]
    %v211 = vld [vmem:[%s1 + $0x4e0] sm:$0xff]
    %v212 = vld [vmem:[%s1 + $0x4e8] sm:$0xff]
    %v213 = vld [vmem:[%s1 + $0x4f0] sm:$0xff]
    %v214 = vld [vmem:[%s1 + $0x4f8] sm:$0xff]
    %v215 = vld [vmem:[%s1 + $0x500] sm:$0xff]
    %v216 = vld [vmem:[%s1 + $0x508] sm:$0xff]
    %v217 = vld [vmem:[%s1 + $0x510] sm:$0xff]
    %v218 = vld [vmem:[%s1 + $0x518] sm:$0xff]
    %v219 = vld [vmem:[%s1 + $0x520] sm:$0xff]
    %v220 = vld [vmem:[%s1 + $0x528] sm:$0xff]
    %v221 = vld [vmem:[%s1 + $0x530] sm:$0xff]
    %v222 = vld [vmem:[%s1 + $0x538] sm:$0xff]
    %v223 = vld [vmem:[%s1 + $0x540] sm:$0xff]
    %v224 = vld [vmem:[%s1 + $0x548] sm:$0xff]
    %v225 = vld [vmem:[%s1 + $0x550] sm:$0xff]
    %v226 = vld [vmem:[%s1 + $0x558] sm:$0xff]
    %v227 = vld [vmem:[%s1 + $0x560] sm:$0xff]
    %v228 = vld [vmem:[%s1 + $0x568] sm:$0xff]
    %v229 = vld [vmem:[%s1 + $0x570] sm:$0xff]
    %v230 = vld [vmem:[%s1 + $0x578] sm:$0xff]
    %v231 = vld [vmem:[%s1 + $0x580] sm:$0xff]
    %v232 = vld [vmem:[%s1 + $0x588] sm:$0xff]
    %v233 = vld [vmem:[%s1 + $0x590] sm:$0xff]
    %v234 = vld [vmem:[%s1 + $0x598] sm:$0xff]
    %v235 = vld [vmem:[%s1 + $0x5a0] sm:$0xff]
    %v236 = vld [vmem:[%s1 + $0x5a8] sm:$0xff]
    %v237 = vld [vmem:[%s1 + $0x5b0] sm:$0xff]
    %v238 = vld [vmem:[%s1 + $0x5b8] sm:$0xff]
    %v239 = vld [vmem:[%s1 + $0x5c0] sm:$0xff]
    %v240 = vld [vmem:[%s1 + $0x5c8] sm:$0xff]
    %v241 = vld [vmem:[%s1 + $0x5d0] sm:$0xff]
    %v242 = vld [vmem:[%s1 + $0x5d8] sm:$0xff]
    %v243 = vld [vmem:[%s1 + $0x5e0] sm:$0xff]
    %v244 = vld [vmem:[%s1 + $0x5e8] sm:$0xff]
    %v245 = vld [vmem:[%s1 + $0x5f0] sm:$0xff]
    %v246 = vld [vmem:[%s1 + $0x5f8] sm:$0xff]
    %v247 = vld [vmem:[%s1 + $0x600] sm:$0xff]
    %v248 = vld [vmem:[%s1 + $0x608] sm:$0xff]
    %v249 = vld [vmem:[%s1 + $0x610] sm:$0xff]
    %v250 = vld [vmem:[%s1 + $0x618] sm:$0xff]
    %v251 = vld [vmem:[%s1 + $0x620] sm:$0xff]
    %v252 = vld [vmem:[%s1 + $0x628] sm:$0xff]
    %v253 = vld [vmem:[%s1 + $0x630] sm:$0xff]
    %v254 = vld [vmem:[%s1 + $0x638] sm:$0xff]
    %v255 = vld [vmem:[%s1 + $0x640] sm:$0xff]
    %v256 = vld [vmem:[%s1 + $0x648] sm:$0xff]
    %v257 = vld [vmem:[%s1 + $0x650] sm:$0xff]
    %v258 = vld [vmem:[%s1 + $0x658] sm:$0xff]
    %v259 = vld [vmem:[%s1 + $0x660] sm:$0xff]
    %v260 = vld [vmem:[%s1 + $0x668] sm:$0xff]
    %v261 = vld [vmem:[%s1 + $0x670] sm:$0xff]
    %v262 = vld [vmem:[%s1 + $0x678] sm:$0xff]
    %v263 = vld [vmem:[%s1 + $0x680] sm:$0xff]
    %v264 = vld [vmem:[%s1 + $0x688] sm:$0xff]
    %v265 = vld [vmem:[%s1 + $0x690] sm:$0xff]
    %v266 = vld [vmem:[%s1 + $0x698] sm:$0xff]
    %v267 = vld [vmem:[%s1 + $0x6a0] sm:$0xff]
    %v268 = vld [vmem:[%s1 + $0x6a8] sm:$0xff]
    %v269 = vld [vmem:[%s1 + $0x6b0] sm:$0xff]
    %v270 = vld [vmem:[%s1 + $0x6b8] sm:$0xff]
    %v271 = vld [vmem:[%s1 + $0x6c0] sm:$0xff]
    %v272 = vld [vmem:[%s1 + $0x6c8] sm:$0xff]
    %v273 = vld [vmem:[%s1 + $0x6d0] sm:$0xff]
    %v274 = vld [vmem:[%s1 + $0x6d8] sm:$0xff]
    %v275 = vld [vmem:[%s1 + $0x6e0] sm:$0xff]
    %v276 = vld [vmem:[%s1 + $0x6e8] sm:$0xff]
    %v277 = vld [vmem:[%s1 + $0x6f0] sm:$0xff]
    %v278 = vld [vmem:[%s1 + $0x6f8] sm:$0xff]
    %v279 = vld [vmem:[%s1 + $0x700] sm:$0xff]
    %v280 = vld [vmem:[%s1 + $0x708] sm:$0xff]
    %v281 = vld [vmem:[%s1 + $0x710] sm:$0xff]
    %v282 = vld [vmem:[%s1 + $0x718] sm:$0xff]
    %v283 = vld [vmem:[%s1 + $0x720] sm:$0xff]
    %v284 = vld [vmem:[%s1 + $0x728] sm:$0xff]
    %v285 = vld [vmem:[%s1 + $0x730] sm:$0xff]
    %v286 = vld [vmem:[%s1 + $0x738] sm:$0xff]
    %v287 = vld [vmem:[%s1 + $0x740] sm:$0xff]
    %v288 = vld [vmem:[%s1 + $0x748] sm:$0xff]
    %v289 = vld [vmem:[%s1 + $0x750] sm:$0xff]
    %v290 = vld [vmem:[%s1 + $0x758] sm:$0xff]
    %v291 = vld [vmem:[%s1 + $0x760] sm:$0xff]
    %v292 = vld [vmem:[%s1 + $0x768] sm:$0xff]
    %v293 = vld [vmem:[%s1 + $0x770] sm:$0xff]
    %v294 = vld [vmem:[%s1 + $0x778] sm:$0xff]
    %v295 = vld [vmem:[%s1 + $0x780] sm:$0xff]
    %v296 = vld [vmem:[%s1 + $0x788] sm:$0xff]
    %v297 = vld [vmem:[%s1 + $0x790] sm:$0xff]
    %v298 = vld [vmem:[%s1 + $0x798] sm:$0xff]
    %v299 = vld [vmem:[%s1 + $0x7a0] sm:$0xff]
    %v300 = vld [vmem:[%s1 + $0x7a8] sm:$0xff]
    %v301 = vld [vmem:[%s1 + $0x7b0] sm:$0xff]
    %v302 = vld [vmem:[%s1 + $0x7b8] sm:$0xff]
    %v303 = vld [vmem:[%s1 + $0x7c0] sm:$0xff]
    %v304 = vld [vmem:[%s1 + $0x7c8] sm:$0xff]
    %v305 = vld [vmem:[%s1 + $0x7d0] sm:$0xff]
    %v306 = vld [vmem:[%s1 + $0x7d8] sm:$0xff]
    %v307 = vld [vmem:[%s1 + $0x7e0] sm:$0xff]
    %v308 = vld [vmem:[%s1 + $0x7e8] sm:$0xff]
    %v309 = vld [vmem:[%s1 + $0x7f0] sm:$0xff]
    %v310 = vld [vmem:[%s1 + $0x7f8] sm:$0xff]
    %v311 = vld [vmem:[%s1 + $0x800] sm:$0xff]
    %v312 = vld [vmem:[%s1 + $0x808] sm:$0xff]
    %v313 = vld [vmem:[%s1 + $0x810] sm:$0xff]
    %v314 = vld [vmem:[%s1 + $0x818] sm:$0xff]
    %v315 = vld [vmem:[%s1 + $0x820] sm:$0xff]
    %v316 = vld [vmem:[%s1 + $0x828] sm:$0xff]
    %v317 = vld [vmem:[%s1 + $0x830] sm:$0xff]
    %v318 = vld [vmem:[%s1 + $0x838] sm:$0xff]
    %v319 = vld [vmem:[%s1 + $0x840] sm:$0xff]
    %v320 = vld [vmem:[%s1 + $0x848] sm:$0xff]
    %v321 = vld [vmem:[%s1 + $0x850] sm:$0xff]
    %v322 = vld [vmem:[%s1 + $0x858] sm:$0xff]
    %v323 = vld [vmem:[%s1 + $0x860] sm:$0xff]
    %v324 = vld [vmem:[%s1 + $0x868] sm:$0xff]
    %v325 = vld [vmem:[%s1 + $0x870] sm:$0xff]
    %v326 = vld [vmem:[%s1 + $0x878] sm:$0xff]
    %v327 = vld [vmem:[%s1 + $0x880] sm:$0xff]
    %v328 = vld [vmem:[%s1 + $0x888] sm:$0xff]
    %v329 = vld [vmem:[%s1 + $0x890] sm:$0xff]
    %v330 = vld [vmem:[%s1 + $0x898] sm:$0xff]
    %v331 = vld [vmem:[%s1 + $0x8a0] sm:$0xff]
    %v332 = vld [vmem:[%s1 + $0x8a8] sm:$0xff]
    %v333 = vld [vmem:[%s1 + $0x8b0] sm:$0xff]
    %v334 = vld [vmem:[%s1 + $0x8b8] sm:$0xff]
    %v335 = vld [vmem:[%s1 + $0x8c0] sm:$0xff]
    %v336 = vld [vmem:[%s1 + $0x8c8] sm:$0xff]
    %v337 = vld [vmem:[%s1 + $0x8d0] sm:$0xff]
    %v338 = vld [vmem:[%s1 + $0x8d8] sm:$0xff]
    %v339 = vld [vmem:[%s1 + $0x8e0] sm:$0xff]
    %v340 = vld [vmem:[%s1 + $0x8e8] sm:$0xff]
    %v341 = vld [vmem:[%s1 + $0x8f0] sm:$0xff]
    %v342 = vld [vmem:[%s1 + $0x8f8] sm:$0xff]
    %v343 = vld [vmem:[%s1 + $0x900] sm:$0xff]
    %v344 = vld [vmem:[%s1 + $0x908] sm:$0xff]
    %v345 = vld [vmem:[%s1 + $0x910] sm:$0xff]
    %v346 = vld [vmem:[%s1 + $0x918] sm:$0xff]
    %v347 = vld [vmem:[%s1 + $0x920] sm:$0xff]
    %v348 = vld [vmem:[%s1 + $0x928] sm:$0xff]
    %v349 = vld [vmem:[%s1 + $0x930] sm:$0xff]
    %v350 = vld [vmem:[%s1 + $0x938] sm:$0xff]
    %v351 = vld [vmem:[%s1 + $0x940] sm:$0xff]
    %v352 = vld [vmem:[%s1 + $0x948] sm:$0xff]
    %v353 = vld [vmem:[%s1 + $0x950] sm:$0xff]
    %v354 = vld [vmem:[%s1 + $0x958] sm:$0xff]
    %v355 = vld [vmem:[%s1 + $0x960] sm:$0xff]
    %v356 = vld [vmem:[%s1 + $0x968] sm:$0xff]
    %v357 = vld [vmem:[%s1 + $0x970] sm:$0xff]
    %v358 = vld [vmem:[%s1 + $0x978] sm:$0xff]
    %v359 = vld [vmem:[%s1 + $0x980] sm:$0xff]
    %v360 = vld [vmem:[%s1 + $0x988] sm:$0xff]
    %v361 = vld [vmem:[%s1 + $0x990] sm:$0xff]
    %v362 = vld [vmem:[%s1 + $0x998] sm:$0xff]
    %v363 = vld [vmem:[%s1 + $0x9a0] sm:$0xff]
    %v364 = vld [vmem:[%s1 + $0x9a8] sm:$0xff]
    %v365 = vld [vmem:[%s1 + $0x9b0] sm:$0xff]
    %v366 = vld [vmem:[%s1 + $0x9b8] sm:$0xff]
    %v367 = vld [vmem:[%s1 + $0x9c0] sm:$0xff]
    %v368 = vld [vmem:[%s1 + $0x9c8] sm:$0xff]
    %v369 = vld [vmem:[%s1 + $0x9d0] sm:$0xff]
    %v370 = vld [vmem:[%s1 + $0x9d8] sm:$0xff]
    %v371 = vld [vmem:[%s1 + $0x9e0] sm:$0xff]
    %v372 = vld [vmem:[%s1 + $0x9e8] sm:$0xff]
    %v373 = vld [vmem:[%s1 + $0x9f0] sm:$0xff]
    %v374 = vld [vmem:[%s1 + $0x9f8] sm:$0xff]
    %v375 = vld [vmem:[%s1 + $0xa00] sm:$0xff]
    %v376 = vld [vmem:[%s1 + $0xa08] sm:$0xff]
    %v377 = vld [vmem:[%s1 + $0xa10] sm:$0xff]
    %v378 = vld [vmem:[%s1 + $0xa18] sm:$0xff]
    %v379 = vld [vmem:[%s1 + $0xa20] sm:$0xff]
    %v380 = vld [vmem:[%s1 + $0xa28] sm:$0xff]
    %v381 = vld [vmem:[%s1 + $0xa30] sm:$0xff]
    %v382 = vld [vmem:[%s1 + $0xa38] sm:$0xff]
    %v383 = vld [vmem:[%s1 + $0xa40] sm:$0xff]
    %v384 = vld [vmem:[%s1 + $0xa48] sm:$0xff]
    %v385 = vld [vmem:[%s1 + $0xa50] sm:$0xff]
    %v386 = vld [vmem:[%s1 + $0xa58] sm:$0xff]
    %v387 = vld [vmem:[%s1 + $0xa60] sm:$0xff]
    %v388 = vld [vmem:[%s1 + $0xa68] sm:$0xff]
    %v389 = vld [vmem:[%s1 + $0xa70] sm:$0xff]
    %v390 = vld [vmem:[%s1 + $0xa78] sm:$0xff]
    %v391 = vld [vmem:[%s1 + $0xa80] sm:$0xff]
    %v392 = vld [vmem:[%s1 + $0xa88] sm:$0xff]
    %v393 = vld [vmem:[%s1 + $0xa90] sm:$0xff]
    %v394 = vld [vmem:[%s1 + $0xa98] sm:$0xff]
    %v395 = vld [vmem:[%s1 + $0xaa0] sm:$0xff]
    %v396 = vld [vmem:[%s1 + $0xaa8] sm:$0xff]
    %v397 = vld [vmem:[%s1 + $0xab0] sm:$0xff]
    %v398 = vld [vmem:[%s1 + $0xab8] sm:$0xff]
    %v399 = vld [vmem:[%s1 + $0xac0] sm:$0xff]
    %v400 = vld [vmem:[%s1 + $0xac8] sm:$0xff]
    %v401 = vld [vmem:[%s1 + $0xad0] sm:$0xff]
    %v402 = vld [vmem:[%s1 + $0xad8] sm:$0xff]
    %v403 = vld [vmem:[%s1 + $0xae0] sm:$0xff]
    %v404 = vld [vmem:[%s1 + $0xae8] sm:$0xff]
    %v405 = vld [vmem:[%s1 + $0xaf0] sm:$0xff]
    %v406 = vld [vmem:[%s1 + $0xaf8] sm:$0xff]
    %v407 = vld [vmem:[%s1 + $0xb00] sm:$0xff]
    %v408 = vld [vmem:[%s1 + $0xb08] sm:$0xff]
    %v409 = vld [vmem:[%s1 + $0xb10] sm:$0xff]
    %v410 = vld [vmem:[%s1 + $0xb18] sm:$0xff]
    %v411 = vld [vmem:[%s1 + $0xb20] sm:$0xff]
    %v412 = vld [vmem:[%s1 + $0xb28] sm:$0xff]
    %v413 = vld [vmem:[%s1 + $0xb30] sm:$0xff]
    %v414 = vld [vmem:[%s1 + $0xb38] sm:$0xff]
    %v415 = vld [vmem:[%s1 + $0xb40] sm:$0xff]
    %v416 = vld [vmem:[%s1 + $0xb48] sm:$0xff]
    %v417 = vld [vmem:[%s1 + $0xb50] sm:$0xff]
    %v418 = vld [vmem:[%s1 + $0xb58] sm:$0xff]
    %v419 = vld [vmem:[%s1 + $0xb60] sm:$0xff]
    %v420 = vld [vmem:[%s1 + $0xb68] sm:$0xff]
    %v421 = vld [vmem:[%s1 + $0xb70] sm:$0xff]
    %v422 = vld [vmem:[%s1 + $0xb78] sm:$0xff]
    %v423 = vld [vmem:[%s1 + $0xb80] sm:$0xff]
    %v424 = vld [vmem:[%s1 + $0xb88] sm:$0xff]
    %v425 = vld [vmem:[%s1 + $0xb90] sm:$0xff]
    %v426 = vld [vmem:[%s1 + $0xb98] sm:$0xff]
    %v427 = vld [vmem:[%s1 + $0xba0] sm:$0xff]
    %v428 = vld [vmem:[%s1 + $0xba8] sm:$0xff]
    %v429 = vld [vmem:[%s1 + $0xbb0] sm:$0xff]
    %v430 = vld [vmem:[%s1 + $0xbb8] sm:$0xff]
    %v431 = vld [vmem:[%s1 + $0xbc0] sm:$0xff]
    %v432 = vld [vmem:[%s1 + $0xbc8] sm:$0xff]
    %v433 = vld [vmem:[%s1 + $0xbd0] sm:$0xff]
    %v434 = vld [vmem:[%s1 + $0xbd8] sm:$0xff]
    %v435 = vld [vmem:[%s1 + $0xbe0] sm:$0xff]
    %v436 = vld [vmem:[%s1 + $0xbe8] sm:$0xff]
    %v437 = vld [vmem:[%s1 + $0xbf0] sm:$0xff]
    %v438 = vld [vmem:[%s1 + $0xbf8] sm:$0xff]
    %v439 = vld [vmem:[%s1 + $0xc00] sm:$0xff]
    %v440 = vld [vmem:[%s1 + $0xc08] sm:$0xff]
    %v441 = vld [vmem:[%s1 + $0xc10] sm:$0xff]
    %v442 = vld [vmem:[%s1 + $0xc18] sm:$0xff]
    %v443 = vld [vmem:[%s1 + $0xc20] sm:$0xff]
    %v444 = vld [vmem:[%s1 + $0xc28] sm:$0xff]
    %v445 = vld [vmem:[%s1 + $0xc30] sm:$0xff]
    %v446 = vld [vmem:[%s1 + $0xc38] sm:$0xff]
    %v447 = vld [vmem:[%s1 + $0xc40] sm:$0xff]
    %v448 = vld [vmem:[%s1 + $0xc48] sm:$0xff]
    %v449 = vld [vmem:[%s1 + $0xc50] sm:$0xff]
    %v450 = vld [vmem:[%s1 + $0xc58] sm:$0xff]
    %v451 = vld [vmem:[%s1 + $0xc60] sm:$0xff]
    %v452 = vld [vmem:[%s1 + $0xc68] sm:$0xff]
    %v453 = vld [vmem:[%s1 + $0xc70] sm:$0xff]
    %v454 = vld [vmem:[%s1 + $0xc78] sm:$0xff]
    %v455 = vld [vmem:[%s1 + $0xc80] sm:$0xff]
    %v456 = vld [vmem:[%s1 + $0xc88] sm:$0xff]
    %v457 = vld [vmem:[%s1 + $0xc90] sm:$0xff]
    %v458 = vld [vmem:[%s1 + $0xc98] sm:$0xff]
    %v459 = vld [vmem:[%s1 + $0xca0] sm:$0xff]
    %v460 = vld [vmem:[%s1 + $0xca8] sm:$0xff]
    %v461 = vld [vmem:[%s1 + $0xcb0] sm:$0xff]
    %v462 = vld [vmem:[%s1 + $0xcb8] sm:$0xff]
    %v463 = vld [vmem:[%s1 + $0xcc0] sm:$0xff]
    %v464 = vld [vmem:[%s1 + $0xcc8] sm:$0xff]
    %v465 = vld [vmem:[%s1 + $0xcd0] sm:$0xff]
    %v466 = vld [vmem:[%s1 + $0xcd8] sm:$0xff]
    %v467 = vld [vmem:[%s1 + $0xce0] sm:$0xff]
    %v468 = vld [vmem:[%s1 + $0xce8] sm:$0xff]
    %v469 = vld [vmem:[%s1 + $0xcf0] sm:$0xff]
    %v470 = vld [vmem:[%s1 + $0xcf8] sm:$0xff]
    %v471 = vld [vmem:[%s1 + $0xd00] sm:$0xff]
    %v472 = vld [vmem:[%s1 + $0xd08] sm:$0xff]
    %v473 = vld [vmem:[%s1 + $0xd10] sm:$0xff]
    %v474 = vld [vmem:[%s1 + $0xd18] sm:$0xff]
    %v475 = vld [vmem:[%s1 + $0xd20] sm:$0xff]
    %v476 = vld [vmem:[%s1 + $0xd28] sm:$0xff]
    %v477 = vld [vmem:[%s1 + $0xd30] sm:$0xff]
    %v478 = vld [vmem:[%s1 + $0xd38] sm:$0xff]
    %v479 = vld [vmem:[%s1 + $0xd40] sm:$0xff]
    %v480 = vld [vmem:[%s1 + $0xd48] sm:$0xff]
    %v481 = vld [vmem:[%s1 + $0xd50] sm:$0xff]
    %v482 = vld [vmem:[%s1 + $0xd58] sm:$0xff]
    %v483 = vld [vmem:[%s1 + $0xd60] sm:$0xff]
    %v484 = vld [vmem:[%s1 + $0xd68] sm:$0xff]
    %v485 = vld [vmem:[%s1 + $0xd70] sm:$0xff]
    %v486 = vld [vmem:[%s1 + $0xd78] sm:$0xff]
    %v487 = vld [vmem:[%s1 + $0xd80] sm:$0xff]
    %v488 = vld [vmem:[%s1 + $0xd88] sm:$0xff]
    %v489 = vld [vmem:[%s1 + $0xd90] sm:$0xff]
    %v490 = vld [vmem:[%s1 + $0xd98] sm:$0xff]
    %v491 = vld [vmem:[%s1 + $0xda0] sm:$0xff]
    %v492 = vld [vmem:[%s1 + $0xda8] sm:$0xff]
    %v493 = vld [vmem:[%s1 + $0xdb0] sm:$0xff]
    %v494 = vld [vmem:[%s1 + $0xdb8] sm:$0xff]
    %v495 = vld [vmem:[%s1 + $0xdc0] sm:$0xff]
    %v496 = vld [vmem:[%s1 + $0xdc8] sm:$0xff]
    %v497 = vld [vmem:[%s1 + $0xdd0] sm:$0xff]
    %v498 = vld [vmem:[%s1 + $0xdd8] sm:$0xff]
    %v499 = vld [vmem:[%s1 + $0xde0] sm:$0xff]
    %v500 = vld [vmem:[%s1 + $0xde8] sm:$0xff]
    %v501 = vld [vmem:[%s1 + $0xdf0] sm:$0xff]
    %v502 = vld [vmem:[%s1 + $0xdf8] sm:$0xff]
    %v503 = vld [vmem:[%s1 + $0xe00] sm:$0xff]
    %v504 = vld [vmem:[%s1 + $0xe08] sm:$0xff]
    %v505 = vld [vmem:[%s1 + $0xe10] sm:$0xff]
    %v506 = vld [vmem:[%s1 + $0xe18] sm:$0xff]
    %v507 = vld [vmem:[%s1 + $0xe20] sm:$0xff]
    %v508 = vld [vmem:[%s1 + $0xe28] sm:$0xff]
    %v509 = vld [vmem:[%s1 + $0xe30] sm:$0xff]
    %v510 = vld [vmem:[%s1 + $0xe38] sm:$0xff]
    %v511 = vld [vmem:[%s1 + $0xe40] sm:$0xff]
    %v512 = vld [vmem:[%s1 + $0xe48] sm:$0xff]
    %v513 = vld [vmem:[%s1 + $0xe50] sm:$0xff]
    %v514 = vld [vmem:[%s1 + $0xe58] sm:$0xff]
    %v515 = vld [vmem:[%s1 + $0xe60] sm:$0xff]
    %v516 = vld [vmem:[%s1 + $0xe68] sm:$0xff]
    %v517 = vld [vmem:[%s1 + $0xe70] sm:$0xff]
    %v518 = vld [vmem:[%s1 + $0xe78] sm:$0xff]
    %v519 = vld [vmem:[%s1 + $0xe80] sm:$0xff]
    %v520 = vld [vmem:[%s1 + $0xe88] sm:$0xff]
    %v521 = vld [vmem:[%s1 + $0xe90] sm:$0xff]
    %v522 = vld [vmem:[%s1 + $0xe98] sm:$0xff]
    %v523 = vld [vmem:[%s1 + $0xea0] sm:$0xff]
    %v524 = vld [vmem:[%s1 + $0xea8] sm:$0xff]
    %v525 = vld [vmem:[%s1 + $0xeb0] sm:$0xff]
    %v526 = vld [vmem:[%s1 + $0xeb8] sm:$0xff]
    %v527 = vld [vmem:[%s1 + $0xec0] sm:$0xff]
    %v528 = vld [vmem:[%s1 + $0xec8] sm:$0xff]
    %v529 = vld [vmem:[%s1 + $0xed0] sm:$0xff]
    %v530 = vld [vmem:[%s1 + $0xed8] sm:$0xff]
    %v531 = vld [vmem:[%s1 + $0xee0] sm:$0xff]
    %v532 = vld [vmem:[%s1 + $0xee8] sm:$0xff]
    %v533 = vld [vmem:[%s1 + $0xef0] sm:$0xff]
    %v534 = vld [vmem:[%s1 + $0xef8] sm:$0xff]
    %v535 = vld [vmem:[%s1 + $0xf00] sm:$0xff]
    %v536 = vld [vmem:[%s1 + $0xf08] sm:$0xff]
    %v537 = vld [vmem:[%s1 + $0xf10] sm:$0xff]
    %v538 = vld [vmem:[%s1 + $0xf18] sm:$0xff]
    %v539 = vld [vmem:[%s1 + $0xf20] sm:$0xff]
    %v540 = vld [vmem:[%s1 + $0xf28] sm:$0xff]
    %v541 = vld [vmem:[%s1 + $0xf30] sm:$0xff]
    %v542 = vld [vmem:[%s1 + $0xf38] sm:$0xff]
    %v543 = vld [vmem:[%s1 + $0xf40] sm:$0xff]
    %v544 = vld [vmem:[%s1 + $0xf48] sm:$0xff]
    %v545 = vld [vmem:[%s1 + $0xf50] sm:$0xff]
    %v546 = vld [vmem:[%s1 + $0xf58] sm:$0xff]
    %v547 = vld [vmem:[%s1 + $0xf60] sm:$0xff]
    %v548 = vld [vmem:[%s1 + $0xf68] sm:$0xff]
    %v549 = vld [vmem:[%s1 + $0xf70] sm:$0xff]
    %v550 = vld [vmem:[%s1 + $0xf78] sm:$0xff]
    %v551 = vld [vmem:[%s1 + $0xf80] sm:$0xff]
    %v552 = vld [vmem:[%s1 + $0xf88] sm:$0xff]
    %v553 = vld [vmem:[%s1 + $0xf90] sm:$0xff]
    %v554 = vld [vmem:[%s1 + $0xf98] sm:$0xff]
    %v555 = vld [vmem:[%s1 + $0xfa0] sm:$0xff]
    %v556 = vld [vmem:[%s1 + $0xfa8] sm:$0xff]
    %v557 = vld [vmem:[%s1 + $0xfb0] sm:$0xff]
    %v558 = vld [vmem:[%s1 + $0xfb8] sm:$0xff]
    %v559 = vld [vmem:[%s1 + $0xfc0] sm:$0xff]
    %v560 = vld [vmem:[%s1 + $0xfc8] sm:$0xff]
    %v561 = vld [vmem:[%s1 + $0xfd0] sm:$0xff]
    %v562 = vld [vmem:[%s1 + $0xfd8] sm:$0xff]
    %v563 = vld [vmem:[%s1 + $0xfe0] sm:$0xff]
    %v564 = vld [vmem:[%s1 + $0xfe8] sm:$0xff]
    %v565 = vld [vmem:[%s1 + $0xff0] sm:$0xff]
    %v566 = vld [vmem:[%s1 + $0xff8] sm:$0xff]
    %v567 = vld [vmem:[%s1 + $0x1000] sm:$0xff]
    %v568 = vld [vmem:[%s1 + $0x1008] sm:$0xff]
    %v569 = vld [vmem:[%s1 + $0x1010] sm:$0xff]
    %v570 = vld [vmem:[%s1 + $0x1018] sm:$0xff]
    %v571 = vld [vmem:[%s1 + $0x1020] sm:$0xff]
    %v572 = vld [vmem:[%s1 + $0x1028] sm:$0xff]
    %v573 = vld [vmem:[%s1 + $0x1030] sm:$0xff]
    %v574 = vld [vmem:[%s1 + $0x1038] sm:$0xff]
    %v575 = vld [vmem:[%s1 + $0x1040] sm:$0xff]
    %v576 = vld [vmem:[%s1 + $0x1048] sm:$0xff]
    %v577 = vld [vmem:[%s1 + $0x1050] sm:$0xff]
    %v578 = vld [vmem:[%s1 + $0x1058] sm:$0xff]
    %v579 = vld [vmem:[%s1 + $0x1060] sm:$0xff]
    %v580 = vld [vmem:[%s1 + $0x1068] sm:$0xff]
    %v581 = vld [vmem:[%s1 + $0x1070] sm:$0xff]
    %v582 = vld [vmem:[%s1 + $0x1078] sm:$0xff]
    %v583 = vld [vmem:[%s1 + $0x1080] sm:$0xff]
    %v584 = vld [vmem:[%s1 + $0x1088] sm:$0xff]
    %v585 = vld [vmem:[%s1 + $0x1090] sm:$0xff]
    %v586 = vld [vmem:[%s1 + $0x1098] sm:$0xff]
    %v587 = vld [vmem:[%s1 + $0x10a0] sm:$0xff]
    %v588 = vld [vmem:[%s1 + $0x10a8] sm:$0xff]
    %v589 = vld [vmem:[%s1 + $0x10b0] sm:$0xff]
    %v590 = vld [vmem:[%s1 + $0x10b8] sm:$0xff]
    %v591 = vld [vmem:[%s1 + $0x10c0] sm:$0xff]
    %v592 = vld [vmem:[%s1 + $0x10c8] sm:$0xff]
    %v593 = vld [vmem:[%s1 + $0x10d0] sm:$0xff]
    %v594 = vld [vmem:[%s1 + $0x10d8] sm:$0xff]
    %v595 = vld [vmem:[%s1 + $0x10e0] sm:$0xff]
    %v596 = vld [vmem:[%s1 + $0x10e8] sm:$0xff]
    %v597 = vld [vmem:[%s1 + $0x10f0] sm:$0xff]
    %v598 = vld [vmem:[%s1 + $0x10f8] sm:$0xff]
    %v599 = vld [vmem:[%s1 + $0x1100] sm:$0xff]
    %v600 = vld [vmem:[%s1 + $0x1108] sm:$0xff]
    %v601 = vld [vmem:[%s1 + $0x1110] sm:$0xff]
    %v602 = vld [vmem:[%s1 + $0x1118] sm:$0xff]
    %v603 = vld [vmem:[%s1 + $0x1120] sm:$0xff]
    %v604 = vld [vmem:[%s1 + $0x1128] sm:$0xff]
    %v605 = vld [vmem:[%s1 + $0x1130] sm:$0xff]
    %v606 = vld [vmem:[%s1 + $0x1138] sm:$0xff]
    %v607 = vld [vmem:[%s1 + $0x1140] sm:$0xff]
    %v608 = vld [vmem:[%s1 + $0x1148] sm:$0xff]
    %v609 = vld [vmem:[%s1 + $0x1150] sm:$0xff]
    %v610 = vld [vmem:[%s1 + $0x1158] sm:$0xff]
    %v611 = vld [vmem:[%s1 + $0x1160] sm:$0xff]
    %v612 = vld [vmem:[%s1 + $0x1168] sm:$0xff]
    %v613 = vld [vmem:[%s1 + $0x1170] sm:$0xff]
    %v614 = vld [vmem:[%s1 + $0x1178] sm:$0xff]
    %v615 = vld [vmem:[%s1 + $0x1180] sm:$0xff]
    %v616 = vld [vmem:[%s1 + $0x1188] sm:$0xff]
    %v617 = vld [vmem:[%s1 + $0x1190] sm:$0xff]
    %v618 = vld [vmem:[%s1 + $0x1198] sm:$0xff]
    %v619 = vld [vmem:[%s1 + $0x11a0] sm:$0xff]
    %v620 = vld [vmem:[%s1 + $0x11a8] sm:$0xff]
    %v621 = vld [vmem:[%s1 + $0x11b0] sm:$0xff]
    %v622 = vld [vmem:[%s1 + $0x11b8] sm:$0xff]
    %v623 = vld [vmem:[%s1 + $0x11c0] sm:$0xff]
    %v624 = vld [vmem:[%s1 + $0x11c8] sm:$0xff]
    %v625 = vld [vmem:[%s1 + $0x11d0] sm:$0xff]
    %v626 = vld [vmem:[%s1 + $0x11d8] sm:$0xff]
    %v627 = vld [vmem:[%s1 + $0x11e0] sm:$0xff]
    %v628 = vld [vmem:[%s1 + $0x11e8] sm:$0xff]
    %v629 = vld [vmem:[%s1 + $0x11f0] sm:$0xff]
    %v630 = vld [vmem:[%s1 + $0x11f8] sm:$0xff]
    %v631 = vld [vmem:[%s1 + $0x1200] sm:$0xff]
    %v632 = vld [vmem:[%s1 + $0x1208] sm:$0xff]
    %v633 = vld [vmem:[%s1 + $0x1210] sm:$0xff]
    %v634 = vld [vmem:[%s1 + $0x1218] sm:$0xff]
    %v635 = vld [vmem:[%s1 + $0x1220] sm:$0xff]
    %v636 = vld [vmem:[%s1 + $0x1228] sm:$0xff]
    %v637 = vld [vmem:[%s1 + $0x1230] sm:$0xff]
    %v638 = vld [vmem:[%s1 + $0x1238] sm:$0xff]
    %v639 = vld [vmem:[%s1 + $0x1240] sm:$0xff]
    %v640 = vld [vmem:[%s1 + $0x1248] sm:$0xff]
    %v641 = vld [vmem:[%s1 + $0x1250] sm:$0xff]
    %v642 = vld [vmem:[%s1 + $0x1258] sm:$0xff]
    %v643 = vld [vmem:[%s1 + $0x1260] sm:$0xff]
    %v644 = vld [vmem:[%s1 + $0x1268] sm:$0xff]
    %v645 = vld [vmem:[%s1 + $0x1270] sm:$0xff]
    %v646 = vld [vmem:[%s1 + $0x1278] sm:$0xff]
    %v647 = vld [vmem:[%s1 + $0x1280] sm:$0xff]
    %v648 = vld [vmem:[%s1 + $0x1288] sm:$0xff]
    %v649 = vld [vmem:[%s1 + $0x1290] sm:$0xff]
    %v650 = vld [vmem:[%s1 + $0x1298] sm:$0xff]
    %v651 = vld [vmem:[%s1 + $0x12a0] sm:$0xff]
    %v652 = vld [vmem:[%s1 + $0x12a8] sm:$0xff]
    %v653 = vld [vmem:[%s1 + $0x12b0] sm:$0xff]
    %v654 = vld [vmem:[%s1 + $0x12b8] sm:$0xff]
    %v655 = vld [vmem:[%s1 + $0x12c0] sm:$0xff]
    %v656 = vld [vmem:[%s1 + $0x12c8] sm:$0xff]
    %v657 = vld [vmem:[%s1 + $0x12d0] sm:$0xff]
    %v658 = vld [vmem:[%s1 + $0x12d8] sm:$0xff]
    %v659 = vld [vmem:[%s1 + $0x12e0] sm:$0xff]
    %v660 = vld [vmem:[%s1 + $0x12e8] sm:$0xff]
    %v661 = vld [vmem:[%s1 + $0x12f0] sm:$0xff]
    %v662 = vld [vmem:[%s1 + $0x12f8] sm:$0xff]
    %v663 = vld [vmem:[%s1 + $0x1300] sm:$0xff]
    %v664 = vld [vmem:[%s1 + $0x1308] sm:$0xff]
    %v665 = vld [vmem:[%s1 + $0x1310] sm:$0xff]
    %v666 = vld [vmem:[%s1 + $0x1318] sm:$0xff]
    %v667 = vld [vmem:[%s1 + $0x1320] sm:$0xff]
    %v668 = vld [vmem:[%s1 + $0x1328] sm:$0xff]
    %v669 = vld [vmem:[%s1 + $0x1330] sm:$0xff]
    %v670 = vld [vmem:[%s1 + $0x1338] sm:$0xff]
    %v671 = vld [vmem:[%s1 + $0x1340] sm:$0xff]
    %v672 = vld [vmem:[%s1 + $0x1348] sm:$0xff]
    %v673 = vld [vmem:[%s1 + $0x1350] sm:$0xff]
    %v674 = vld [vmem:[%s1 + $0x1358] sm:$0xff]
    %v675 = vld [vmem:[%s1 + $0x1360] sm:$0xff]
    %v676 = vld [vmem:[%s1 + $0x1368] sm:$0xff]
    %v677 = vld [vmem:[%s1 + $0x1370] sm:$0xff]
    %v678 = vld [vmem:[%s1 + $0x1378] sm:$0xff]
    %v679 = vld [vmem:[%s1 + $0x1380] sm:$0xff]
    %v680 = vld [vmem:[%s1 + $0x1388] sm:$0xff]
    %v681 = vld [vmem:[%s1 + $0x1390] sm:$0xff]
    %v682 = vld [vmem:[%s1 + $0x1398] sm:$0xff]
    %v683 = vld [vmem:[%s1 + $0x13a0] sm:$0xff]
    %v684 = vld [vmem:[%s1 + $0x13a8] sm:$0xff]
    %v685 = vld [vmem:[%s1 + $0x13b0] sm:$0xff]
    %v686 = vld [vmem:[%s1 + $0x13b8] sm:$0xff]
    %v687 = vld [vmem:[%s1 + $0x13c0] sm:$0xff]
    %v688 = vld [vmem:[%s1 + $0x13c8] sm:$0xff]
    %v689 = vld [vmem:[%s1 + $0x13d0] sm:$0xff]
    %v690 = vld [vmem:[%s1 + $0x13d8] sm:$0xff]
    %v691 = vld [vmem:[%s1 + $0x13e0] sm:$0xff]
    %v692 = vld [vmem:[%s1 + $0x13e8] sm:$0xff]
    %v693 = vld [vmem:[%s1 + $0x13f0] sm:$0xff]
    %v694 = vld [vmem:[%s1 + $0x13f8] sm:$0xff]
    %v695 = vld [vmem:[%s1 + $0x1400] sm:$0xff]
    %v696 = vld [vmem:[%s1 + $0x1408] sm:$0xff]
    %v697 = vld [vmem:[%s1 + $0x1410] sm:$0xff]
    %v698 = vld [vmem:[%s1 + $0x1418] sm:$0xff]
    %v699 = vld [vmem:[%s1 + $0x1420] sm:$0xff]
    %v700 = vld [vmem:[%s1 + $0x1428] sm:$0xff]
    %v701 = vld [vmem:[%s1 + $0x1430] sm:$0xff]
    %v702 = vld [vmem:[%s1 + $0x1438] sm:$0xff]
    %v703 = vld [vmem:[%s1 + $0x1440] sm:$0xff]
    %v704 = vld [vmem:[%s1 + $0x1448] sm:$0xff]
    %v705 = vld [vmem:[%s1 + $0x1450] sm:$0xff]
    %v706 = vld [vmem:[%s1 + $0x1458] sm:$0xff]
    %v707 = vld [vmem:[%s1 + $0x1460] sm:$0xff]
    %v708 = vld [vmem:[%s1 + $0x1468] sm:$0xff]
    %v709 = vld [vmem:[%s1 + $0x1470] sm:$0xff]
    %v710 = vld [vmem:[%s1 + $0x1478] sm:$0xff]
    %v711 = vld [vmem:[%s1 + $0x1480] sm:$0xff]
    %v712 = vld [vmem:[%s1 + $0x1488] sm:$0xff]
    %v713 = vld [vmem:[%s1 + $0x1490] sm:$0xff]
    %v714 = vld [vmem:[%s1 + $0x1498] sm:$0xff]
    %v715 = vld [vmem:[%s1 + $0x14a0] sm:$0xff]
    %v716 = vld [vmem:[%s1 + $0x14a8] sm:$0xff]
    %v717 = vld [vmem:[%s1 + $0x14b0] sm:$0xff]
    %v718 = vld [vmem:[%s1 + $0x14b8] sm:$0xff]
    %v719 = vld [vmem:[%s1 + $0x14c0] sm:$0xff]
    %v720 = vld [vmem:[%s1 + $0x14c8] sm:$0xff]
    %v721 = vld [vmem:[%s1 + $0x14d0] sm:$0xff]
    %v722 = vld [vmem:[%s1 + $0x14d8] sm:$0xff]
    %v723 = vld [vmem:[%s1 + $0x14e0] sm:$0xff]
    %v724 = vld [vmem:[%s1 + $0x14e8] sm:$0xff]
    %v725 = vld [vmem:[%s1 + $0x14f0] sm:$0xff]
    %v726 = vld [vmem:[%s1 + $0x14f8] sm:$0xff]
    %v727 = vld [vmem:[%s1 + $0x1500] sm:$0xff]
    %v728 = vld [vmem:[%s1 + $0x1508] sm:$0xff]
    %v729 = vld [vmem:[%s1 + $0x1510] sm:$0xff]
    %v730 = vld [vmem:[%s1 + $0x1518] sm:$0xff]
    %v731 = vld [vmem:[%s1 + $0x1520] sm:$0xff]
    %v732 = vld [vmem:[%s1 + $0x1528] sm:$0xff]
    %v733 = vld [vmem:[%s1 + $0x1530] sm:$0xff]
    %v734 = vld [vmem:[%s1 + $0x1538] sm:$0xff]
    %v735 = vld [vmem:[%s1 + $0x1540] sm:$0xff]
    %v736 = vld [vmem:[%s1 + $0x1548] sm:$0xff]
    %v737 = vld [vmem:[%s1 + $0x1550] sm:$0xff]
    %v738 = vld [vmem:[%s1 + $0x1558] sm:$0xff]
    %v739 = vld [vmem:[%s1 + $0x1560] sm:$0xff]
    %v740 = vld [vmem:[%s1 + $0x1568] sm:$0xff]
    %v741 = vld [vmem:[%s1 + $0x1570] sm:$0xff]
    %v742 = vld [vmem:[%s1 + $0x1578] sm:$0xff]
    %v743 = vld [vmem:[%s1 + $0x1580] sm:$0xff]
    %v744 = vld [vmem:[%s1 + $0x1588] sm:$0xff]
    %v745 = vld [vmem:[%s1 + $0x1590] sm:$0xff]
    %v746 = vld [vmem:[%s1 + $0x1598] sm:$0xff]
    %v747 = vld [vmem:[%s1 + $0x15a0] sm:$0xff]
    %v748 = vld [vmem:[%s1 + $0x15a8] sm:$0xff]
    %v749 = vld [vmem:[%s1 + $0x15b0] sm:$0xff]
    %v750 = vld [vmem:[%s1 + $0x15b8] sm:$0xff]
    %v751 = vld [vmem:[%s1 + $0x15c0] sm:$0xff]
    %v752 = vld [vmem:[%s1 + $0x15c8] sm:$0xff]
    %v753 = vld [vmem:[%s1 + $0x15d0] sm:$0xff]
    %v754 = vld [vmem:[%s1 + $0x15d8] sm:$0xff]
    %v755 = vld [vmem:[%s1 + $0x15e0] sm:$0xff]
    %v756 = vld [vmem:[%s1 + $0x15e8] sm:$0xff]
    %v757 = vld [vmem:[%s1 + $0x15f0] sm:$0xff]
    %v758 = vld [vmem:[%s1 + $0x15f8] sm:$0xff]
    %v759 = vld [vmem:[%s1 + $0x1600] sm:$0xff]
    %v760 = vld [vmem:[%s1 + $0x1608] sm:$0xff]
    %v761 = vld [vmem:[%s1 + $0x1610] sm:$0xff]
    %v762 = vld [vmem:[%s1 + $0x1618] sm:$0xff]
    %v763 = vld [vmem:[%s1 + $0x1620] sm:$0xff]
    %v764 = vld [vmem:[%s1 + $0x1628] sm:$0xff]
    %v765 = vld [vmem:[%s1 + $0x1630] sm:$0xff]
    %v766 = vld [vmem:[%s1 + $0x1638] sm:$0xff]
    %v767 = vld [vmem:[%s1 + $0x1640] sm:$0xff]
    %v768 = vld [vmem:[%s1 + $0x1648] sm:$0xff]
    %v769 = vld [vmem:[%s1 + $0x1650] sm:$0xff]
    %v770 = vld [vmem:[%s1 + $0x1658] sm:$0xff]
    %v771 = vld [vmem:[%s1 + $0x1660] sm:$0xff]
    %v772 = vld [vmem:[%s1 + $0x1668] sm:$0xff]
    %v773 = vld [vmem:[%s1 + $0x1670] sm:$0xff]
    %v774 = vld [vmem:[%s1 + $0x1678] sm:$0xff]
    %v775 = vld [vmem:[%s1 + $0x1680] sm:$0xff]
    %v776 = vld [vmem:[%s1 + $0x1688] sm:$0xff]
    %v777 = vld [vmem:[%s1 + $0x1690] sm:$0xff]
    %v778 = vld [vmem:[%s1 + $0x1698] sm:$0xff]
    %v779 = vld [vmem:[%s1 + $0x16a0] sm:$0xff]
    %v780 = vld [vmem:[%s1 + $0x16a8] sm:$0xff]
    %v781 = vld [vmem:[%s1 + $0x16b0] sm:$0xff]
    %v782 = vld [vmem:[%s1 + $0x16b8] sm:$0xff]
    %v783 = vld [vmem:[%s1 + $0x16c0] sm:$0xff]
    %v784 = vld [vmem:[%s1 + $0x16c8] sm:$0xff]
    %v785 = vld [vmem:[%s1 + $0x16d0] sm:$0xff]
    %v786 = vld [vmem:[%s1 + $0x16d8] sm:$0xff]
    %v787 = vld [vmem:[%s1 + $0x16e0] sm:$0xff]
    %v788 = vld [vmem:[%s1 + $0x16e8] sm:$0xff]
    %v789 = vld [vmem:[%s1 + $0x16f0] sm:$0xff]
    %v790 = vld [vmem:[%s1 + $0x16f8] sm:$0xff]
    %v791 = vld [vmem:[%s1 + $0x1700] sm:$0xff]
    %v792 = vld [vmem:[%s1 + $0x1708] sm:$0xff]
    %v793 = vld [vmem:[%s1 + $0x1710] sm:$0xff]
    %v794 = vld [vmem:[%s1 + $0x1718] sm:$0xff]
    %v795 = vld [vmem:[%s1 + $0x1720] sm:$0xff]
    %v796 = vld [vmem:[%s1 + $0x1728] sm:$0xff]
    %v797 = vld [vmem:[%s1 + $0x1730] sm:$0xff]
    %v798 = vld [vmem:[%s1 + $0x1738] sm:$0xff]
    %v799 = vld [vmem:[%s1 + $0x1740] sm:$0xff]
    %v800 = vld [vmem:[%s1 + $0x1748] sm:$0xff]
    %v801 = vld [vmem:[%s1 + $0x1750] sm:$0xff]
    %v802 = vld [vmem:[%s1 + $0x1758] sm:$0xff]
    %v803 = vld [vmem:[%s1 + $0x1760] sm:$0xff]
    %v804 = vld [vmem:[%s1 + $0x1768] sm:$0xff]
    %v805 = vld [vmem:[%s1 + $0x1770] sm:$0xff]
    %v806 = vld [vmem:[%s1 + $0x1778] sm:$0xff]
    %v807 = vld [vmem:[%s1 + $0x1780] sm:$0xff]
    %v808 = vld [vmem:[%s1 + $0x1788] sm:$0xff]
    %v809 = vld [vmem:[%s1 + $0x1790] sm:$0xff]
    %v810 = vld [vmem:[%s1 + $0x1798] sm:$0xff]
    %v811 = vld [vmem:[%s1 + $0x17a0] sm:$0xff]
    %v812 = vld [vmem:[%s1 + $0x17a8] sm:$0xff]
    %v813 = vld [vmem:[%s1 + $0x17b0] sm:$0xff]
    %v814 = vld [vmem:[%s1 + $0x17b8] sm:$0xff]
    %v815 = vld [vmem:[%s1 + $0x17c0] sm:$0xff]
    %v816 = vld [vmem:[%s1 + $0x17c8] sm:$0xff]
    %v817 = vld [vmem:[%s1 + $0x17d0] sm:$0xff]
    %v818 = vld [vmem:[%s1 + $0x17d8] sm:$0xff]
    %v819 = vld [vmem:[%s1 + $0x17e0] sm:$0xff]
    %v820 = vld [vmem:[%s1 + $0x17e8] sm:$0xff]
    %v821 = vld [vmem:[%s1 + $0x17f0] sm:$0xff]
    %v822 = vld [vmem:[%s1 + $0x17f8] sm:$0xff]
    %v823 = vld [vmem:[%s1 + $0x1800] sm:$0xff]
    %v824 = vld [vmem:[%s1 + $0x1808] sm:$0xff]
    %v825 = vld [vmem:[%s1 + $0x1810] sm:$0xff]
    %v826 = vld [vmem:[%s1 + $0x1818] sm:$0xff]
    %v827 = vld [vmem:[%s1 + $0x1820] sm:$0xff]
    %v828 = vld [vmem:[%s1 + $0x1828] sm:$0xff]
    %v829 = vld [vmem:[%s1 + $0x1830] sm:$0xff]
    %v830 = vld [vmem:[%s1 + $0x1838] sm:$0xff]
    %v831 = vld [vmem:[%s1 + $0x1840] sm:$0xff]
    %v832 = vld [vmem:[%s1 + $0x1848] sm:$0xff]
    %v833 = vld [vmem:[%s1 + $0x1850] sm:$0xff]
    %v834 = vld [vmem:[%s1 + $0x1858] sm:$0xff]
    %v835 = vld [vmem:[%s1 + $0x1860] sm:$0xff]
    %v836 = vld [vmem:[%s1 + $0x1868] sm:$0xff]
    %v837 = vld [vmem:[%s1 + $0x1870] sm:$0xff]
    %v838 = vld [vmem:[%s1 + $0x1878] sm:$0xff]
    %v839 = vld [vmem:[%s2] sm:$0x3]
    %v841 = vlaneseq
    %v842 = vshrl.u32 %v841, 7
    %v843 = vsub.s32 0, %v842
    %v844 = vrot.slane %v839, %v843
    %v845 = vlaneseq
    %v846 = vshrl.u32 %v845, 7
    %v847 = vsub.s32 1, %v846
    %v848 = vrot.slane %v839, %v847
    %v858 = vcombine.high %v48, %v48
    %v860 = vunpack.c.l.s4 1983009808
    %v861 = vunpack.c.0.s8 %v860
    %v862 = vlaneseq
    %v863 = vshrl.u32 %v862, 7
    %v864 = vsub.s32 %v861, %v863
    %v865 = vrot.slane %v48, %v864
    %v867 = vunpack.c.l.s4 1983009808
    %v868 = vunpack.c.0.s8 %v867
    %v869 = vlaneseq
    %v870 = vshrl.u32 %v869, 7
    %v871 = vsub.s32 %v868, %v870
    %v872 = vrot.slane %v858, %v871
    %v873 = vcombine.high %v865, %v865
    %v874 = vcombine.high %v872, %v872
    %v875 = vcombine.high %v49, %v49
    %v877 = vunpack.c.l.s4 1983009808
    %v878 = vunpack.c.0.s8 %v877
    %v879 = vlaneseq
    %v880 = vshrl.u32 %v879, 7
    %v881 = vsub.s32 %v878, %v880
    %v882 = vrot.slane %v49, %v881
    %v884 = vunpack.c.l.s4 1983009808
    %v885 = vunpack.c.0.s8 %v884
    %v886 = vlaneseq
    %v887 = vshrl.u32 %v886, 7
    %v888 = vsub.s32 %v885, %v887
    %v889 = vrot.slane %v875, %v888
    %v890 = vcombine.high %v882, %v882
    %v891 = vcombine.high %v889, %v889
    %v892 = vcombine.high %v50, %v50
    %v894 = vunpack.c.l.s4 1983009808
    %v895 = vunpack.c.0.s8 %v894
    %v896 = vlaneseq
    %v897 = vshrl.u32 %v896, 7
    %v898 = vsub.s32 %v895, %v897
    %v899 = vrot.slane %v50, %v898
    %v901 = vunpack.c.l.s4 1983009808
    %v902 = vunpack.c.0.s8 %v901
    %v903 = vlaneseq
    %v904 = vshrl.u32 %v903, 7
    %v905 = vsub.s32 %v902, %v904
    %v906 = vrot.slane %v892, %v905
    %v907 = vcombine.high %v899, %v899
    %v908 = vcombine.high %v906, %v906
    %v909 = vcombine.high %v51, %v51
    %v911 = vunpack.c.l.s4 1983009808
    %v912 = vunpack.c.0.s8 %v911
    %v913 = vlaneseq
    %v914 = vshrl.u32 %v913, 7
    %v915 = vsub.s32 %v912, %v914
    %v916 = vrot.slane %v51, %v915
    %v918 = vunpack.c.l.s4 1983009808
    %v919 = vunpack.c.0.s8 %v918
    %v920 = vlaneseq
    %v921 = vshrl.u32 %v920, 7
    %v922 = vsub.s32 %v919, %v921
    %v923 = vrot.slane %v909, %v922
    %v924 = vcombine.high %v916, %v916
    %v925 = vcombine.high %v923, %v923
    %v926 = vcombine.high %v52, %v52
    %v928 = vunpack.c.l.s4 1983009808
    %v929 = vunpack.c.0.s8 %v928
    %v930 = vlaneseq
    %v931 = vshrl.u32 %v930, 7
    %v932 = vsub.s32 %v929, %v931
    %v933 = vrot.slane %v52, %v932
    %v935 = vunpack.c.l.s4 1983009808
    %v936 = vunpack.c.0.s8 %v935
    %v937 = vlaneseq
    %v938 = vshrl.u32 %v937, 7
    %v939 = vsub.s32 %v936, %v938
    %v940 = vrot.slane %v926, %v939
    %v941 = vcombine.high %v933, %v933
    %v942 = vcombine.high %v940, %v940
    %v943 = vcombine.high %v53, %v53
    %v945 = vunpack.c.l.s4 1983009808
    %v946 = vunpack.c.0.s8 %v945
    %v947 = vlaneseq
    %v948 = vshrl.u32 %v947, 7
    %v949 = vsub.s32 %v946, %v948
    %v950 = vrot.slane %v53, %v949
    %v952 = vunpack.c.l.s4 1983009808
    %v953 = vunpack.c.0.s8 %v952
    %v954 = vlaneseq
    %v955 = vshrl.u32 %v954, 7
    %v956 = vsub.s32 %v953, %v955
    %v957 = vrot.slane %v943, %v956
    %v958 = vcombine.high %v950, %v950
    %v959 = vcombine.high %v957, %v957
    %v961 = vunpack.c.l.s4 1983009808
    %v962 = vunpack.c.0.s8 %v961
    %v963 = vlaneseq
    %v964 = vshrl.u32 %v963, 7
    %v965 = vsub.s32 %v962, %v964
    %v966 = vrot.slane %v54, %v965
    %vm991 = vcmask 523264
    %v992 = vsel %vm991, %v966, 0
    %994 = vmatprep.subr.mxu0 %v56
    %995 = vmatpush1.msra.mxu0 %v55
    %996 = vmatprep.subr.mxu0 %v58
    %997 = vmatpush1.msra.mxu0 %v57
    %998 = vmatprep.subr.mxu0 %v60
    %999 = vmatpush1.msra.mxu0 %v59
    %1000 = vmatprep.subr.mxu0 %v62
    %1001 = vmatpush1.msra.mxu0 %v61
    %1002 = vmatprep.subr.mxu0 %v64
    %1003 = vmatpush1.msra.mxu0 %v63
    %1004 = vmatprep.subr.mxu0 %v66
    %1005 = vmatpush1.msra.mxu0 %v65
    %1006 = vmatprep.subr.mxu0 %v68
    %1007 = vmatpush1.msra.mxu0 %v67
    %1008 = vmatprep.subr.mxu0 %v70
    %1009 = vmatpush1.msra.mxu0 %v69
    %1010 = vmatprep.subr.mxu0 %v72
    %1011 = vmatpush1.msra.mxu0 %v71
    %1012 = vmatprep.subr.mxu0 %v74
    %1013 = vmatpush1.msra.mxu0 %v73
    %1014 = vmatprep.subr.mxu0 %v76
    %1015 = vmatpush1.msra.mxu0 %v75
    %1016 = vmatprep.subr.mxu0 %v78
    %1017 = vmatpush1.msra.mxu0 %v77
    %1018 = vmatprep.subr.mxu0 %v80
    %1019 = vmatpush1.msra.mxu0 %v79
    %1020 = vmatprep.subr.mxu0 %v82
    %1021 = vmatpush1.msra.mxu0 %v81
    %1022 = vmatprep.subr.mxu0 %v84
    %1023 = vmatpush1.msra.mxu0 %v83
    %1024 = vmatprep.subr.mxu0 %v86
    %1025 = vmatpush1.msra.mxu0 %v85
    %1026 = vmatprep.subr.mxu0 %v88
    %1027 = vmatpush1.msra.mxu0 %v87
    %1028 = vmatprep.subr.mxu0 %v90
    %1029 = vmatpush1.msra.mxu0 %v89
    %1030 = vmatprep.subr.mxu0 %v92
    %1031 = vmatpush1.msra.mxu0 %v91
    %1032 = vmatprep.subr.mxu0 %v94
    %1033 = vmatpush1.msra.mxu0 %v93
    %1034 = vmatprep.subr.mxu0 %v96
    %1035 = vmatpush1.msra.mxu0 %v95
    %1036 = vmatprep.subr.mxu0 %v98
    %1037 = vmatpush1.msra.mxu0 %v97
    %1038 = vmatprep.subr.mxu0 %v100
    %1039 = vmatpush1.msra.mxu0 %v99
    %1040 = vmatprep.subr.mxu0 %v102
    %1041 = vmatpush1.msra.mxu0 %v101
    %1042 = vmatprep.subr.mxu0 %v104
    %1043 = vmatpush1.msra.mxu0 %v103
    %1044 = vmatprep.subr.mxu0 %v106
    %1045 = vmatpush1.msra.mxu0 %v105
    %1046 = vmatprep.subr.mxu0 %v108
    %1047 = vmatpush1.msra.mxu0 %v107
    %1048 = vmatprep.subr.mxu0 %v110
    %1049 = vmatpush1.msra.mxu0 %v109
    %1050 = vmatprep.subr.mxu0 %v112
    %1051 = vmatpush1.msra.mxu0 %v111
    %1052 = vmatprep.subr.mxu0 %v114
    %1053 = vmatpush1.msra.mxu0 %v113
    %1054 = vmatprep.subr.mxu0 %v116
    %1055 = vmatpush1.msra.mxu0 %v115
    %1056 = vmatprep.subr.mxu0 %v118
    %1057 = vmatpush1.msra.mxu0 %v117
    %1058 = vmatprep.mubr.f32.mxu0 %v873
    %1059 = vmatmul.mubr.f32.gmra.mrb[0].mxu0 %v865
    %v1060 = vpop.f32.mrb[0].mxu0
    %v1061 = vadd.f32 %v844, %v1060
    %v1062 = vpop.f32.mrb[0].mxu0
    %v1063 = vadd.f32 %v848, %v1062
    %1064 = vdwg.mxu0
    %1065 = vmatprep.subr.mxu0 %v120
    %1066 = vmatpush1.msra.mxu0 %v119
    %1067 = vmatprep.subr.mxu0 %v122
    %1068 = vmatpush1.msra.mxu0 %v121
    %1069 = vmatprep.subr.mxu0 %v124
    %1070 = vmatpush1.msra.mxu0 %v123
    %1071 = vmatprep.subr.mxu0 %v126
    %1072 = vmatpush1.msra.mxu0 %v125
    %1073 = vmatprep.subr.mxu0 %v128
    %1074 = vmatpush1.msra.mxu0 %v127
    %1075 = vmatprep.subr.mxu0 %v130
    %1076 = vmatpush1.msra.mxu0 %v129
    %1077 = vmatprep.subr.mxu0 %v132
    %1078 = vmatpush1.msra.mxu0 %v131
    %1079 = vmatprep.subr.mxu0 %v134
    %1080 = vmatpush1.msra.mxu0 %v133
    %1081 = vmatprep.subr.mxu0 %v136
    %1082 = vmatpush1.msra.mxu0 %v135
    %1083 = vmatprep.subr.mxu0 %v138
    %1084 = vmatpush1.msra.mxu0 %v137
    %1085 = vmatprep.subr.mxu0 %v140
    %1086 = vmatpush1.msra.mxu0 %v139
    %1087 = vmatprep.subr.mxu0 %v142
    %1088 = vmatpush1.msra.mxu0 %v141
    %1089 = vmatprep.subr.mxu0 %v144
    %1090 = vmatpush1.msra.mxu0 %v143
    %1091 = vmatprep.subr.mxu0 %v146
    %1092 = vmatpush1.msra.mxu0 %v145
    %1093 = vmatprep.subr.mxu0 %v148
    %1094 = vmatpush1.msra.mxu0 %v147
    %1095 = vmatprep.subr.mxu0 %v150
    %1096 = vmatpush1.msra.mxu0 %v149
    %1097 = vmatprep.subr.mxu0 %v152
    %1098 = vmatpush1.msra.mxu0 %v151
    %1099 = vmatprep.subr.mxu0 %v154
    %1100 = vmatpush1.msra.mxu0 %v153
    %1101 = vmatprep.subr.mxu0 %v156
    %1102 = vmatpush1.msra.mxu0 %v155
    %1103 = vmatprep.subr.mxu0 %v158
    %1104 = vmatpush1.msra.mxu0 %v157
    %1105 = vmatprep.subr.mxu0 %v160
    %1106 = vmatpush1.msra.mxu0 %v159
    %1107 = vmatprep.subr.mxu0 %v162
    %1108 = vmatpush1.msra.mxu0 %v161
    %1109 = vmatprep.subr.mxu0 %v164
    %1110 = vmatpush1.msra.mxu0 %v163
    %1111 = vmatprep.subr.mxu0 %v166
    %1112 = vmatpush1.msra.mxu0 %v165
    %1113 = vmatprep.subr.mxu0 %v168
    %1114 = vmatpush1.msra.mxu0 %v167
    %1115 = vmatprep.subr.mxu0 %v170
    %1116 = vmatpush1.msra.mxu0 %v169
    %1117 = vmatprep.subr.mxu0 %v172
    %1118 = vmatpush1.msra.mxu0 %v171
    %1119 = vmatprep.subr.mxu0 %v174
    %1120 = vmatpush1.msra.mxu0 %v173
    %1121 = vmatprep.subr.mxu0 %v176
    %1122 = vmatpush1.msra.mxu0 %v175
    %1123 = vmatprep.subr.mxu0 %v178
    %1124 = vmatpush1.msra.mxu0 %v177
    %1125 = vmatprep.subr.mxu0 %v180
    %1126 = vmatpush1.msra.mxu0 %v179
    %1127 = vmatprep.subr.mxu0 %v182
    %1128 = vmatpush1.msra.mxu0 %v181
    %1129 = vmatprep.mubr.f32.mxu0 %v874
    %1130 = vmatmul.mubr.f32.gmra.mrb[0].mxu0 %v872
    %v1131 = vpop.f32.mrb[0].mxu0
    %v1132 = vadd.f32 %v1061, %v1131
    %v1133 = vpop.f32.mrb[0].mxu0
    %v1134 = vadd.f32 %v1063, %v1133
    %1135 = vdwg.mxu0
    %1136 = vmatprep.subr.mxu0 %v184
    %1137 = vmatpush1.msra.mxu0 %v183
    %1138 = vmatprep.subr.mxu0 %v186
    %1139 = vmatpush1.msra.mxu0 %v185
    %1140 = vmatprep.subr.mxu0 %v188
    %1141 = vmatpush1.msra.mxu0 %v187
    %1142 = vmatprep.subr.mxu0 %v190
    %1143 = vmatpush1.msra.mxu0 %v189
    %1144 = vmatprep.subr.mxu0 %v192
    %1145 = vmatpush1.msra.mxu0 %v191
    %1146 = vmatprep.subr.mxu0 %v194
    %1147 = vmatpush1.msra.mxu0 %v193
    %1148 = vmatprep.subr.mxu0 %v196
    %1149 = vmatpush1.msra.mxu0 %v195
    %1150 = vmatprep.subr.mxu0 %v198
    %1151 = vmatpush1.msra.mxu0 %v197
    %1152 = vmatprep.subr.mxu0 %v200
    %1153 = vmatpush1.msra.mxu0 %v199
    %1154 = vmatprep.subr.mxu0 %v202
    %1155 = vmatpush1.msra.mxu0 %v201
    %1156 = vmatprep.subr.mxu0 %v204
    %1157 = vmatpush1.msra.mxu0 %v203
    %1158 = vmatprep.subr.mxu0 %v206
    %1159 = vmatpush1.msra.mxu0 %v205
    %1160 = vmatprep.subr.mxu0 %v208
    %1161 = vmatpush1.msra.mxu0 %v207
    %1162 = vmatprep.subr.mxu0 %v210
    %1163 = vmatpush1.msra.mxu0 %v209
    %1164 = vmatprep.subr.mxu0 %v212
    %1165 = vmatpush1.msra.mxu0 %v211
    %1166 = vmatprep.subr.mxu0 %v214
    %1167 = vmatpush1.msra.mxu0 %v213
    %1168 = vmatprep.subr.mxu0 %v216
    %1169 = vmatpush1.msra.mxu0 %v215
    %1170 = vmatprep.subr.mxu0 %v218
    %1171 = vmatpush1.msra.mxu0 %v217
    %1172 = vmatprep.subr.mxu0 %v220
    %1173 = vmatpush1.msra.mxu0 %v219
    %1174 = vmatprep.subr.mxu0 %v222
    %1175 = vmatpush1.msra.mxu0 %v221
    %1176 = vmatprep.subr.mxu0 %v224
    %1177 = vmatpush1.msra.mxu0 %v223
    %1178 = vmatprep.subr.mxu0 %v226
    %1179 = vmatpush1.msra.mxu0 %v225
    %1180 = vmatprep.subr.mxu0 %v228
    %1181 = vmatpush1.msra.mxu0 %v227
    %1182 = vmatprep.subr.mxu0 %v230
    %1183 = vmatpush1.msra.mxu0 %v229
    %1184 = vmatprep.subr.mxu0 %v232
    %1185 = vmatpush1.msra.mxu0 %v231
    %1186 = vmatprep.subr.mxu0 %v234
    %1187 = vmatpush1.msra.mxu0 %v233
    %1188 = vmatprep.subr.mxu0 %v236
    %1189 = vmatpush1.msra.mxu0 %v235
    %1190 = vmatprep.subr.mxu0 %v238
    %1191 = vmatpush1.msra.mxu0 %v237
    %1192 = vmatprep.subr.mxu0 %v240
    %1193 = vmatpush1.msra.mxu0 %v239
    %1194 = vmatprep.subr.mxu0 %v242
    %1195 = vmatpush1.msra.mxu0 %v241
    %1196 = vmatprep.subr.mxu0 %v244
    %1197 = vmatpush1.msra.mxu0 %v243
    %1198 = vmatprep.subr.mxu0 %v246
    %1199 = vmatpush1.msra.mxu0 %v245
    %1200 = vmatprep.mubr.f32.mxu0 %v890
    %1201 = vmatmul.mubr.f32.gmra.mrb[0].mxu0 %v882
    %v1202 = vpop.f32.mrb[0].mxu0
    %v1203 = vadd.f32 %v1132, %v1202
    %v1204 = vpop.f32.mrb[0].mxu0
    %v1205 = vadd.f32 %v1134, %v1204
    %1206 = vdwg.mxu0
    %1207 = vmatprep.subr.mxu0 %v248
    %1208 = vmatpush1.msra.mxu0 %v247
    %1209 = vmatprep.subr.mxu0 %v250
    %1210 = vmatpush1.msra.mxu0 %v249
    %1211 = vmatprep.subr.mxu0 %v252
    %1212 = vmatpush1.msra.mxu0 %v251
    %1213 = vmatprep.subr.mxu0 %v254
    %1214 = vmatpush1.msra.mxu0 %v253
    %1215 = vmatprep.subr.mxu0 %v256
    %1216 = vmatpush1.msra.mxu0 %v255
    %1217 = vmatprep.subr.mxu0 %v258
    %1218 = vmatpush1.msra.mxu0 %v257
    %1219 = vmatprep.subr.mxu0 %v260
    %1220 = vmatpush1.msra.mxu0 %v259
    %1221 = vmatprep.subr.mxu0 %v262
    %1222 = vmatpush1.msra.mxu0 %v261
    %1223 = vmatprep.subr.mxu0 %v264
    %1224 = vmatpush1.msra.mxu0 %v263
    %1225 = vmatprep.subr.mxu0 %v266
    %1226 = vmatpush1.msra.mxu0 %v265
    %1227 = vmatprep.subr.mxu0 %v268
    %1228 = vmatpush1.msra.mxu0 %v267
    %1229 = vmatprep.subr.mxu0 %v270
    %1230 = vmatpush1.msra.mxu0 %v269
    %1231 = vmatprep.subr.mxu0 %v272
    %1232 = vmatpush1.msra.mxu0 %v271
    %1233 = vmatprep.subr.mxu0 %v274
    %1234 = vmatpush1.msra.mxu0 %v273
    %1235 = vmatprep.subr.mxu0 %v276
    %1236 = vmatpush1.msra.mxu0 %v275
    %1237 = vmatprep.subr.mxu0 %v278
    %1238 = vmatpush1.msra.mxu0 %v277
    %1239 = vmatprep.subr.mxu0 %v280
    %1240 = vmatpush1.msra.mxu0 %v279
    %1241 = vmatprep.subr.mxu0 %v282
    %1242 = vmatpush1.msra.mxu0 %v281
    %1243 = vmatprep.subr.mxu0 %v284
    %1244 = vmatpush1.msra.mxu0 %v283
    %1245 = vmatprep.subr.mxu0 %v286
    %1246 = vmatpush1.msra.mxu0 %v285
    %1247 = vmatprep.subr.mxu0 %v288
    %1248 = vmatpush1.msra.mxu0 %v287
    %1249 = vmatprep.subr.mxu0 %v290
    %1250 = vmatpush1.msra.mxu0 %v289
    %1251 = vmatprep.subr.mxu0 %v292
    %1252 = vmatpush1.msra.mxu0 %v291
    %1253 = vmatprep.subr.mxu0 %v294
    %1254 = vmatpush1.msra.mxu0 %v293
    %1255 = vmatprep.subr.mxu0 %v296
    %1256 = vmatpush1.msra.mxu0 %v295
    %1257 = vmatprep.subr.mxu0 %v298
    %1258 = vmatpush1.msra.mxu0 %v297
    %1259 = vmatprep.subr.mxu0 %v300
    %1260 = vmatpush1.msra.mxu0 %v299
    %1261 = vmatprep.subr.mxu0 %v302
    %1262 = vmatpush1.msra.mxu0 %v301
    %1263 = vmatprep.subr.mxu0 %v304
    %1264 = vmatpush1.msra.mxu0 %v303
    %1265 = vmatprep.subr.mxu0 %v306
    %1266 = vmatpush1.msra.mxu0 %v305
    %1267 = vmatprep.subr.mxu0 %v308
    %1268 = vmatpush1.msra.mxu0 %v307
    %1269 = vmatprep.subr.mxu0 %v310
    %1270 = vmatpush1.msra.mxu0 %v309
    %1271 = vmatprep.mubr.f32.mxu0 %v891
    %1272 = vmatmul.mubr.f32.gmra.mrb[0].mxu0 %v889
    %v1273 = vpop.f32.mrb[0].mxu0
    %v1274 = vadd.f32 %v1203, %v1273
    %v1275 = vpop.f32.mrb[0].mxu0
    %v1276 = vadd.f32 %v1205, %v1275
    %1277 = vdwg.mxu0
    %1278 = vmatprep.subr.mxu0 %v312
    %1279 = vmatpush1.msra.mxu0 %v311
    %1280 = vmatprep.subr.mxu0 %v314
    %1281 = vmatpush1.msra.mxu0 %v313
    %1282 = vmatprep.subr.mxu0 %v316
    %1283 = vmatpush1.msra.mxu0 %v315
    %1284 = vmatprep.subr.mxu0 %v318
    %1285 = vmatpush1.msra.mxu0 %v317
    %1286 = vmatprep.subr.mxu0 %v320
    %1287 = vmatpush1.msra.mxu0 %v319
    %1288 = vmatprep.subr.mxu0 %v322
    %1289 = vmatpush1.msra.mxu0 %v321
    %1290 = vmatprep.subr.mxu0 %v324
    %1291 = vmatpush1.msra.mxu0 %v323
    %1292 = vmatprep.subr.mxu0 %v326
    %1293 = vmatpush1.msra.mxu0 %v325
    %1294 = vmatprep.subr.mxu0 %v328
    %1295 = vmatpush1.msra.mxu0 %v327
    %1296 = vmatprep.subr.mxu0 %v330
    %1297 = vmatpush1.msra.mxu0 %v329
    %1298 = vmatprep.subr.mxu0 %v332
    %1299 = vmatpush1.msra.mxu0 %v331
    %1300 = vmatprep.subr.mxu0 %v334
    %1301 = vmatpush1.msra.mxu0 %v333
    %1302 = vmatprep.subr.mxu0 %v336
    %1303 = vmatpush1.msra.mxu0 %v335
    %1304 = vmatprep.subr.mxu0 %v338
    %1305 = vmatpush1.msra.mxu0 %v337
    %1306 = vmatprep.subr.mxu0 %v340
    %1307 = vmatpush1.msra.mxu0 %v339
    %1308 = vmatprep.subr.mxu0 %v342
    %1309 = vmatpush1.msra.mxu0 %v341
    %1310 = vmatprep.subr.mxu0 %v344
    %1311 = vmatpush1.msra.mxu0 %v343
    %1312 = vmatprep.subr.mxu0 %v346
    %1313 = vmatpush1.msra.mxu0 %v345
    %1314 = vmatprep.subr.mxu0 %v348
    %1315 = vmatpush1.msra.mxu0 %v347
    %1316 = vmatprep.subr.mxu0 %v350
    %1317 = vmatpush1.msra.mxu0 %v349
    %1318 = vmatprep.subr.mxu0 %v352
    %1319 = vmatpush1.msra.mxu0 %v351
    %1320 = vmatprep.subr.mxu0 %v354
    %1321 = vmatpush1.msra.mxu0 %v353
    %1322 = vmatprep.subr.mxu0 %v356
    %1323 = vmatpush1.msra.mxu0 %v355
    %1324 = vmatprep.subr.mxu0 %v358
    %1325 = vmatpush1.msra.mxu0 %v357
    %1326 = vmatprep.subr.mxu0 %v360
    %1327 = vmatpush1.msra.mxu0 %v359
    %1328 = vmatprep.subr.mxu0 %v362
    %1329 = vmatpush1.msra.mxu0 %v361
    %1330 = vmatprep.subr.mxu0 %v364
    %1331 = vmatpush1.msra.mxu0 %v363
    %1332 = vmatprep.subr.mxu0 %v366
    %1333 = vmatpush1.msra.mxu0 %v365
    %1334 = vmatprep.subr.mxu0 %v368
    %1335 = vmatpush1.msra.mxu0 %v367
    %1336 = vmatprep.subr.mxu0 %v370
    %1337 = vmatpush1.msra.mxu0 %v369
    %1338 = vmatprep.subr.mxu0 %v372
    %1339 = vmatpush1.msra.mxu0 %v371
    %1340 = vmatprep.subr.mxu0 %v374
    %1341 = vmatpush1.msra.mxu0 %v373
    %1342 = vmatprep.mubr.f32.mxu0 %v907
    %1343 = vmatmul.mubr.f32.gmra.mrb[0].mxu0 %v899
    %v1344 = vpop.f32.mrb[0].mxu0
    %v1345 = vadd.f32 %v1274, %v1344
    %v1346 = vpop.f32.mrb[0].mxu0
    %v1347 = vadd.f32 %v1276, %v1346
    %1348 = vdwg.mxu0
    %1349 = vmatprep.subr.mxu0 %v376
    %1350 = vmatpush1.msra.mxu0 %v375
    %1351 = vmatprep.subr.mxu0 %v378
    %1352 = vmatpush1.msra.mxu0 %v377
    %1353 = vmatprep.subr.mxu0 %v380
    %1354 = vmatpush1.msra.mxu0 %v379
    %1355 = vmatprep.subr.mxu0 %v382
    %1356 = vmatpush1.msra.mxu0 %v381
    %1357 = vmatprep.subr.mxu0 %v384
    %1358 = vmatpush1.msra.mxu0 %v383
    %1359 = vmatprep.subr.mxu0 %v386
    %1360 = vmatpush1.msra.mxu0 %v385
    %1361 = vmatprep.subr.mxu0 %v388
    %1362 = vmatpush1.msra.mxu0 %v387
    %1363 = vmatprep.subr.mxu0 %v390
    %1364 = vmatpush1.msra.mxu0 %v389
    %1365 = vmatprep.subr.mxu0 %v392
    %1366 = vmatpush1.msra.mxu0 %v391
    %1367 = vmatprep.subr.mxu0 %v394
    %1368 = vmatpush1.msra.mxu0 %v393
    %1369 = vmatprep.subr.mxu0 %v396
    %1370 = vmatpush1.msra.mxu0 %v395
    %1371 = vmatprep.subr.mxu0 %v398
    %1372 = vmatpush1.msra.mxu0 %v397
    %1373 = vmatprep.subr.mxu0 %v400
    %1374 = vmatpush1.msra.mxu0 %v399
    %1375 = vmatprep.subr.mxu0 %v402
    %1376 = vmatpush1.msra.mxu0 %v401
    %1377 = vmatprep.subr.mxu0 %v404
    %1378 = vmatpush1.msra.mxu0 %v403
    %1379 = vmatprep.subr.mxu0 %v406
    %1380 = vmatpush1.msra.mxu0 %v405
    %1381 = vmatprep.subr.mxu0 %v408
    %1382 = vmatpush1.msra.mxu0 %v407
    %1383 = vmatprep.subr.mxu0 %v410
    %1384 = vmatpush1.msra.mxu0 %v409
    %1385 = vmatprep.subr.mxu0 %v412
    %1386 = vmatpush1.msra.mxu0 %v411
    %1387 = vmatprep.subr.mxu0 %v414
    %1388 = vmatpush1.msra.mxu0 %v413
    %1389 = vmatprep.subr.mxu0 %v416
    %1390 = vmatpush1.msra.mxu0 %v415
    %1391 = vmatprep.subr.mxu0 %v418
    %1392 = vmatpush1.msra.mxu0 %v417
    %1393 = vmatprep.subr.mxu0 %v420
    %1394 = vmatpush1.msra.mxu0 %v419
    %1395 = vmatprep.subr.mxu0 %v422
    %1396 = vmatpush1.msra.mxu0 %v421
    %1397 = vmatprep.subr.mxu0 %v424
    %1398 = vmatpush1.msra.mxu0 %v423
    %1399 = vmatprep.subr.mxu0 %v426
    %1400 = vmatpush1.msra.mxu0 %v425
    %1401 = vmatprep.subr.mxu0 %v428
    %1402 = vmatpush1.msra.mxu0 %v427
    %1403 = vmatprep.subr.mxu0 %v430
    %1404 = vmatpush1.msra.mxu0 %v429
    %1405 = vmatprep.subr.mxu0 %v432
    %1406 = vmatpush1.msra.mxu0 %v431
    %1407 = vmatprep.subr.mxu0 %v434
    %1408 = vmatpush1.msra.mxu0 %v433
    %1409 = vmatprep.subr.mxu0 %v436
    %1410 = vmatpush1.msra.mxu0 %v435
    %1411 = vmatprep.subr.mxu0 %v438
    %1412 = vmatpush1.msra.mxu0 %v437
    %1413 = vmatprep.mubr.f32.mxu0 %v908
    %1414 = vmatmul.mubr.f32.gmra.mrb[0].mxu0 %v906
    %v1415 = vpop.f32.mrb[0].mxu0
    %v1416 = vadd.f32 %v1345, %v1415
    %v1417 = vpop.f32.mrb[0].mxu0
    %v1418 = vadd.f32 %v1347, %v1417
    %1419 = vdwg.mxu0
    %1420 = vmatprep.subr.mxu0 %v440
    %1421 = vmatpush1.msra.mxu0 %v439
    %1422 = vmatprep.subr.mxu0 %v442
    %1423 = vmatpush1.msra.mxu0 %v441
    %1424 = vmatprep.subr.mxu0 %v444
    %1425 = vmatpush1.msra.mxu0 %v443
    %1426 = vmatprep.subr.mxu0 %v446
    %1427 = vmatpush1.msra.mxu0 %v445
    %1428 = vmatprep.subr.mxu0 %v448
    %1429 = vmatpush1.msra.mxu0 %v447
    %1430 = vmatprep.subr.mxu0 %v450
    %1431 = vmatpush1.msra.mxu0 %v449
    %1432 = vmatprep.subr.mxu0 %v452
    %1433 = vmatpush1.msra.mxu0 %v451
    %1434 = vmatprep.subr.mxu0 %v454
    %1435 = vmatpush1.msra.mxu0 %v453
    %1436 = vmatprep.subr.mxu0 %v456
    %1437 = vmatpush1.msra.mxu0 %v455
    %1438 = vmatprep.subr.mxu0 %v458
    %1439 = vmatpush1.msra.mxu0 %v457
    %1440 = vmatprep.subr.mxu0 %v460
    %1441 = vmatpush1.msra.mxu0 %v459
    %1442 = vmatprep.subr.mxu0 %v462
    %1443 = vmatpush1.msra.mxu0 %v461
    %1444 = vmatprep.subr.mxu0 %v464
    %1445 = vmatpush1.msra.mxu0 %v463
    %1446 = vmatprep.subr.mxu0 %v466
    %1447 = vmatpush1.msra.mxu0 %v465
    %1448 = vmatprep.subr.mxu0 %v468
    %1449 = vmatpush1.msra.mxu0 %v467
    %1450 = vmatprep.subr.mxu0 %v470
    %1451 = vmatpush1.msra.mxu0 %v469
    %1452 = vmatprep.subr.mxu0 %v472
    %1453 = vmatpush1.msra.mxu0 %v471
    %1454 = vmatprep.subr.mxu0 %v474
    %1455 = vmatpush1.msra.mxu0 %v473
    %1456 = vmatprep.subr.mxu0 %v476
    %1457 = vmatpush1.msra.mxu0 %v475
    %1458 = vmatprep.subr.mxu0 %v478
    %1459 = vmatpush1.msra.mxu0 %v477
    %1460 = vmatprep.subr.mxu0 %v480
    %1461 = vmatpush1.msra.mxu0 %v479
    %1462 = vmatprep.subr.mxu0 %v482
    %1463 = vmatpush1.msra.mxu0 %v481
    %1464 = vmatprep.subr.mxu0 %v484
    %1465 = vmatpush1.msra.mxu0 %v483
    %1466 = vmatprep.subr.mxu0 %v486
    %1467 = vmatpush1.msra.mxu0 %v485
    %1468 = vmatprep.subr.mxu0 %v488
    %1469 = vmatpush1.msra.mxu0 %v487
    %1470 = vmatprep.subr.mxu0 %v490
    %1471 = vmatpush1.msra.mxu0 %v489
    %1472 = vmatprep.subr.mxu0 %v492
    %1473 = vmatpush1.msra.mxu0 %v491
    %1474 = vmatprep.subr.mxu0 %v494
    %1475 = vmatpush1.msra.mxu0 %v493
    %1476 = vmatprep.subr.mxu0 %v496
    %1477 = vmatpush1.msra.mxu0 %v495
    %1478 = vmatprep.subr.mxu0 %v498
    %1479 = vmatpush1.msra.mxu0 %v497
    %1480 = vmatprep.subr.mxu0 %v500
    %1481 = vmatpush1.msra.mxu0 %v499
    %1482 = vmatprep.subr.mxu0 %v502
    %1483 = vmatpush1.msra.mxu0 %v501
    %1484 = vmatprep.mubr.f32.mxu0 %v924
    %1485 = vmatmul.mubr.f32.gmra.mrb[0].mxu0 %v916
    %v1486 = vpop.f32.mrb[0].mxu0
    %v1487 = vadd.f32 %v1416, %v1486
    %v1488 = vpop.f32.mrb[0].mxu0
    %v1489 = vadd.f32 %v1418, %v1488
    %1490 = vdwg.mxu0
    %1491 = vmatprep.subr.mxu0 %v504
    %1492 = vmatpush1.msra.mxu0 %v503
    %1493 = vmatprep.subr.mxu0 %v506
    %1494 = vmatpush1.msra.mxu0 %v505
    %1495 = vmatprep.subr.mxu0 %v508
    %1496 = vmatpush1.msra.mxu0 %v507
    %1497 = vmatprep.subr.mxu0 %v510
    %1498 = vmatpush1.msra.mxu0 %v509
    %1499 = vmatprep.subr.mxu0 %v512
    %1500 = vmatpush1.msra.mxu0 %v511
    %1501 = vmatprep.subr.mxu0 %v514
    %1502 = vmatpush1.msra.mxu0 %v513
    %1503 = vmatprep.subr.mxu0 %v516
    %1504 = vmatpush1.msra.mxu0 %v515
    %1505 = vmatprep.subr.mxu0 %v518
    %1506 = vmatpush1.msra.mxu0 %v517
    %1507 = vmatprep.subr.mxu0 %v520
    %1508 = vmatpush1.msra.mxu0 %v519
    %1509 = vmatprep.subr.mxu0 %v522
    %1510 = vmatpush1.msra.mxu0 %v521
    %1511 = vmatprep.subr.mxu0 %v524
    %1512 = vmatpush1.msra.mxu0 %v523
    %1513 = vmatprep.subr.mxu0 %v526
    %1514 = vmatpush1.msra.mxu0 %v525
    %1515 = vmatprep.subr.mxu0 %v528
    %1516 = vmatpush1.msra.mxu0 %v527
    %1517 = vmatprep.subr.mxu0 %v530
    %1518 = vmatpush1.msra.mxu0 %v529
    %1519 = vmatprep.subr.mxu0 %v532
    %1520 = vmatpush1.msra.mxu0 %v531
    %1521 = vmatprep.subr.mxu0 %v534
    %1522 = vmatpush1.msra.mxu0 %v533
    %1523 = vmatprep.subr.mxu0 %v536
    %1524 = vmatpush1.msra.mxu0 %v535
    %1525 = vmatprep.subr.mxu0 %v538
    %1526 = vmatpush1.msra.mxu0 %v537
    %1527 = vmatprep.subr.mxu0 %v540
    %1528 = vmatpush1.msra.mxu0 %v539
    %1529 = vmatprep.subr.mxu0 %v542
    %1530 = vmatpush1.msra.mxu0 %v541
    %1531 = vmatprep.subr.mxu0 %v544
    %1532 = vmatpush1.msra.mxu0 %v543
    %1533 = vmatprep.subr.mxu0 %v546
    %1534 = vmatpush1.msra.mxu0 %v545
    %1535 = vmatprep.subr.mxu0 %v548
    %1536 = vmatpush1.msra.mxu0 %v547
    %1537 = vmatprep.subr.mxu0 %v550
    %1538 = vmatpush1.msra.mxu0 %v549
    %1539 = vmatprep.subr.mxu0 %v552
    %1540 = vmatpush1.msra.mxu0 %v551
    %1541 = vmatprep.subr.mxu0 %v554
    %1542 = vmatpush1.msra.mxu0 %v553
    %1543 = vmatprep.subr.mxu0 %v556
    %1544 = vmatpush1.msra.mxu0 %v555
    %1545 = vmatprep.subr.mxu0 %v558
    %1546 = vmatpush1.msra.mxu0 %v557
    %1547 = vmatprep.subr.mxu0 %v560
    %1548 = vmatpush1.msra.mxu0 %v559
    %1549 = vmatprep.subr.mxu0 %v562
    %1550 = vmatpush1.msra.mxu0 %v561
    %1551 = vmatprep.subr.mxu0 %v564
    %1552 = vmatpush1.msra.mxu0 %v563
    %1553 = vmatprep.subr.mxu0 %v566
    %1554 = vmatpush1.msra.mxu0 %v565
    %1555 = vmatprep.mubr.f32.mxu0 %v925
    %1556 = vmatmul.mubr.f32.gmra.mrb[0].mxu0 %v923
    %v1557 = vpop.f32.mrb[0].mxu0
    %v1558 = vadd.f32 %v1487, %v1557
    %v1559 = vpop.f32.mrb[0].mxu0
    %v1560 = vadd.f32 %v1489, %v1559
    %1561 = vdwg.mxu0
    %1562 = vmatprep.subr.mxu0 %v568
    %1563 = vmatpush1.msra.mxu0 %v567
    %1564 = vmatprep.subr.mxu0 %v570
    %1565 = vmatpush1.msra.mxu0 %v569
    %1566 = vmatprep.subr.mxu0 %v572
    %1567 = vmatpush1.msra.mxu0 %v571
    %1568 = vmatprep.subr.mxu0 %v574
    %1569 = vmatpush1.msra.mxu0 %v573
    %1570 = vmatprep.subr.mxu0 %v576
    %1571 = vmatpush1.msra.mxu0 %v575
    %1572 = vmatprep.subr.mxu0 %v578
    %1573 = vmatpush1.msra.mxu0 %v577
    %1574 = vmatprep.subr.mxu0 %v580
    %1575 = vmatpush1.msra.mxu0 %v579
    %1576 = vmatprep.subr.mxu0 %v582
    %1577 = vmatpush1.msra.mxu0 %v581
    %1578 = vmatprep.subr.mxu0 %v584
    %1579 = vmatpush1.msra.mxu0 %v583
    %1580 = vmatprep.subr.mxu0 %v586
    %1581 = vmatpush1.msra.mxu0 %v585
    %1582 = vmatprep.subr.mxu0 %v588
    %1583 = vmatpush1.msra.mxu0 %v587
    %1584 = vmatprep.subr.mxu0 %v590
    %1585 = vmatpush1.msra.mxu0 %v589
    %1586 = vmatprep.subr.mxu0 %v592
    %1587 = vmatpush1.msra.mxu0 %v591
    %1588 = vmatprep.subr.mxu0 %v594
    %1589 = vmatpush1.msra.mxu0 %v593
    %1590 = vmatprep.subr.mxu0 %v596
    %1591 = vmatpush1.msra.mxu0 %v595
    %1592 = vmatprep.subr.mxu0 %v598
    %1593 = vmatpush1.msra.mxu0 %v597
    %1594 = vmatprep.subr.mxu0 %v600
    %1595 = vmatpush1.msra.mxu0 %v599
    %1596 = vmatprep.subr.mxu0 %v602
    %1597 = vmatpush1.msra.mxu0 %v601
    %1598 = vmatprep.subr.mxu0 %v604
    %1599 = vmatpush1.msra.mxu0 %v603
    %1600 = vmatprep.subr.mxu0 %v606
    %1601 = vmatpush1.msra.mxu0 %v605
    %1602 = vmatprep.subr.mxu0 %v608
    %1603 = vmatpush1.msra.mxu0 %v607
    %1604 = vmatprep.subr.mxu0 %v610
    %1605 = vmatpush1.msra.mxu0 %v609
    %1606 = vmatprep.subr.mxu0 %v612
    %1607 = vmatpush1.msra.mxu0 %v611
    %1608 = vmatprep.subr.mxu0 %v614
    %1609 = vmatpush1.msra.mxu0 %v613
    %1610 = vmatprep.subr.mxu0 %v616
    %1611 = vmatpush1.msra.mxu0 %v615
    %1612 = vmatprep.subr.mxu0 %v618
    %1613 = vmatpush1.msra.mxu0 %v617
    %1614 = vmatprep.subr.mxu0 %v620
    %1615 = vmatpush1.msra.mxu0 %v619
    %1616 = vmatprep.subr.mxu0 %v622
    %1617 = vmatpush1.msra.mxu0 %v621
    %1618 = vmatprep.subr.mxu0 %v624
    %1619 = vmatpush1.msra.mxu0 %v623
    %1620 = vmatprep.subr.mxu0 %v626
    %1621 = vmatpush1.msra.mxu0 %v625
    %1622 = vmatprep.subr.mxu0 %v628
    %1623 = vmatpush1.msra.mxu0 %v627
    %1624 = vmatprep.subr.mxu0 %v630
    %1625 = vmatpush1.msra.mxu0 %v629
    %1626 = vmatprep.mubr.f32.mxu0 %v941
    %1627 = vmatmul.mubr.f32.gmra.mrb[0].mxu0 %v933
    %v1628 = vpop.f32.mrb[0].mxu0
    %v1629 = vadd.f32 %v1558, %v1628
    %v1630 = vpop.f32.mrb[0].mxu0
    %v1631 = vadd.f32 %v1560, %v1630
    %1632 = vdwg.mxu0
    %1633 = vmatprep.subr.mxu0 %v632
    %1634 = vmatpush1.msra.mxu0 %v631
    %1635 = vmatprep.subr.mxu0 %v634
    %1636 = vmatpush1.msra.mxu0 %v633
    %1637 = vmatprep.subr.mxu0 %v636
    %1638 = vmatpush1.msra.mxu0 %v635
    %1639 = vmatprep.subr.mxu0 %v638
    %1640 = vmatpush1.msra.mxu0 %v637
    %1641 = vmatprep.subr.mxu0 %v640
    %1642 = vmatpush1.msra.mxu0 %v639
    %1643 = vmatprep.subr.mxu0 %v642
    %1644 = vmatpush1.msra.mxu0 %v641
    %1645 = vmatprep.subr.mxu0 %v644
    %1646 = vmatpush1.msra.mxu0 %v643
    %1647 = vmatprep.subr.mxu0 %v646
    %1648 = vmatpush1.msra.mxu0 %v645
    %1649 = vmatprep.subr.mxu0 %v648
    %1650 = vmatpush1.msra.mxu0 %v647
    %1651 = vmatprep.subr.mxu0 %v650
    %1652 = vmatpush1.msra.mxu0 %v649
    %1653 = vmatprep.subr.mxu0 %v652
    %1654 = vmatpush1.msra.mxu0 %v651
    %1655 = vmatprep.subr.mxu0 %v654
    %1656 = vmatpush1.msra.mxu0 %v653
    %1657 = vmatprep.subr.mxu0 %v656
    %1658 = vmatpush1.msra.mxu0 %v655
    %1659 = vmatprep.subr.mxu0 %v658
    %1660 = vmatpush1.msra.mxu0 %v657
    %1661 = vmatprep.subr.mxu0 %v660
    %1662 = vmatpush1.msra.mxu0 %v659
    %1663 = vmatprep.subr.mxu0 %v662
    %1664 = vmatpush1.msra.mxu0 %v661
    %1665 = vmatprep.subr.mxu0 %v664
    %1666 = vmatpush1.msra.mxu0 %v663
    %1667 = vmatprep.subr.mxu0 %v666
    %1668 = vmatpush1.msra.mxu0 %v665
    %1669 = vmatprep.subr.mxu0 %v668
    %1670 = vmatpush1.msra.mxu0 %v667
    %1671 = vmatprep.subr.mxu0 %v670
    %1672 = vmatpush1.msra.mxu0 %v669
    %1673 = vmatprep.subr.mxu0 %v672
    %1674 = vmatpush1.msra.mxu0 %v671
    %1675 = vmatprep.subr.mxu0 %v674
    %1676 = vmatpush1.msra.mxu0 %v673
    %1677 = vmatprep.subr.mxu0 %v676
    %1678 = vmatpush1.msra.mxu0 %v675
    %1679 = vmatprep.subr.mxu0 %v678
    %1680 = vmatpush1.msra.mxu0 %v677
    %1681 = vmatprep.subr.mxu0 %v680
    %1682 = vmatpush1.msra.mxu0 %v679
    %1683 = vmatprep.subr.mxu0 %v682
    %1684 = vmatpush1.msra.mxu0 %v681
    %1685 = vmatprep.subr.mxu0 %v684
    %1686 = vmatpush1.msra.mxu0 %v683
    %1687 = vmatprep.subr.mxu0 %v686
    %1688 = vmatpush1.msra.mxu0 %v685
    %1689 = vmatprep.subr.mxu0 %v688
    %1690 = vmatpush1.msra.mxu0 %v687
    %1691 = vmatprep.subr.mxu0 %v690
    %1692 = vmatpush1.msra.mxu0 %v689
    %1693 = vmatprep.subr.mxu0 %v692
    %1694 = vmatpush1.msra.mxu0 %v691
    %1695 = vmatprep.subr.mxu0 %v694
    %1696 = vmatpush1.msra.mxu0 %v693
    %1697 = vmatprep.mubr.f32.mxu0 %v942
    %1698 = vmatmul.mubr.f32.gmra.mrb[0].mxu0 %v940
    %v1699 = vpop.f32.mrb[0].mxu0
    %v1700 = vadd.f32 %v1629, %v1699
    %v1701 = vpop.f32.mrb[0].mxu0
    %v1702 = vadd.f32 %v1631, %v1701
    %1703 = vdwg.mxu0
    %1704 = vmatprep.subr.mxu0 %v696
    %1705 = vmatpush1.msra.mxu0 %v695
    %1706 = vmatprep.subr.mxu0 %v698
    %1707 = vmatpush1.msra.mxu0 %v697
    %1708 = vmatprep.subr.mxu0 %v700
    %1709 = vmatpush1.msra.mxu0 %v699
    %1710 = vmatprep.subr.mxu0 %v702
    %1711 = vmatpush1.msra.mxu0 %v701
    %1712 = vmatprep.subr.mxu0 %v704
    %1713 = vmatpush1.msra.mxu0 %v703
    %1714 = vmatprep.subr.mxu0 %v706
    %1715 = vmatpush1.msra.mxu0 %v705
    %1716 = vmatprep.subr.mxu0 %v708
    %1717 = vmatpush1.msra.mxu0 %v707
    %1718 = vmatprep.subr.mxu0 %v710
    %1719 = vmatpush1.msra.mxu0 %v709
    %1720 = vmatprep.subr.mxu0 %v712
    %1721 = vmatpush1.msra.mxu0 %v711
    %1722 = vmatprep.subr.mxu0 %v714
    %1723 = vmatpush1.msra.mxu0 %v713
    %1724 = vmatprep.subr.mxu0 %v716
    %1725 = vmatpush1.msra.mxu0 %v715
    %1726 = vmatprep.subr.mxu0 %v718
    %1727 = vmatpush1.msra.mxu0 %v717
    %1728 = vmatprep.subr.mxu0 %v720
    %1729 = vmatpush1.msra.mxu0 %v719
    %1730 = vmatprep.subr.mxu0 %v722
    %1731 = vmatpush1.msra.mxu0 %v721
    %1732 = vmatprep.subr.mxu0 %v724
    %1733 = vmatpush1.msra.mxu0 %v723
    %1734 = vmatprep.subr.mxu0 %v726
    %1735 = vmatpush1.msra.mxu0 %v725
    %1736 = vmatprep.subr.mxu0 %v728
    %1737 = vmatpush1.msra.mxu0 %v727
    %1738 = vmatprep.subr.mxu0 %v730
    %1739 = vmatpush1.msra.mxu0 %v729
    %1740 = vmatprep.subr.mxu0 %v732
    %1741 = vmatpush1.msra.mxu0 %v731
    %1742 = vmatprep.subr.mxu0 %v734
    %1743 = vmatpush1.msra.mxu0 %v733
    %1744 = vmatprep.subr.mxu0 %v736
    %1745 = vmatpush1.msra.mxu0 %v735
    %1746 = vmatprep.subr.mxu0 %v738
    %1747 = vmatpush1.msra.mxu0 %v737
    %1748 = vmatprep.subr.mxu0 %v740
    %1749 = vmatpush1.msra.mxu0 %v739
    %1750 = vmatprep.subr.mxu0 %v742
    %1751 = vmatpush1.msra.mxu0 %v741
    %1752 = vmatprep.subr.mxu0 %v744
    %1753 = vmatpush1.msra.mxu0 %v743
    %1754 = vmatprep.subr.mxu0 %v746
    %1755 = vmatpush1.msra.mxu0 %v745
    %1756 = vmatprep.subr.mxu0 %v748
    %1757 = vmatpush1.msra.mxu0 %v747
    %1758 = vmatprep.subr.mxu0 %v750
    %1759 = vmatpush1.msra.mxu0 %v749
    %1760 = vmatprep.subr.mxu0 %v752
    %1761 = vmatpush1.msra.mxu0 %v751
    %1762 = vmatprep.subr.mxu0 %v754
    %1763 = vmatpush1.msra.mxu0 %v753
    %1764 = vmatprep.subr.mxu0 %v756
    %1765 = vmatpush1.msra.mxu0 %v755
    %1766 = vmatprep.subr.mxu0 %v758
    %1767 = vmatpush1.msra.mxu0 %v757
    %1768 = vmatprep.mubr.f32.mxu0 %v958
    %1769 = vmatmul.mubr.f32.gmra.mrb[0].mxu0 %v950
    %v1770 = vpop.f32.mrb[0].mxu0
    %v1771 = vadd.f32 %v1700, %v1770
    %v1772 = vpop.f32.mrb[0].mxu0
    %v1773 = vadd.f32 %v1702, %v1772
    %1774 = vdwg.mxu0
    %1775 = vmatprep.subr.mxu0 %v760
    %1776 = vmatpush1.msra.mxu0 %v759
    %1777 = vmatprep.subr.mxu0 %v762
    %1778 = vmatpush1.msra.mxu0 %v761
    %1779 = vmatprep.subr.mxu0 %v764
    %1780 = vmatpush1.msra.mxu0 %v763
    %1781 = vmatprep.subr.mxu0 %v766
    %1782 = vmatpush1.msra.mxu0 %v765
    %1783 = vmatprep.subr.mxu0 %v768
    %1784 = vmatpush1.msra.mxu0 %v767
    %1785 = vmatprep.subr.mxu0 %v770
    %1786 = vmatpush1.msra.mxu0 %v769
    %1787 = vmatprep.subr.mxu0 %v772
    %1788 = vmatpush1.msra.mxu0 %v771
    %1789 = vmatprep.subr.mxu0 %v774
    %1790 = vmatpush1.msra.mxu0 %v773
    %1791 = vmatprep.subr.mxu0 %v776
    %1792 = vmatpush1.msra.mxu0 %v775
    %1793 = vmatprep.subr.mxu0 %v778
    %1794 = vmatpush1.msra.mxu0 %v777
    %1795 = vmatprep.subr.mxu0 %v780
    %1796 = vmatpush1.msra.mxu0 %v779
    %1797 = vmatprep.subr.mxu0 %v782
    %1798 = vmatpush1.msra.mxu0 %v781
    %1799 = vmatprep.subr.mxu0 %v784
    %1800 = vmatpush1.msra.mxu0 %v783
    %1801 = vmatprep.subr.mxu0 %v786
    %1802 = vmatpush1.msra.mxu0 %v785
    %1803 = vmatprep.subr.mxu0 %v788
    %1804 = vmatpush1.msra.mxu0 %v787
    %1805 = vmatprep.subr.mxu0 %v790
    %1806 = vmatpush1.msra.mxu0 %v789
    %1807 = vmatprep.subr.mxu0 %v792
    %1808 = vmatpush1.msra.mxu0 %v791
    %1809 = vmatprep.subr.mxu0 %v794
    %1810 = vmatpush1.msra.mxu0 %v793
    %1811 = vmatprep.subr.mxu0 %v796
    %1812 = vmatpush1.msra.mxu0 %v795
    %1813 = vmatprep.subr.mxu0 %v798
    %1814 = vmatpush1.msra.mxu0 %v797
    %1815 = vmatprep.subr.mxu0 %v800
    %1816 = vmatpush1.msra.mxu0 %v799
    %1817 = vmatprep.subr.mxu0 %v802
    %1818 = vmatpush1.msra.mxu0 %v801
    %1819 = vmatprep.subr.mxu0 %v804
    %1820 = vmatpush1.msra.mxu0 %v803
    %1821 = vmatprep.subr.mxu0 %v806
    %1822 = vmatpush1.msra.mxu0 %v805
    %1823 = vmatprep.subr.mxu0 %v808
    %1824 = vmatpush1.msra.mxu0 %v807
    %1825 = vmatprep.subr.mxu0 %v810
    %1826 = vmatpush1.msra.mxu0 %v809
    %1827 = vmatprep.subr.mxu0 %v812
    %1828 = vmatpush1.msra.mxu0 %v811
    %1829 = vmatprep.subr.mxu0 %v814
    %1830 = vmatpush1.msra.mxu0 %v813
    %1831 = vmatprep.subr.mxu0 %v816
    %1832 = vmatpush1.msra.mxu0 %v815
    %1833 = vmatprep.subr.mxu0 %v818
    %1834 = vmatpush1.msra.mxu0 %v817
    %1835 = vmatprep.subr.mxu0 %v820
    %1836 = vmatpush1.msra.mxu0 %v819
    %1837 = vmatprep.subr.mxu0 %v822
    %1838 = vmatpush1.msra.mxu0 %v821
    %1839 = vmatprep.mubr.f32.mxu0 %v959
    %1840 = vmatmul.mubr.f32.gmra.mrb[0].mxu0 %v957
    %v1841 = vpop.f32.mrb[0].mxu0
    %v1842 = vadd.f32 %v1771, %v1841
    %v1843 = vpop.f32.mrb[0].mxu0
    %v1844 = vadd.f32 %v1773, %v1843
    %1845 = vdwg.mxu0
    %1846 = vmatprep.subr.mxu0 %v824
    %1847 = vmatpush1.msra.mxu0 %v823
    %1848 = vmatprep.subr.mxu0 %v826
    %1849 = vmatpush1.msra.mxu0 %v825
    %1850 = vmatprep.subr.mxu0 %v828
    %1851 = vmatpush1.msra.mxu0 %v827
    %1852 = vmatprep.subr.mxu0 %v830
    %1853 = vmatpush1.msra.mxu0 %v829
    %1854 = vmatprep.subr.mxu0 %v832
    %1855 = vmatpush1.msra.mxu0 %v831
    %1856 = vmatprep.subr.mxu0 %v834
    %1857 = vmatpush1.msra.mxu0 %v833
    %1858 = vmatprep.subr.mxu0 %v836
    %1859 = vmatpush1.msra.mxu0 %v835
    %1860 = vmatprep.subr.mxu0 %v838
    %1861 = vmatpush1.msra.mxu0 %v837
    %1862 = vmatprep.subr.mxu0 0.0
    %1863 = vmatpush1.msra.mxu0 0.0
    %1864 = vmatprep.subr.mxu0 0.0
    %1865 = vmatpush1.msra.mxu0 0.0
    %1866 = vmatprep.subr.mxu0 0.0
    %1867 = vmatpush1.msra.mxu0 0.0
    %1868 = vmatprep.subr.mxu0 0.0
    %1869 = vmatpush1.msra.mxu0 0.0
    %1870 = vmatprep.subr.mxu0 0.0
    %1871 = vmatpush1.msra.mxu0 0.0
    %1872 = vmatprep.subr.mxu0 0.0
    %1873 = vmatpush1.msra.mxu0 0.0
    %1874 = vmatprep.subr.mxu0 0.0
    %1875 = vmatpush1.msra.mxu0 0.0
    %1876 = vmatprep.subr.mxu0 0.0
    %1877 = vmatpush1.msra.mxu0 0.0
    %1878 = vmatprep.subr.mxu0 0.0
    %1879 = vmatpush1.msra.mxu0 0.0
    %1880 = vmatprep.subr.mxu0 0.0
    %1881 = vmatpush1.msra.mxu0 0.0
    %1882 = vmatprep.subr.mxu0 0.0
    %1883 = vmatpush1.msra.mxu0 0.0
    %1884 = vmatprep.subr.mxu0 0.0
    %1885 = vmatpush1.msra.mxu0 0.0
    %1886 = vmatprep.subr.mxu0 0.0
    %1887 = vmatpush1.msra.mxu0 0.0
    %1888 = vmatprep.subr.mxu0 0.0
    %1889 = vmatpush1.msra.mxu0 0.0
    %1890 = vmatprep.subr.mxu0 0.0
    %1891 = vmatpush1.msra.mxu0 0.0
    %1892 = vmatprep.subr.mxu0 0.0
    %1893 = vmatpush1.msra.mxu0 0.0
    %1894 = vmatprep.subr.mxu0 0.0
    %1895 = vmatpush1.msra.mxu0 0.0
    %1896 = vmatprep.subr.mxu0 0.0
    %1897 = vmatpush1.msra.mxu0 0.0
    %1898 = vmatprep.subr.mxu0 0.0
    %1899 = vmatpush1.msra.mxu0 0.0
    %1900 = vmatprep.subr.mxu0 0.0
    %1901 = vmatpush1.msra.mxu0 0.0
    %1902 = vmatprep.subr.mxu0 0.0
    %1903 = vmatpush1.msra.mxu0 0.0
    %1904 = vmatprep.subr.mxu0 0.0
    %1905 = vmatpush1.msra.mxu0 0.0
    %1906 = vmatprep.subr.mxu0 0.0
    %1907 = vmatpush1.msra.mxu0 0.0
    %1908 = vmatprep.subr.mxu0 0.0
    %1909 = vmatpush1.msra.mxu0 0.0
    %1910 = vmatprep.mubr.f32.mxu0 0.0
    %1911 = vmatmul.mubr.f32.gmra.mrb[0].mxu0 %v992
    %v1912 = vpop.f32.mrb[0].mxu0
    %v1913 = vadd.f32 %v1842, %v1912
    %v1914 = vpop.f32.mrb[0].mxu0
    %v1915 = vadd.f32 %v1844, %v1914
    %1916 = vdwg.mxu0
    %v1917 = vmax.f32 %v1913, 0.0
    %v1918 = vmax.f32 %v1915, 0.0
    %v1919 = vld [vmem:[%s3] sm:$0xff]
    %v1920 = vld [vmem:[%s3 + $0x8] sm:$0xff]
    %v1921 = vld [vmem:[%s3 + $0x10] sm:$0xff]
    %v1922 = vld [vmem:[%s3 + $0x18] sm:$0xff]
    %v1923 = vld [vmem:[%s3 + $0x20] sm:$0xff]
    %v1924 = vld [vmem:[%s3 + $0x28] sm:$0xff]
    %v1925 = vld [vmem:[%s3 + $0x30] sm:$0xff]
    %v1926 = vld [vmem:[%s3 + $0x38] sm:$0xff]
    %v1927 = vld [vmem:[%s3 + $0x40] sm:$0xff]
    %v1928 = vld [vmem:[%s3 + $0x48] sm:$0xff]
    %v1929 = vld [vmem:[%s3 + $0x50] sm:$0xff]
    %v1930 = vld [vmem:[%s3 + $0x58] sm:$0xff]
    %v1931 = vld [vmem:[%s3 + $0x60] sm:$0xff]
    %v1932 = vld [vmem:[%s3 + $0x68] sm:$0xff]
    %v1933 = vld [vmem:[%s3 + $0x70] sm:$0xff]
    %v1934 = vld [vmem:[%s3 + $0x78] sm:$0xff]
    %v1935 = vld [vmem:[%s3 + $0x80] sm:$0xff]
    %v1936 = vld [vmem:[%s3 + $0x88] sm:$0xff]
    %v1937 = vld [vmem:[%s3 + $0x90] sm:$0xff]
    %v1938 = vld [vmem:[%s3 + $0x98] sm:$0xff]
    %v1939 = vld [vmem:[%s3 + $0xa0] sm:$0xff]
    %v1940 = vld [vmem:[%s3 + $0xa8] sm:$0xff]
    %v1941 = vld [vmem:[%s3 + $0xb0] sm:$0xff]
    %v1942 = vld [vmem:[%s3 + $0xb8] sm:$0xff]
    %v1943 = vld [vmem:[%s3 + $0xc0] sm:$0xff]
    %v1944 = vld [vmem:[%s3 + $0xc8] sm:$0xff]
    %v1945 = vld [vmem:[%s3 + $0xd0] sm:$0xff]
    %v1946 = vld [vmem:[%s3 + $0xd8] sm:$0xff]
    %v1947 = vld [vmem:[%s3 + $0xe0] sm:$0xff]
    %v1948 = vld [vmem:[%s3 + $0xe8] sm:$0xff]
    %v1949 = vld [vmem:[%s3 + $0xf0] sm:$0xff]
    %v1950 = vld [vmem:[%s3 + $0xf8] sm:$0xff]
    %v1951 = vld [vmem:[%s3 + $0x100] sm:$0xff]
    %v1952 = vld [vmem:[%s3 + $0x108] sm:$0xff]
    %v1953 = vld [vmem:[%s3 + $0x110] sm:$0xff]
    %v1954 = vld [vmem:[%s3 + $0x118] sm:$0xff]
    %v1955 = vld [vmem:[%s3 + $0x120] sm:$0xff]
    %v1956 = vld [vmem:[%s3 + $0x128] sm:$0xff]
    %v1957 = vld [vmem:[%s3 + $0x130] sm:$0xff]
    %v1958 = vld [vmem:[%s3 + $0x138] sm:$0xff]
    %v1959 = vld [vmem:[%s3 + $0x140] sm:$0xff]
    %v1960 = vld [vmem:[%s3 + $0x148] sm:$0xff]
    %v1961 = vld [vmem:[%s3 + $0x150] sm:$0xff]
    %v1962 = vld [vmem:[%s3 + $0x158] sm:$0xff]
    %v1963 = vld [vmem:[%s3 + $0x160] sm:$0xff]
    %v1964 = vld [vmem:[%s3 + $0x168] sm:$0xff]
    %v1965 = vld [vmem:[%s3 + $0x170] sm:$0xff]
    %v1966 = vld [vmem:[%s3 + $0x178] sm:$0xff]
    %v1967 = vld [vmem:[%s3 + $0x180] sm:$0xff]
    %v1968 = vld [vmem:[%s3 + $0x188] sm:$0xff]
    %v1969 = vld [vmem:[%s3 + $0x190] sm:$0xff]
    %v1970 = vld [vmem:[%s3 + $0x198] sm:$0xff]
    %v1971 = vld [vmem:[%s3 + $0x1a0] sm:$0xff]
    %v1972 = vld [vmem:[%s3 + $0x1a8] sm:$0xff]
    %v1973 = vld [vmem:[%s3 + $0x1b0] sm:$0xff]
    %v1974 = vld [vmem:[%s3 + $0x1b8] sm:$0xff]
    %v1975 = vld [vmem:[%s3 + $0x1c0] sm:$0xff]
    %v1976 = vld [vmem:[%s3 + $0x1c8] sm:$0xff]
    %v1977 = vld [vmem:[%s3 + $0x1d0] sm:$0xff]
    %v1978 = vld [vmem:[%s3 + $0x1d8] sm:$0xff]
    %v1979 = vld [vmem:[%s3 + $0x1e0] sm:$0xff]
    %v1980 = vld [vmem:[%s3 + $0x1e8] sm:$0xff]
    %v1981 = vld [vmem:[%s3 + $0x1f0] sm:$0xff]
    %v1982 = vld [vmem:[%s3 + $0x1f8] sm:$0xff]
    %v1983 = vld [vmem:[%s3 + $0x200] sm:$0xff]
    %v1984 = vld [vmem:[%s3 + $0x208] sm:$0xff]
    %v1985 = vld [vmem:[%s3 + $0x210] sm:$0xff]
    %v1986 = vld [vmem:[%s3 + $0x218] sm:$0xff]
    %v1987 = vld [vmem:[%s3 + $0x220] sm:$0xff]
    %v1988 = vld [vmem:[%s3 + $0x228] sm:$0xff]
    %v1989 = vld [vmem:[%s3 + $0x230] sm:$0xff]
    %v1990 = vld [vmem:[%s3 + $0x238] sm:$0xff]
    %v1991 = vld [vmem:[%s3 + $0x240] sm:$0xff]
    %v1992 = vld [vmem:[%s3 + $0x248] sm:$0xff]
    %v1993 = vld [vmem:[%s3 + $0x250] sm:$0xff]
    %v1994 = vld [vmem:[%s3 + $0x258] sm:$0xff]
    %v1995 = vld [vmem:[%s3 + $0x260] sm:$0xff]
    %v1996 = vld [vmem:[%s3 + $0x268] sm:$0xff]
    %v1997 = vld [vmem:[%s3 + $0x270] sm:$0xff]
    %v1998 = vld [vmem:[%s3 + $0x278] sm:$0xff]
    %v1999 = vld [vmem:[%s3 + $0x280] sm:$0xff]
    %v2000 = vld [vmem:[%s3 + $0x288] sm:$0xff]
    %v2001 = vld [vmem:[%s3 + $0x290] sm:$0xff]
    %v2002 = vld [vmem:[%s3 + $0x298] sm:$0xff]
    %v2003 = vld [vmem:[%s3 + $0x2a0] sm:$0xff]
    %v2004 = vld [vmem:[%s3 + $0x2a8] sm:$0xff]
    %v2005 = vld [vmem:[%s3 + $0x2b0] sm:$0xff]
    %v2006 = vld [vmem:[%s3 + $0x2b8] sm:$0xff]
    %v2007 = vld [vmem:[%s3 + $0x2c0] sm:$0xff]
    %v2008 = vld [vmem:[%s3 + $0x2c8] sm:$0xff]
    %v2009 = vld [vmem:[%s3 + $0x2d0] sm:$0xff]
    %v2010 = vld [vmem:[%s3 + $0x2d8] sm:$0xff]
    %v2011 = vld [vmem:[%s3 + $0x2e0] sm:$0xff]
    %v2012 = vld [vmem:[%s3 + $0x2e8] sm:$0xff]
    %v2013 = vld [vmem:[%s3 + $0x2f0] sm:$0xff]
    %v2014 = vld [vmem:[%s3 + $0x2f8] sm:$0xff]
    %v2015 = vld [vmem:[%s3 + $0x300] sm:$0xff]
    %v2016 = vld [vmem:[%s3 + $0x308] sm:$0xff]
    %v2017 = vld [vmem:[%s3 + $0x310] sm:$0xff]
    %v2018 = vld [vmem:[%s3 + $0x318] sm:$0xff]
    %v2019 = vld [vmem:[%s3 + $0x320] sm:$0xff]
    %v2020 = vld [vmem:[%s3 + $0x328] sm:$0xff]
    %v2021 = vld [vmem:[%s3 + $0x330] sm:$0xff]
    %v2022 = vld [vmem:[%s3 + $0x338] sm:$0xff]
    %v2023 = vld [vmem:[%s3 + $0x340] sm:$0xff]
    %v2024 = vld [vmem:[%s3 + $0x348] sm:$0xff]
    %v2025 = vld [vmem:[%s3 + $0x350] sm:$0xff]
    %v2026 = vld [vmem:[%s3 + $0x358] sm:$0xff]
    %v2027 = vld [vmem:[%s3 + $0x360] sm:$0xff]
    %v2028 = vld [vmem:[%s3 + $0x368] sm:$0xff]
    %v2029 = vld [vmem:[%s3 + $0x370] sm:$0xff]
    %v2030 = vld [vmem:[%s3 + $0x378] sm:$0xff]
    %v2031 = vld [vmem:[%s3 + $0x380] sm:$0xff]
    %v2032 = vld [vmem:[%s3 + $0x388] sm:$0xff]
    %v2033 = vld [vmem:[%s3 + $0x390] sm:$0xff]
    %v2034 = vld [vmem:[%s3 + $0x398] sm:$0xff]
    %v2035 = vld [vmem:[%s3 + $0x3a0] sm:$0xff]
    %v2036 = vld [vmem:[%s3 + $0x3a8] sm:$0xff]
    %v2037 = vld [vmem:[%s3 + $0x3b0] sm:$0xff]
    %v2038 = vld [vmem:[%s3 + $0x3b8] sm:$0xff]
    %v2039 = vld [vmem:[%s3 + $0x3c0] sm:$0xff]
    %v2040 = vld [vmem:[%s3 + $0x3c8] sm:$0xff]
    %v2041 = vld [vmem:[%s3 + $0x3d0] sm:$0xff]
    %v2042 = vld [vmem:[%s3 + $0x3d8] sm:$0xff]
    %v2043 = vld [vmem:[%s3 + $0x3e0] sm:$0xff]
    %v2044 = vld [vmem:[%s3 + $0x3e8] sm:$0xff]
    %v2045 = vld [vmem:[%s3 + $0x3f0] sm:$0xff]
    %v2046 = vld [vmem:[%s3 + $0x3f8] sm:$0xff]
    %v2047 = vld [vmem:[%s4] sm:$0xf]
    %v2049 = vlaneseq
    %v2050 = vshrl.u32 %v2049, 7
    %v2051 = vsub.s32 0, %v2050
    %v2052 = vrot.slane %v2047, %v2051
    %v2053 = vlaneseq
    %v2054 = vshrl.u32 %v2053, 7
    %v2055 = vsub.s32 1, %v2054
    %v2056 = vrot.slane %v2047, %v2055
    %v2057 = vlaneseq
    %v2058 = vshrl.u32 %v2057, 7
    %v2059 = vsub.s32 2, %v2058
    %v2060 = vrot.slane %v2047, %v2059
    %v2061 = vlaneseq
    %v2062 = vshrl.u32 %v2061, 7
    %v2063 = vsub.s32 3, %v2062
    %v2064 = vrot.slane %v2047, %v2063
    %2069 = vmatprep.subr.mxu0 %v1920
    %2070 = vmatpush1.msra.mxu0 %v1919
    %2071 = vmatprep.subr.mxu0 %v1924
    %2072 = vmatpush1.msra.mxu0 %v1923
    %2073 = vmatprep.subr.mxu0 %v1928
    %2074 = vmatpush1.msra.mxu0 %v1927
    %2075 = vmatprep.subr.mxu0 %v1932
    %2076 = vmatpush1.msra.mxu0 %v1931
    %2077 = vmatprep.subr.mxu0 %v1936
    %2078 = vmatpush1.msra.mxu0 %v1935
    %2079 = vmatprep.subr.mxu0 %v1940
    %2080 = vmatpush1.msra.mxu0 %v1939
    %2081 = vmatprep.subr.mxu0 %v1944
    %2082 = vmatpush1.msra.mxu0 %v1943
    %2083 = vmatprep.subr.mxu0 %v1948
    %2084 = vmatpush1.msra.mxu0 %v1947
    %2085 = vmatprep.subr.mxu0 %v1952
    %2086 = vmatpush1.msra.mxu0 %v1951
    %2087 = vmatprep.subr.mxu0 %v1956
    %2088 = vmatpush1.msra.mxu0 %v1955
    %2089 = vmatprep.subr.mxu0 %v1960
    %2090 = vmatpush1.msra.mxu0 %v1959
    %2091 = vmatprep.subr.mxu0 %v1964
    %2092 = vmatpush1.msra.mxu0 %v1963
    %2093 = vmatprep.subr.mxu0 %v1968
    %2094 = vmatpush1.msra.mxu0 %v1967
    %2095 = vmatprep.subr.mxu0 %v1972
    %2096 = vmatpush1.msra.mxu0 %v1971
    %2097 = vmatprep.subr.mxu0 %v1976
    %2098 = vmatpush1.msra.mxu0 %v1975
    %2099 = vmatprep.subr.mxu0 %v1980
    %2100 = vmatpush1.msra.mxu0 %v1979
    %2101 = vmatprep.subr.mxu0 %v1984
    %2102 = vmatpush1.msra.mxu0 %v1983
    %2103 = vmatprep.subr.mxu0 %v1988
    %2104 = vmatpush1.msra.mxu0 %v1987
    %2105 = vmatprep.subr.mxu0 %v1992
    %2106 = vmatpush1.msra.mxu0 %v1991
    %2107 = vmatprep.subr.mxu0 %v1996
    %2108 = vmatpush1.msra.mxu0 %v1995
    %2109 = vmatprep.subr.mxu0 %v2000
    %2110 = vmatpush1.msra.mxu0 %v1999
    %2111 = vmatprep.subr.mxu0 %v2004
    %2112 = vmatpush1.msra.mxu0 %v2003
    %2113 = vmatprep.subr.mxu0 %v2008
    %2114 = vmatpush1.msra.mxu0 %v2007
    %2115 = vmatprep.subr.mxu0 %v2012
    %2116 = vmatpush1.msra.mxu0 %v2011
    %2117 = vmatprep.subr.mxu0 %v2016
    %2118 = vmatpush1.msra.mxu0 %v2015
    %2119 = vmatprep.subr.mxu0 %v2020
    %2120 = vmatpush1.msra.mxu0 %v2019
    %2121 = vmatprep.subr.mxu0 %v2024
    %2122 = vmatpush1.msra.mxu0 %v2023
    %2123 = vmatprep.subr.mxu0 %v2028
    %2124 = vmatpush1.msra.mxu0 %v2027
    %2125 = vmatprep.subr.mxu0 %v2032
    %2126 = vmatpush1.msra.mxu0 %v2031
    %2127 = vmatprep.subr.mxu0 %v2036
    %2128 = vmatpush1.msra.mxu0 %v2035
    %2129 = vmatprep.subr.mxu0 %v2040
    %2130 = vmatpush1.msra.mxu0 %v2039
    %2131 = vmatprep.subr.mxu0 %v2044
    %2132 = vmatpush1.msra.mxu0 %v2043
    %2133 = vmatprep.mubr.f32.mxu0 %v1918
    %2134 = vmatmul.mubr.f32.gmra.mrb[0].mxu0 %v1917
    %v2135 = vpop.f32.mrb[0].mxu0
    %v2136 = vadd.f32 %v2052, %v2135
    %v2137 = vpop.f32.mrb[0].mxu0
    %v2138 = vadd.f32 %v2056, %v2137
    %2139 = vdwg.mxu0
    %2140 = vmatprep.subr.mxu0 %v1922
    %2141 = vmatpush1.msra.mxu0 %v1921
    %2142 = vmatprep.subr.mxu0 %v1926
    %2143 = vmatpush1.msra.mxu0 %v1925
    %2144 = vmatprep.subr.mxu0 %v1930
    %2145 = vmatpush1.msra.mxu0 %v1929
    %2146 = vmatprep.subr.mxu0 %v1934
    %2147 = vmatpush1.msra.mxu0 %v1933
    %2148 = vmatprep.subr.mxu0 %v1938
    %2149 = vmatpush1.msra.mxu0 %v1937
    %2150 = vmatprep.subr.mxu0 %v1942
    %2151 = vmatpush1.msra.mxu0 %v1941
    %2152 = vmatprep.subr.mxu0 %v1946
    %2153 = vmatpush1.msra.mxu0 %v1945
    %2154 = vmatprep.subr.mxu0 %v1950
    %2155 = vmatpush1.msra.mxu0 %v1949
    %2156 = vmatprep.subr.mxu0 %v1954
    %2157 = vmatpush1.msra.mxu0 %v1953
    %2158 = vmatprep.subr.mxu0 %v1958
    %2159 = vmatpush1.msra.mxu0 %v1957
    %2160 = vmatprep.subr.mxu0 %v1962
    %2161 = vmatpush1.msra.mxu0 %v1961
    %2162 = vmatprep.subr.mxu0 %v1966
    %2163 = vmatpush1.msra.mxu0 %v1965
    %2164 = vmatprep.subr.mxu0 %v1970
    %2165 = vmatpush1.msra.mxu0 %v1969
    %2166 = vmatprep.subr.mxu0 %v1974
    %2167 = vmatpush1.msra.mxu0 %v1973
    %2168 = vmatprep.subr.mxu0 %v1978
    %2169 = vmatpush1.msra.mxu0 %v1977
    %2170 = vmatprep.subr.mxu0 %v1982
    %2171 = vmatpush1.msra.mxu0 %v1981
    %2172 = vmatprep.subr.mxu0 %v1986
    %2173 = vmatpush1.msra.mxu0 %v1985
    %2174 = vmatprep.subr.mxu0 %v1990
    %2175 = vmatpush1.msra.mxu0 %v1989
    %2176 = vmatprep.subr.mxu0 %v1994
    %2177 = vmatpush1.msra.mxu0 %v1993
    %2178 = vmatprep.subr.mxu0 %v1998
    %2179 = vmatpush1.msra.mxu0 %v1997
    %2180 = vmatprep.subr.mxu0 %v2002
    %2181 = vmatpush1.msra.mxu0 %v2001
    %2182 = vmatprep.subr.mxu0 %v2006
    %2183 = vmatpush1.msra.mxu0 %v2005
    %2184 = vmatprep.subr.mxu0 %v2010
    %2185 = vmatpush1.msra.mxu0 %v2009
    %2186 = vmatprep.subr.mxu0 %v2014
    %2187 = vmatpush1.msra.mxu0 %v2013
    %2188 = vmatprep.subr.mxu0 %v2018
    %2189 = vmatpush1.msra.mxu0 %v2017
    %2190 = vmatprep.subr.mxu0 %v2022
    %2191 = vmatpush1.msra.mxu0 %v2021
    %2192 = vmatprep.subr.mxu0 %v2026
    %2193 = vmatpush1.msra.mxu0 %v2025
    %2194 = vmatprep.subr.mxu0 %v2030
    %2195 = vmatpush1.msra.mxu0 %v2029
    %2196 = vmatprep.subr.mxu0 %v2034
    %2197 = vmatpush1.msra.mxu0 %v2033
    %2198 = vmatprep.subr.mxu0 %v2038
    %2199 = vmatpush1.msra.mxu0 %v2037
    %2200 = vmatprep.subr.mxu0 %v2042
    %2201 = vmatpush1.msra.mxu0 %v2041
    %2202 = vmatprep.subr.mxu0 %v2046
    %2203 = vmatpush1.msra.mxu0 %v2045
    %2204 = vmatprep.mubr.f32.mxu0 %v1918
    %2205 = vmatmul.mubr.f32.gmra.mrb[0].mxu0 %v1917
    %v2206 = vpop.f32.mrb[0].mxu0
    %v2207 = vadd.f32 %v2060, %v2206
    %v2208 = vpop.f32.mrb[0].mxu0
    %v2209 = vadd.f32 %v2064, %v2208
    %2210 = vdwg.mxu0
    %v2211 = vmax.f32 %v2136, 0.0
    %v2212 = vmax.f32 %v2138, 0.0
    %v2213 = vmax.f32 %v2207, 0.0
    %v2214 = vmax.f32 %v2209, 0.0
    %v2215 = vld [vmem:[%s5] sm:$0xff]
    %v2216 = vld [vmem:[%s5 + $0x8] sm:$0xff]
    %v2217 = vld [vmem:[%s5 + $0x10] sm:$0xff]
    %v2218 = vld [vmem:[%s5 + $0x18] sm:$0xff]
    %v2219 = vld [vmem:[%s5 + $0x20] sm:$0xff]
    %v2220 = vld [vmem:[%s5 + $0x28] sm:$0xff]
    %v2221 = vld [vmem:[%s5 + $0x30] sm:$0xff]
    %v2222 = vld [vmem:[%s5 + $0x38] sm:$0xff]
    %v2223 = vld [vmem:[%s5 + $0x40] sm:$0xff]
    %v2224 = vld [vmem:[%s5 + $0x48] sm:$0xff]
    %v2225 = vld [vmem:[%s5 + $0x50] sm:$0xff]
    %v2226 = vld [vmem:[%s5 + $0x58] sm:$0xff]
    %v2227 = vld [vmem:[%s5 + $0x60] sm:$0xff]
    %v2228 = vld [vmem:[%s5 + $0x68] sm:$0xff]
    %v2229 = vld [vmem:[%s5 + $0x70] sm:$0xff]
    %v2230 = vld [vmem:[%s5 + $0x78] sm:$0xff]
    %v2231 = vld [vmem:[%s5 + $0x80] sm:$0xff]
    %v2232 = vld [vmem:[%s5 + $0x88] sm:$0xff]
    %v2233 = vld [vmem:[%s5 + $0x90] sm:$0xff]
    %v2234 = vld [vmem:[%s5 + $0x98] sm:$0xff]
    %v2235 = vld [vmem:[%s5 + $0xa0] sm:$0xff]
    %v2236 = vld [vmem:[%s5 + $0xa8] sm:$0xff]
    %v2237 = vld [vmem:[%s5 + $0xb0] sm:$0xff]
    %v2238 = vld [vmem:[%s5 + $0xb8] sm:$0xff]
    %v2239 = vld [vmem:[%s5 + $0xc0] sm:$0xff]
    %v2240 = vld [vmem:[%s5 + $0xc8] sm:$0xff]
    %v2241 = vld [vmem:[%s5 + $0xd0] sm:$0xff]
    %v2242 = vld [vmem:[%s5 + $0xd8] sm:$0xff]
    %v2243 = vld [vmem:[%s5 + $0xe0] sm:$0xff]
    %v2244 = vld [vmem:[%s5 + $0xe8] sm:$0xff]
    %v2245 = vld [vmem:[%s5 + $0xf0] sm:$0xff]
    %v2246 = vld [vmem:[%s5 + $0xf8] sm:$0xff]
    %v2247 = vld [vmem:[%s5 + $0x100] sm:$0xff]
    %v2248 = vld [vmem:[%s5 + $0x108] sm:$0xff]
    %v2249 = vld [vmem:[%s5 + $0x110] sm:$0xff]
    %v2250 = vld [vmem:[%s5 + $0x118] sm:$0xff]
    %v2251 = vld [vmem:[%s5 + $0x120] sm:$0xff]
    %v2252 = vld [vmem:[%s5 + $0x128] sm:$0xff]
    %v2253 = vld [vmem:[%s5 + $0x130] sm:$0xff]
    %v2254 = vld [vmem:[%s5 + $0x138] sm:$0xff]
    %v2255 = vld [vmem:[%s5 + $0x140] sm:$0xff]
    %v2256 = vld [vmem:[%s5 + $0x148] sm:$0xff]
    %v2257 = vld [vmem:[%s5 + $0x150] sm:$0xff]
    %v2258 = vld [vmem:[%s5 + $0x158] sm:$0xff]
    %v2259 = vld [vmem:[%s5 + $0x160] sm:$0xff]
    %v2260 = vld [vmem:[%s5 + $0x168] sm:$0xff]
    %v2261 = vld [vmem:[%s5 + $0x170] sm:$0xff]
    %v2262 = vld [vmem:[%s5 + $0x178] sm:$0xff]
    %v2263 = vld [vmem:[%s5 + $0x180] sm:$0xff]
    %v2264 = vld [vmem:[%s5 + $0x188] sm:$0xff]
    %v2265 = vld [vmem:[%s5 + $0x190] sm:$0xff]
    %v2266 = vld [vmem:[%s5 + $0x198] sm:$0xff]
    %v2267 = vld [vmem:[%s5 + $0x1a0] sm:$0xff]
    %v2268 = vld [vmem:[%s5 + $0x1a8] sm:$0xff]
    %v2269 = vld [vmem:[%s5 + $0x1b0] sm:$0xff]
    %v2270 = vld [vmem:[%s5 + $0x1b8] sm:$0xff]
    %v2271 = vld [vmem:[%s5 + $0x1c0] sm:$0xff]
    %v2272 = vld [vmem:[%s5 + $0x1c8] sm:$0xff]
    %v2273 = vld [vmem:[%s5 + $0x1d0] sm:$0xff]
    %v2274 = vld [vmem:[%s5 + $0x1d8] sm:$0xff]
    %v2275 = vld [vmem:[%s5 + $0x1e0] sm:$0xff]
    %v2276 = vld [vmem:[%s5 + $0x1e8] sm:$0xff]
    %v2277 = vld [vmem:[%s5 + $0x1f0] sm:$0xff]
    %v2278 = vld [vmem:[%s5 + $0x1f8] sm:$0xff]
    %v2279 = vld [vmem:[%s5 + $0x200] sm:$0xff]
    %v2280 = vld [vmem:[%s5 + $0x208] sm:$0xff]
    %v2281 = vld [vmem:[%s5 + $0x210] sm:$0xff]
    %v2282 = vld [vmem:[%s5 + $0x218] sm:$0xff]
    %v2283 = vld [vmem:[%s5 + $0x220] sm:$0xff]
    %v2284 = vld [vmem:[%s5 + $0x228] sm:$0xff]
    %v2285 = vld [vmem:[%s5 + $0x230] sm:$0xff]
    %v2286 = vld [vmem:[%s5 + $0x238] sm:$0xff]
    %v2287 = vld [vmem:[%s5 + $0x240] sm:$0xff]
    %v2288 = vld [vmem:[%s5 + $0x248] sm:$0xff]
    %v2289 = vld [vmem:[%s5 + $0x250] sm:$0xff]
    %v2290 = vld [vmem:[%s5 + $0x258] sm:$0xff]
    %v2291 = vld [vmem:[%s5 + $0x260] sm:$0xff]
    %v2292 = vld [vmem:[%s5 + $0x268] sm:$0xff]
    %v2293 = vld [vmem:[%s5 + $0x270] sm:$0xff]
    %v2294 = vld [vmem:[%s5 + $0x278] sm:$0xff]
    %v2295 = vld [vmem:[%s5 + $0x280] sm:$0xff]
    %v2296 = vld [vmem:[%s5 + $0x288] sm:$0xff]
    %v2297 = vld [vmem:[%s5 + $0x290] sm:$0xff]
    %v2298 = vld [vmem:[%s5 + $0x298] sm:$0xff]
    %v2299 = vld [vmem:[%s5 + $0x2a0] sm:$0xff]
    %v2300 = vld [vmem:[%s5 + $0x2a8] sm:$0xff]
    %v2301 = vld [vmem:[%s5 + $0x2b0] sm:$0xff]
    %v2302 = vld [vmem:[%s5 + $0x2b8] sm:$0xff]
    %v2303 = vld [vmem:[%s5 + $0x2c0] sm:$0xff]
    %v2304 = vld [vmem:[%s5 + $0x2c8] sm:$0xff]
    %v2305 = vld [vmem:[%s5 + $0x2d0] sm:$0xff]
    %v2306 = vld [vmem:[%s5 + $0x2d8] sm:$0xff]
    %v2307 = vld [vmem:[%s5 + $0x2e0] sm:$0xff]
    %v2308 = vld [vmem:[%s5 + $0x2e8] sm:$0xff]
    %v2309 = vld [vmem:[%s5 + $0x2f0] sm:$0xff]
    %v2310 = vld [vmem:[%s5 + $0x2f8] sm:$0xff]
    %v2311 = vld [vmem:[%s5 + $0x300] sm:$0xff]
    %v2312 = vld [vmem:[%s5 + $0x308] sm:$0xff]
    %v2313 = vld [vmem:[%s5 + $0x310] sm:$0xff]
    %v2314 = vld [vmem:[%s5 + $0x318] sm:$0xff]
    %v2315 = vld [vmem:[%s5 + $0x320] sm:$0xff]
    %v2316 = vld [vmem:[%s5 + $0x328] sm:$0xff]
    %v2317 = vld [vmem:[%s5 + $0x330] sm:$0xff]
    %v2318 = vld [vmem:[%s5 + $0x338] sm:$0xff]
    %v2319 = vld [vmem:[%s5 + $0x340] sm:$0xff]
    %v2320 = vld [vmem:[%s5 + $0x348] sm:$0xff]
    %v2321 = vld [vmem:[%s5 + $0x350] sm:$0xff]
    %v2322 = vld [vmem:[%s5 + $0x358] sm:$0xff]
    %v2323 = vld [vmem:[%s5 + $0x360] sm:$0xff]
    %v2324 = vld [vmem:[%s5 + $0x368] sm:$0xff]
    %v2325 = vld [vmem:[%s5 + $0x370] sm:$0xff]
    %v2326 = vld [vmem:[%s5 + $0x378] sm:$0xff]
    %v2327 = vld [vmem:[%s5 + $0x380] sm:$0xff]
    %v2328 = vld [vmem:[%s5 + $0x388] sm:$0xff]
    %v2329 = vld [vmem:[%s5 + $0x390] sm:$0xff]
    %v2330 = vld [vmem:[%s5 + $0x398] sm:$0xff]
    %v2331 = vld [vmem:[%s5 + $0x3a0] sm:$0xff]
    %v2332 = vld [vmem:[%s5 + $0x3a8] sm:$0xff]
    %v2333 = vld [vmem:[%s5 + $0x3b0] sm:$0xff]
    %v2334 = vld [vmem:[%s5 + $0x3b8] sm:$0xff]
    %v2335 = vld [vmem:[%s5 + $0x3c0] sm:$0xff]
    %v2336 = vld [vmem:[%s5 + $0x3c8] sm:$0xff]
    %v2337 = vld [vmem:[%s5 + $0x3d0] sm:$0xff]
    %v2338 = vld [vmem:[%s5 + $0x3d8] sm:$0xff]
    %v2339 = vld [vmem:[%s5 + $0x3e0] sm:$0xff]
    %v2340 = vld [vmem:[%s5 + $0x3e8] sm:$0xff]
    %v2341 = vld [vmem:[%s5 + $0x3f0] sm:$0xff]
    %v2342 = vld [vmem:[%s5 + $0x3f8] sm:$0xff]
    %v2343 = vld [vmem:[%s5 + $0x400] sm:$0xff]
    %v2344 = vld [vmem:[%s5 + $0x408] sm:$0xff]
    %v2345 = vld [vmem:[%s5 + $0x410] sm:$0xff]
    %v2346 = vld [vmem:[%s5 + $0x418] sm:$0xff]
    %v2347 = vld [vmem:[%s5 + $0x420] sm:$0xff]
    %v2348 = vld [vmem:[%s5 + $0x428] sm:$0xff]
    %v2349 = vld [vmem:[%s5 + $0x430] sm:$0xff]
    %v2350 = vld [vmem:[%s5 + $0x438] sm:$0xff]
    %v2351 = vld [vmem:[%s5 + $0x440] sm:$0xff]
    %v2352 = vld [vmem:[%s5 + $0x448] sm:$0xff]
    %v2353 = vld [vmem:[%s5 + $0x450] sm:$0xff]
    %v2354 = vld [vmem:[%s5 + $0x458] sm:$0xff]
    %v2355 = vld [vmem:[%s5 + $0x460] sm:$0xff]
    %v2356 = vld [vmem:[%s5 + $0x468] sm:$0xff]
    %v2357 = vld [vmem:[%s5 + $0x470] sm:$0xff]
    %v2358 = vld [vmem:[%s5 + $0x478] sm:$0xff]
    %v2359 = vld [vmem:[%s5 + $0x480] sm:$0xff]
    %v2360 = vld [vmem:[%s5 + $0x488] sm:$0xff]
    %v2361 = vld [vmem:[%s5 + $0x490] sm:$0xff]
    %v2362 = vld [vmem:[%s5 + $0x498] sm:$0xff]
    %v2363 = vld [vmem:[%s5 + $0x4a0] sm:$0xff]
    %v2364 = vld [vmem:[%s5 + $0x4a8] sm:$0xff]
    %v2365 = vld [vmem:[%s5 + $0x4b0] sm:$0xff]
    %v2366 = vld [vmem:[%s5 + $0x4b8] sm:$0xff]
    %v2367 = vld [vmem:[%s5 + $0x4c0] sm:$0xff]
    %v2368 = vld [vmem:[%s5 + $0x4c8] sm:$0xff]
    %v2369 = vld [vmem:[%s5 + $0x4d0] sm:$0xff]
    %v2370 = vld [vmem:[%s5 + $0x4d8] sm:$0xff]
    %v2371 = vld [vmem:[%s5 + $0x4e0] sm:$0xff]
    %v2372 = vld [vmem:[%s5 + $0x4e8] sm:$0xff]
    %v2373 = vld [vmem:[%s5 + $0x4f0] sm:$0xff]
    %v2374 = vld [vmem:[%s5 + $0x4f8] sm:$0xff]
    %v2375 = vld [vmem:[%s5 + $0x500] sm:$0xff]
    %v2376 = vld [vmem:[%s5 + $0x508] sm:$0xff]
    %v2377 = vld [vmem:[%s5 + $0x510] sm:$0xff]
    %v2378 = vld [vmem:[%s5 + $0x518] sm:$0xff]
    %v2379 = vld [vmem:[%s5 + $0x520] sm:$0xff]
    %v2380 = vld [vmem:[%s5 + $0x528] sm:$0xff]
    %v2381 = vld [vmem:[%s5 + $0x530] sm:$0xff]
    %v2382 = vld [vmem:[%s5 + $0x538] sm:$0xff]
    %v2383 = vld [vmem:[%s5 + $0x540] sm:$0xff]
    %v2384 = vld [vmem:[%s5 + $0x548] sm:$0xff]
    %v2385 = vld [vmem:[%s5 + $0x550] sm:$0xff]
    %v2386 = vld [vmem:[%s5 + $0x558] sm:$0xff]
    %v2387 = vld [vmem:[%s5 + $0x560] sm:$0xff]
    %v2388 = vld [vmem:[%s5 + $0x568] sm:$0xff]
    %v2389 = vld [vmem:[%s5 + $0x570] sm:$0xff]
    %v2390 = vld [vmem:[%s5 + $0x578] sm:$0xff]
    %v2391 = vld [vmem:[%s5 + $0x580] sm:$0xff]
    %v2392 = vld [vmem:[%s5 + $0x588] sm:$0xff]
    %v2393 = vld [vmem:[%s5 + $0x590] sm:$0xff]
    %v2394 = vld [vmem:[%s5 + $0x598] sm:$0xff]
    %v2395 = vld [vmem:[%s5 + $0x5a0] sm:$0xff]
    %v2396 = vld [vmem:[%s5 + $0x5a8] sm:$0xff]
    %v2397 = vld [vmem:[%s5 + $0x5b0] sm:$0xff]
    %v2398 = vld [vmem:[%s5 + $0x5b8] sm:$0xff]
    %v2399 = vld [vmem:[%s5 + $0x5c0] sm:$0xff]
    %v2400 = vld [vmem:[%s5 + $0x5c8] sm:$0xff]
    %v2401 = vld [vmem:[%s5 + $0x5d0] sm:$0xff]
    %v2402 = vld [vmem:[%s5 + $0x5d8] sm:$0xff]
    %v2403 = vld [vmem:[%s5 + $0x5e0] sm:$0xff]
    %v2404 = vld [vmem:[%s5 + $0x5e8] sm:$0xff]
    %v2405 = vld [vmem:[%s5 + $0x5f0] sm:$0xff]
    %v2406 = vld [vmem:[%s5 + $0x5f8] sm:$0xff]
    %v2407 = vld [vmem:[%s5 + $0x600] sm:$0xff]
    %v2408 = vld [vmem:[%s5 + $0x608] sm:$0xff]
    %v2409 = vld [vmem:[%s5 + $0x610] sm:$0xff]
    %v2410 = vld [vmem:[%s5 + $0x618] sm:$0xff]
    %v2411 = vld [vmem:[%s5 + $0x620] sm:$0xff]
    %v2412 = vld [vmem:[%s5 + $0x628] sm:$0xff]
    %v2413 = vld [vmem:[%s5 + $0x630] sm:$0xff]
    %v2414 = vld [vmem:[%s5 + $0x638] sm:$0xff]
    %v2415 = vld [vmem:[%s5 + $0x640] sm:$0xff]
    %v2416 = vld [vmem:[%s5 + $0x648] sm:$0xff]
    %v2417 = vld [vmem:[%s5 + $0x650] sm:$0xff]
    %v2418 = vld [vmem:[%s5 + $0x658] sm:$0xff]
    %v2419 = vld [vmem:[%s5 + $0x660] sm:$0xff]
    %v2420 = vld [vmem:[%s5 + $0x668] sm:$0xff]
    %v2421 = vld [vmem:[%s5 + $0x670] sm:$0xff]
    %v2422 = vld [vmem:[%s5 + $0x678] sm:$0xff]
    %v2423 = vld [vmem:[%s5 + $0x680] sm:$0xff]
    %v2424 = vld [vmem:[%s5 + $0x688] sm:$0xff]
    %v2425 = vld [vmem:[%s5 + $0x690] sm:$0xff]
    %v2426 = vld [vmem:[%s5 + $0x698] sm:$0xff]
    %v2427 = vld [vmem:[%s5 + $0x6a0] sm:$0xff]
    %v2428 = vld [vmem:[%s5 + $0x6a8] sm:$0xff]
    %v2429 = vld [vmem:[%s5 + $0x6b0] sm:$0xff]
    %v2430 = vld [vmem:[%s5 + $0x6b8] sm:$0xff]
    %v2431 = vld [vmem:[%s5 + $0x6c0] sm:$0xff]
    %v2432 = vld [vmem:[%s5 + $0x6c8] sm:$0xff]
    %v2433 = vld [vmem:[%s5 + $0x6d0] sm:$0xff]
    %v2434 = vld [vmem:[%s5 + $0x6d8] sm:$0xff]
    %v2435 = vld [vmem:[%s5 + $0x6e0] sm:$0xff]
    %v2436 = vld [vmem:[%s5 + $0x6e8] sm:$0xff]
    %v2437 = vld [vmem:[%s5 + $0x6f0] sm:$0xff]
    %v2438 = vld [vmem:[%s5 + $0x6f8] sm:$0xff]
    %v2439 = vld [vmem:[%s6] sm:$0xf]
    %v2441 = vlaneseq
    %v2442 = vshrl.u32 %v2441, 7
    %v2443 = vsub.s32 0, %v2442
    %v2444 = vrot.slane %v2439, %v2443
    %v2445 = vlaneseq
    %v2446 = vshrl.u32 %v2445, 7
    %v2447 = vsub.s32 1, %v2446
    %v2448 = vrot.slane %v2439, %v2447
    %v2449 = vlaneseq
    %v2450 = vshrl.u32 %v2449, 7
    %v2451 = vsub.s32 2, %v2450
    %v2452 = vrot.slane %v2439, %v2451
    %v2453 = vlaneseq
    %v2454 = vshrl.u32 %v2453, 7
    %v2455 = vsub.s32 3, %v2454
    %v2456 = vrot.slane %v2439, %v2455
    %v2462 = vsel %vm991, %v2214, 0
    %2464 = vmatprep.subr.mxu0 %v2216
    %2465 = vmatpush1.msra.mxu0 %v2215
    %2466 = vmatprep.subr.mxu0 %v2220
    %2467 = vmatpush1.msra.mxu0 %v2219
    %2468 = vmatprep.subr.mxu0 %v2224
    %2469 = vmatpush1.msra.mxu0 %v2223
    %2470 = vmatprep.subr.mxu0 %v2228
    %2471 = vmatpush1.msra.mxu0 %v2227
    %2472 = vmatprep.subr.mxu0 %v2232
    %2473 = vmatpush1.msra.mxu0 %v2231
    %2474 = vmatprep.subr.mxu0 %v2236
    %2475 = vmatpush1.msra.mxu0 %v2235
    %2476 = vmatprep.subr.mxu0 %v2240
    %2477 = vmatpush1.msra.mxu0 %v2239
    %2478 = vmatprep.subr.mxu0 %v2244
    %2479 = vmatpush1.msra.mxu0 %v2243
    %2480 = vmatprep.subr.mxu0 %v2248
    %2481 = vmatpush1.msra.mxu0 %v2247
    %2482 = vmatprep.subr.mxu0 %v2252
    %2483 = vmatpush1.msra.mxu0 %v2251
    %2484 = vmatprep.subr.mxu0 %v2256
    %2485 = vmatpush1.msra.mxu0 %v2255
    %2486 = vmatprep.subr.mxu0 %v2260
    %2487 = vmatpush1.msra.mxu0 %v2259
    %2488 = vmatprep.subr.mxu0 %v2264
    %2489 = vmatpush1.msra.mxu0 %v2263
    %2490 = vmatprep.subr.mxu0 %v2268
    %2491 = vmatpush1.msra.mxu0 %v2267
    %2492 = vmatprep.subr.mxu0 %v2272
    %2493 = vmatpush1.msra.mxu0 %v2271
    %2494 = vmatprep.subr.mxu0 %v2276
    %2495 = vmatpush1.msra.mxu0 %v2275
    %2496 = vmatprep.subr.mxu0 %v2280
    %2497 = vmatpush1.msra.mxu0 %v2279
    %2498 = vmatprep.subr.mxu0 %v2284
    %2499 = vmatpush1.msra.mxu0 %v2283
    %2500 = vmatprep.subr.mxu0 %v2288
    %2501 = vmatpush1.msra.mxu0 %v2287
    %2502 = vmatprep.subr.mxu0 %v2292
    %2503 = vmatpush1.msra.mxu0 %v2291
    %2504 = vmatprep.subr.mxu0 %v2296
    %2505 = vmatpush1.msra.mxu0 %v2295
    %2506 = vmatprep.subr.mxu0 %v2300
    %2507 = vmatpush1.msra.mxu0 %v2299
    %2508 = vmatprep.subr.mxu0 %v2304
    %2509 = vmatpush1.msra.mxu0 %v2303
    %2510 = vmatprep.subr.mxu0 %v2308
    %2511 = vmatpush1.msra.mxu0 %v2307
    %2512 = vmatprep.subr.mxu0 %v2312
    %2513 = vmatpush1.msra.mxu0 %v2311
    %2514 = vmatprep.subr.mxu0 %v2316
    %2515 = vmatpush1.msra.mxu0 %v2315
    %2516 = vmatprep.subr.mxu0 %v2320
    %2517 = vmatpush1.msra.mxu0 %v2319
    %2518 = vmatprep.subr.mxu0 %v2324
    %2519 = vmatpush1.msra.mxu0 %v2323
    %2520 = vmatprep.subr.mxu0 %v2328
    %2521 = vmatpush1.msra.mxu0 %v2327
    %2522 = vmatprep.subr.mxu0 %v2332
    %2523 = vmatpush1.msra.mxu0 %v2331
    %2524 = vmatprep.subr.mxu0 %v2336
    %2525 = vmatpush1.msra.mxu0 %v2335
    %2526 = vmatprep.subr.mxu0 %v2340
    %2527 = vmatpush1.msra.mxu0 %v2339
    %2528 = vmatprep.mubr.f32.mxu0 %v2212
    %2529 = vmatmul.mubr.f32.gmra.mrb[0].mxu0 %v2211
    %v2530 = vpop.f32.mrb[0].mxu0
    %v2531 = vadd.f32 %v2444, %v2530
    %v2532 = vpop.f32.mrb[0].mxu0
    %v2533 = vadd.f32 %v2448, %v2532
    %2534 = vdwg.mxu0
    %2535 = vmatprep.subr.mxu0 %v2344
    %2536 = vmatpush1.msra.mxu0 %v2343
    %2537 = vmatprep.subr.mxu0 %v2348
    %2538 = vmatpush1.msra.mxu0 %v2347
    %2539 = vmatprep.subr.mxu0 %v2352
    %2540 = vmatpush1.msra.mxu0 %v2351
    %2541 = vmatprep.subr.mxu0 %v2356
    %2542 = vmatpush1.msra.mxu0 %v2355
    %2543 = vmatprep.subr.mxu0 %v2360
    %2544 = vmatpush1.msra.mxu0 %v2359
    %2545 = vmatprep.subr.mxu0 %v2364
    %2546 = vmatpush1.msra.mxu0 %v2363
    %2547 = vmatprep.subr.mxu0 %v2368
    %2548 = vmatpush1.msra.mxu0 %v2367
    %2549 = vmatprep.subr.mxu0 %v2372
    %2550 = vmatpush1.msra.mxu0 %v2371
    %2551 = vmatprep.subr.mxu0 %v2376
    %2552 = vmatpush1.msra.mxu0 %v2375
    %2553 = vmatprep.subr.mxu0 %v2380
    %2554 = vmatpush1.msra.mxu0 %v2379
    %2555 = vmatprep.subr.mxu0 %v2384
    %2556 = vmatpush1.msra.mxu0 %v2383
    %2557 = vmatprep.subr.mxu0 %v2388
    %2558 = vmatpush1.msra.mxu0 %v2387
    %2559 = vmatprep.subr.mxu0 %v2392
    %2560 = vmatpush1.msra.mxu0 %v2391
    %2561 = vmatprep.subr.mxu0 %v2396
    %2562 = vmatpush1.msra.mxu0 %v2395
    %2563 = vmatprep.subr.mxu0 %v2400
    %2564 = vmatpush1.msra.mxu0 %v2399
    %2565 = vmatprep.subr.mxu0 %v2404
    %2566 = vmatpush1.msra.mxu0 %v2403
    %2567 = vmatprep.subr.mxu0 %v2408
    %2568 = vmatpush1.msra.mxu0 %v2407
    %2569 = vmatprep.subr.mxu0 %v2412
    %2570 = vmatpush1.msra.mxu0 %v2411
    %2571 = vmatprep.subr.mxu0 %v2416
    %2572 = vmatpush1.msra.mxu0 %v2415
    %2573 = vmatprep.subr.mxu0 %v2420
    %2574 = vmatpush1.msra.mxu0 %v2419
    %2575 = vmatprep.subr.mxu0 %v2424
    %2576 = vmatpush1.msra.mxu0 %v2423
    %2577 = vmatprep.subr.mxu0 %v2428
    %2578 = vmatpush1.msra.mxu0 %v2427
    %2579 = vmatprep.subr.mxu0 %v2432
    %2580 = vmatpush1.msra.mxu0 %v2431
    %2581 = vmatprep.subr.mxu0 %v2436
    %2582 = vmatpush1.msra.mxu0 %v2435
    %2583 = vmatprep.subr.mxu0 0.0
    %2584 = vmatpush1.msra.mxu0 0.0
    %2585 = vmatprep.subr.mxu0 0.0
    %2586 = vmatpush1.msra.mxu0 0.0
    %2587 = vmatprep.subr.mxu0 0.0
    %2588 = vmatpush1.msra.mxu0 0.0
    %2589 = vmatprep.subr.mxu0 0.0
    %2590 = vmatpush1.msra.mxu0 0.0
    %2591 = vmatprep.subr.mxu0 0.0
    %2592 = vmatpush1.msra.mxu0 0.0
    %2593 = vmatprep.subr.mxu0 0.0
    %2594 = vmatpush1.msra.mxu0 0.0
    %2595 = vmatprep.subr.mxu0 0.0
    %2596 = vmatpush1.msra.mxu0 0.0
    %2597 = vmatprep.subr.mxu0 0.0
    %2598 = vmatpush1.msra.mxu0 0.0
    %2599 = vmatprep.mubr.f32.mxu0 %v2462
    %2600 = vmatmul.mubr.f32.gmra.mrb[0].mxu0 %v2213
    %v2601 = vpop.f32.mrb[0].mxu0
    %v2602 = vadd.f32 %v2531, %v2601
    %v2603 = vpop.f32.mrb[0].mxu0
    %v2604 = vadd.f32 %v2533, %v2603
    %2605 = vdwg.mxu0
    %2606 = vmatprep.subr.mxu0 %v2218
    %2607 = vmatpush1.msra.mxu0 %v2217
    %2608 = vmatprep.subr.mxu0 %v2222
    %2609 = vmatpush1.msra.mxu0 %v2221
    %2610 = vmatprep.subr.mxu0 %v2226
    %2611 = vmatpush1.msra.mxu0 %v2225
    %2612 = vmatprep.subr.mxu0 %v2230
    %2613 = vmatpush1.msra.mxu0 %v2229
    %2614 = vmatprep.subr.mxu0 %v2234
    %2615 = vmatpush1.msra.mxu0 %v2233
    %2616 = vmatprep.subr.mxu0 %v2238
    %2617 = vmatpush1.msra.mxu0 %v2237
    %2618 = vmatprep.subr.mxu0 %v2242
    %2619 = vmatpush1.msra.mxu0 %v2241
    %2620 = vmatprep.subr.mxu0 %v2246
    %2621 = vmatpush1.msra.mxu0 %v2245
    %2622 = vmatprep.subr.mxu0 %v2250
    %2623 = vmatpush1.msra.mxu0 %v2249
    %2624 = vmatprep.subr.mxu0 %v2254
    %2625 = vmatpush1.msra.mxu0 %v2253
    %2626 = vmatprep.subr.mxu0 %v2258
    %2627 = vmatpush1.msra.mxu0 %v2257
    %2628 = vmatprep.subr.mxu0 %v2262
    %2629 = vmatpush1.msra.mxu0 %v2261
    %2630 = vmatprep.subr.mxu0 %v2266
    %2631 = vmatpush1.msra.mxu0 %v2265
    %2632 = vmatprep.subr.mxu0 %v2270
    %2633 = vmatpush1.msra.mxu0 %v2269
    %2634 = vmatprep.subr.mxu0 %v2274
    %2635 = vmatpush1.msra.mxu0 %v2273
    %2636 = vmatprep.subr.mxu0 %v2278
    %2637 = vmatpush1.msra.mxu0 %v2277
    %2638 = vmatprep.subr.mxu0 %v2282
    %2639 = vmatpush1.msra.mxu0 %v2281
    %2640 = vmatprep.subr.mxu0 %v2286
    %2641 = vmatpush1.msra.mxu0 %v2285
    %2642 = vmatprep.subr.mxu0 %v2290
    %2643 = vmatpush1.msra.mxu0 %v2289
    %2644 = vmatprep.subr.mxu0 %v2294
    %2645 = vmatpush1.msra.mxu0 %v2293
    %2646 = vmatprep.subr.mxu0 %v2298
    %2647 = vmatpush1.msra.mxu0 %v2297
    %2648 = vmatprep.subr.mxu0 %v2302
    %2649 = vmatpush1.msra.mxu0 %v2301
    %2650 = vmatprep.subr.mxu0 %v2306
    %2651 = vmatpush1.msra.mxu0 %v2305
    %2652 = vmatprep.subr.mxu0 %v2310
    %2653 = vmatpush1.msra.mxu0 %v2309
    %2654 = vmatprep.subr.mxu0 %v2314
    %2655 = vmatpush1.msra.mxu0 %v2313
    %2656 = vmatprep.subr.mxu0 %v2318
    %2657 = vmatpush1.msra.mxu0 %v2317
    %2658 = vmatprep.subr.mxu0 %v2322
    %2659 = vmatpush1.msra.mxu0 %v2321
    %2660 = vmatprep.subr.mxu0 %v2326
    %2661 = vmatpush1.msra.mxu0 %v2325
    %2662 = vmatprep.subr.mxu0 %v2330
    %2663 = vmatpush1.msra.mxu0 %v2329
    %2664 = vmatprep.subr.mxu0 %v2334
    %2665 = vmatpush1.msra.mxu0 %v2333
    %2666 = vmatprep.subr.mxu0 %v2338
    %2667 = vmatpush1.msra.mxu0 %v2337
    %2668 = vmatprep.subr.mxu0 %v2342
    %2669 = vmatpush1.msra.mxu0 %v2341
    %2670 = vmatprep.mubr.f32.mxu0 %v2212
    %2671 = vmatmul.mubr.f32.gmra.mrb[0].mxu0 %v2211
    %v2672 = vpop.f32.mrb[0].mxu0
    %v2673 = vadd.f32 %v2452, %v2672
    %v2674 = vpop.f32.mrb[0].mxu0
    %v2675 = vadd.f32 %v2456, %v2674
    %2676 = vdwg.mxu0
    %2677 = vmatprep.subr.mxu0 %v2346
    %2678 = vmatpush1.msra.mxu0 %v2345
    %2679 = vmatprep.subr.mxu0 %v2350
    %2680 = vmatpush1.msra.mxu0 %v2349
    %2681 = vmatprep.subr.mxu0 %v2354
    %2682 = vmatpush1.msra.mxu0 %v2353
    %2683 = vmatprep.subr.mxu0 %v2358
    %2684 = vmatpush1.msra.mxu0 %v2357
    %2685 = vmatprep.subr.mxu0 %v2362
    %2686 = vmatpush1.msra.mxu0 %v2361
    %2687 = vmatprep.subr.mxu0 %v2366
    %2688 = vmatpush1.msra.mxu0 %v2365
    %2689 = vmatprep.subr.mxu0 %v2370
    %2690 = vmatpush1.msra.mxu0 %v2369
    %2691 = vmatprep.subr.mxu0 %v2374
    %2692 = vmatpush1.msra.mxu0 %v2373
    %2693 = vmatprep.subr.mxu0 %v2378
    %2694 = vmatpush1.msra.mxu0 %v2377
    %2695 = vmatprep.subr.mxu0 %v2382
    %2696 = vmatpush1.msra.mxu0 %v2381
    %2697 = vmatprep.subr.mxu0 %v2386
    %2698 = vmatpush1.msra.mxu0 %v2385
    %2699 = vmatprep.subr.mxu0 %v2390
    %2700 = vmatpush1.msra.mxu0 %v2389
    %2701 = vmatprep.subr.mxu0 %v2394
    %2702 = vmatpush1.msra.mxu0 %v2393
    %2703 = vmatprep.subr.mxu0 %v2398
    %2704 = vmatpush1.msra.mxu0 %v2397
    %2705 = vmatprep.subr.mxu0 %v2402
    %2706 = vmatpush1.msra.mxu0 %v2401
    %2707 = vmatprep.subr.mxu0 %v2406
    %2708 = vmatpush1.msra.mxu0 %v2405
    %2709 = vmatprep.subr.mxu0 %v2410
    %2710 = vmatpush1.msra.mxu0 %v2409
    %2711 = vmatprep.subr.mxu0 %v2414
    %2712 = vmatpush1.msra.mxu0 %v2413
    %2713 = vmatprep.subr.mxu0 %v2418
    %2714 = vmatpush1.msra.mxu0 %v2417
    %2715 = vmatprep.subr.mxu0 %v2422
    %2716 = vmatpush1.msra.mxu0 %v2421
    %2717 = vmatprep.subr.mxu0 %v2426
    %2718 = vmatpush1.msra.mxu0 %v2425
    %2719 = vmatprep.subr.mxu0 %v2430
    %2720 = vmatpush1.msra.mxu0 %v2429
    %2721 = vmatprep.subr.mxu0 %v2434
    %2722 = vmatpush1.msra.mxu0 %v2433
    %2723 = vmatprep.subr.mxu0 %v2438
    %2724 = vmatpush1.msra.mxu0 %v2437
    %2725 = vmatprep.subr.mxu0 0.0
    %2726 = vmatpush1.msra.mxu0 0.0
    %2727 = vmatprep.subr.mxu0 0.0
    %2728 = vmatpush1.msra.mxu0 0.0
    %2729 = vmatprep.subr.mxu0 0.0
    %2730 = vmatpush1.msra.mxu0 0.0
    %2731 = vmatprep.subr.mxu0 0.0
    %2732 = vmatpush1.msra.mxu0 0.0
    %2733 = vmatprep.subr.mxu0 0.0
    %2734 = vmatpush1.msra.mxu0 0.0
    %2735 = vmatprep.subr.mxu0 0.0
    %2736 = vmatpush1.msra.mxu0 0.0
    %2737 = vmatprep.subr.mxu0 0.0
    %2738 = vmatpush1.msra.mxu0 0.0
    %2739 = vmatprep.subr.mxu0 0.0
    %2740 = vmatpush1.msra.mxu0 0.0
    %2741 = vmatprep.mubr.f32.mxu0 %v2462
    %2742 = vmatmul.mubr.f32.gmra.mrb[0].mxu0 %v2213
    %v2743 = vpop.f32.mrb[0].mxu0
    %v2744 = vadd.f32 %v2673, %v2743
    %v2745 = vpop.f32.mrb[0].mxu0
    %v2746 = vadd.f32 %v2675, %v2745
    %2747 = vdwg.mxu0
    %v2748 = vmax.f32 %v2602, 0.0
    %v2749 = vmax.f32 %v2604, 0.0
    %v2750 = vmax.f32 %v2744, 0.0
    %v2751 = vmax.f32 %v2746, 0.0
    %v2752 = vld [vmem:[%s7] sm:$0xff]
    %v2753 = vld [vmem:[%s7 + $0x8] sm:$0xff]
    %v2754 = vld [vmem:[%s7 + $0x10] sm:$0xff]
    %v2755 = vld [vmem:[%s7 + $0x18] sm:$0xff]
    %v2756 = vld [vmem:[%s7 + $0x20] sm:$0xff]
    %v2757 = vld [vmem:[%s7 + $0x28] sm:$0xff]
    %v2758 = vld [vmem:[%s7 + $0x30] sm:$0xff]
    %v2759 = vld [vmem:[%s7 + $0x38] sm:$0xff]
    %v2760 = vld [vmem:[%s7 + $0x40] sm:$0xff]
    %v2761 = vld [vmem:[%s7 + $0x48] sm:$0xff]
    %v2762 = vld [vmem:[%s7 + $0x50] sm:$0xff]
    %v2763 = vld [vmem:[%s7 + $0x58] sm:$0xff]
    %v2764 = vld [vmem:[%s7 + $0x60] sm:$0xff]
    %v2765 = vld [vmem:[%s7 + $0x68] sm:$0xff]
    %v2766 = vld [vmem:[%s7 + $0x70] sm:$0xff]
    %v2767 = vld [vmem:[%s7 + $0x78] sm:$0xff]
    %v2768 = vld [vmem:[%s7 + $0x80] sm:$0xff]
    %v2769 = vld [vmem:[%s7 + $0x88] sm:$0xff]
    %v2770 = vld [vmem:[%s7 + $0x90] sm:$0xff]
    %v2771 = vld [vmem:[%s7 + $0x98] sm:$0xff]
    %v2772 = vld [vmem:[%s7 + $0xa0] sm:$0xff]
    %v2773 = vld [vmem:[%s7 + $0xa8] sm:$0xff]
    %v2774 = vld [vmem:[%s7 + $0xb0] sm:$0xff]
    %v2775 = vld [vmem:[%s7 + $0xb8] sm:$0xff]
    %v2776 = vld [vmem:[%s7 + $0xc0] sm:$0xff]
    %v2777 = vld [vmem:[%s7 + $0xc8] sm:$0xff]
    %v2778 = vld [vmem:[%s7 + $0xd0] sm:$0xff]
    %v2779 = vld [vmem:[%s7 + $0xd8] sm:$0xff]
    %v2780 = vld [vmem:[%s7 + $0xe0] sm:$0xff]
    %v2781 = vld [vmem:[%s7 + $0xe8] sm:$0xff]
    %v2782 = vld [vmem:[%s7 + $0xf0] sm:$0xff]
    %v2783 = vld [vmem:[%s7 + $0xf8] sm:$0xff]
    %v2784 = vld [vmem:[%s7 + $0x100] sm:$0xff]
    %v2785 = vld [vmem:[%s7 + $0x108] sm:$0xff]
    %v2786 = vld [vmem:[%s7 + $0x110] sm:$0xff]
    %v2787 = vld [vmem:[%s7 + $0x118] sm:$0xff]
    %v2788 = vld [vmem:[%s7 + $0x120] sm:$0xff]
    %v2789 = vld [vmem:[%s7 + $0x128] sm:$0xff]
    %v2790 = vld [vmem:[%s7 + $0x130] sm:$0xff]
    %v2791 = vld [vmem:[%s7 + $0x138] sm:$0xff]
    %v2792 = vld [vmem:[%s7 + $0x140] sm:$0xff]
    %v2793 = vld [vmem:[%s7 + $0x148] sm:$0xff]
    %v2794 = vld [vmem:[%s7 + $0x150] sm:$0xff]
    %v2795 = vld [vmem:[%s7 + $0x158] sm:$0xff]
    %v2796 = vld [vmem:[%s7 + $0x160] sm:$0xff]
    %v2797 = vld [vmem:[%s7 + $0x168] sm:$0xff]
    %v2798 = vld [vmem:[%s7 + $0x170] sm:$0xff]
    %v2799 = vld [vmem:[%s7 + $0x178] sm:$0xff]
    %v2800 = vld [vmem:[%s7 + $0x180] sm:$0xff]
    %v2801 = vld [vmem:[%s7 + $0x188] sm:$0xff]
    %v2802 = vld [vmem:[%s7 + $0x190] sm:$0xff]
    %v2803 = vld [vmem:[%s7 + $0x198] sm:$0xff]
    %v2804 = vld [vmem:[%s7 + $0x1a0] sm:$0xff]
    %v2805 = vld [vmem:[%s7 + $0x1a8] sm:$0xff]
    %v2806 = vld [vmem:[%s7 + $0x1b0] sm:$0xff]
    %v2807 = vld [vmem:[%s7 + $0x1b8] sm:$0xff]
    %v2808 = vld [vmem:[%s8] sm:$0x1]
    %v2810 = vlaneseq
    %v2811 = vshrl.u32 %v2810, 7
    %v2812 = vsub.s32 0, %v2811
    %v2813 = vrot.slane %v2808, %v2812
    %v2816 = vsel %vm991, %v2751, 0
    %2818 = vmatprep.subr.mxu0 0.0
    %2819 = vmatpush1.msra.mxu0 %v2752
    %2820 = vmatprep.subr.mxu0 0.0
    %2821 = vmatpush1.msra.mxu0 %v2753
    %2822 = vmatprep.subr.mxu0 0.0
    %2823 = vmatpush1.msra.mxu0 %v2754
    %2824 = vmatprep.subr.mxu0 0.0
    %2825 = vmatpush1.msra.mxu0 %v2755
    %2826 = vmatprep.subr.mxu0 0.0
    %2827 = vmatpush1.msra.mxu0 %v2756
    %2828 = vmatprep.subr.mxu0 0.0
    %2829 = vmatpush1.msra.mxu0 %v2757
    %2830 = vmatprep.subr.mxu0 0.0
    %2831 = vmatpush1.msra.mxu0 %v2758
    %2832 = vmatprep.subr.mxu0 0.0
    %2833 = vmatpush1.msra.mxu0 %v2759
    %2834 = vmatprep.subr.mxu0 0.0
    %2835 = vmatpush1.msra.mxu0 %v2760
    %2836 = vmatprep.subr.mxu0 0.0
    %2837 = vmatpush1.msra.mxu0 %v2761
    %2838 = vmatprep.subr.mxu0 0.0
    %2839 = vmatpush1.msra.mxu0 %v2762
    %2840 = vmatprep.subr.mxu0 0.0
    %2841 = vmatpush1.msra.mxu0 %v2763
    %2842 = vmatprep.subr.mxu0 0.0
    %2843 = vmatpush1.msra.mxu0 %v2764
    %2844 = vmatprep.subr.mxu0 0.0
    %2845 = vmatpush1.msra.mxu0 %v2765
    %2846 = vmatprep.subr.mxu0 0.0
    %2847 = vmatpush1.msra.mxu0 %v2766
    %2848 = vmatprep.subr.mxu0 0.0
    %2849 = vmatpush1.msra.mxu0 %v2767
    %2850 = vmatprep.subr.mxu0 0.0
    %2851 = vmatpush1.msra.mxu0 %v2768
    %2852 = vmatprep.subr.mxu0 0.0
    %2853 = vmatpush1.msra.mxu0 %v2769
    %2854 = vmatprep.subr.mxu0 0.0
    %2855 = vmatpush1.msra.mxu0 %v2770
    %2856 = vmatprep.subr.mxu0 0.0
    %2857 = vmatpush1.msra.mxu0 %v2771
    %2858 = vmatprep.subr.mxu0 0.0
    %2859 = vmatpush1.msra.mxu0 %v2772
    %2860 = vmatprep.subr.mxu0 0.0
    %2861 = vmatpush1.msra.mxu0 %v2773
    %2862 = vmatprep.subr.mxu0 0.0
    %2863 = vmatpush1.msra.mxu0 %v2774
    %2864 = vmatprep.subr.mxu0 0.0
    %2865 = vmatpush1.msra.mxu0 %v2775
    %2866 = vmatprep.subr.mxu0 0.0
    %2867 = vmatpush1.msra.mxu0 %v2776
    %2868 = vmatprep.subr.mxu0 0.0
    %2869 = vmatpush1.msra.mxu0 %v2777
    %2870 = vmatprep.subr.mxu0 0.0
    %2871 = vmatpush1.msra.mxu0 %v2778
    %2872 = vmatprep.subr.mxu0 0.0
    %2873 = vmatpush1.msra.mxu0 %v2779
    %2874 = vmatprep.subr.mxu0 0.0
    %2875 = vmatpush1.msra.mxu0 %v2780
    %2876 = vmatprep.subr.mxu0 0.0
    %2877 = vmatpush1.msra.mxu0 %v2781
    %2878 = vmatprep.subr.mxu0 0.0
    %2879 = vmatpush1.msra.mxu0 %v2782
    %2880 = vmatprep.subr.mxu0 0.0
    %2881 = vmatpush1.msra.mxu0 %v2783
    %2882 = vmatprep.mubr.f32.mxu0 %v2749
    %2883 = vmatmul.mubr.f32.gmra.mrb[0].mxu0 %v2748
    %v2884 = vpop.f32.mrb[0].mxu0
    %v2885 = vadd.f32 %v2813, %v2884
    %v2886 = vpop.f32.mrb[0].mxu0
    %2887 = vdwg.mxu0
    %2888 = vmatprep.subr.mxu0 0.0
    %2889 = vmatpush1.msra.mxu0 %v2784
    %2890 = vmatprep.subr.mxu0 0.0
    %2891 = vmatpush1.msra.mxu0 %v2785
    %2892 = vmatprep.subr.mxu0 0.0
    %2893 = vmatpush1.msra.mxu0 %v2786
    %2894 = vmatprep.subr.mxu0 0.0
    %2895 = vmatpush1.msra.mxu0 %v2787
    %2896 = vmatprep.subr.mxu0 0.0
    %2897 = vmatpush1.msra.mxu0 %v2788
    %2898 = vmatprep.subr.mxu0 0.0
    %2899 = vmatpush1.msra.mxu0 %v2789
    %2900 = vmatprep.subr.mxu0 0.0
    %2901 = vmatpush1.msra.mxu0 %v2790
    %2902 = vmatprep.subr.mxu0 0.0
    %2903 = vmatpush1.msra.mxu0 %v2791
    %2904 = vmatprep.subr.mxu0 0.0
    %2905 = vmatpush1.msra.mxu0 %v2792
    %2906 = vmatprep.subr.mxu0 0.0
    %2907 = vmatpush1.msra.mxu0 %v2793
    %2908 = vmatprep.subr.mxu0 0.0
    %2909 = vmatpush1.msra.mxu0 %v2794
    %2910 = vmatprep.subr.mxu0 0.0
    %2911 = vmatpush1.msra.mxu0 %v2795
    %2912 = vmatprep.subr.mxu0 0.0
    %2913 = vmatpush1.msra.mxu0 %v2796
    %2914 = vmatprep.subr.mxu0 0.0
    %2915 = vmatpush1.msra.mxu0 %v2797
    %2916 = vmatprep.subr.mxu0 0.0
    %2917 = vmatpush1.msra.mxu0 %v2798
    %2918 = vmatprep.subr.mxu0 0.0
    %2919 = vmatpush1.msra.mxu0 %v2799
    %2920 = vmatprep.subr.mxu0 0.0
    %2921 = vmatpush1.msra.mxu0 %v2800
    %2922 = vmatprep.subr.mxu0 0.0
    %2923 = vmatpush1.msra.mxu0 %v2801
    %2924 = vmatprep.subr.mxu0 0.0
    %2925 = vmatpush1.msra.mxu0 %v2802
    %2926 = vmatprep.subr.mxu0 0.0
    %2927 = vmatpush1.msra.mxu0 %v2803
    %2928 = vmatprep.subr.mxu0 0.0
    %2929 = vmatpush1.msra.mxu0 %v2804
    %2930 = vmatprep.subr.mxu0 0.0
    %2931 = vmatpush1.msra.mxu0 %v2805
    %2932 = vmatprep.subr.mxu0 0.0
    %2933 = vmatpush1.msra.mxu0 %v2806
    %2934 = vmatprep.subr.mxu0 0.0
    %2935 = vmatpush1.msra.mxu0 %v2807
    %2936 = vmatprep.subr.mxu0 0.0
    %2937 = vmatpush1.msra.mxu0 0.0
    %2938 = vmatprep.subr.mxu0 0.0
    %2939 = vmatpush1.msra.mxu0 0.0
    %2940 = vmatprep.subr.mxu0 0.0
    %2941 = vmatpush1.msra.mxu0 0.0
    %2942 = vmatprep.subr.mxu0 0.0
    %2943 = vmatpush1.msra.mxu0 0.0
    %2944 = vmatprep.subr.mxu0 0.0
    %2945 = vmatpush1.msra.mxu0 0.0
    %2946 = vmatprep.subr.mxu0 0.0
    %2947 = vmatpush1.msra.mxu0 0.0
    %2948 = vmatprep.subr.mxu0 0.0
    %2949 = vmatpush1.msra.mxu0 0.0
    %2950 = vmatprep.subr.mxu0 0.0
    %2951 = vmatpush1.msra.mxu0 0.0
    %2952 = vmatprep.mubr.f32.mxu0 %v2816
    %2953 = vmatmul.mubr.f32.gmra.mrb[0].mxu0 %v2750
    %v2954 = vpop.f32.mrb[0].mxu0
    %v2955 = vadd.f32 %v2885, %v2954
    %v2956 = vpop.f32.mrb[0].mxu0
    %2957 = vdwg.mxu0
    %vm2958 = vcmask 41984
    %2959 = vst.msk [vmem:[#allocation2] sm:$0x3] %vm2958, %v2955
    %v2960 = vld [vmem:[%s9] sm:$0xff]
    %v2961 = vld [vmem:[%s9 + $0x8] sm:$0xff]
    %v2962 = vld [vmem:[%s9 + $0x10] sm:$0xff]
    %v2963 = vld [vmem:[%s9 + $0x18] sm:$0xff]
    %v2964 = vld [vmem:[%s9 + $0x20] sm:$0xff]
    %v2965 = vld [vmem:[%s9 + $0x28] sm:$0xff]
    %v2966 = vld [vmem:[%s9 + $0x30] sm:$0xff]
    %v2967 = vld [vmem:[%s9 + $0x38] sm:$0xff]
    %v2968 = vld [vmem:[%s9 + $0x40] sm:$0xff]
    %v2969 = vld [vmem:[%s9 + $0x48] sm:$0xff]
    %v2970 = vld [vmem:[%s9 + $0x50] sm:$0xff]
    %v2971 = vld [vmem:[%s9 + $0x58] sm:$0xff]
    %v2972 = vld [vmem:[%s9 + $0x60] sm:$0xff]
    %v2973 = vld [vmem:[%s9 + $0x68] sm:$0xff]
    %v2974 = vld [vmem:[%s9 + $0x70] sm:$0xff]
    %v2975 = vld [vmem:[%s9 + $0x78] sm:$0xff]
    %v2976 = vld [vmem:[%s9 + $0x80] sm:$0xff]
    %v2977 = vld [vmem:[%s9 + $0x88] sm:$0xff]
    %v2978 = vld [vmem:[%s9 + $0x90] sm:$0xff]
    %v2979 = vld [vmem:[%s9 + $0x98] sm:$0xff]
    %v2980 = vld [vmem:[%s9 + $0xa0] sm:$0xff]
    %v2981 = vld [vmem:[%s9 + $0xa8] sm:$0xff]
    %v2982 = vld [vmem:[%s9 + $0xb0] sm:$0xff]
    %v2983 = vld [vmem:[%s9 + $0xb8] sm:$0xff]
    %v2984 = vld [vmem:[%s9 + $0xc0] sm:$0xff]
    %v2985 = vld [vmem:[%s9 + $0xc8] sm:$0xff]
    %v2986 = vld [vmem:[%s9 + $0xd0] sm:$0xff]
    %v2987 = vld [vmem:[%s9 + $0xd8] sm:$0xff]
    %v2988 = vld [vmem:[%s9 + $0xe0] sm:$0xff]
    %v2989 = vld [vmem:[%s9 + $0xe8] sm:$0xff]
    %v2990 = vld [vmem:[%s9 + $0xf0] sm:$0xff]
    %v2991 = vld [vmem:[%s9 + $0xf8] sm:$0xff]
    %v2992 = vld [vmem:[%s9 + $0x100] sm:$0xff]
    %v2993 = vld [vmem:[%s9 + $0x108] sm:$0xff]
    %v2994 = vld [vmem:[%s9 + $0x110] sm:$0xff]
    %v2995 = vld [vmem:[%s9 + $0x118] sm:$0xff]
    %v2996 = vld [vmem:[%s9 + $0x120] sm:$0xff]
    %v2997 = vld [vmem:[%s9 + $0x128] sm:$0xff]
    %v2998 = vld [vmem:[%s9 + $0x130] sm:$0xff]
    %v2999 = vld [vmem:[%s9 + $0x138] sm:$0xff]
    %v3000 = vld [vmem:[%s9 + $0x140] sm:$0xff]
    %v3001 = vld [vmem:[%s9 + $0x148] sm:$0xff]
    %v3002 = vld [vmem:[%s9 + $0x150] sm:$0xff]
    %v3003 = vld [vmem:[%s9 + $0x158] sm:$0xff]
    %v3004 = vld [vmem:[%s9 + $0x160] sm:$0xff]
    %v3005 = vld [vmem:[%s9 + $0x168] sm:$0xff]
    %v3006 = vld [vmem:[%s9 + $0x170] sm:$0xff]
    %v3007 = vld [vmem:[%s9 + $0x178] sm:$0xff]
    %v3008 = vld [vmem:[%s9 + $0x180] sm:$0xff]
    %v3009 = vld [vmem:[%s9 + $0x188] sm:$0xff]
    %v3010 = vld [vmem:[%s9 + $0x190] sm:$0xff]
    %v3011 = vld [vmem:[%s9 + $0x198] sm:$0xff]
    %v3012 = vld [vmem:[%s9 + $0x1a0] sm:$0xff]
    %v3013 = vld [vmem:[%s9 + $0x1a8] sm:$0xff]
    %v3014 = vld [vmem:[%s9 + $0x1b0] sm:$0xff]
    %v3015 = vld [vmem:[%s9 + $0x1b8] sm:$0xff]
    %v3016 = vld [vmem:[%s9 + $0x1c0] sm:$0xff]
    %v3017 = vld [vmem:[%s9 + $0x1c8] sm:$0xff]
    %v3018 = vld [vmem:[%s9 + $0x1d0] sm:$0xff]
    %v3019 = vld [vmem:[%s9 + $0x1d8] sm:$0xff]
    %v3020 = vld [vmem:[%s9 + $0x1e0] sm:$0xff]
    %v3021 = vld [vmem:[%s9 + $0x1e8] sm:$0xff]
    %v3022 = vld [vmem:[%s9 + $0x1f0] sm:$0xff]
    %v3023 = vld [vmem:[%s9 + $0x1f8] sm:$0xff]
    %v3024 = vld [vmem:[%s9 + $0x200] sm:$0xff]
    %v3025 = vld [vmem:[%s9 + $0x208] sm:$0xff]
    %v3026 = vld [vmem:[%s9 + $0x210] sm:$0xff]
    %v3027 = vld [vmem:[%s9 + $0x218] sm:$0xff]
    %v3028 = vld [vmem:[%s9 + $0x220] sm:$0xff]
    %v3029 = vld [vmem:[%s9 + $0x228] sm:$0xff]
    %v3030 = vld [vmem:[%s9 + $0x230] sm:$0xff]
    %v3031 = vld [vmem:[%s9 + $0x238] sm:$0xff]
    %v3032 = vld [vmem:[%s9 + $0x240] sm:$0xff]
    %v3033 = vld [vmem:[%s9 + $0x248] sm:$0xff]
    %v3034 = vld [vmem:[%s9 + $0x250] sm:$0xff]
    %v3035 = vld [vmem:[%s9 + $0x258] sm:$0xff]
    %v3036 = vld [vmem:[%s9 + $0x260] sm:$0xff]
    %v3037 = vld [vmem:[%s9 + $0x268] sm:$0xff]
    %v3038 = vld [vmem:[%s9 + $0x270] sm:$0xff]
    %v3039 = vld [vmem:[%s9 + $0x278] sm:$0xff]
    %v3040 = vld [vmem:[%s9 + $0x280] sm:$0xff]
    %v3041 = vld [vmem:[%s9 + $0x288] sm:$0xff]
    %v3042 = vld [vmem:[%s9 + $0x290] sm:$0xff]
    %v3043 = vld [vmem:[%s9 + $0x298] sm:$0xff]
    %v3044 = vld [vmem:[%s9 + $0x2a0] sm:$0xff]
    %v3045 = vld [vmem:[%s9 + $0x2a8] sm:$0xff]
    %v3046 = vld [vmem:[%s9 + $0x2b0] sm:$0xff]
    %v3047 = vld [vmem:[%s9 + $0x2b8] sm:$0xff]
    %v3048 = vld [vmem:[%s9 + $0x2c0] sm:$0xff]
    %v3049 = vld [vmem:[%s9 + $0x2c8] sm:$0xff]
    %v3050 = vld [vmem:[%s9 + $0x2d0] sm:$0xff]
    %v3051 = vld [vmem:[%s9 + $0x2d8] sm:$0xff]
    %v3052 = vld [vmem:[%s9 + $0x2e0] sm:$0xff]
    %v3053 = vld [vmem:[%s9 + $0x2e8] sm:$0xff]
    %v3054 = vld [vmem:[%s9 + $0x2f0] sm:$0xff]
    %v3055 = vld [vmem:[%s9 + $0x2f8] sm:$0xff]
    %v3056 = vld [vmem:[%s9 + $0x300] sm:$0xff]
    %v3057 = vld [vmem:[%s9 + $0x308] sm:$0xff]
    %v3058 = vld [vmem:[%s9 + $0x310] sm:$0xff]
    %v3059 = vld [vmem:[%s9 + $0x318] sm:$0xff]
    %v3060 = vld [vmem:[%s9 + $0x320] sm:$0xff]
    %v3061 = vld [vmem:[%s9 + $0x328] sm:$0xff]
    %v3062 = vld [vmem:[%s9 + $0x330] sm:$0xff]
    %v3063 = vld [vmem:[%s9 + $0x338] sm:$0xff]
    %v3064 = vld [vmem:[%s9 + $0x340] sm:$0xff]
    %v3065 = vld [vmem:[%s9 + $0x348] sm:$0xff]
    %v3066 = vld [vmem:[%s9 + $0x350] sm:$0xff]
    %v3067 = vld [vmem:[%s9 + $0x358] sm:$0xff]
    %v3068 = vld [vmem:[%s9 + $0x360] sm:$0xff]
    %v3069 = vld [vmem:[%s9 + $0x368] sm:$0xff]
    %v3070 = vld [vmem:[%s9 + $0x370] sm:$0xff]
    %v3071 = vld [vmem:[%s9 + $0x378] sm:$0xff]
    %v3072 = vld [vmem:[%s9 + $0x380] sm:$0xff]
    %v3073 = vld [vmem:[%s9 + $0x388] sm:$0xff]
    %v3074 = vld [vmem:[%s9 + $0x390] sm:$0xff]
    %v3075 = vld [vmem:[%s9 + $0x398] sm:$0xff]
    %v3076 = vld [vmem:[%s9 + $0x3a0] sm:$0xff]
    %v3077 = vld [vmem:[%s9 + $0x3a8] sm:$0xff]
    %v3078 = vld [vmem:[%s9 + $0x3b0] sm:$0xff]
    %v3079 = vld [vmem:[%s9 + $0x3b8] sm:$0xff]
    %v3080 = vld [vmem:[%s9 + $0x3c0] sm:$0xff]
    %v3081 = vld [vmem:[%s9 + $0x3c8] sm:$0xff]
    %v3082 = vld [vmem:[%s9 + $0x3d0] sm:$0xff]
    %v3083 = vld [vmem:[%s9 + $0x3d8] sm:$0xff]
    %v3084 = vld [vmem:[%s9 + $0x3e0] sm:$0xff]
    %v3085 = vld [vmem:[%s9 + $0x3e8] sm:$0xff]
    %v3086 = vld [vmem:[%s9 + $0x3f0] sm:$0xff]
    %v3087 = vld [vmem:[%s9 + $0x3f8] sm:$0xff]
    %v3088 = vld [vmem:[%s9 + $0x400] sm:$0xff]
    %v3089 = vld [vmem:[%s9 + $0x408] sm:$0xff]
    %v3090 = vld [vmem:[%s9 + $0x410] sm:$0xff]
    %v3091 = vld [vmem:[%s9 + $0x418] sm:$0xff]
    %v3092 = vld [vmem:[%s9 + $0x420] sm:$0xff]
    %v3093 = vld [vmem:[%s9 + $0x428] sm:$0xff]
    %v3094 = vld [vmem:[%s9 + $0x430] sm:$0xff]
    %v3095 = vld [vmem:[%s9 + $0x438] sm:$0xff]
    %v3096 = vld [vmem:[%s9 + $0x440] sm:$0xff]
    %v3097 = vld [vmem:[%s9 + $0x448] sm:$0xff]
    %v3098 = vld [vmem:[%s9 + $0x450] sm:$0xff]
    %v3099 = vld [vmem:[%s9 + $0x458] sm:$0xff]
    %v3100 = vld [vmem:[%s9 + $0x460] sm:$0xff]
    %v3101 = vld [vmem:[%s9 + $0x468] sm:$0xff]
    %v3102 = vld [vmem:[%s9 + $0x470] sm:$0xff]
    %v3103 = vld [vmem:[%s9 + $0x478] sm:$0xff]
    %v3104 = vld [vmem:[%s9 + $0x480] sm:$0xff]
    %v3105 = vld [vmem:[%s9 + $0x488] sm:$0xff]
    %v3106 = vld [vmem:[%s9 + $0x490] sm:$0xff]
    %v3107 = vld [vmem:[%s9 + $0x498] sm:$0xff]
    %v3108 = vld [vmem:[%s9 + $0x4a0] sm:$0xff]
    %v3109 = vld [vmem:[%s9 + $0x4a8] sm:$0xff]
    %v3110 = vld [vmem:[%s9 + $0x4b0] sm:$0xff]
    %v3111 = vld [vmem:[%s9 + $0x4b8] sm:$0xff]
    %v3112 = vld [vmem:[%s9 + $0x4c0] sm:$0xff]
    %v3113 = vld [vmem:[%s9 + $0x4c8] sm:$0xff]
    %v3114 = vld [vmem:[%s9 + $0x4d0] sm:$0xff]
    %v3115 = vld [vmem:[%s9 + $0x4d8] sm:$0xff]
    %v3116 = vld [vmem:[%s9 + $0x4e0] sm:$0xff]
    %v3117 = vld [vmem:[%s9 + $0x4e8] sm:$0xff]
    %v3118 = vld [vmem:[%s9 + $0x4f0] sm:$0xff]
    %v3119 = vld [vmem:[%s9 + $0x4f8] sm:$0xff]
    %v3120 = vld [vmem:[%s9 + $0x500] sm:$0xff]
    %v3121 = vld [vmem:[%s9 + $0x508] sm:$0xff]
    %v3122 = vld [vmem:[%s9 + $0x510] sm:$0xff]
    %v3123 = vld [vmem:[%s9 + $0x518] sm:$0xff]
    %v3124 = vld [vmem:[%s9 + $0x520] sm:$0xff]
    %v3125 = vld [vmem:[%s9 + $0x528] sm:$0xff]
    %v3126 = vld [vmem:[%s9 + $0x530] sm:$0xff]
    %v3127 = vld [vmem:[%s9 + $0x538] sm:$0xff]
    %v3128 = vld [vmem:[%s9 + $0x540] sm:$0xff]
    %v3129 = vld [vmem:[%s9 + $0x548] sm:$0xff]
    %v3130 = vld [vmem:[%s9 + $0x550] sm:$0xff]
    %v3131 = vld [vmem:[%s9 + $0x558] sm:$0xff]
    %v3132 = vld [vmem:[%s9 + $0x560] sm:$0xff]
    %v3133 = vld [vmem:[%s9 + $0x568] sm:$0xff]
    %v3134 = vld [vmem:[%s9 + $0x570] sm:$0xff]
    %v3135 = vld [vmem:[%s9 + $0x578] sm:$0xff]
    %v3136 = vld [vmem:[%s9 + $0x580] sm:$0xff]
    %v3137 = vld [vmem:[%s9 + $0x588] sm:$0xff]
    %v3138 = vld [vmem:[%s9 + $0x590] sm:$0xff]
    %v3139 = vld [vmem:[%s9 + $0x598] sm:$0xff]
    %v3140 = vld [vmem:[%s9 + $0x5a0] sm:$0xff]
    %v3141 = vld [vmem:[%s9 + $0x5a8] sm:$0xff]
    %v3142 = vld [vmem:[%s9 + $0x5b0] sm:$0xff]
    %v3143 = vld [vmem:[%s9 + $0x5b8] sm:$0xff]
    %v3144 = vld [vmem:[%s9 + $0x5c0] sm:$0xff]
    %v3145 = vld [vmem:[%s9 + $0x5c8] sm:$0xff]
    %v3146 = vld [vmem:[%s9 + $0x5d0] sm:$0xff]
    %v3147 = vld [vmem:[%s9 + $0x5d8] sm:$0xff]
    %v3148 = vld [vmem:[%s9 + $0x5e0] sm:$0xff]
    %v3149 = vld [vmem:[%s9 + $0x5e8] sm:$0xff]
    %v3150 = vld [vmem:[%s9 + $0x5f0] sm:$0xff]
    %v3151 = vld [vmem:[%s9 + $0x5f8] sm:$0xff]
    %v3152 = vld [vmem:[%s9 + $0x600] sm:$0xff]
    %v3153 = vld [vmem:[%s9 + $0x608] sm:$0xff]
    %v3154 = vld [vmem:[%s9 + $0x610] sm:$0xff]
    %v3155 = vld [vmem:[%s9 + $0x618] sm:$0xff]
    %v3156 = vld [vmem:[%s9 + $0x620] sm:$0xff]
    %v3157 = vld [vmem:[%s9 + $0x628] sm:$0xff]
    %v3158 = vld [vmem:[%s9 + $0x630] sm:$0xff]
    %v3159 = vld [vmem:[%s9 + $0x638] sm:$0xff]
    %v3160 = vld [vmem:[%s9 + $0x640] sm:$0xff]
    %v3161 = vld [vmem:[%s9 + $0x648] sm:$0xff]
    %v3162 = vld [vmem:[%s9 + $0x650] sm:$0xff]
    %v3163 = vld [vmem:[%s9 + $0x658] sm:$0xff]
    %v3164 = vld [vmem:[%s9 + $0x660] sm:$0xff]
    %v3165 = vld [vmem:[%s9 + $0x668] sm:$0xff]
    %v3166 = vld [vmem:[%s9 + $0x670] sm:$0xff]
    %v3167 = vld [vmem:[%s9 + $0x678] sm:$0xff]
    %v3168 = vld [vmem:[%s9 + $0x680] sm:$0xff]
    %v3169 = vld [vmem:[%s9 + $0x688] sm:$0xff]
    %v3170 = vld [vmem:[%s9 + $0x690] sm:$0xff]
    %v3171 = vld [vmem:[%s9 + $0x698] sm:$0xff]
    %v3172 = vld [vmem:[%s9 + $0x6a0] sm:$0xff]
    %v3173 = vld [vmem:[%s9 + $0x6a8] sm:$0xff]
    %v3174 = vld [vmem:[%s9 + $0x6b0] sm:$0xff]
    %v3175 = vld [vmem:[%s9 + $0x6b8] sm:$0xff]
    %v3176 = vld [vmem:[%s9 + $0x6c0] sm:$0xff]
    %v3177 = vld [vmem:[%s9 + $0x6c8] sm:$0xff]
    %v3178 = vld [vmem:[%s9 + $0x6d0] sm:$0xff]
    %v3179 = vld [vmem:[%s9 + $0x6d8] sm:$0xff]
    %v3180 = vld [vmem:[%s9 + $0x6e0] sm:$0xff]
    %v3181 = vld [vmem:[%s9 + $0x6e8] sm:$0xff]
    %v3182 = vld [vmem:[%s9 + $0x6f0] sm:$0xff]
    %v3183 = vld [vmem:[%s9 + $0x6f8] sm:$0xff]
    %v3184 = vld [vmem:[%s10] sm:$0xf]
    %v3186 = vlaneseq
    %v3187 = vshrl.u32 %v3186, 7
    %v3188 = vsub.s32 0, %v3187
    %v3189 = vrot.slane %v3184, %v3188
    %v3190 = vlaneseq
    %v3191 = vshrl.u32 %v3190, 7
    %v3192 = vsub.s32 1, %v3191
    %v3193 = vrot.slane %v3184, %v3192
    %v3194 = vlaneseq
    %v3195 = vshrl.u32 %v3194, 7
    %v3196 = vsub.s32 2, %v3195
    %v3197 = vrot.slane %v3184, %v3196
    %v3198 = vlaneseq
    %v3199 = vshrl.u32 %v3198, 7
    %v3200 = vsub.s32 3, %v3199
    %v3201 = vrot.slane %v3184, %v3200
    %3206 = vmatprep.subr.mxu0 %v2961
    %3207 = vmatpush1.msra.mxu0 %v2960
    %3208 = vmatprep.subr.mxu0 %v2965
    %3209 = vmatpush1.msra.mxu0 %v2964
    %3210 = vmatprep.subr.mxu0 %v2969
    %3211 = vmatpush1.msra.mxu0 %v2968
    %3212 = vmatprep.subr.mxu0 %v2973
    %3213 = vmatpush1.msra.mxu0 %v2972
    %3214 = vmatprep.subr.mxu0 %v2977
    %3215 = vmatpush1.msra.mxu0 %v2976
    %3216 = vmatprep.subr.mxu0 %v2981
    %3217 = vmatpush1.msra.mxu0 %v2980
    %3218 = vmatprep.subr.mxu0 %v2985
    %3219 = vmatpush1.msra.mxu0 %v2984
    %3220 = vmatprep.subr.mxu0 %v2989
    %3221 = vmatpush1.msra.mxu0 %v2988
    %3222 = vmatprep.subr.mxu0 %v2993
    %3223 = vmatpush1.msra.mxu0 %v2992
    %3224 = vmatprep.subr.mxu0 %v2997
    %3225 = vmatpush1.msra.mxu0 %v2996
    %3226 = vmatprep.subr.mxu0 %v3001
    %3227 = vmatpush1.msra.mxu0 %v3000
    %3228 = vmatprep.subr.mxu0 %v3005
    %3229 = vmatpush1.msra.mxu0 %v3004
    %3230 = vmatprep.subr.mxu0 %v3009
    %3231 = vmatpush1.msra.mxu0 %v3008
    %3232 = vmatprep.subr.mxu0 %v3013
    %3233 = vmatpush1.msra.mxu0 %v3012
    %3234 = vmatprep.subr.mxu0 %v3017
    %3235 = vmatpush1.msra.mxu0 %v3016
    %3236 = vmatprep.subr.mxu0 %v3021
    %3237 = vmatpush1.msra.mxu0 %v3020
    %3238 = vmatprep.subr.mxu0 %v3025
    %3239 = vmatpush1.msra.mxu0 %v3024
    %3240 = vmatprep.subr.mxu0 %v3029
    %3241 = vmatpush1.msra.mxu0 %v3028
    %3242 = vmatprep.subr.mxu0 %v3033
    %3243 = vmatpush1.msra.mxu0 %v3032
    %3244 = vmatprep.subr.mxu0 %v3037
    %3245 = vmatpush1.msra.mxu0 %v3036
    %3246 = vmatprep.subr.mxu0 %v3041
    %3247 = vmatpush1.msra.mxu0 %v3040
    %3248 = vmatprep.subr.mxu0 %v3045
    %3249 = vmatpush1.msra.mxu0 %v3044
    %3250 = vmatprep.subr.mxu0 %v3049
    %3251 = vmatpush1.msra.mxu0 %v3048
    %3252 = vmatprep.subr.mxu0 %v3053
    %3253 = vmatpush1.msra.mxu0 %v3052
    %3254 = vmatprep.subr.mxu0 %v3057
    %3255 = vmatpush1.msra.mxu0 %v3056
    %3256 = vmatprep.subr.mxu0 %v3061
    %3257 = vmatpush1.msra.mxu0 %v3060
    %3258 = vmatprep.subr.mxu0 %v3065
    %3259 = vmatpush1.msra.mxu0 %v3064
    %3260 = vmatprep.subr.mxu0 %v3069
    %3261 = vmatpush1.msra.mxu0 %v3068
    %3262 = vmatprep.subr.mxu0 %v3073
    %3263 = vmatpush1.msra.mxu0 %v3072
    %3264 = vmatprep.subr.mxu0 %v3077
    %3265 = vmatpush1.msra.mxu0 %v3076
    %3266 = vmatprep.subr.mxu0 %v3081
    %3267 = vmatpush1.msra.mxu0 %v3080
    %3268 = vmatprep.subr.mxu0 %v3085
    %3269 = vmatpush1.msra.mxu0 %v3084
    %3270 = vmatprep.mubr.f32.mxu0 %v2212
    %3271 = vmatmul.mubr.f32.gmra.mrb[0].mxu0 %v2211
    %v3272 = vpop.f32.mrb[0].mxu0
    %v3273 = vadd.f32 %v3189, %v3272
    %v3274 = vpop.f32.mrb[0].mxu0
    %v3275 = vadd.f32 %v3193, %v3274
    %3276 = vdwg.mxu0
    %3277 = vmatprep.subr.mxu0 %v3089
    %3278 = vmatpush1.msra.mxu0 %v3088
    %3279 = vmatprep.subr.mxu0 %v3093
    %3280 = vmatpush1.msra.mxu0 %v3092
    %3281 = vmatprep.subr.mxu0 %v3097
    %3282 = vmatpush1.msra.mxu0 %v3096
    %3283 = vmatprep.subr.mxu0 %v3101
    %3284 = vmatpush1.msra.mxu0 %v3100
    %3285 = vmatprep.subr.mxu0 %v3105
    %3286 = vmatpush1.msra.mxu0 %v3104
    %3287 = vmatprep.subr.mxu0 %v3109
    %3288 = vmatpush1.msra.mxu0 %v3108
    %3289 = vmatprep.subr.mxu0 %v3113
    %3290 = vmatpush1.msra.mxu0 %v3112
    %3291 = vmatprep.subr.mxu0 %v3117
    %3292 = vmatpush1.msra.mxu0 %v3116
    %3293 = vmatprep.subr.mxu0 %v3121
    %3294 = vmatpush1.msra.mxu0 %v3120
    %3295 = vmatprep.subr.mxu0 %v3125
    %3296 = vmatpush1.msra.mxu0 %v3124
    %3297 = vmatprep.subr.mxu0 %v3129
    %3298 = vmatpush1.msra.mxu0 %v3128
    %3299 = vmatprep.subr.mxu0 %v3133
    %3300 = vmatpush1.msra.mxu0 %v3132
    %3301 = vmatprep.subr.mxu0 %v3137
    %3302 = vmatpush1.msra.mxu0 %v3136
    %3303 = vmatprep.subr.mxu0 %v3141
    %3304 = vmatpush1.msra.mxu0 %v3140
    %3305 = vmatprep.subr.mxu0 %v3145
    %3306 = vmatpush1.msra.mxu0 %v3144
    %3307 = vmatprep.subr.mxu0 %v3149
    %3308 = vmatpush1.msra.mxu0 %v3148
    %3309 = vmatprep.subr.mxu0 %v3153
    %3310 = vmatpush1.msra.mxu0 %v3152
    %3311 = vmatprep.subr.mxu0 %v3157
    %3312 = vmatpush1.msra.mxu0 %v3156
    %3313 = vmatprep.subr.mxu0 %v3161
    %3314 = vmatpush1.msra.mxu0 %v3160
    %3315 = vmatprep.subr.mxu0 %v3165
    %3316 = vmatpush1.msra.mxu0 %v3164
    %3317 = vmatprep.subr.mxu0 %v3169
    %3318 = vmatpush1.msra.mxu0 %v3168
    %3319 = vmatprep.subr.mxu0 %v3173
    %3320 = vmatpush1.msra.mxu0 %v3172
    %3321 = vmatprep.subr.mxu0 %v3177
    %3322 = vmatpush1.msra.mxu0 %v3176
    %3323 = vmatprep.subr.mxu0 %v3181
    %3324 = vmatpush1.msra.mxu0 %v3180
    %3325 = vmatprep.subr.mxu0 0.0
    %3326 = vmatpush1.msra.mxu0 0.0
    %3327 = vmatprep.subr.mxu0 0.0
    %3328 = vmatpush1.msra.mxu0 0.0
    %3329 = vmatprep.subr.mxu0 0.0
    %3330 = vmatpush1.msra.mxu0 0.0
    %3331 = vmatprep.subr.mxu0 0.0
    %3332 = vmatpush1.msra.mxu0 0.0
    %3333 = vmatprep.subr.mxu0 0.0
    %3334 = vmatpush1.msra.mxu0 0.0
    %3335 = vmatprep.subr.mxu0 0.0
    %3336 = vmatpush1.msra.mxu0 0.0
    %3337 = vmatprep.subr.mxu0 0.0
    %3338 = vmatpush1.msra.mxu0 0.0
    %3339 = vmatprep.subr.mxu0 0.0
    %3340 = vmatpush1.msra.mxu0 0.0
    %3341 = vmatprep.mubr.f32.mxu0 %v2462
    %3342 = vmatmul.mubr.f32.gmra.mrb[0].mxu0 %v2213
    %v3343 = vpop.f32.mrb[0].mxu0
    %v3344 = vadd.f32 %v3273, %v3343
    %v3345 = vpop.f32.mrb[0].mxu0
    %v3346 = vadd.f32 %v3275, %v3345
    %3347 = vdwg.mxu0
    %3348 = vmatprep.subr.mxu0 %v2963
    %3349 = vmatpush1.msra.mxu0 %v2962
    %3350 = vmatprep.subr.mxu0 %v2967
    %3351 = vmatpush1.msra.mxu0 %v2966
    %3352 = vmatprep.subr.mxu0 %v2971
    %3353 = vmatpush1.msra.mxu0 %v2970
    %3354 = vmatprep.subr.mxu0 %v2975
    %3355 = vmatpush1.msra.mxu0 %v2974
    %3356 = vmatprep.subr.mxu0 %v2979
    %3357 = vmatpush1.msra.mxu0 %v2978
    %3358 = vmatprep.subr.mxu0 %v2983
    %3359 = vmatpush1.msra.mxu0 %v2982
    %3360 = vmatprep.subr.mxu0 %v2987
    %3361 = vmatpush1.msra.mxu0 %v2986
    %3362 = vmatprep.subr.mxu0 %v2991
    %3363 = vmatpush1.msra.mxu0 %v2990
    %3364 = vmatprep.subr.mxu0 %v2995
    %3365 = vmatpush1.msra.mxu0 %v2994
    %3366 = vmatprep.subr.mxu0 %v2999
    %3367 = vmatpush1.msra.mxu0 %v2998
    %3368 = vmatprep.subr.mxu0 %v3003
    %3369 = vmatpush1.msra.mxu0 %v3002
    %3370 = vmatprep.subr.mxu0 %v3007
    %3371 = vmatpush1.msra.mxu0 %v3006
    %3372 = vmatprep.subr.mxu0 %v3011
    %3373 = vmatpush1.msra.mxu0 %v3010
    %3374 = vmatprep.subr.mxu0 %v3015
    %3375 = vmatpush1.msra.mxu0 %v3014
    %3376 = vmatprep.subr.mxu0 %v3019
    %3377 = vmatpush1.msra.mxu0 %v3018
    %3378 = vmatprep.subr.mxu0 %v3023
    %3379 = vmatpush1.msra.mxu0 %v3022
    %3380 = vmatprep.subr.mxu0 %v3027
    %3381 = vmatpush1.msra.mxu0 %v3026
    %3382 = vmatprep.subr.mxu0 %v3031
    %3383 = vmatpush1.msra.mxu0 %v3030
    %3384 = vmatprep.subr.mxu0 %v3035
    %3385 = vmatpush1.msra.mxu0 %v3034
    %3386 = vmatprep.subr.mxu0 %v3039
    %3387 = vmatpush1.msra.mxu0 %v3038
    %3388 = vmatprep.subr.mxu0 %v3043
    %3389 = vmatpush1.msra.mxu0 %v3042
    %3390 = vmatprep.subr.mxu0 %v3047
    %3391 = vmatpush1.msra.mxu0 %v3046
    %3392 = vmatprep.subr.mxu0 %v3051
    %3393 = vmatpush1.msra.mxu0 %v3050
    %3394 = vmatprep.subr.mxu0 %v3055
    %3395 = vmatpush1.msra.mxu0 %v3054
    %3396 = vmatprep.subr.mxu0 %v3059
    %3397 = vmatpush1.msra.mxu0 %v3058
    %3398 = vmatprep.subr.mxu0 %v3063
    %3399 = vmatpush1.msra.mxu0 %v3062
    %3400 = vmatprep.subr.mxu0 %v3067
    %3401 = vmatpush1.msra.mxu0 %v3066
    %3402 = vmatprep.subr.mxu0 %v3071
    %3403 = vmatpush1.msra.mxu0 %v3070
    %3404 = vmatprep.subr.mxu0 %v3075
    %3405 = vmatpush1.msra.mxu0 %v3074
    %3406 = vmatprep.subr.mxu0 %v3079
    %3407 = vmatpush1.msra.mxu0 %v3078
    %3408 = vmatprep.subr.mxu0 %v3083
    %3409 = vmatpush1.msra.mxu0 %v3082
    %3410 = vmatprep.subr.mxu0 %v3087
    %3411 = vmatpush1.msra.mxu0 %v3086
    %3412 = vmatprep.mubr.f32.mxu0 %v2212
    %3413 = vmatmul.mubr.f32.gmra.mrb[0].mxu0 %v2211
    %v3414 = vpop.f32.mrb[0].mxu0
    %v3415 = vadd.f32 %v3197, %v3414
    %v3416 = vpop.f32.mrb[0].mxu0
    %v3417 = vadd.f32 %v3201, %v3416
    %3418 = vdwg.mxu0
    %3419 = vmatprep.subr.mxu0 %v3091
    %3420 = vmatpush1.msra.mxu0 %v3090
    %3421 = vmatprep.subr.mxu0 %v3095
    %3422 = vmatpush1.msra.mxu0 %v3094
    %3423 = vmatprep.subr.mxu0 %v3099
    %3424 = vmatpush1.msra.mxu0 %v3098
    %3425 = vmatprep.subr.mxu0 %v3103
    %3426 = vmatpush1.msra.mxu0 %v3102
    %3427 = vmatprep.subr.mxu0 %v3107
    %3428 = vmatpush1.msra.mxu0 %v3106
    %3429 = vmatprep.subr.mxu0 %v3111
    %3430 = vmatpush1.msra.mxu0 %v3110
    %3431 = vmatprep.subr.mxu0 %v3115
    %3432 = vmatpush1.msra.mxu0 %v3114
    %3433 = vmatprep.subr.mxu0 %v3119
    %3434 = vmatpush1.msra.mxu0 %v3118
    %3435 = vmatprep.subr.mxu0 %v3123
    %3436 = vmatpush1.msra.mxu0 %v3122
    %3437 = vmatprep.subr.mxu0 %v3127
    %3438 = vmatpush1.msra.mxu0 %v3126
    %3439 = vmatprep.subr.mxu0 %v3131
    %3440 = vmatpush1.msra.mxu0 %v3130
    %3441 = vmatprep.subr.mxu0 %v3135
    %3442 = vmatpush1.msra.mxu0 %v3134
    %3443 = vmatprep.subr.mxu0 %v3139
    %3444 = vmatpush1.msra.mxu0 %v3138
    %3445 = vmatprep.subr.mxu0 %v3143
    %3446 = vmatpush1.msra.mxu0 %v3142
    %3447 = vmatprep.subr.mxu0 %v3147
    %3448 = vmatpush1.msra.mxu0 %v3146
    %3449 = vmatprep.subr.mxu0 %v3151
    %3450 = vmatpush1.msra.mxu0 %v3150
    %3451 = vmatprep.subr.mxu0 %v3155
    %3452 = vmatpush1.msra.mxu0 %v3154
    %3453 = vmatprep.subr.mxu0 %v3159
    %3454 = vmatpush1.msra.mxu0 %v3158
    %3455 = vmatprep.subr.mxu0 %v3163
    %3456 = vmatpush1.msra.mxu0 %v3162
    %3457 = vmatprep.subr.mxu0 %v3167
    %3458 = vmatpush1.msra.mxu0 %v3166
    %3459 = vmatprep.subr.mxu0 %v3171
    %3460 = vmatpush1.msra.mxu0 %v3170
    %3461 = vmatprep.subr.mxu0 %v3175
    %3462 = vmatpush1.msra.mxu0 %v3174
    %3463 = vmatprep.subr.mxu0 %v3179
    %3464 = vmatpush1.msra.mxu0 %v3178
    %3465 = vmatprep.subr.mxu0 %v3183
    %3466 = vmatpush1.msra.mxu0 %v3182
    %3467 = vmatprep.subr.mxu0 0.0
    %3468 = vmatpush1.msra.mxu0 0.0
    %3469 = vmatprep.subr.mxu0 0.0
    %3470 = vmatpush1.msra.mxu0 0.0
    %3471 = vmatprep.subr.mxu0 0.0
    %3472 = vmatpush1.msra.mxu0 0.0
    %3473 = vmatprep.subr.mxu0 0.0
    %3474 = vmatpush1.msra.mxu0 0.0
    %3475 = vmatprep.subr.mxu0 0.0
    %3476 = vmatpush1.msra.mxu0 0.0
    %3477 = vmatprep.subr.mxu0 0.0
    %3478 = vmatpush1.msra.mxu0 0.0
    %3479 = vmatprep.subr.mxu0 0.0
    %3480 = vmatpush1.msra.mxu0 0.0
    %3481 = vmatprep.subr.mxu0 0.0
    %3482 = vmatpush1.msra.mxu0 0.0
    %3483 = vmatprep.mubr.f32.mxu0 %v2462
    %3484 = vmatmul.mubr.f32.gmra.mrb[0].mxu0 %v2213
    %v3485 = vpop.f32.mrb[0].mxu0
    %v3486 = vadd.f32 %v3415, %v3485
    %v3487 = vpop.f32.mrb[0].mxu0
    %v3488 = vadd.f32 %v3417, %v3487
    %3489 = vdwg.mxu0
    %v3490 = vmax.f32 %v3344, 0.0
    %v3491 = vmax.f32 %v3346, 0.0
    %v3492 = vmax.f32 %v3486, 0.0
    %v3493 = vmax.f32 %v3488, 0.0
    %v3494 = vadd.f32 %v3490, %v2211
    %v3495 = vadd.f32 %v3491, %v2212
    %v3496 = vadd.f32 %v3492, %v2213
    %v3497 = vadd.f32 %v3493, %v2214
    %v3498 = vld [vmem:[%s11] sm:$0xff]
    %v3499 = vld [vmem:[%s11 + $0x8] sm:$0xff]
    %v3500 = vld [vmem:[%s11 + $0x10] sm:$0xff]
    %v3501 = vld [vmem:[%s11 + $0x18] sm:$0xff]
    %v3502 = vld [vmem:[%s11 + $0x20] sm:$0xff]
    %v3503 = vld [vmem:[%s11 + $0x28] sm:$0xff]
    %v3504 = vld [vmem:[%s11 + $0x30] sm:$0xff]
    %v3505 = vld [vmem:[%s11 + $0x38] sm:$0xff]
    %v3506 = vld [vmem:[%s11 + $0x40] sm:$0xff]
    %v3507 = vld [vmem:[%s11 + $0x48] sm:$0xff]
    %v3508 = vld [vmem:[%s11 + $0x50] sm:$0xff]
    %v3509 = vld [vmem:[%s11 + $0x58] sm:$0xff]
    %v3510 = vld [vmem:[%s11 + $0x60] sm:$0xff]
    %v3511 = vld [vmem:[%s11 + $0x68] sm:$0xff]
    %v3512 = vld [vmem:[%s11 + $0x70] sm:$0xff]
    %v3513 = vld [vmem:[%s11 + $0x78] sm:$0xff]
    %v3514 = vld [vmem:[%s11 + $0x80] sm:$0xff]
    %v3515 = vld [vmem:[%s11 + $0x88] sm:$0xff]
    %v3516 = vld [vmem:[%s11 + $0x90] sm:$0xff]
    %v3517 = vld [vmem:[%s11 + $0x98] sm:$0xff]
    %v3518 = vld [vmem:[%s11 + $0xa0] sm:$0xff]
    %v3519 = vld [vmem:[%s11 + $0xa8] sm:$0xff]
    %v3520 = vld [vmem:[%s11 + $0xb0] sm:$0xff]
    %v3521 = vld [vmem:[%s11 + $0xb8] sm:$0xff]
    %v3522 = vld [vmem:[%s11 + $0xc0] sm:$0xff]
    %v3523 = vld [vmem:[%s11 + $0xc8] sm:$0xff]
    %v3524 = vld [vmem:[%s11 + $0xd0] sm:$0xff]
    %v3525 = vld [vmem:[%s11 + $0xd8] sm:$0xff]
    %v3526 = vld [vmem:[%s11 + $0xe0] sm:$0xff]
    %v3527 = vld [vmem:[%s11 + $0xe8] sm:$0xff]
    %v3528 = vld [vmem:[%s11 + $0xf0] sm:$0xff]
    %v3529 = vld [vmem:[%s11 + $0xf8] sm:$0xff]
    %v3530 = vld [vmem:[%s11 + $0x100] sm:$0xff]
    %v3531 = vld [vmem:[%s11 + $0x108] sm:$0xff]
    %v3532 = vld [vmem:[%s11 + $0x110] sm:$0xff]
    %v3533 = vld [vmem:[%s11 + $0x118] sm:$0xff]
    %v3534 = vld [vmem:[%s11 + $0x120] sm:$0xff]
    %v3535 = vld [vmem:[%s11 + $0x128] sm:$0xff]
    %v3536 = vld [vmem:[%s11 + $0x130] sm:$0xff]
    %v3537 = vld [vmem:[%s11 + $0x138] sm:$0xff]
    %v3538 = vld [vmem:[%s11 + $0x140] sm:$0xff]
    %v3539 = vld [vmem:[%s11 + $0x148] sm:$0xff]
    %v3540 = vld [vmem:[%s11 + $0x150] sm:$0xff]
    %v3541 = vld [vmem:[%s11 + $0x158] sm:$0xff]
    %v3542 = vld [vmem:[%s11 + $0x160] sm:$0xff]
    %v3543 = vld [vmem:[%s11 + $0x168] sm:$0xff]
    %v3544 = vld [vmem:[%s11 + $0x170] sm:$0xff]
    %v3545 = vld [vmem:[%s11 + $0x178] sm:$0xff]
    %v3546 = vld [vmem:[%s11 + $0x180] sm:$0xff]
    %v3547 = vld [vmem:[%s11 + $0x188] sm:$0xff]
    %v3548 = vld [vmem:[%s11 + $0x190] sm:$0xff]
    %v3549 = vld [vmem:[%s11 + $0x198] sm:$0xff]
    %v3550 = vld [vmem:[%s11 + $0x1a0] sm:$0xff]
    %v3551 = vld [vmem:[%s11 + $0x1a8] sm:$0xff]
    %v3552 = vld [vmem:[%s11 + $0x1b0] sm:$0xff]
    %v3553 = vld [vmem:[%s11 + $0x1b8] sm:$0xff]
    %v3554 = vld [vmem:[%s12] sm:$0x1]
    %v3556 = vlaneseq
    %v3557 = vshrl.u32 %v3556, 7
    %v3558 = vsub.s32 0, %v3557
    %v3559 = vrot.slane %v3554, %v3558
    %v3562 = vsel %vm991, %v3497, 0
    %3564 = vmatprep.subr.mxu0 0.0
    %3565 = vmatpush1.msra.mxu0 %v3498
    %3566 = vmatprep.subr.mxu0 0.0
    %3567 = vmatpush1.msra.mxu0 %v3499
    %3568 = vmatprep.subr.mxu0 0.0
    %3569 = vmatpush1.msra.mxu0 %v3500
    %3570 = vmatprep.subr.mxu0 0.0
    %3571 = vmatpush1.msra.mxu0 %v3501
    %3572 = vmatprep.subr.mxu0 0.0
    %3573 = vmatpush1.msra.mxu0 %v3502
    %3574 = vmatprep.subr.mxu0 0.0
    %3575 = vmatpush1.msra.mxu0 %v3503
    %3576 = vmatprep.subr.mxu0 0.0
    %3577 = vmatpush1.msra.mxu0 %v3504
    %3578 = vmatprep.subr.mxu0 0.0
    %3579 = vmatpush1.msra.mxu0 %v3505
    %3580 = vmatprep.subr.mxu0 0.0
    %3581 = vmatpush1.msra.mxu0 %v3506
    %3582 = vmatprep.subr.mxu0 0.0
    %3583 = vmatpush1.msra.mxu0 %v3507
    %3584 = vmatprep.subr.mxu0 0.0
    %3585 = vmatpush1.msra.mxu0 %v3508
    %3586 = vmatprep.subr.mxu0 0.0
    %3587 = vmatpush1.msra.mxu0 %v3509
    %3588 = vmatprep.subr.mxu0 0.0
    %3589 = vmatpush1.msra.mxu0 %v3510
    %3590 = vmatprep.subr.mxu0 0.0
    %3591 = vmatpush1.msra.mxu0 %v3511
    %3592 = vmatprep.subr.mxu0 0.0
    %3593 = vmatpush1.msra.mxu0 %v3512
    %3594 = vmatprep.subr.mxu0 0.0
    %3595 = vmatpush1.msra.mxu0 %v3513
    %3596 = vmatprep.subr.mxu0 0.0
    %3597 = vmatpush1.msra.mxu0 %v3514
    %3598 = vmatprep.subr.mxu0 0.0
    %3599 = vmatpush1.msra.mxu0 %v3515
    %3600 = vmatprep.subr.mxu0 0.0
    %3601 = vmatpush1.msra.mxu0 %v3516
    %3602 = vmatprep.subr.mxu0 0.0
    %3603 = vmatpush1.msra.mxu0 %v3517
    %3604 = vmatprep.subr.mxu0 0.0
    %3605 = vmatpush1.msra.mxu0 %v3518
    %3606 = vmatprep.subr.mxu0 0.0
    %3607 = vmatpush1.msra.mxu0 %v3519
    %3608 = vmatprep.subr.mxu0 0.0
    %3609 = vmatpush1.msra.mxu0 %v3520
    %3610 = vmatprep.subr.mxu0 0.0
    %3611 = vmatpush1.msra.mxu0 %v3521
    %3612 = vmatprep.subr.mxu0 0.0
    %3613 = vmatpush1.msra.mxu0 %v3522
    %3614 = vmatprep.subr.mxu0 0.0
    %3615 = vmatpush1.msra.mxu0 %v3523
    %3616 = vmatprep.subr.mxu0 0.0
    %3617 = vmatpush1.msra.mxu0 %v3524
    %3618 = vmatprep.subr.mxu0 0.0
    %3619 = vmatpush1.msra.mxu0 %v3525
    %3620 = vmatprep.subr.mxu0 0.0
    %3621 = vmatpush1.msra.mxu0 %v3526
    %3622 = vmatprep.subr.mxu0 0.0
    %3623 = vmatpush1.msra.mxu0 %v3527
    %3624 = vmatprep.subr.mxu0 0.0
    %3625 = vmatpush1.msra.mxu0 %v3528
    %3626 = vmatprep.subr.mxu0 0.0
    %3627 = vmatpush1.msra.mxu0 %v3529
    %3628 = vmatprep.mubr.f32.mxu0 %v3495
    %3629 = vmatmul.mubr.f32.gmra.mrb[0].mxu0 %v3494
    %v3630 = vpop.f32.mrb[0].mxu0
    %v3631 = vadd.f32 %v3559, %v3630
    %v3632 = vpop.f32.mrb[0].mxu0
    %3633 = vdwg.mxu0
    %3634 = vmatprep.subr.mxu0 0.0
    %3635 = vmatpush1.msra.mxu0 %v3530
    %3636 = vmatprep.subr.mxu0 0.0
    %3637 = vmatpush1.msra.mxu0 %v3531
    %3638 = vmatprep.subr.mxu0 0.0
    %3639 = vmatpush1.msra.mxu0 %v3532
    %3640 = vmatprep.subr.mxu0 0.0
    %3641 = vmatpush1.msra.mxu0 %v3533
    %3642 = vmatprep.subr.mxu0 0.0
    %3643 = vmatpush1.msra.mxu0 %v3534
    %3644 = vmatprep.subr.mxu0 0.0
    %3645 = vmatpush1.msra.mxu0 %v3535
    %3646 = vmatprep.subr.mxu0 0.0
    %3647 = vmatpush1.msra.mxu0 %v3536
    %3648 = vmatprep.subr.mxu0 0.0
    %3649 = vmatpush1.msra.mxu0 %v3537
    %3650 = vmatprep.subr.mxu0 0.0
    %3651 = vmatpush1.msra.mxu0 %v3538
    %3652 = vmatprep.subr.mxu0 0.0
    %3653 = vmatpush1.msra.mxu0 %v3539
    %3654 = vmatprep.subr.mxu0 0.0
    %3655 = vmatpush1.msra.mxu0 %v3540
    %3656 = vmatprep.subr.mxu0 0.0
    %3657 = vmatpush1.msra.mxu0 %v3541
    %3658 = vmatprep.subr.mxu0 0.0
    %3659 = vmatpush1.msra.mxu0 %v3542
    %3660 = vmatprep.subr.mxu0 0.0
    %3661 = vmatpush1.msra.mxu0 %v3543
    %3662 = vmatprep.subr.mxu0 0.0
    %3663 = vmatpush1.msra.mxu0 %v3544
    %3664 = vmatprep.subr.mxu0 0.0
    %3665 = vmatpush1.msra.mxu0 %v3545
    %3666 = vmatprep.subr.mxu0 0.0
    %3667 = vmatpush1.msra.mxu0 %v3546
    %3668 = vmatprep.subr.mxu0 0.0
    %3669 = vmatpush1.msra.mxu0 %v3547
    %3670 = vmatprep.subr.mxu0 0.0
    %3671 = vmatpush1.msra.mxu0 %v3548
    %3672 = vmatprep.subr.mxu0 0.0
    %3673 = vmatpush1.msra.mxu0 %v3549
    %3674 = vmatprep.subr.mxu0 0.0
    %3675 = vmatpush1.msra.mxu0 %v3550
    %3676 = vmatprep.subr.mxu0 0.0
    %3677 = vmatpush1.msra.mxu0 %v3551
    %3678 = vmatprep.subr.mxu0 0.0
    %3679 = vmatpush1.msra.mxu0 %v3552
    %3680 = vmatprep.subr.mxu0 0.0
    %3681 = vmatpush1.msra.mxu0 %v3553
    %3682 = vmatprep.subr.mxu0 0.0
    %3683 = vmatpush1.msra.mxu0 0.0
    %3684 = vmatprep.subr.mxu0 0.0
    %3685 = vmatpush1.msra.mxu0 0.0
    %3686 = vmatprep.subr.mxu0 0.0
    %3687 = vmatpush1.msra.mxu0 0.0
    %3688 = vmatprep.subr.mxu0 0.0
    %3689 = vmatpush1.msra.mxu0 0.0
    %3690 = vmatprep.subr.mxu0 0.0
    %3691 = vmatpush1.msra.mxu0 0.0
    %3692 = vmatprep.subr.mxu0 0.0
    %3693 = vmatpush1.msra.mxu0 0.0
    %3694 = vmatprep.subr.mxu0 0.0
    %3695 = vmatpush1.msra.mxu0 0.0
    %3696 = vmatprep.subr.mxu0 0.0
    %3697 = vmatpush1.msra.mxu0 0.0
    %3698 = vmatprep.mubr.f32.mxu0 %v3562
    %3699 = vmatmul.mubr.f32.gmra.mrb[0].mxu0 %v3496
    %v3700 = vpop.f32.mrb[0].mxu0
    %v3701 = vadd.f32 %v3631, %v3700
    %v3702 = vpop.f32.mrb[0].mxu0
    %3703 = vdwg.mxu0
    %vm3704 = vcmask 1024
    %3705 = vst.msk [vmem:[%s14] sm:$0x3] %vm3704, %v3701
    %3707 = vrot.lane.b32.xlu0 %v3701, 127
    %v3708 = vpop.permute.xlu0 %3707
    %3710 = vst.msk [vmem:[%s15] sm:$0x3] %vm3704, %v3708
    // Predicated region
    $region54: #{cnn_actor_critic_forward.7} parent=1 // pred_check
      _
    $region55: #{cnn_actor_critic_forward.7} parent=1 // pred_check_branch
      %3712 = sbr.rel (0) target = $region57
    $region56: #{cnn_actor_critic_forward.7} parent=1 // pred_region
      %s3714 = ssub.s32 32, 32
      %3715 = vsyncadd [#allocation3], %s3714
      %s3717 = sshll.u32 [#allocation2], 4
      %s3718 = int_to_ptr.vmem [resolvable:$true] %s3717
      %3720 = dma.vmem_to_hbm [thread:$0]  %s3718, 32, %s13, [#allocation3]
    $region57: #{cnn_actor_critic_forward.7} parent=1 // pred_fallthru
      _
    // Predicated region
    $region58: #{cnn_actor_critic_forward.7} parent=1 // pred_check
      _
    $region59: #{cnn_actor_critic_forward.7} parent=1 // pred_check_branch
      %3722 = sbr.rel (0) target = $region61
    $region60: #{cnn_actor_critic_forward.7} parent=1 // pred_region
      _
    $region61: #{cnn_actor_critic_forward.7} parent=1 // pred_fallthru
      _
    // Predicated region
    $region62: #{cnn_actor_critic_forward.7} parent=1 // pred_check
      _
    $region63: #{cnn_actor_critic_forward.7} parent=1 // pred_check_branch
      %3724 = sbr.rel (0) target = $region65
    $region64: #{cnn_actor_critic_forward.7} parent=1 // pred_region
      _
    $region65: #{cnn_actor_critic_forward.7} parent=1 // pred_fallthru
      _
    // Predicated region
    $region66: #{cnn_actor_critic_forward.7} parent=1 // pred_check
      _
    $region67: #{cnn_actor_critic_forward.7} parent=1 // pred_check_branch
      %3726 = sbr.rel (0) target = $region69
    $region68: #{cnn_actor_critic_forward.7} parent=1 // pred_region
      %3727 = dma.done [#allocation3], 32
    $region69: #{cnn_actor_critic_forward.7} parent=1 // pred_fallthru
      _
    // Predicated region
    $region70: #{cnn_actor_critic_forward.7} parent=1 // pred_check
      _
    $region71: #{cnn_actor_critic_forward.7} parent=1 // pred_check_branch
      %3729 = sbr.rel (0) target = $region73
    $region72: #{cnn_actor_critic_forward.7} parent=1 // pred_region
      _
    $region73: #{cnn_actor_critic_forward.7} parent=1 // pred_fallthru
      _
    // Predicated region
    $region74: #{cnn_actor_critic_forward.7} parent=1 // pred_check
      _
    $region75: #{cnn_actor_critic_forward.7} parent=1 // pred_check_branch
      %3731 = sbr.rel (0) target = $region77
    $region76: #{cnn_actor_critic_forward.7} parent=1 // pred_region
      _
    $region77: #{cnn_actor_critic_forward.7} parent=1 // pred_fallthru
      _
    %3732 = vsyncpa [#allocation3], 1

</llo_original>
